<compile_context>
chip_gen: v6e
topology: v6e:2x2x1
jax: 0.10.0
libtpu: 0.0.40
codegen_flags: <defaults>
</compile_context>

<pallas_src>
import jax
import jax.numpy as jnp
from jax import lax
from jax.experimental import pallas as pl
from jax.experimental.pallas import tpu as pltpu

LANE = 128


def _sigmoid(z):
    return 1.0 / (1.0 + jnp.exp(-z))


def _bilstm_heads_kernel(x_ref, m_ref, wih_fb_ref, b_fb_ref, whh_f_ref, whh_b_ref,
                         whead_f_ref, whead_b_ref, bhead_ref,
                         logits_ref, se_ref, gx_f, h_bwd):
    """Full BiLSTM (packed-sequence masking) + both heads for one batch tile."""
    T, tb, _ = x_ref.shape
    H = whh_f_ref.shape[0]
    G = 4 * H
    Lpad = logits_ref.shape[-1]
    unroll = T <= 32  # short fixed trip-count -> let the LLO scheduler see it

    def cell(gates, c_prev):
        # PyTorch gate order: i, f, g, o
        i = _sigmoid(gates[:, 0:H])
        f = _sigmoid(gates[:, H:2 * H])
        g = jnp.tanh(gates[:, 2 * H:3 * H])
        o = _sigmoid(gates[:, 3 * H:4 * H])
        c_new = f * c_prev + i * g
        h_new = o * jnp.tanh(c_new)
        return h_new, c_new

    zero = jnp.zeros((tb, H), jnp.float32)

    # --- Pass 1: reverse direction. Also stashes the forward-direction input
    # projection (incl. bias) so pass 2 never re-touches x / W_ih.
    def bwd_body(t, carry):
        h, c = carry
        tr = T - 1 - t
        m = m_ref[tr]                                            # (tb, 1)
        gx = jnp.dot(x_ref[tr], wih_fb_ref[...],
                     preferred_element_type=jnp.float32) + b_fb_ref[...]
        gx_f[tr] = gx[:, :G]                                     # fwd-dir projection
        gates = gx[:, G:] + jnp.dot(h, whh_b_ref[...],
                                    preferred_element_type=jnp.float32)
        h_new, c_new = cell(gates, c)
        h_new = m * h_new                                        # packed-seq masking
        c_new = m * c_new
        h_bwd[tr] = h_new
        return h_new, c_new

    lax.fori_loop(0, T, bwd_body, (zero, zero), unroll=unroll)

    # --- Pass 2: forward direction fused with BOTH classification heads.
    def fwd_body(t, carry):
        h, c = carry
        m = m_ref[t]
        gates = gx_f[t] + jnp.dot(h, whh_f_ref[...],
                                  preferred_element_type=jnp.float32)
        h_new, c_new = cell(gates, c)
        h_f = m * h_new                                          # zero past length
        c_new = m * c_new
        # TODO(synk): dropout_0 / dropout_1 are identity at inference; training
        # dropout would need pltpu.prng_seed / pltpu.prng_random_bits here.
        head = (jnp.dot(h_f, whead_f_ref[...], preferred_element_type=jnp.float32)
                + jnp.dot(h_bwd[t], whead_b_ref[...],
                          preferred_element_type=jnp.float32)
                + bhead_ref[...])                                # (tb, 2*Lpad)
        logits_ref[t] = head[:, :Lpad].astype(logits_ref.dtype)
        se_ref[t] = head[:, Lpad:].astype(se_ref.dtype)
        return h_f, c_new

    lax.fori_loop(0, T, fwd_body, (zero, zero), unroll=unroll)


def _pad_lanes(a, target):
    pad = target - a.shape[-1]
    if pad <= 0:
        return a
    return jnp.pad(a, [(0, 0)] * (a.ndim - 1) + [(0, pad)])


def bilstm_two_head_forward(x, attention_mask, params, *, batch_tile=None):
    """Fused BiLSTM + dual classifier heads.

    x:              (B, T, 300) float32 (the module feeds its `input_ids` straight
                    into nn.LSTM(input_size=300), i.e. pre-embedded vectors).
    attention_mask: (B, T) {0,1}.
    params:         PyTorch-layout weights (see __main__ for keys/shapes).
    Returns (logits (B, T, num_labels), se_logits (B, T, num_se_labels)).
    """
    B, T, Fin = x.shape
    H = params["w_hh_f"].shape[1]
    L = params["w_cls"].shape[0]
    Lse = params["w_se"].shape[0]
    Lpad = pl.cdiv(max(L, Lse, 1), LANE) * LANE

    tb = batch_tile if batch_tile is not None else B
    assert B % tb == 0, "batch_tile must divide the batch"
    assert tb == B or tb % 8 == 0, "sub-batch tiles must be sublane (8) aligned"
    nb = B // tb

    f32 = jnp.float32
    # Time-major layout so the in-kernel recurrence indexes the leading dim.
    x_tbf = jnp.transpose(x, (1, 0, 2)).astype(f32)                      # (T, B, Fin)
    lengths = jnp.sum(attention_mask, axis=1)
    mask = (jnp.arange(T)[:, None] < lengths[None, :]).astype(f32)[:, :, None]  # (T,B,1)

    # LSTM weights: PyTorch (4H, in) -> (in, 4H); both directions' input
    # projections fused into one (Fin, 8H) matrix; biases folded together.
    wih_fb = jnp.concatenate(
        [params["w_ih_f"].T, params["w_ih_b"].T], axis=1).astype(f32)    # (Fin, 8H)
    b_fb = jnp.concatenate(
        [params["b_ih_f"] + params["b_hh_f"],
         params["b_ih_b"] + params["b_hh_b"]]).reshape(1, 8 * H).astype(f32)
    whh_f = params["w_hh_f"].T.astype(f32)                               # (H, 4H)
    whh_b = params["w_hh_b"].T.astype(f32)

    # Heads: (L, 2H) -> (2H, Lpad) zero-padded lanes, split into fwd/bwd halves,
    # then the two heads fused side-by-side -> (H, 2*Lpad).
    wc = _pad_lanes(params["w_cls"].T.astype(f32), Lpad)
    wse = _pad_lanes(params["w_se"].T.astype(f32), Lpad)
    bc = _pad_lanes(params["b_cls"].reshape(1, L).astype(f32), Lpad)
    bse = _pad_lanes(params["b_se"].reshape(1, Lse).astype(f32), Lpad)
    whead_f = jnp.concatenate([wc[:H], wse[:H]], axis=1)                 # (H, 2*Lpad)
    whead_b = jnp.concatenate([wc[H:], wse[H:]], axis=1)
    bhead = jnp.concatenate([bc, bse], axis=1)                           # (1, 2*Lpad)

    def resident(shape):
        return pl.BlockSpec(shape, lambda b: (0,) * len(shape))

    logits_pad, se_pad = pl.pallas_call(
        _bilstm_heads_kernel,
        out_shape=(
            jax.ShapeDtypeStruct((T, B, Lpad), f32),
            jax.ShapeDtypeStruct((T, B, Lpad), f32),
        ),
        grid=(nb,),
        in_specs=[
            pl.BlockSpec((T, tb, Fin), lambda b: (0, b, 0)),
            pl.BlockSpec((T, tb, 1), lambda b: (0, b, 0)),
            resident((Fin, 8 * H)),
            resident((1, 8 * H)),
            resident((H, 4 * H)),
            resident((H, 4 * H)),
            resident((H, 2 * Lpad)),
            resident((H, 2 * Lpad)),
            resident((1, 2 * Lpad)),
        ],
        out_specs=(
            pl.BlockSpec((T, tb, Lpad), lambda b: (0, b, 0)),
            pl.BlockSpec((T, tb, Lpad), lambda b: (0, b, 0)),
        ),
        scratch_shapes=[
            pltpu.VMEM((T, tb, 4 * H), f32),   # forward-dir input projections
            pltpu.VMEM((T, tb, H), f32),       # reverse-dir hidden sequence
        ],
        compiler_params=pltpu.CompilerParams(dimension_semantics=("parallel",)),
    )(x_tbf, mask, wih_fb, b_fb, whh_f, whh_b, whead_f, whead_b, bhead)

    logits = jnp.transpose(logits_pad, (1, 0, 2))[:, :, :L]
    se_logits = jnp.transpose(se_pad, (1, 0, 2))[:, :, :Lse]
    return logits, se_logits


def reference_forward(x, attention_mask, params):
    """Pure-JAX reference matching the packed-sequence BiLSTM + two linear heads."""
    B, T, _ = x.shape
    H = params["w_hh_f"].shape[1]
    lengths = jnp.sum(attention_mask, axis=1)
    mask = (jnp.arange(T)[None, :] < lengths[:, None]).astype(x.dtype)   # (B, T)

    def cell(x_t, h, c, w_ih, w_hh, b_ih, b_hh):
        gates = x_t @ w_ih.T + h @ w_hh.T + b_ih + b_hh
        i, f, g, o = jnp.split(gates, 4, axis=-1)
        i, f, o = jax.nn.sigmoid(i), jax.nn.sigmoid(f), jax.nn.sigmoid(o)
        g = jnp.tanh(g)
        c = f * c + i * g
        h = o * jnp.tanh(c)
        return h, c

    h = jnp.zeros((B, H), x.dtype)
    c = jnp.zeros((B, H), x.dtype)
    fwd = []
    for t in range(T):
        hn, cn = cell(x[:, t], h, c, params["w_ih_f"], params["w_hh_f"],
                      params["b_ih_f"], params["b_hh_f"])
        m = mask[:, t:t + 1]
        h, c = m * hn, m * cn
        fwd.append(h)

    h = jnp.zeros((B, H), x.dtype)
    c = jnp.zeros((B, H), x.dtype)
    bwd = [None] * T
    for t in range(T - 1, -1, -1):
        hn, cn = cell(x[:, t], h, c, params["w_ih_b"], params["w_hh_b"],
                      params["b_ih_b"], params["b_hh_b"])
        m = mask[:, t:t + 1]
        h, c = m * hn, m * cn
        bwd[t] = h

    out = jnp.concatenate([jnp.stack(fwd, axis=1), jnp.stack(bwd, axis=1)], axis=-1)
    logits = out @ params["w_cls"].T + params["b_cls"]
    se_logits = out @ params["w_se"].T + params["b_se"]
    return logits, se_logits


if __name__ == "__main__":
    # config: rnn_hidden_dimension=32, LSTM input_size=300 (per module),
    # num_labels=3, num_se_labels=5; small batch/seq for the demo.
    B, T, Fin = 2, 8, 300
    H = 32
    num_labels, num_se_labels = 3, 5

    key = jax.random.PRNGKey(0)
    ks = jax.random.split(key, 14)
    s = 0.1
    params = {
        "w_ih_f": jax.random.normal(ks[0], (4 * H, Fin), jnp.float32) * s,
        "w_hh_f": jax.random.normal(ks[1], (4 * H, H), jnp.float32) * s,
        "b_ih_f": jax.random.normal(ks[2], (4 * H,), jnp.float32) * s,
        "b_hh_f": jax.random.normal(ks[3], (4 * H,), jnp.float32) * s,
        "w_ih_b": jax.random.normal(ks[4], (4 * H, Fin), jnp.float32) * s,
        "w_hh_b": jax.random.normal(ks[5], (4 * H, H), jnp.float32) * s,
        "b_ih_b": jax.random.normal(ks[6], (4 * H,), jnp.float32) * s,
        "b_hh_b": jax.random.normal(ks[7], (4 * H,), jnp.float32) * s,
        "w_cls": jax.random.normal(ks[8], (num_labels, 2 * H), jnp.float32) * s,
        "b_cls": jax.random.normal(ks[9], (num_labels,), jnp.float32) * s,
        "w_se": jax.random.normal(ks[10], (num_se_labels, 2 * H), jnp.float32) * s,
        "b_se": jax.random.normal(ks[11], (num_se_labels,), jnp.float32) * s,
    }
    x = jax.random.normal(ks[12], (B, T, Fin), jnp.float32)
    # Variable-length sequences exercise the pack_padded_sequence masking.
    attention_mask = jnp.array(
        [[1, 1, 1, 1, 1, 1, 1, 1],
         [1, 1, 1, 1, 1, 0, 0, 0]], dtype=jnp.int32)

    logits, se_logits = bilstm_two_head_forward(x, attention_mask, params)
    logits = jax.block_until_ready(logits)
    se_logits = jax.block_until_ready(se_logits)

    ref_logits, ref_se = reference_forward(x, attention_mask, params)

    assert logits.shape == (B, T, num_labels)
    assert se_logits.shape == (B, T, num_se_labels)
    assert jnp.allclose(logits, ref_logits, atol=1e-4, rtol=1e-4), "logits mismatch"
    assert jnp.allclose(se_logits, ref_se, atol=1e-4, rtol=1e-4), "se_logits mismatch"

    # TODO(synk): CRF token_mean NLL + Viterbi decode and the labels>=0 gather /
    # pad_sequence re-padding require data-dependent shapes; left outside the kernel.

    print("KERNEL_OK")
</pallas_src>

<mosaic_0001>
module attributes {stable_mosaic.version = 11 : i64} {
  func.func @_bilstm_heads_kernel(%arg0: i32, %arg1: memref<8x2x300xf32, #tpu.memory_space<vmem>>, %arg2: memref<8x2x1xf32, #tpu.memory_space<vmem>>, %arg3: memref<300x256xf32, #tpu.memory_space<vmem>>, %arg4: memref<1x256xf32, #tpu.memory_space<vmem>>, %arg5: memref<32x128xf32, #tpu.memory_space<vmem>>, %arg6: memref<32x128xf32, #tpu.memory_space<vmem>>, %arg7: memref<32x256xf32, #tpu.memory_space<vmem>>, %arg8: memref<32x256xf32, #tpu.memory_space<vmem>>, %arg9: memref<1x256xf32, #tpu.memory_space<vmem>>, %arg10: memref<8x2x128xf32, #tpu.memory_space<vmem>>, %arg11: memref<8x2x128xf32, #tpu.memory_space<vmem>>, %arg12: memref<8x2x128xf32, #tpu.memory_space<vmem>>, %arg13: memref<8x2x32xf32, #tpu.memory_space<vmem>>) attributes {dimension_semantics = [#tpu.dimension_semantics<parallel>], iteration_bounds = array<i64: 1>, scalar_prefetch = 0 : i64, scratch_operands = 2 : i64, tpu.core_type = #tpu.core_type<tc>, window_params = [{transform_indices = @transform_0, window_bounds = array<i64: 8, 2, 300>}, {transform_indices = @transform_1, window_bounds = array<i64: 8, 2, 1>}, {pipeline_mode = #tpu.pipeline_mode<synchronous>, transform_indices = @transform_2, window_bounds = array<i64: 300, 256>}, {pipeline_mode = #tpu.pipeline_mode<synchronous>, transform_indices = @transform_3, window_bounds = array<i64: 1, 256>}, {pipeline_mode = #tpu.pipeline_mode<synchronous>, transform_indices = @transform_4, window_bounds = array<i64: 32, 128>}, {pipeline_mode = #tpu.pipeline_mode<synchronous>, transform_indices = @transform_5, window_bounds = array<i64: 32, 128>}, {pipeline_mode = #tpu.pipeline_mode<synchronous>, transform_indices = @transform_6, window_bounds = array<i64: 32, 256>}, {pipeline_mode = #tpu.pipeline_mode<synchronous>, transform_indices = @transform_7, window_bounds = array<i64: 32, 256>}, {pipeline_mode = #tpu.pipeline_mode<synchronous>, transform_indices = @transform_8, window_bounds = array<i64: 1, 256>}, {transform_indices = @transform_9, window_bounds = array<i64: 8, 2, 128>}, {transform_indices = @transform_10, window_bounds = array<i64: 8, 2, 128>}]} {
    %cst = arith.constant 0.000000e+00 : f32
    %0 = vector.broadcast %cst : f32 to vector<2x32xf32>
    %c0_i32 = arith.constant 0 : i32
    %c7_i32 = arith.constant 7 : i32
    %1 = arith.subi %c7_i32, %c0_i32 : i32
    %2 = arith.index_cast %1 : i32 to index
    %c0 = arith.constant 0 : index
    %c0_0 = arith.constant 0 : index
    %3 = vector.load %arg2[%2, %c0, %c0_0] : memref<8x2x1xf32, #tpu.memory_space<vmem>>, vector<1x2x1xf32>
    %4 = vector.shape_cast %3 : vector<1x2x1xf32> to vector<2x1xf32>
    %5 = arith.index_cast %1 : i32 to index
    %c0_1 = arith.constant 0 : index
    %c0_2 = arith.constant 0 : index
    %6 = vector.load %arg1[%5, %c0_1, %c0_2] : memref<8x2x300xf32, #tpu.memory_space<vmem>>, vector<1x2x300xf32>
    %7 = vector.shape_cast %6 : vector<1x2x300xf32> to vector<2x300xf32>
    %c0_3 = arith.constant 0 : index
    %c0_4 = arith.constant 0 : index
    %8 = vector.load %arg3[%c0_3, %c0_4] : memref<300x256xf32, #tpu.memory_space<vmem>>, vector<300x256xf32>
    %cst_5 = arith.constant dense<0.000000e+00> : vector<2x256xf32>
    %9 = tpu.matmul %7, %8, %cst_5 {dimension_numbers = #tpu.dot_dimension_numbers<[1], [0], [0], [1], [0, 0, 1, 1], [], []>} : vector<2x300xf32>, vector<300x256xf32>, vector<2x256xf32> -> vector<2x256xf32>
    %c0_6 = arith.constant 0 : index
    %c0_7 = arith.constant 0 : index
    %10 = vector.load %arg4[%c0_6, %c0_7] : memref<1x256xf32, #tpu.memory_space<vmem>>, vector<1x256xf32>
    %11 = vector.broadcast %10 : vector<1x256xf32> to vector<2x256xf32>
    %12 = arith.addf %9, %11 : vector<2x256xf32>
    %13 = vector.extract_strided_slice %12 {offsets = [0, 0], sizes = [2, 128], strides = [1, 1]} : vector<2x256xf32> to vector<2x128xf32>
    %14 = arith.index_cast %1 : i32 to index
    %c0_8 = arith.constant 0 : index
    %c0_9 = arith.constant 0 : index
    %15 = vector.load %arg12[%14, %c0_8, %c0_9] : memref<8x2x128xf32, #tpu.memory_space<vmem>>, vector<1x2x128xf32>
    %16 = vector.shape_cast %15 : vector<1x2x128xf32> to vector<2x128xf32>
    %17 = vector.shape_cast %13 : vector<2x128xf32> to vector<1x2x128xf32>
    tpu.vector_store %arg12[%14, %c0_8, %c0_9], %17 {strides = array<i32>} : memref<8x2x128xf32, #tpu.memory_space<vmem>>, vector<1x2x128xf32>,
    %18 = vector.extract_strided_slice %12 {offsets = [0, 128], sizes = [2, 128], strides = [1, 1]} : vector<2x256xf32> to vector<2x128xf32>
    %c0_10 = arith.constant 0 : index
    %c0_11 = arith.constant 0 : index
    %19 = vector.load %arg6[%c0_10, %c0_11] : memref<32x128xf32, #tpu.memory_space<vmem>>, vector<32x128xf32>
    %cst_12 = arith.constant dense<0.000000e+00> : vector<2x128xf32>
    %20 = tpu.matmul %0, %19, %cst_12 {dimension_numbers = #tpu.dot_dimension_numbers<[1], [0], [0], [1], [0, 0, 1, 1], [], []>} : vector<2x32xf32>, vector<32x128xf32>, vector<2x128xf32> -> vector<2x128xf32>
    %21 = arith.addf %18, %20 : vector<2x128xf32>
    %22 = vector.extract_strided_slice %21 {offsets = [0, 0], sizes = [2, 32], strides = [1, 1]} : vector<2x128xf32> to vector<2x32xf32>
    %cst_13 = arith.constant 0.000000e+00 : f32
    %23 = vector.broadcast %cst_13 : f32 to vector<2x32xf32>
    %24 = arith.subf %23, %22 : vector<2x32xf32>
    %25 = math.exp %24 : vector<2x32xf32>
    %cst_14 = arith.constant 1.000000e+00 : f32
    %26 = vector.broadcast %cst_14 : f32 to vector<2x32xf32>
    %27 = arith.addf %26, %25 : vector<2x32xf32>
    %cst_15 = arith.constant 1.000000e+00 : f32
    %28 = vector.broadcast %cst_15 : f32 to vector<2x32xf32>
    %29 = arith.divf %28, %27 : vector<2x32xf32>
    %30 = vector.extract_strided_slice %21 {offsets = [0, 32], sizes = [2, 32], strides = [1, 1]} : vector<2x128xf32> to vector<2x32xf32>
    %cst_16 = arith.constant 0.000000e+00 : f32
    %31 = vector.broadcast %cst_16 : f32 to vector<2x32xf32>
    %32 = arith.subf %31, %30 : vector<2x32xf32>
    %33 = math.exp %32 : vector<2x32xf32>
    %cst_17 = arith.constant 1.000000e+00 : f32
    %34 = vector.broadcast %cst_17 : f32 to vector<2x32xf32>
    %35 = arith.addf %34, %33 : vector<2x32xf32>
    %cst_18 = arith.constant 1.000000e+00 : f32
    %36 = vector.broadcast %cst_18 : f32 to vector<2x32xf32>
    %37 = arith.divf %36, %35 : vector<2x32xf32>
    %38 = vector.extract_strided_slice %21 {offsets = [0, 64], sizes = [2, 32], strides = [1, 1]} : vector<2x128xf32> to vector<2x32xf32>
    %39 = math.tanh %38 : vector<2x32xf32>
    %40 = vector.extract_strided_slice %21 {offsets = [0, 96], sizes = [2, 32], strides = [1, 1]} : vector<2x128xf32> to vector<2x32xf32>
    %cst_19 = arith.constant 0.000000e+00 : f32
    %41 = vector.broadcast %cst_19 : f32 to vector<2x32xf32>
    %42 = arith.subf %41, %40 : vector<2x32xf32>
    %43 = math.exp %42 : vector<2x32xf32>
    %cst_20 = arith.constant 1.000000e+00 : f32
    %44 = vector.broadcast %cst_20 : f32 to vector<2x32xf32>
    %45 = arith.addf %44, %43 : vector<2x32xf32>
    %cst_21 = arith.constant 1.000000e+00 : f32
    %46 = vector.broadcast %cst_21 : f32 to vector<2x32xf32>
    %47 = arith.divf %46, %45 : vector<2x32xf32>
    %48 = arith.mulf %37, %0 : vector<2x32xf32>
    %49 = arith.mulf %29, %39 : vector<2x32xf32>
    %50 = arith.addf %48, %49 : vector<2x32xf32>
    %51 = math.tanh %50 : vector<2x32xf32>
    %52 = arith.mulf %47, %51 : vector<2x32xf32>
    %53 = vector.broadcast %4 : vector<2x1xf32> to vector<2x32xf32>
    %54 = arith.mulf %53, %52 : vector<2x32xf32>
    %55 = vector.broadcast %4 : vector<2x1xf32> to vector<2x32xf32>
    %56 = arith.mulf %55, %50 : vector<2x32xf32>
    %57 = arith.index_cast %1 : i32 to index
    %c0_22 = arith.constant 0 : index
    %c0_23 = arith.constant 0 : index
    %58 = vector.load %arg13[%57, %c0_22, %c0_23] : memref<8x2x32xf32, #tpu.memory_space<vmem>>, vector<1x2x32xf32>
    %59 = vector.shape_cast %58 : vector<1x2x32xf32> to vector<2x32xf32>
    %60 = vector.shape_cast %54 : vector<2x32xf32> to vector<1x2x32xf32>
    tpu.vector_store %arg13[%57, %c0_22, %c0_23], %60 {strides = array<i32>} : memref<8x2x32xf32, #tpu.memory_space<vmem>>, vector<1x2x32xf32>,
    %c1_i32 = arith.constant 1 : i32
    %c7_i32_24 = arith.constant 7 : i32
    %61 = arith.subi %c7_i32_24, %c1_i32 : i32
    %62 = arith.index_cast %61 : i32 to index
    %c0_25 = arith.constant 0 : index
    %c0_26 = arith.constant 0 : index
    %63 = vector.load %arg2[%62, %c0_25, %c0_26] : memref<8x2x1xf32, #tpu.memory_space<vmem>>, vector<1x2x1xf32>
    %64 = vector.shape_cast %63 : vector<1x2x1xf32> to vector<2x1xf32>
    %65 = arith.index_cast %61 : i32 to index
    %c0_27 = arith.constant 0 : index
    %c0_28 = arith.constant 0 : index
    %66 = vector.load %arg1[%65, %c0_27, %c0_28] : memref<8x2x300xf32, #tpu.memory_space<vmem>>, vector<1x2x300xf32>
    %67 = vector.shape_cast %66 : vector<1x2x300xf32> to vector<2x300xf32>
    %c0_29 = arith.constant 0 : index
    %c0_30 = arith.constant 0 : index
    %68 = vector.load %arg3[%c0_29, %c0_30] : memref<300x256xf32, #tpu.memory_space<vmem>>, vector<300x256xf32>
    %cst_31 = arith.constant dense<0.000000e+00> : vector<2x256xf32>
    %69 = tpu.matmul %67, %68, %cst_31 {dimension_numbers = #tpu.dot_dimension_numbers<[1], [0], [0], [1], [0, 0, 1, 1], [], []>} : vector<2x300xf32>, vector<300x256xf32>, vector<2x256xf32> -> vector<2x256xf32>
    %c0_32 = arith.constant 0 : index
    %c0_33 = arith.constant 0 : index
    %70 = vector.load %arg4[%c0_32, %c0_33] : memref<1x256xf32, #tpu.memory_space<vmem>>, vector<1x256xf32>
    %71 = vector.broadcast %70 : vector<1x256xf32> to vector<2x256xf32>
    %72 = arith.addf %69, %71 : vector<2x256xf32>
    %73 = vector.extract_strided_slice %72 {offsets = [0, 0], sizes = [2, 128], strides = [1, 1]} : vector<2x256xf32> to vector<2x128xf32>
    %74 = arith.index_cast %61 : i32 to index
    %c0_34 = arith.constant 0 : index
    %c0_35 = arith.constant 0 : index
    %75 = vector.load %arg12[%74, %c0_34, %c0_35] : memref<8x2x128xf32, #tpu.memory_space<vmem>>, vector<1x2x128xf32>
    %76 = vector.shape_cast %75 : vector<1x2x128xf32> to vector<2x128xf32>
    %77 = vector.shape_cast %73 : vector<2x128xf32> to vector<1x2x128xf32>
    tpu.vector_store %arg12[%74, %c0_34, %c0_35], %77 {strides = array<i32>} : memref<8x2x128xf32, #tpu.memory_space<vmem>>, vector<1x2x128xf32>,
    %78 = vector.extract_strided_slice %72 {offsets = [0, 128], sizes = [2, 128], strides = [1, 1]} : vector<2x256xf32> to vector<2x128xf32>
    %c0_36 = arith.constant 0 : index
    %c0_37 = arith.constant 0 : index
    %79 = vector.load %arg6[%c0_36, %c0_37] : memref<32x128xf32, #tpu.memory_space<vmem>>, vector<32x128xf32>
    %cst_38 = arith.constant dense<0.000000e+00> : vector<2x128xf32>
    %80 = tpu.matmul %54, %79, %cst_38 {dimension_numbers = #tpu.dot_dimension_numbers<[1], [0], [0], [1], [0, 0, 1, 1], [], []>} : vector<2x32xf32>, vector<32x128xf32>, vector<2x128xf32> -> vector<2x128xf32>
    %81 = arith.addf %78, %80 : vector<2x128xf32>
    %82 = vector.extract_strided_slice %81 {offsets = [0, 0], sizes = [2, 32], strides = [1, 1]} : vector<2x128xf32> to vector<2x32xf32>
    %cst_39 = arith.constant 0.000000e+00 : f32
    %83 = vector.broadcast %cst_39 : f32 to vector<2x32xf32>
    %84 = arith.subf %83, %82 : vector<2x32xf32>
    %85 = math.exp %84 : vector<2x32xf32>
    %cst_40 = arith.constant 1.000000e+00 : f32
    %86 = vector.broadcast %cst_40 : f32 to vector<2x32xf32>
    %87 = arith.addf %86, %85 : vector<2x32xf32>
    %cst_41 = arith.constant 1.000000e+00 : f32
    %88 = vector.broadcast %cst_41 : f32 to vector<2x32xf32>
    %89 = arith.divf %88, %87 : vector<2x32xf32>
    %90 = vector.extract_strided_slice %81 {offsets = [0, 32], sizes = [2, 32], strides = [1, 1]} : vector<2x128xf32> to vector<2x32xf32>
    %cst_42 = arith.constant 0.000000e+00 : f32
    %91 = vector.broadcast %cst_42 : f32 to vector<2x32xf32>
    %92 = arith.subf %91, %90 : vector<2x32xf32>
    %93 = math.exp %92 : vector<2x32xf32>
    %cst_43 = arith.constant 1.000000e+00 : f32
    %94 = vector.broadcast %cst_43 : f32 to vector<2x32xf32>
    %95 = arith.addf %94, %93 : vector<2x32xf32>
    %cst_44 = arith.constant 1.000000e+00 : f32
    %96 = vector.broadcast %cst_44 : f32 to vector<2x32xf32>
    %97 = arith.divf %96, %95 : vector<2x32xf32>
    %98 = vector.extract_strided_slice %81 {offsets = [0, 64], sizes = [2, 32], strides = [1, 1]} : vector<2x128xf32> to vector<2x32xf32>
    %99 = math.tanh %98 : vector<2x32xf32>
    %100 = vector.extract_strided_slice %81 {offsets = [0, 96], sizes = [2, 32], strides = [1, 1]} : vector<2x128xf32> to vector<2x32xf32>
    %cst_45 = arith.constant 0.000000e+00 : f32
    %101 = vector.broadcast %cst_45 : f32 to vector<2x32xf32>
    %102 = arith.subf %101, %100 : vector<2x32xf32>
    %103 = math.exp %102 : vector<2x32xf32>
    %cst_46 = arith.constant 1.000000e+00 : f32
    %104 = vector.broadcast %cst_46 : f32 to vector<2x32xf32>
    %105 = arith.addf %104, %103 : vector<2x32xf32>
    %cst_47 = arith.constant 1.000000e+00 : f32
    %106 = vector.broadcast %cst_47 : f32 to vector<2x32xf32>
    %107 = arith.divf %106, %105 : vector<2x32xf32>
    %108 = arith.mulf %97, %56 : vector<2x32xf32>
    %109 = arith.mulf %89, %99 : vector<2x32xf32>
    %110 = arith.addf %108, %109 : vector<2x32xf32>
    %111 = math.tanh %110 : vector<2x32xf32>
    %112 = arith.mulf %107, %111 : vector<2x32xf32>
    %113 = vector.broadcast %64 : vector<2x1xf32> to vector<2x32xf32>
    %114 = arith.mulf %113, %112 : vector<2x32xf32>
    %115 = vector.broadcast %64 : vector<2x1xf32> to vector<2x32xf32>
    %116 = arith.mulf %115, %110 : vector<2x32xf32>
    %117 = arith.index_cast %61 : i32 to index
    %c0_48 = arith.constant 0 : index
    %c0_49 = arith.constant 0 : index
    %118 = vector.load %arg13[%117, %c0_48, %c0_49] : memref<8x2x32xf32, #tpu.memory_space<vmem>>, vector<1x2x32xf32>
    %119 = vector.shape_cast %118 : vector<1x2x32xf32> to vector<2x32xf32>
    %120 = vector.shape_cast %114 : vector<2x32xf32> to vector<1x2x32xf32>
    tpu.vector_store %arg13[%117, %c0_48, %c0_49], %120 {strides = array<i32>} : memref<8x2x32xf32, #tpu.memory_space<vmem>>, vector<1x2x32xf32>,
    %c2_i32 = arith.constant 2 : i32
    %c7_i32_50 = arith.constant 7 : i32
    %121 = arith.subi %c7_i32_50, %c2_i32 : i32
    %122 = arith.index_cast %121 : i32 to index
    %c0_51 = arith.constant 0 : index
    %c0_52 = arith.constant 0 : index
    %123 = vector.load %arg2[%122, %c0_51, %c0_52] : memref<8x2x1xf32, #tpu.memory_space<vmem>>, vector<1x2x1xf32>
    %124 = vector.shape_cast %123 : vector<1x2x1xf32> to vector<2x1xf32>
    %125 = arith.index_cast %121 : i32 to index
    %c0_53 = arith.constant 0 : index
    %c0_54 = arith.constant 0 : index
    %126 = vector.load %arg1[%125, %c0_53, %c0_54] : memref<8x2x300xf32, #tpu.memory_space<vmem>>, vector<1x2x300xf32>
    %127 = vector.shape_cast %126 : vector<1x2x300xf32> to vector<2x300xf32>
    %c0_55 = arith.constant 0 : index
    %c0_56 = arith.constant 0 : index
    %128 = vector.load %arg3[%c0_55, %c0_56] : memref<300x256xf32, #tpu.memory_space<vmem>>, vector<300x256xf32>
    %cst_57 = arith.constant dense<0.000000e+00> : vector<2x256xf32>
    %129 = tpu.matmul %127, %128, %cst_57 {dimension_numbers = #tpu.dot_dimension_numbers<[1], [0], [0], [1], [0, 0, 1, 1], [], []>} : vector<2x300xf32>, vector<300x256xf32>, vector<2x256xf32> -> vector<2x256xf32>
    %c0_58 = arith.constant 0 : index
    %c0_59 = arith.constant 0 : index
    %130 = vector.load %arg4[%c0_58, %c0_59] : memref<1x256xf32, #tpu.memory_space<vmem>>, vector<1x256xf32>
    %131 = vector.broadcast %130 : vector<1x256xf32> to vector<2x256xf32>
    %132 = arith.addf %129, %131 : vector<2x256xf32>
    %133 = vector.extract_strided_slice %132 {offsets = [0, 0], sizes = [2, 128], strides = [1, 1]} : vector<2x256xf32> to vector<2x128xf32>
    %134 = arith.index_cast %121 : i32 to index
    %c0_60 = arith.constant 0 : index
    %c0_61 = arith.constant 0 : index
    %135 = vector.load %arg12[%134, %c0_60, %c0_61] : memref<8x2x128xf32, #tpu.memory_space<vmem>>, vector<1x2x128xf32>
    %136 = vector.shape_cast %135 : vector<1x2x128xf32> to vector<2x128xf32>
    %137 = vector.shape_cast %133 : vector<2x128xf32> to vector<1x2x128xf32>
    tpu.vector_store %arg12[%134, %c0_60, %c0_61], %137 {strides = array<i32>} : memref<8x2x128xf32, #tpu.memory_space<vmem>>, vector<1x2x128xf32>,
    %138 = vector.extract_strided_slice %132 {offsets = [0, 128], sizes = [2, 128], strides = [1, 1]} : vector<2x256xf32> to vector<2x128xf32>
    %c0_62 = arith.constant 0 : index
    %c0_63 = arith.constant 0 : index
    %139 = vector.load %arg6[%c0_62, %c0_63] : memref<32x128xf32, #tpu.memory_space<vmem>>, vector<32x128xf32>
    %cst_64 = arith.constant dense<0.000000e+00> : vector<2x128xf32>
    %140 = tpu.matmul %114, %139, %cst_64 {dimension_numbers = #tpu.dot_dimension_numbers<[1], [0], [0], [1], [0, 0, 1, 1], [], []>} : vector<2x32xf32>, vector<32x128xf32>, vector<2x128xf32> -> vector<2x128xf32>
    %141 = arith.addf %138, %140 : vector<2x128xf32>
    %142 = vector.extract_strided_slice %141 {offsets = [0, 0], sizes = [2, 32], strides = [1, 1]} : vector<2x128xf32> to vector<2x32xf32>
    %cst_65 = arith.constant 0.000000e+00 : f32
    %143 = vector.broadcast %cst_65 : f32 to vector<2x32xf32>
    %144 = arith.subf %143, %142 : vector<2x32xf32>
    %145 = math.exp %144 : vector<2x32xf32>
    %cst_66 = arith.constant 1.000000e+00 : f32
    %146 = vector.broadcast %cst_66 : f32 to vector<2x32xf32>
    %147 = arith.addf %146, %145 : vector<2x32xf32>
    %cst_67 = arith.constant 1.000000e+00 : f32
    %148 = vector.broadcast %cst_67 : f32 to vector<2x32xf32>
    %149 = arith.divf %148, %147 : vector<2x32xf32>
    %150 = vector.extract_strided_slice %141 {offsets = [0, 32], sizes = [2, 32], strides = [1, 1]} : vector<2x128xf32> to vector<2x32xf32>
    %cst_68 = arith.constant 0.000000e+00 : f32
    %151 = vector.broadcast %cst_68 : f32 to vector<2x32xf32>
    %152 = arith.subf %151, %150 : vector<2x32xf32>
    %153 = math.exp %152 : vector<2x32xf32>
    %cst_69 = arith.constant 1.000000e+00 : f32
    %154 = vector.broadcast %cst_69 : f32 to vector<2x32xf32>
    %155 = arith.addf %154, %153 : vector<2x32xf32>
    %cst_70 = arith.constant 1.000000e+00 : f32
    %156 = vector.broadcast %cst_70 : f32 to vector<2x32xf32>
    %157 = arith.divf %156, %155 : vector<2x32xf32>
    %158 = vector.extract_strided_slice %141 {offsets = [0, 64], sizes = [2, 32], strides = [1, 1]} : vector<2x128xf32> to vector<2x32xf32>
    %159 = math.tanh %158 : vector<2x32xf32>
    %160 = vector.extract_strided_slice %141 {offsets = [0, 96], sizes = [2, 32], strides = [1, 1]} : vector<2x128xf32> to vector<2x32xf32>
    %cst_71 = arith.constant 0.000000e+00 : f32
    %161 = vector.broadcast %cst_71 : f32 to vector<2x32xf32>
    %162 = arith.subf %161, %160 : vector<2x32xf32>
    %163 = math.exp %162 : vector<2x32xf32>
    %cst_72 = arith.constant 1.000000e+00 : f32
    %164 = vector.broadcast %cst_72 : f32 to vector<2x32xf32>
    %165 = arith.addf %164, %163 : vector<2x32xf32>
    %cst_73 = arith.constant 1.000000e+00 : f32
    %166 = vector.broadcast %cst_73 : f32 to vector<2x32xf32>
    %167 = arith.divf %166, %165 : vector<2x32xf32>
    %168 = arith.mulf %157, %116 : vector<2x32xf32>
    %169 = arith.mulf %149, %159 : vector<2x32xf32>
    %170 = arith.addf %168, %169 : vector<2x32xf32>
    %171 = math.tanh %170 : vector<2x32xf32>
    %172 = arith.mulf %167, %171 : vector<2x32xf32>
    %173 = vector.broadcast %124 : vector<2x1xf32> to vector<2x32xf32>
    %174 = arith.mulf %173, %172 : vector<2x32xf32>
    %175 = vector.broadcast %124 : vector<2x1xf32> to vector<2x32xf32>
    %176 = arith.mulf %175, %170 : vector<2x32xf32>
    %177 = arith.index_cast %121 : i32 to index
    %c0_74 = arith.constant 0 : index
    %c0_75 = arith.constant 0 : index
    %178 = vector.load %arg13[%177, %c0_74, %c0_75] : memref<8x2x32xf32, #tpu.memory_space<vmem>>, vector<1x2x32xf32>
    %179 = vector.shape_cast %178 : vector<1x2x32xf32> to vector<2x32xf32>
    %180 = vector.shape_cast %174 : vector<2x32xf32> to vector<1x2x32xf32>
    tpu.vector_store %arg13[%177, %c0_74, %c0_75], %180 {strides = array<i32>} : memref<8x2x32xf32, #tpu.memory_space<vmem>>, vector<1x2x32xf32>,
    %c3_i32 = arith.constant 3 : i32
    %c7_i32_76 = arith.constant 7 : i32
    %181 = arith.subi %c7_i32_76, %c3_i32 : i32
    %182 = arith.index_cast %181 : i32 to index
    %c0_77 = arith.constant 0 : index
    %c0_78 = arith.constant 0 : index
    %183 = vector.load %arg2[%182, %c0_77, %c0_78] : memref<8x2x1xf32, #tpu.memory_space<vmem>>, vector<1x2x1xf32>
    %184 = vector.shape_cast %183 : vector<1x2x1xf32> to vector<2x1xf32>
    %185 = arith.index_cast %181 : i32 to index
    %c0_79 = arith.constant 0 : index
    %c0_80 = arith.constant 0 : index
    %186 = vector.load %arg1[%185, %c0_79, %c0_80] : memref<8x2x300xf32, #tpu.memory_space<vmem>>, vector<1x2x300xf32>
    %187 = vector.shape_cast %186 : vector<1x2x300xf32> to vector<2x300xf32>
    %c0_81 = arith.constant 0 : index
    %c0_82 = arith.constant 0 : index
    %188 = vector.load %arg3[%c0_81, %c0_82] : memref<300x256xf32, #tpu.memory_space<vmem>>, vector<300x256xf32>
    %cst_83 = arith.constant dense<0.000000e+00> : vector<2x256xf32>
    %189 = tpu.matmul %187, %188, %cst_83 {dimension_numbers = #tpu.dot_dimension_numbers<[1], [0], [0], [1], [0, 0, 1, 1], [], []>} : vector<2x300xf32>, vector<300x256xf32>, vector<2x256xf32> -> vector<2x256xf32>
    %c0_84 = arith.constant 0 : index
    %c0_85 = arith.constant 0 : index
    %190 = vector.load %arg4[%c0_84, %c0_85] : memref<1x256xf32, #tpu.memory_space<vmem>>, vector<1x256xf32>
    %191 = vector.broadcast %190 : vector<1x256xf32> to vector<2x256xf32>
    %192 = arith.addf %189, %191 : vector<2x256xf32>
    %193 = vector.extract_strided_slice %192 {offsets = [0, 0], sizes = [2, 128], strides = [1, 1]} : vector<2x256xf32> to vector<2x128xf32>
    %194 = arith.index_cast %181 : i32 to index
    %c0_86 = arith.constant 0 : index
    %c0_87 = arith.constant 0 : index
    %195 = vector.load %arg12[%194, %c0_86, %c0_87] : memref<8x2x128xf32, #tpu.memory_space<vmem>>, vector<1x2x128xf32>
    %196 = vector.shape_cast %195 : vector<1x2x128xf32> to vector<2x128xf32>
    %197 = vector.shape_cast %193 : vector<2x128xf32> to vector<1x2x128xf32>
    tpu.vector_store %arg12[%194, %c0_86, %c0_87], %197 {strides = array<i32>} : memref<8x2x128xf32, #tpu.memory_space<vmem>>, vector<1x2x128xf32>,
    %198 = vector.extract_strided_slice %192 {offsets = [0, 128], sizes = [2, 128], strides = [1, 1]} : vector<2x256xf32> to vector<2x128xf32>
    %c0_88 = arith.constant 0 : index
    %c0_89 = arith.constant 0 : index
    %199 = vector.load %arg6[%c0_88, %c0_89] : memref<32x128xf32, #tpu.memory_space<vmem>>, vector<32x128xf32>
    %cst_90 = arith.constant dense<0.000000e+00> : vector<2x128xf32>
    %200 = tpu.matmul %174, %199, %cst_90 {dimension_numbers = #tpu.dot_dimension_numbers<[1], [0], [0], [1], [0, 0, 1, 1], [], []>} : vector<2x32xf32>, vector<32x128xf32>, vector<2x128xf32> -> vector<2x128xf32>
    %201 = arith.addf %198, %200 : vector<2x128xf32>
    %202 = vector.extract_strided_slice %201 {offsets = [0, 0], sizes = [2, 32], strides = [1, 1]} : vector<2x128xf32> to vector<2x32xf32>
    %cst_91 = arith.constant 0.000000e+00 : f32
    %203 = vector.broadcast %cst_91 : f32 to vector<2x32xf32>
    %204 = arith.subf %203, %202 : vector<2x32xf32>
    %205 = math.exp %204 : vector<2x32xf32>
    %cst_92 = arith.constant 1.000000e+00 : f32
    %206 = vector.broadcast %cst_92 : f32 to vector<2x32xf32>
    %207 = arith.addf %206, %205 : vector<2x32xf32>
    %cst_93 = arith.constant 1.000000e+00 : f32
    %208 = vector.broadcast %cst_93 : f32 to vector<2x32xf32>
    %209 = arith.divf %208, %207 : vector<2x32xf32>
    %210 = vector.extract_strided_slice %201 {offsets = [0, 32], sizes = [2, 32], strides = [1, 1]} : vector<2x128xf32> to vector<2x32xf32>
    %cst_94 = arith.constant 0.000000e+00 : f32
    %211 = vector.broadcast %cst_94 : f32 to vector<2x32xf32>
    %212 = arith.subf %211, %210 : vector<2x32xf32>
    %213 = math.exp %212 : vector<2x32xf32>
    %cst_95 = arith.constant 1.000000e+00 : f32
    %214 = vector.broadcast %cst_95 : f32 to vector<2x32xf32>
    %215 = arith.addf %214, %213 : vector<2x32xf32>
    %cst_96 = arith.constant 1.000000e+00 : f32
    %216 = vector.broadcast %cst_96 : f32 to vector<2x32xf32>
    %217 = arith.divf %216, %215 : vector<2x32xf32>
    %218 = vector.extract_strided_slice %201 {offsets = [0, 64], sizes = [2, 32], strides = [1, 1]} : vector<2x128xf32> to vector<2x32xf32>
    %219 = math.tanh %218 : vector<2x32xf32>
    %220 = vector.extract_strided_slice %201 {offsets = [0, 96], sizes = [2, 32], strides = [1, 1]} : vector<2x128xf32> to vector<2x32xf32>
    %cst_97 = arith.constant 0.000000e+00 : f32
    %221 = vector.broadcast %cst_97 : f32 to vector<2x32xf32>
    %222 = arith.subf %221, %220 : vector<2x32xf32>
    %223 = math.exp %222 : vector<2x32xf32>
    %cst_98 = arith.constant 1.000000e+00 : f32
    %224 = vector.broadcast %cst_98 : f32 to vector<2x32xf32>
    %225 = arith.addf %224, %223 : vector<2x32xf32>
    %cst_99 = arith.constant 1.000000e+00 : f32
    %226 = vector.broadcast %cst_99 : f32 to vector<2x32xf32>
    %227 = arith.divf %226, %225 : vector<2x32xf32>
    %228 = arith.mulf %217, %176 : vector<2x32xf32>
    %229 = arith.mulf %209, %219 : vector<2x32xf32>
    %230 = arith.addf %228, %229 : vector<2x32xf32>
    %231 = math.tanh %230 : vector<2x32xf32>
    %232 = arith.mulf %227, %231 : vector<2x32xf32>
    %233 = vector.broadcast %184 : vector<2x1xf32> to vector<2x32xf32>
    %234 = arith.mulf %233, %232 : vector<2x32xf32>
    %235 = vector.broadcast %184 : vector<2x1xf32> to vector<2x32xf32>
    %236 = arith.mulf %235, %230 : vector<2x32xf32>
    %237 = arith.index_cast %181 : i32 to index
    %c0_100 = arith.constant 0 : index
    %c0_101 = arith.constant 0 : index
    %238 = vector.load %arg13[%237, %c0_100, %c0_101] : memref<8x2x32xf32, #tpu.memory_space<vmem>>, vector<1x2x32xf32>
    %239 = vector.shape_cast %238 : vector<1x2x32xf32> to vector<2x32xf32>
    %240 = vector.shape_cast %234 : vector<2x32xf32> to vector<1x2x32xf32>
    tpu.vector_store %arg13[%237, %c0_100, %c0_101], %240 {strides = array<i32>} : memref<8x2x32xf32, #tpu.memory_space<vmem>>, vector<1x2x32xf32>,
    %c4_i32 = arith.constant 4 : i32
    %c7_i32_102 = arith.constant 7 : i32
    %241 = arith.subi %c7_i32_102, %c4_i32 : i32
    %242 = arith.index_cast %241 : i32 to index
    %c0_103 = arith.constant 0 : index
    %c0_104 = arith.constant 0 : index
    %243 = vector.load %arg2[%242, %c0_103, %c0_104] : memref<8x2x1xf32, #tpu.memory_space<vmem>>, vector<1x2x1xf32>
    %244 = vector.shape_cast %243 : vector<1x2x1xf32> to vector<2x1xf32>
    %245 = arith.index_cast %241 : i32 to index
    %c0_105 = arith.constant 0 : index
    %c0_106 = arith.constant 0 : index
    %246 = vector.load %arg1[%245, %c0_105, %c0_106] : memref<8x2x300xf32, #tpu.memory_space<vmem>>, vector<1x2x300xf32>
    %247 = vector.shape_cast %246 : vector<1x2x300xf32> to vector<2x300xf32>
    %c0_107 = arith.constant 0 : index
    %c0_108 = arith.constant 0 : index
    %248 = vector.load %arg3[%c0_107, %c0_108] : memref<300x256xf32, #tpu.memory_space<vmem>>, vector<300x256xf32>
    %cst_109 = arith.constant dense<0.000000e+00> : vector<2x256xf32>
    %249 = tpu.matmul %247, %248, %cst_109 {dimension_numbers = #tpu.dot_dimension_numbers<[1], [0], [0], [1], [0, 0, 1, 1], [], []>} : vector<2x300xf32>, vector<300x256xf32>, vector<2x256xf32> -> vector<2x256xf32>
    %c0_110 = arith.constant 0 : index
    %c0_111 = arith.constant 0 : index
    %250 = vector.load %arg4[%c0_110, %c0_111] : memref<1x256xf32, #tpu.memory_space<vmem>>, vector<1x256xf32>
    %251 = vector.broadcast %250 : vector<1x256xf32> to vector<2x256xf32>
    %252 = arith.addf %249, %251 : vector<2x256xf32>
    %253 = vector.extract_strided_slice %252 {offsets = [0, 0], sizes = [2, 128], strides = [1, 1]} : vector<2x256xf32> to vector<2x128xf32>
    %254 = arith.index_cast %241 : i32 to index
    %c0_112 = arith.constant 0 : index
    %c0_113 = arith.constant 0 : index
    %255 = vector.load %arg12[%254, %c0_112, %c0_113] : memref<8x2x128xf32, #tpu.memory_space<vmem>>, vector<1x2x128xf32>
    %256 = vector.shape_cast %255 : vector<1x2x128xf32> to vector<2x128xf32>
    %257 = vector.shape_cast %253 : vector<2x128xf32> to vector<1x2x128xf32>
    tpu.vector_store %arg12[%254, %c0_112, %c0_113], %257 {strides = array<i32>} : memref<8x2x128xf32, #tpu.memory_space<vmem>>, vector<1x2x128xf32>,
    %258 = vector.extract_strided_slice %252 {offsets = [0, 128], sizes = [2, 128], strides = [1, 1]} : vector<2x256xf32> to vector<2x128xf32>
    %c0_114 = arith.constant 0 : index
    %c0_115 = arith.constant 0 : index
    %259 = vector.load %arg6[%c0_114, %c0_115] : memref<32x128xf32, #tpu.memory_space<vmem>>, vector<32x128xf32>
    %cst_116 = arith.constant dense<0.000000e+00> : vector<2x128xf32>
    %260 = tpu.matmul %234, %259, %cst_116 {dimension_numbers = #tpu.dot_dimension_numbers<[1], [0], [0], [1], [0, 0, 1, 1], [], []>} : vector<2x32xf32>, vector<32x128xf32>, vector<2x128xf32> -> vector<2x128xf32>
    %261 = arith.addf %258, %260 : vector<2x128xf32>
    %262 = vector.extract_strided_slice %261 {offsets = [0, 0], sizes = [2, 32], strides = [1, 1]} : vector<2x128xf32> to vector<2x32xf32>
    %cst_117 = arith.constant 0.000000e+00 : f32
    %263 = vector.broadcast %cst_117 : f32 to vector<2x32xf32>
    %264 = arith.subf %263, %262 : vector<2x32xf32>
    %265 = math.exp %264 : vector<2x32xf32>
    %cst_118 = arith.constant 1.000000e+00 : f32
    %266 = vector.broadcast %cst_118 : f32 to vector<2x32xf32>
    %267 = arith.addf %266, %265 : vector<2x32xf32>
    %cst_119 = arith.constant 1.000000e+00 : f32
    %268 = vector.broadcast %cst_119 : f32 to vector<2x32xf32>
    %269 = arith.divf %268, %267 : vector<2x32xf32>
    %270 = vector.extract_strided_slice %261 {offsets = [0, 32], sizes = [2, 32], strides = [1, 1]} : vector<2x128xf32> to vector<2x32xf32>
    %cst_120 = arith.constant 0.000000e+00 : f32
    %271 = vector.broadcast %cst_120 : f32 to vector<2x32xf32>
    %272 = arith.subf %271, %270 : vector<2x32xf32>
    %273 = math.exp %272 : vector<2x32xf32>
    %cst_121 = arith.constant 1.000000e+00 : f32
    %274 = vector.broadcast %cst_121 : f32 to vector<2x32xf32>
    %275 = arith.addf %274, %273 : vector<2x32xf32>
    %cst_122 = arith.constant 1.000000e+00 : f32
    %276 = vector.broadcast %cst_122 : f32 to vector<2x32xf32>
    %277 = arith.divf %276, %275 : vector<2x32xf32>
    %278 = vector.extract_strided_slice %261 {offsets = [0, 64], sizes = [2, 32], strides = [1, 1]} : vector<2x128xf32> to vector<2x32xf32>
    %279 = math.tanh %278 : vector<2x32xf32>
    %280 = vector.extract_strided_slice %261 {offsets = [0, 96], sizes = [2, 32], strides = [1, 1]} : vector<2x128xf32> to vector<2x32xf32>
    %cst_123 = arith.constant 0.000000e+00 : f32
    %281 = vector.broadcast %cst_123 : f32 to vector<2x32xf32>
    %282 = arith.subf %281, %280 : vector<2x32xf32>
    %283 = math.exp %282 : vector<2x32xf32>
    %cst_124 = arith.constant 1.000000e+00 : f32
    %284 = vector.broadcast %cst_124 : f32 to vector<2x32xf32>
    %285 = arith.addf %284, %283 : vector<2x32xf32>
    %cst_125 = arith.constant 1.000000e+00 : f32
    %286 = vector.broadcast %cst_125 : f32 to vector<2x32xf32>
    %287 = arith.divf %286, %285 : vector<2x32xf32>
    %288 = arith.mulf %277, %236 : vector<2x32xf32>
    %289 = arith.mulf %269, %279 : vector<2x32xf32>
    %290 = arith.addf %288, %289 : vector<2x32xf32>
    %291 = math.tanh %290 : vector<2x32xf32>
    %292 = arith.mulf %287, %291 : vector<2x32xf32>
    %293 = vector.broadcast %244 : vector<2x1xf32> to vector<2x32xf32>
    %294 = arith.mulf %293, %292 : vector<2x32xf32>
    %295 = vector.broadcast %244 : vector<2x1xf32> to vector<2x32xf32>
    %296 = arith.mulf %295, %290 : vector<2x32xf32>
    %297 = arith.index_cast %241 : i32 to index
    %c0_126 = arith.constant 0 : index
    %c0_127 = arith.constant 0 : index
    %298 = vector.load %arg13[%297, %c0_126, %c0_127] : memref<8x2x32xf32, #tpu.memory_space<vmem>>, vector<1x2x32xf32>
    %299 = vector.shape_cast %298 : vector<1x2x32xf32> to vector<2x32xf32>
    %300 = vector.shape_cast %294 : vector<2x32xf32> to vector<1x2x32xf32>
    tpu.vector_store %arg13[%297, %c0_126, %c0_127], %300 {strides = array<i32>} : memref<8x2x32xf32, #tpu.memory_space<vmem>>, vector<1x2x32xf32>,
    %c5_i32 = arith.constant 5 : i32
    %c7_i32_128 = arith.constant 7 : i32
    %301 = arith.subi %c7_i32_128, %c5_i32 : i32
    %302 = arith.index_cast %301 : i32 to index
    %c0_129 = arith.constant 0 : index
    %c0_130 = arith.constant 0 : index
    %303 = vector.load %arg2[%302, %c0_129, %c0_130] : memref<8x2x1xf32, #tpu.memory_space<vmem>>, vector<1x2x1xf32>
    %304 = vector.shape_cast %303 : vector<1x2x1xf32> to vector<2x1xf32>
    %305 = arith.index_cast %301 : i32 to index
    %c0_131 = arith.constant 0 : index
    %c0_132 = arith.constant 0 : index
    %306 = vector.load %arg1[%305, %c0_131, %c0_132] : memref<8x2x300xf32, #tpu.memory_space<vmem>>, vector<1x2x300xf32>
    %307 = vector.shape_cast %306 : vector<1x2x300xf32> to vector<2x300xf32>
    %c0_133 = arith.constant 0 : index
    %c0_134 = arith.constant 0 : index
    %308 = vector.load %arg3[%c0_133, %c0_134] : memref<300x256xf32, #tpu.memory_space<vmem>>, vector<300x256xf32>
    %cst_135 = arith.constant dense<0.000000e+00> : vector<2x256xf32>
    %309 = tpu.matmul %307, %308, %cst_135 {dimension_numbers = #tpu.dot_dimension_numbers<[1], [0], [0], [1], [0, 0, 1, 1], [], []>} : vector<2x300xf32>, vector<300x256xf32>, vector<2x256xf32> -> vector<2x256xf32>
    %c0_136 = arith.constant 0 : index
    %c0_137 = arith.constant 0 : index
    %310 = vector.load %arg4[%c0_136, %c0_137] : memref<1x256xf32, #tpu.memory_space<vmem>>, vector<1x256xf32>
    %311 = vector.broadcast %310 : vector<1x256xf32> to vector<2x256xf32>
    %312 = arith.addf %309, %311 : vector<2x256xf32>
    %313 = vector.extract_strided_slice %312 {offsets = [0, 0], sizes = [2, 128], strides = [1, 1]} : vector<2x256xf32> to vector<2x128xf32>
    %314 = arith.index_cast %301 : i32 to index
    %c0_138 = arith.constant 0 : index
    %c0_139 = arith.constant 0 : index
    %315 = vector.load %arg12[%314, %c0_138, %c0_139] : memref<8x2x128xf32, #tpu.memory_space<vmem>>, vector<1x2x128xf32>
    %316 = vector.shape_cast %315 : vector<1x2x128xf32> to vector<2x128xf32>
    %317 = vector.shape_cast %313 : vector<2x128xf32> to vector<1x2x128xf32>
    tpu.vector_store %arg12[%314, %c0_138, %c0_139], %317 {strides = array<i32>} : memref<8x2x128xf32, #tpu.memory_space<vmem>>, vector<1x2x128xf32>,
    %318 = vector.extract_strided_slice %312 {offsets = [0, 128], sizes = [2, 128], strides = [1, 1]} : vector<2x256xf32> to vector<2x128xf32>
    %c0_140 = arith.constant 0 : index
    %c0_141 = arith.constant 0 : index
    %319 = vector.load %arg6[%c0_140, %c0_141] : memref<32x128xf32, #tpu.memory_space<vmem>>, vector<32x128xf32>
    %cst_142 = arith.constant dense<0.000000e+00> : vector<2x128xf32>
    %320 = tpu.matmul %294, %319, %cst_142 {dimension_numbers = #tpu.dot_dimension_numbers<[1], [0], [0], [1], [0, 0, 1, 1], [], []>} : vector<2x32xf32>, vector<32x128xf32>, vector<2x128xf32> -> vector<2x128xf32>
    %321 = arith.addf %318, %320 : vector<2x128xf32>
    %322 = vector.extract_strided_slice %321 {offsets = [0, 0], sizes = [2, 32], strides = [1, 1]} : vector<2x128xf32> to vector<2x32xf32>
    %cst_143 = arith.constant 0.000000e+00 : f32
    %323 = vector.broadcast %cst_143 : f32 to vector<2x32xf32>
    %324 = arith.subf %323, %322 : vector<2x32xf32>
    %325 = math.exp %324 : vector<2x32xf32>
    %cst_144 = arith.constant 1.000000e+00 : f32
    %326 = vector.broadcast %cst_144 : f32 to vector<2x32xf32>
    %327 = arith.addf %326, %325 : vector<2x32xf32>
    %cst_145 = arith.constant 1.000000e+00 : f32
    %328 = vector.broadcast %cst_145 : f32 to vector<2x32xf32>
    %329 = arith.divf %328, %327 : vector<2x32xf32>
    %330 = vector.extract_strided_slice %321 {offsets = [0, 32], sizes = [2, 32], strides = [1, 1]} : vector<2x128xf32> to vector<2x32xf32>
    %cst_146 = arith.constant 0.000000e+00 : f32
    %331 = vector.broadcast %cst_146 : f32 to vector<2x32xf32>
    %332 = arith.subf %331, %330 : vector<2x32xf32>
    %333 = math.exp %332 : vector<2x32xf32>
    %cst_147 = arith.constant 1.000000e+00 : f32
    %334 = vector.broadcast %cst_147 : f32 to vector<2x32xf32>
    %335 = arith.addf %334, %333 : vector<2x32xf32>
    %cst_148 = arith.constant 1.000000e+00 : f32
    %336 = vector.broadcast %cst_148 : f32 to vector<2x32xf32>
    %337 = arith.divf %336, %335 : vector<2x32xf32>
    %338 = vector.extract_strided_slice %321 {offsets = [0, 64], sizes = [2, 32], strides = [1, 1]} : vector<2x128xf32> to vector<2x32xf32>
    %339 = math.tanh %338 : vector<2x32xf32>
    %340 = vector.extract_strided_slice %321 {offsets = [0, 96], sizes = [2, 32], strides = [1, 1]} : vector<2x128xf32> to vector<2x32xf32>
    %cst_149 = arith.constant 0.000000e+00 : f32
    %341 = vector.broadcast %cst_149 : f32 to vector<2x32xf32>
    %342 = arith.subf %341, %340 : vector<2x32xf32>
    %343 = math.exp %342 : vector<2x32xf32>
    %cst_150 = arith.constant 1.000000e+00 : f32
    %344 = vector.broadcast %cst_150 : f32 to vector<2x32xf32>
    %345 = arith.addf %344, %343 : vector<2x32xf32>
    %cst_151 = arith.constant 1.000000e+00 : f32
    %346 = vector.broadcast %cst_151 : f32 to vector<2x32xf32>
    %347 = arith.divf %346, %345 : vector<2x32xf32>
    %348 = arith.mulf %337, %296 : vector<2x32xf32>
    %349 = arith.mulf %329, %339 : vector<2x32xf32>
    %350 = arith.addf %348, %349 : vector<2x32xf32>
    %351 = math.tanh %350 : vector<2x32xf32>
    %352 = arith.mulf %347, %351 : vector<2x32xf32>
    %353 = vector.broadcast %304 : vector<2x1xf32> to vector<2x32xf32>
    %354 = arith.mulf %353, %352 : vector<2x32xf32>
    %355 = vector.broadcast %304 : vector<2x1xf32> to vector<2x32xf32>
    %356 = arith.mulf %355, %350 : vector<2x32xf32>
    %357 = arith.index_cast %301 : i32 to index
    %c0_152 = arith.constant 0 : index
    %c0_153 = arith.constant 0 : index
    %358 = vector.load %arg13[%357, %c0_152, %c0_153] : memref<8x2x32xf32, #tpu.memory_space<vmem>>, vector<1x2x32xf32>
    %359 = vector.shape_cast %358 : vector<1x2x32xf32> to vector<2x32xf32>
    %360 = vector.shape_cast %354 : vector<2x32xf32> to vector<1x2x32xf32>
    tpu.vector_store %arg13[%357, %c0_152, %c0_153], %360 {strides = array<i32>} : memref<8x2x32xf32, #tpu.memory_space<vmem>>, vector<1x2x32xf32>,
    %c6_i32 = arith.constant 6 : i32
    %c7_i32_154 = arith.constant 7 : i32
    %361 = arith.subi %c7_i32_154, %c6_i32 : i32
    %362 = arith.index_cast %361 : i32 to index
    %c0_155 = arith.constant 0 : index
    %c0_156 = arith.constant 0 : index
    %363 = vector.load %arg2[%362, %c0_155, %c0_156] : memref<8x2x1xf32, #tpu.memory_space<vmem>>, vector<1x2x1xf32>
    %364 = vector.shape_cast %363 : vector<1x2x1xf32> to vector<2x1xf32>
    %365 = arith.index_cast %361 : i32 to index
    %c0_157 = arith.constant 0 : index
    %c0_158 = arith.constant 0 : index
    %366 = vector.load %arg1[%365, %c0_157, %c0_158] : memref<8x2x300xf32, #tpu.memory_space<vmem>>, vector<1x2x300xf32>
    %367 = vector.shape_cast %366 : vector<1x2x300xf32> to vector<2x300xf32>
    %c0_159 = arith.constant 0 : index
    %c0_160 = arith.constant 0 : index
    %368 = vector.load %arg3[%c0_159, %c0_160] : memref<300x256xf32, #tpu.memory_space<vmem>>, vector<300x256xf32>
    %cst_161 = arith.constant dense<0.000000e+00> : vector<2x256xf32>
    %369 = tpu.matmul %367, %368, %cst_161 {dimension_numbers = #tpu.dot_dimension_numbers<[1], [0], [0], [1], [0, 0, 1, 1], [], []>} : vector<2x300xf32>, vector<300x256xf32>, vector<2x256xf32> -> vector<2x256xf32>
    %c0_162 = arith.constant 0 : index
    %c0_163 = arith.constant 0 : index
    %370 = vector.load %arg4[%c0_162, %c0_163] : memref<1x256xf32, #tpu.memory_space<vmem>>, vector<1x256xf32>
    %371 = vector.broadcast %370 : vector<1x256xf32> to vector<2x256xf32>
    %372 = arith.addf %369, %371 : vector<2x256xf32>
    %373 = vector.extract_strided_slice %372 {offsets = [0, 0], sizes = [2, 128], strides = [1, 1]} : vector<2x256xf32> to vector<2x128xf32>
    %374 = arith.index_cast %361 : i32 to index
    %c0_164 = arith.constant 0 : index
    %c0_165 = arith.constant 0 : index
    %375 = vector.load %arg12[%374, %c0_164, %c0_165] : memref<8x2x128xf32, #tpu.memory_space<vmem>>, vector<1x2x128xf32>
    %376 = vector.shape_cast %375 : vector<1x2x128xf32> to vector<2x128xf32>
    %377 = vector.shape_cast %373 : vector<2x128xf32> to vector<1x2x128xf32>
    tpu.vector_store %arg12[%374, %c0_164, %c0_165], %377 {strides = array<i32>} : memref<8x2x128xf32, #tpu.memory_space<vmem>>, vector<1x2x128xf32>,
    %378 = vector.extract_strided_slice %372 {offsets = [0, 128], sizes = [2, 128], strides = [1, 1]} : vector<2x256xf32> to vector<2x128xf32>
    %c0_166 = arith.constant 0 : index
    %c0_167 = arith.constant 0 : index
    %379 = vector.load %arg6[%c0_166, %c0_167] : memref<32x128xf32, #tpu.memory_space<vmem>>, vector<32x128xf32>
    %cst_168 = arith.constant dense<0.000000e+00> : vector<2x128xf32>
    %380 = tpu.matmul %354, %379, %cst_168 {dimension_numbers = #tpu.dot_dimension_numbers<[1], [0], [0], [1], [0, 0, 1, 1], [], []>} : vector<2x32xf32>, vector<32x128xf32>, vector<2x128xf32> -> vector<2x128xf32>
    %381 = arith.addf %378, %380 : vector<2x128xf32>
    %382 = vector.extract_strided_slice %381 {offsets = [0, 0], sizes = [2, 32], strides = [1, 1]} : vector<2x128xf32> to vector<2x32xf32>
    %cst_169 = arith.constant 0.000000e+00 : f32
    %383 = vector.broadcast %cst_169 : f32 to vector<2x32xf32>
    %384 = arith.subf %383, %382 : vector<2x32xf32>
    %385 = math.exp %384 : vector<2x32xf32>
    %cst_170 = arith.constant 1.000000e+00 : f32
    %386 = vector.broadcast %cst_170 : f32 to vector<2x32xf32>
    %387 = arith.addf %386, %385 : vector<2x32xf32>
    %cst_171 = arith.constant 1.000000e+00 : f32
    %388 = vector.broadcast %cst_171 : f32 to vector<2x32xf32>
    %389 = arith.divf %388, %387 : vector<2x32xf32>
    %390 = vector.extract_strided_slice %381 {offsets = [0, 32], sizes = [2, 32], strides = [1, 1]} : vector<2x128xf32> to vector<2x32xf32>
    %cst_172 = arith.constant 0.000000e+00 : f32
    %391 = vector.broadcast %cst_172 : f32 to vector<2x32xf32>
    %392 = arith.subf %391, %390 : vector<2x32xf32>
    %393 = math.exp %392 : vector<2x32xf32>
    %cst_173 = arith.constant 1.000000e+00 : f32
    %394 = vector.broadcast %cst_173 : f32 to vector<2x32xf32>
    %395 = arith.addf %394, %393 : vector<2x32xf32>
    %cst_174 = arith.constant 1.000000e+00 : f32
    %396 = vector.broadcast %cst_174 : f32 to vector<2x32xf32>
    %397 = arith.divf %396, %395 : vector<2x32xf32>
    %398 = vector.extract_strided_slice %381 {offsets = [0, 64], sizes = [2, 32], strides = [1, 1]} : vector<2x128xf32> to vector<2x32xf32>
    %399 = math.tanh %398 : vector<2x32xf32>
    %400 = vector.extract_strided_slice %381 {offsets = [0, 96], sizes = [2, 32], strides = [1, 1]} : vector<2x128xf32> to vector<2x32xf32>
    %cst_175 = arith.constant 0.000000e+00 : f32
    %401 = vector.broadcast %cst_175 : f32 to vector<2x32xf32>
    %402 = arith.subf %401, %400 : vector<2x32xf32>
    %403 = math.exp %402 : vector<2x32xf32>
    %cst_176 = arith.constant 1.000000e+00 : f32
    %404 = vector.broadcast %cst_176 : f32 to vector<2x32xf32>
    %405 = arith.addf %404, %403 : vector<2x32xf32>
    %cst_177 = arith.constant 1.000000e+00 : f32
    %406 = vector.broadcast %cst_177 : f32 to vector<2x32xf32>
    %407 = arith.divf %406, %405 : vector<2x32xf32>
    %408 = arith.mulf %397, %356 : vector<2x32xf32>
    %409 = arith.mulf %389, %399 : vector<2x32xf32>
    %410 = arith.addf %408, %409 : vector<2x32xf32>
    %411 = math.tanh %410 : vector<2x32xf32>
    %412 = arith.mulf %407, %411 : vector<2x32xf32>
    %413 = vector.broadcast %364 : vector<2x1xf32> to vector<2x32xf32>
    %414 = arith.mulf %413, %412 : vector<2x32xf32>
    %415 = vector.broadcast %364 : vector<2x1xf32> to vector<2x32xf32>
    %416 = arith.mulf %415, %410 : vector<2x32xf32>
    %417 = arith.index_cast %361 : i32 to index
    %c0_178 = arith.constant 0 : index
    %c0_179 = arith.constant 0 : index
    %418 = vector.load %arg13[%417, %c0_178, %c0_179] : memref<8x2x32xf32, #tpu.memory_space<vmem>>, vector<1x2x32xf32>
    %419 = vector.shape_cast %418 : vector<1x2x32xf32> to vector<2x32xf32>
    %420 = vector.shape_cast %414 : vector<2x32xf32> to vector<1x2x32xf32>
    tpu.vector_store %arg13[%417, %c0_178, %c0_179], %420 {strides = array<i32>} : memref<8x2x32xf32, #tpu.memory_space<vmem>>, vector<1x2x32xf32>,
    %c7_i32_180 = arith.constant 7 : i32
    %c7_i32_181 = arith.constant 7 : i32
    %421 = arith.subi %c7_i32_181, %c7_i32_180 : i32
    %422 = arith.index_cast %421 : i32 to index
    %c0_182 = arith.constant 0 : index
    %c0_183 = arith.constant 0 : index
    %423 = vector.load %arg2[%422, %c0_182, %c0_183] : memref<8x2x1xf32, #tpu.memory_space<vmem>>, vector<1x2x1xf32>
    %424 = vector.shape_cast %423 : vector<1x2x1xf32> to vector<2x1xf32>
    %425 = arith.index_cast %421 : i32 to index
    %c0_184 = arith.constant 0 : index
    %c0_185 = arith.constant 0 : index
    %426 = vector.load %arg1[%425, %c0_184, %c0_185] : memref<8x2x300xf32, #tpu.memory_space<vmem>>, vector<1x2x300xf32>
    %427 = vector.shape_cast %426 : vector<1x2x300xf32> to vector<2x300xf32>
    %c0_186 = arith.constant 0 : index
    %c0_187 = arith.constant 0 : index
    %428 = vector.load %arg3[%c0_186, %c0_187] : memref<300x256xf32, #tpu.memory_space<vmem>>, vector<300x256xf32>
    %cst_188 = arith.constant dense<0.000000e+00> : vector<2x256xf32>
    %429 = tpu.matmul %427, %428, %cst_188 {dimension_numbers = #tpu.dot_dimension_numbers<[1], [0], [0], [1], [0, 0, 1, 1], [], []>} : vector<2x300xf32>, vector<300x256xf32>, vector<2x256xf32> -> vector<2x256xf32>
    %c0_189 = arith.constant 0 : index
    %c0_190 = arith.constant 0 : index
    %430 = vector.load %arg4[%c0_189, %c0_190] : memref<1x256xf32, #tpu.memory_space<vmem>>, vector<1x256xf32>
    %431 = vector.broadcast %430 : vector<1x256xf32> to vector<2x256xf32>
    %432 = arith.addf %429, %431 : vector<2x256xf32>
    %433 = vector.extract_strided_slice %432 {offsets = [0, 0], sizes = [2, 128], strides = [1, 1]} : vector<2x256xf32> to vector<2x128xf32>
    %434 = arith.index_cast %421 : i32 to index
    %c0_191 = arith.constant 0 : index
    %c0_192 = arith.constant 0 : index
    %435 = vector.load %arg12[%434, %c0_191, %c0_192] : memref<8x2x128xf32, #tpu.memory_space<vmem>>, vector<1x2x128xf32>
    %436 = vector.shape_cast %435 : vector<1x2x128xf32> to vector<2x128xf32>
    %437 = vector.shape_cast %433 : vector<2x128xf32> to vector<1x2x128xf32>
    tpu.vector_store %arg12[%434, %c0_191, %c0_192], %437 {strides = array<i32>} : memref<8x2x128xf32, #tpu.memory_space<vmem>>, vector<1x2x128xf32>,
    %438 = vector.extract_strided_slice %432 {offsets = [0, 128], sizes = [2, 128], strides = [1, 1]} : vector<2x256xf32> to vector<2x128xf32>
    %c0_193 = arith.constant 0 : index
    %c0_194 = arith.constant 0 : index
    %439 = vector.load %arg6[%c0_193, %c0_194] : memref<32x128xf32, #tpu.memory_space<vmem>>, vector<32x128xf32>
    %cst_195 = arith.constant dense<0.000000e+00> : vector<2x128xf32>
    %440 = tpu.matmul %414, %439, %cst_195 {dimension_numbers = #tpu.dot_dimension_numbers<[1], [0], [0], [1], [0, 0, 1, 1], [], []>} : vector<2x32xf32>, vector<32x128xf32>, vector<2x128xf32> -> vector<2x128xf32>
    %441 = arith.addf %438, %440 : vector<2x128xf32>
    %442 = vector.extract_strided_slice %441 {offsets = [0, 0], sizes = [2, 32], strides = [1, 1]} : vector<2x128xf32> to vector<2x32xf32>
    %cst_196 = arith.constant 0.000000e+00 : f32
    %443 = vector.broadcast %cst_196 : f32 to vector<2x32xf32>
    %444 = arith.subf %443, %442 : vector<2x32xf32>
    %445 = math.exp %444 : vector<2x32xf32>
    %cst_197 = arith.constant 1.000000e+00 : f32
    %446 = vector.broadcast %cst_197 : f32 to vector<2x32xf32>
    %447 = arith.addf %446, %445 : vector<2x32xf32>
    %cst_198 = arith.constant 1.000000e+00 : f32
    %448 = vector.broadcast %cst_198 : f32 to vector<2x32xf32>
    %449 = arith.divf %448, %447 : vector<2x32xf32>
    %450 = vector.extract_strided_slice %441 {offsets = [0, 32], sizes = [2, 32], strides = [1, 1]} : vector<2x128xf32> to vector<2x32xf32>
    %cst_199 = arith.constant 0.000000e+00 : f32
    %451 = vector.broadcast %cst_199 : f32 to vector<2x32xf32>
    %452 = arith.subf %451, %450 : vector<2x32xf32>
    %453 = math.exp %452 : vector<2x32xf32>
    %cst_200 = arith.constant 1.000000e+00 : f32
    %454 = vector.broadcast %cst_200 : f32 to vector<2x32xf32>
    %455 = arith.addf %454, %453 : vector<2x32xf32>
    %cst_201 = arith.constant 1.000000e+00 : f32
    %456 = vector.broadcast %cst_201 : f32 to vector<2x32xf32>
    %457 = arith.divf %456, %455 : vector<2x32xf32>
    %458 = vector.extract_strided_slice %441 {offsets = [0, 64], sizes = [2, 32], strides = [1, 1]} : vector<2x128xf32> to vector<2x32xf32>
    %459 = math.tanh %458 : vector<2x32xf32>
    %460 = vector.extract_strided_slice %441 {offsets = [0, 96], sizes = [2, 32], strides = [1, 1]} : vector<2x128xf32> to vector<2x32xf32>
    %cst_202 = arith.constant 0.000000e+00 : f32
    %461 = vector.broadcast %cst_202 : f32 to vector<2x32xf32>
    %462 = arith.subf %461, %460 : vector<2x32xf32>
    %463 = math.exp %462 : vector<2x32xf32>
    %cst_203 = arith.constant 1.000000e+00 : f32
    %464 = vector.broadcast %cst_203 : f32 to vector<2x32xf32>
    %465 = arith.addf %464, %463 : vector<2x32xf32>
    %cst_204 = arith.constant 1.000000e+00 : f32
    %466 = vector.broadcast %cst_204 : f32 to vector<2x32xf32>
    %467 = arith.divf %466, %465 : vector<2x32xf32>
    %468 = arith.mulf %457, %416 : vector<2x32xf32>
    %469 = arith.mulf %449, %459 : vector<2x32xf32>
    %470 = arith.addf %468, %469 : vector<2x32xf32>
    %471 = math.tanh %470 : vector<2x32xf32>
    %472 = arith.mulf %467, %471 : vector<2x32xf32>
    %473 = vector.broadcast %424 : vector<2x1xf32> to vector<2x32xf32>
    %474 = arith.mulf %473, %472 : vector<2x32xf32>
    %475 = vector.broadcast %424 : vector<2x1xf32> to vector<2x32xf32>
    %476 = arith.mulf %475, %470 : vector<2x32xf32>
    %477 = arith.index_cast %421 : i32 to index
    %c0_205 = arith.constant 0 : index
    %c0_206 = arith.constant 0 : index
    %478 = vector.load %arg13[%477, %c0_205, %c0_206] : memref<8x2x32xf32, #tpu.memory_space<vmem>>, vector<1x2x32xf32>
    %479 = vector.shape_cast %478 : vector<1x2x32xf32> to vector<2x32xf32>
    %480 = vector.shape_cast %474 : vector<2x32xf32> to vector<1x2x32xf32>
    tpu.vector_store %arg13[%477, %c0_205, %c0_206], %480 {strides = array<i32>} : memref<8x2x32xf32, #tpu.memory_space<vmem>>, vector<1x2x32xf32>,
    %c8_i32 = arith.constant 8 : i32
    %c0_i32_207 = arith.constant 0 : i32
    %481 = arith.index_cast %c0_i32_207 : i32 to index
    %c0_208 = arith.constant 0 : index
    %c0_209 = arith.constant 0 : index
    %482 = vector.load %arg2[%481, %c0_208, %c0_209] : memref<8x2x1xf32, #tpu.memory_space<vmem>>, vector<1x2x1xf32>
    %483 = vector.shape_cast %482 : vector<1x2x1xf32> to vector<2x1xf32>
    %484 = arith.index_cast %c0_i32_207 : i32 to index
    %c0_210 = arith.constant 0 : index
    %c0_211 = arith.constant 0 : index
    %485 = vector.load %arg12[%484, %c0_210, %c0_211] : memref<8x2x128xf32, #tpu.memory_space<vmem>>, vector<1x2x128xf32>
    %486 = vector.shape_cast %485 : vector<1x2x128xf32> to vector<2x128xf32>
    %c0_212 = arith.constant 0 : index
    %c0_213 = arith.constant 0 : index
    %487 = vector.load %arg5[%c0_212, %c0_213] : memref<32x128xf32, #tpu.memory_space<vmem>>, vector<32x128xf32>
    %cst_214 = arith.constant dense<0.000000e+00> : vector<2x128xf32>
    %488 = tpu.matmul %0, %487, %cst_214 {dimension_numbers = #tpu.dot_dimension_numbers<[1], [0], [0], [1], [0, 0, 1, 1], [], []>} : vector<2x32xf32>, vector<32x128xf32>, vector<2x128xf32> -> vector<2x128xf32>
    %489 = arith.addf %486, %488 : vector<2x128xf32>
    %490 = vector.extract_strided_slice %489 {offsets = [0, 0], sizes = [2, 32], strides = [1, 1]} : vector<2x128xf32> to vector<2x32xf32>
    %cst_215 = arith.constant 0.000000e+00 : f32
    %491 = vector.broadcast %cst_215 : f32 to vector<2x32xf32>
    %492 = arith.subf %491, %490 : vector<2x32xf32>
    %493 = math.exp %492 : vector<2x32xf32>
    %cst_216 = arith.constant 1.000000e+00 : f32
    %494 = vector.broadcast %cst_216 : f32 to vector<2x32xf32>
    %495 = arith.addf %494, %493 : vector<2x32xf32>
    %cst_217 = arith.constant 1.000000e+00 : f32
    %496 = vector.broadcast %cst_217 : f32 to vector<2x32xf32>
    %497 = arith.divf %496, %495 : vector<2x32xf32>
    %498 = vector.extract_strided_slice %489 {offsets = [0, 32], sizes = [2, 32], strides = [1, 1]} : vector<2x128xf32> to vector<2x32xf32>
    %cst_218 = arith.constant 0.000000e+00 : f32
    %499 = vector.broadcast %cst_218 : f32 to vector<2x32xf32>
    %500 = arith.subf %499, %498 : vector<2x32xf32>
    %501 = math.exp %500 : vector<2x32xf32>
    %cst_219 = arith.constant 1.000000e+00 : f32
    %502 = vector.broadcast %cst_219 : f32 to vector<2x32xf32>
    %503 = arith.addf %502, %501 : vector<2x32xf32>
    %cst_220 = arith.constant 1.000000e+00 : f32
    %504 = vector.broadcast %cst_220 : f32 to vector<2x32xf32>
    %505 = arith.divf %504, %503 : vector<2x32xf32>
    %506 = vector.extract_strided_slice %489 {offsets = [0, 64], sizes = [2, 32], strides = [1, 1]} : vector<2x128xf32> to vector<2x32xf32>
    %507 = math.tanh %506 : vector<2x32xf32>
    %508 = vector.extract_strided_slice %489 {offsets = [0, 96], sizes = [2, 32], strides = [1, 1]} : vector<2x128xf32> to vector<2x32xf32>
    %cst_221 = arith.constant 0.000000e+00 : f32
    %509 = vector.broadcast %cst_221 : f32 to vector<2x32xf32>
    %510 = arith.subf %509, %508 : vector<2x32xf32>
    %511 = math.exp %510 : vector<2x32xf32>
    %cst_222 = arith.constant 1.000000e+00 : f32
    %512 = vector.broadcast %cst_222 : f32 to vector<2x32xf32>
    %513 = arith.addf %512, %511 : vector<2x32xf32>
    %cst_223 = arith.constant 1.000000e+00 : f32
    %514 = vector.broadcast %cst_223 : f32 to vector<2x32xf32>
    %515 = arith.divf %514, %513 : vector<2x32xf32>
    %516 = arith.mulf %505, %0 : vector<2x32xf32>
    %517 = arith.mulf %497, %507 : vector<2x32xf32>
    %518 = arith.addf %516, %517 : vector<2x32xf32>
    %519 = math.tanh %518 : vector<2x32xf32>
    %520 = arith.mulf %515, %519 : vector<2x32xf32>
    %521 = vector.broadcast %483 : vector<2x1xf32> to vector<2x32xf32>
    %522 = arith.mulf %521, %520 : vector<2x32xf32>
    %523 = vector.broadcast %483 : vector<2x1xf32> to vector<2x32xf32>
    %524 = arith.mulf %523, %518 : vector<2x32xf32>
    %c0_224 = arith.constant 0 : index
    %c0_225 = arith.constant 0 : index
    %525 = vector.load %arg7[%c0_224, %c0_225] : memref<32x256xf32, #tpu.memory_space<vmem>>, vector<32x256xf32>
    %cst_226 = arith.constant dense<0.000000e+00> : vector<2x256xf32>
    %526 = tpu.matmul %522, %525, %cst_226 {dimension_numbers = #tpu.dot_dimension_numbers<[1], [0], [0], [1], [0, 0, 1, 1], [], []>} : vector<2x32xf32>, vector<32x256xf32>, vector<2x256xf32> -> vector<2x256xf32>
    %527 = arith.index_cast %c0_i32_207 : i32 to index
    %c0_227 = arith.constant 0 : index
    %c0_228 = arith.constant 0 : index
    %528 = vector.load %arg13[%527, %c0_227, %c0_228] : memref<8x2x32xf32, #tpu.memory_space<vmem>>, vector<1x2x32xf32>
    %529 = vector.shape_cast %528 : vector<1x2x32xf32> to vector<2x32xf32>
    %c0_229 = arith.constant 0 : index
    %c0_230 = arith.constant 0 : index
    %530 = vector.load %arg8[%c0_229, %c0_230] : memref<32x256xf32, #tpu.memory_space<vmem>>, vector<32x256xf32>
    %cst_231 = arith.constant dense<0.000000e+00> : vector<2x256xf32>
    %531 = tpu.matmul %529, %530, %cst_231 {dimension_numbers = #tpu.dot_dimension_numbers<[1], [0], [0], [1], [0, 0, 1, 1], [], []>} : vector<2x32xf32>, vector<32x256xf32>, vector<2x256xf32> -> vector<2x256xf32>
    %532 = arith.addf %526, %531 : vector<2x256xf32>
    %c0_232 = arith.constant 0 : index
    %c0_233 = arith.constant 0 : index
    %533 = vector.load %arg9[%c0_232, %c0_233] : memref<1x256xf32, #tpu.memory_space<vmem>>, vector<1x256xf32>
    %534 = vector.broadcast %533 : vector<1x256xf32> to vector<2x256xf32>
    %535 = arith.addf %532, %534 : vector<2x256xf32>
    %536 = vector.extract_strided_slice %535 {offsets = [0, 0], sizes = [2, 128], strides = [1, 1]} : vector<2x256xf32> to vector<2x128xf32>
    %537 = arith.index_cast %c0_i32_207 : i32 to index
    %c0_234 = arith.constant 0 : index
    %c0_235 = arith.constant 0 : index
    %538 = vector.load %arg10[%537, %c0_234, %c0_235] : memref<8x2x128xf32, #tpu.memory_space<vmem>>, vector<1x2x128xf32>
    %539 = vector.shape_cast %538 : vector<1x2x128xf32> to vector<2x128xf32>
    %540 = vector.shape_cast %536 : vector<2x128xf32> to vector<1x2x128xf32>
    tpu.vector_store %arg10[%537, %c0_234, %c0_235], %540 {strides = array<i32>} : memref<8x2x128xf32, #tpu.memory_space<vmem>>, vector<1x2x128xf32>,
    %541 = vector.extract_strided_slice %535 {offsets = [0, 128], sizes = [2, 128], strides = [1, 1]} : vector<2x256xf32> to vector<2x128xf32>
    %542 = arith.index_cast %c0_i32_207 : i32 to index
    %c0_236 = arith.constant 0 : index
    %c0_237 = arith.constant 0 : index
    %543 = vector.load %arg11[%542, %c0_236, %c0_237] : memref<8x2x128xf32, #tpu.memory_space<vmem>>, vector<1x2x128xf32>
    %544 = vector.shape_cast %543 : vector<1x2x128xf32> to vector<2x128xf32>
    %545 = vector.shape_cast %541 : vector<2x128xf32> to vector<1x2x128xf32>
    tpu.vector_store %arg11[%542, %c0_236, %c0_237], %545 {strides = array<i32>} : memref<8x2x128xf32, #tpu.memory_space<vmem>>, vector<1x2x128xf32>,
    %c1_i32_238 = arith.constant 1 : i32
    %546 = arith.index_cast %c1_i32_238 : i32 to index
    %c0_239 = arith.constant 0 : index
    %c0_240 = arith.constant 0 : index
    %547 = vector.load %arg2[%546, %c0_239, %c0_240] : memref<8x2x1xf32, #tpu.memory_space<vmem>>, vector<1x2x1xf32>
    %548 = vector.shape_cast %547 : vector<1x2x1xf32> to vector<2x1xf32>
    %549 = arith.index_cast %c1_i32_238 : i32 to index
    %c0_241 = arith.constant 0 : index
    %c0_242 = arith.constant 0 : index
    %550 = vector.load %arg12[%549, %c0_241, %c0_242] : memref<8x2x128xf32, #tpu.memory_space<vmem>>, vector<1x2x128xf32>
    %551 = vector.shape_cast %550 : vector<1x2x128xf32> to vector<2x128xf32>
    %c0_243 = arith.constant 0 : index
    %c0_244 = arith.constant 0 : index
    %552 = vector.load %arg5[%c0_243, %c0_244] : memref<32x128xf32, #tpu.memory_space<vmem>>, vector<32x128xf32>
    %cst_245 = arith.constant dense<0.000000e+00> : vector<2x128xf32>
    %553 = tpu.matmul %522, %552, %cst_245 {dimension_numbers = #tpu.dot_dimension_numbers<[1], [0], [0], [1], [0, 0, 1, 1], [], []>} : vector<2x32xf32>, vector<32x128xf32>, vector<2x128xf32> -> vector<2x128xf32>
    %554 = arith.addf %551, %553 : vector<2x128xf32>
    %555 = vector.extract_strided_slice %554 {offsets = [0, 0], sizes = [2, 32], strides = [1, 1]} : vector<2x128xf32> to vector<2x32xf32>
    %cst_246 = arith.constant 0.000000e+00 : f32
    %556 = vector.broadcast %cst_246 : f32 to vector<2x32xf32>
    %557 = arith.subf %556, %555 : vector<2x32xf32>
    %558 = math.exp %557 : vector<2x32xf32>
    %cst_247 = arith.constant 1.000000e+00 : f32
    %559 = vector.broadcast %cst_247 : f32 to vector<2x32xf32>
    %560 = arith.addf %559, %558 : vector<2x32xf32>
    %cst_248 = arith.constant 1.000000e+00 : f32
    %561 = vector.broadcast %cst_248 : f32 to vector<2x32xf32>
    %562 = arith.divf %561, %560 : vector<2x32xf32>
    %563 = vector.extract_strided_slice %554 {offsets = [0, 32], sizes = [2, 32], strides = [1, 1]} : vector<2x128xf32> to vector<2x32xf32>
    %cst_249 = arith.constant 0.000000e+00 : f32
    %564 = vector.broadcast %cst_249 : f32 to vector<2x32xf32>
    %565 = arith.subf %564, %563 : vector<2x32xf32>
    %566 = math.exp %565 : vector<2x32xf32>
    %cst_250 = arith.constant 1.000000e+00 : f32
    %567 = vector.broadcast %cst_250 : f32 to vector<2x32xf32>
    %568 = arith.addf %567, %566 : vector<2x32xf32>
    %cst_251 = arith.constant 1.000000e+00 : f32
    %569 = vector.broadcast %cst_251 : f32 to vector<2x32xf32>
    %570 = arith.divf %569, %568 : vector<2x32xf32>
    %571 = vector.extract_strided_slice %554 {offsets = [0, 64], sizes = [2, 32], strides = [1, 1]} : vector<2x128xf32> to vector<2x32xf32>
    %572 = math.tanh %571 : vector<2x32xf32>
    %573 = vector.extract_strided_slice %554 {offsets = [0, 96], sizes = [2, 32], strides = [1, 1]} : vector<2x128xf32> to vector<2x32xf32>
    %cst_252 = arith.constant 0.000000e+00 : f32
    %574 = vector.broadcast %cst_252 : f32 to vector<2x32xf32>
    %575 = arith.subf %574, %573 : vector<2x32xf32>
    %576 = math.exp %575 : vector<2x32xf32>
    %cst_253 = arith.constant 1.000000e+00 : f32
    %577 = vector.broadcast %cst_253 : f32 to vector<2x32xf32>
    %578 = arith.addf %577, %576 : vector<2x32xf32>
    %cst_254 = arith.constant 1.000000e+00 : f32
    %579 = vector.broadcast %cst_254 : f32 to vector<2x32xf32>
    %580 = arith.divf %579, %578 : vector<2x32xf32>
    %581 = arith.mulf %570, %524 : vector<2x32xf32>
    %582 = arith.mulf %562, %572 : vector<2x32xf32>
    %583 = arith.addf %581, %582 : vector<2x32xf32>
    %584 = math.tanh %583 : vector<2x32xf32>
    %585 = arith.mulf %580, %584 : vector<2x32xf32>
    %586 = vector.broadcast %548 : vector<2x1xf32> to vector<2x32xf32>
    %587 = arith.mulf %586, %585 : vector<2x32xf32>
    %588 = vector.broadcast %548 : vector<2x1xf32> to vector<2x32xf32>
    %589 = arith.mulf %588, %583 : vector<2x32xf32>
    %c0_255 = arith.constant 0 : index
    %c0_256 = arith.constant 0 : index
    %590 = vector.load %arg7[%c0_255, %c0_256] : memref<32x256xf32, #tpu.memory_space<vmem>>, vector<32x256xf32>
    %cst_257 = arith.constant dense<0.000000e+00> : vector<2x256xf32>
    %591 = tpu.matmul %587, %590, %cst_257 {dimension_numbers = #tpu.dot_dimension_numbers<[1], [0], [0], [1], [0, 0, 1, 1], [], []>} : vector<2x32xf32>, vector<32x256xf32>, vector<2x256xf32> -> vector<2x256xf32>
    %592 = arith.index_cast %c1_i32_238 : i32 to index
    %c0_258 = arith.constant 0 : index
    %c0_259 = arith.constant 0 : index
    %593 = vector.load %arg13[%592, %c0_258, %c0_259] : memref<8x2x32xf32, #tpu.memory_space<vmem>>, vector<1x2x32xf32>
    %594 = vector.shape_cast %593 : vector<1x2x32xf32> to vector<2x32xf32>
    %c0_260 = arith.constant 0 : index
    %c0_261 = arith.constant 0 : index
    %595 = vector.load %arg8[%c0_260, %c0_261] : memref<32x256xf32, #tpu.memory_space<vmem>>, vector<32x256xf32>
    %cst_262 = arith.constant dense<0.000000e+00> : vector<2x256xf32>
    %596 = tpu.matmul %594, %595, %cst_262 {dimension_numbers = #tpu.dot_dimension_numbers<[1], [0], [0], [1], [0, 0, 1, 1], [], []>} : vector<2x32xf32>, vector<32x256xf32>, vector<2x256xf32> -> vector<2x256xf32>
    %597 = arith.addf %591, %596 : vector<2x256xf32>
    %c0_263 = arith.constant 0 : index
    %c0_264 = arith.constant 0 : index
    %598 = vector.load %arg9[%c0_263, %c0_264] : memref<1x256xf32, #tpu.memory_space<vmem>>, vector<1x256xf32>
    %599 = vector.broadcast %598 : vector<1x256xf32> to vector<2x256xf32>
    %600 = arith.addf %597, %599 : vector<2x256xf32>
    %601 = vector.extract_strided_slice %600 {offsets = [0, 0], sizes = [2, 128], strides = [1, 1]} : vector<2x256xf32> to vector<2x128xf32>
    %602 = arith.index_cast %c1_i32_238 : i32 to index
    %c0_265 = arith.constant 0 : index
    %c0_266 = arith.constant 0 : index
    %603 = vector.load %arg10[%602, %c0_265, %c0_266] : memref<8x2x128xf32, #tpu.memory_space<vmem>>, vector<1x2x128xf32>
    %604 = vector.shape_cast %603 : vector<1x2x128xf32> to vector<2x128xf32>
    %605 = vector.shape_cast %601 : vector<2x128xf32> to vector<1x2x128xf32>
    tpu.vector_store %arg10[%602, %c0_265, %c0_266], %605 {strides = array<i32>} : memref<8x2x128xf32, #tpu.memory_space<vmem>>, vector<1x2x128xf32>,
    %606 = vector.extract_strided_slice %600 {offsets = [0, 128], sizes = [2, 128], strides = [1, 1]} : vector<2x256xf32> to vector<2x128xf32>
    %607 = arith.index_cast %c1_i32_238 : i32 to index
    %c0_267 = arith.constant 0 : index
    %c0_268 = arith.constant 0 : index
    %608 = vector.load %arg11[%607, %c0_267, %c0_268] : memref<8x2x128xf32, #tpu.memory_space<vmem>>, vector<1x2x128xf32>
    %609 = vector.shape_cast %608 : vector<1x2x128xf32> to vector<2x128xf32>
    %610 = vector.shape_cast %606 : vector<2x128xf32> to vector<1x2x128xf32>
    tpu.vector_store %arg11[%607, %c0_267, %c0_268], %610 {strides = array<i32>} : memref<8x2x128xf32, #tpu.memory_space<vmem>>, vector<1x2x128xf32>,
    %c2_i32_269 = arith.constant 2 : i32
    %611 = arith.index_cast %c2_i32_269 : i32 to index
    %c0_270 = arith.constant 0 : index
    %c0_271 = arith.constant 0 : index
    %612 = vector.load %arg2[%611, %c0_270, %c0_271] : memref<8x2x1xf32, #tpu.memory_space<vmem>>, vector<1x2x1xf32>
    %613 = vector.shape_cast %612 : vector<1x2x1xf32> to vector<2x1xf32>
    %614 = arith.index_cast %c2_i32_269 : i32 to index
    %c0_272 = arith.constant 0 : index
    %c0_273 = arith.constant 0 : index
    %615 = vector.load %arg12[%614, %c0_272, %c0_273] : memref<8x2x128xf32, #tpu.memory_space<vmem>>, vector<1x2x128xf32>
    %616 = vector.shape_cast %615 : vector<1x2x128xf32> to vector<2x128xf32>
    %c0_274 = arith.constant 0 : index
    %c0_275 = arith.constant 0 : index
    %617 = vector.load %arg5[%c0_274, %c0_275] : memref<32x128xf32, #tpu.memory_space<vmem>>, vector<32x128xf32>
    %cst_276 = arith.constant dense<0.000000e+00> : vector<2x128xf32>
    %618 = tpu.matmul %587, %617, %cst_276 {dimension_numbers = #tpu.dot_dimension_numbers<[1], [0], [0], [1], [0, 0, 1, 1], [], []>} : vector<2x32xf32>, vector<32x128xf32>, vector<2x128xf32> -> vector<2x128xf32>
    %619 = arith.addf %616, %618 : vector<2x128xf32>
    %620 = vector.extract_strided_slice %619 {offsets = [0, 0], sizes = [2, 32], strides = [1, 1]} : vector<2x128xf32> to vector<2x32xf32>
    %cst_277 = arith.constant 0.000000e+00 : f32
    %621 = vector.broadcast %cst_277 : f32 to vector<2x32xf32>
    %622 = arith.subf %621, %620 : vector<2x32xf32>
    %623 = math.exp %622 : vector<2x32xf32>
    %cst_278 = arith.constant 1.000000e+00 : f32
    %624 = vector.broadcast %cst_278 : f32 to vector<2x32xf32>
    %625 = arith.addf %624, %623 : vector<2x32xf32>
    %cst_279 = arith.constant 1.000000e+00 : f32
    %626 = vector.broadcast %cst_279 : f32 to vector<2x32xf32>
    %627 = arith.divf %626, %625 : vector<2x32xf32>
    %628 = vector.extract_strided_slice %619 {offsets = [0, 32], sizes = [2, 32], strides = [1, 1]} : vector<2x128xf32> to vector<2x32xf32>
    %cst_280 = arith.constant 0.000000e+00 : f32
    %629 = vector.broadcast %cst_280 : f32 to vector<2x32xf32>
    %630 = arith.subf %629, %628 : vector<2x32xf32>
    %631 = math.exp %630 : vector<2x32xf32>
    %cst_281 = arith.constant 1.000000e+00 : f32
    %632 = vector.broadcast %cst_281 : f32 to vector<2x32xf32>
    %633 = arith.addf %632, %631 : vector<2x32xf32>
    %cst_282 = arith.constant 1.000000e+00 : f32
    %634 = vector.broadcast %cst_282 : f32 to vector<2x32xf32>
    %635 = arith.divf %634, %633 : vector<2x32xf32>
    %636 = vector.extract_strided_slice %619 {offsets = [0, 64], sizes = [2, 32], strides = [1, 1]} : vector<2x128xf32> to vector<2x32xf32>
    %637 = math.tanh %636 : vector<2x32xf32>
    %638 = vector.extract_strided_slice %619 {offsets = [0, 96], sizes = [2, 32], strides = [1, 1]} : vector<2x128xf32> to vector<2x32xf32>
    %cst_283 = arith.constant 0.000000e+00 : f32
    %639 = vector.broadcast %cst_283 : f32 to vector<2x32xf32>
    %640 = arith.subf %639, %638 : vector<2x32xf32>
    %641 = math.exp %640 : vector<2x32xf32>
    %cst_284 = arith.constant 1.000000e+00 : f32
    %642 = vector.broadcast %cst_284 : f32 to vector<2x32xf32>
    %643 = arith.addf %642, %641 : vector<2x32xf32>
    %cst_285 = arith.constant 1.000000e+00 : f32
    %644 = vector.broadcast %cst_285 : f32 to vector<2x32xf32>
    %645 = arith.divf %644, %643 : vector<2x32xf32>
    %646 = arith.mulf %635, %589 : vector<2x32xf32>
    %647 = arith.mulf %627, %637 : vector<2x32xf32>
    %648 = arith.addf %646, %647 : vector<2x32xf32>
    %649 = math.tanh %648 : vector<2x32xf32>
    %650 = arith.mulf %645, %649 : vector<2x32xf32>
    %651 = vector.broadcast %613 : vector<2x1xf32> to vector<2x32xf32>
    %652 = arith.mulf %651, %650 : vector<2x32xf32>
    %653 = vector.broadcast %613 : vector<2x1xf32> to vector<2x32xf32>
    %654 = arith.mulf %653, %648 : vector<2x32xf32>
    %c0_286 = arith.constant 0 : index
    %c0_287 = arith.constant 0 : index
    %655 = vector.load %arg7[%c0_286, %c0_287] : memref<32x256xf32, #tpu.memory_space<vmem>>, vector<32x256xf32>
    %cst_288 = arith.constant dense<0.000000e+00> : vector<2x256xf32>
    %656 = tpu.matmul %652, %655, %cst_288 {dimension_numbers = #tpu.dot_dimension_numbers<[1], [0], [0], [1], [0, 0, 1, 1], [], []>} : vector<2x32xf32>, vector<32x256xf32>, vector<2x256xf32> -> vector<2x256xf32>
    %657 = arith.index_cast %c2_i32_269 : i32 to index
    %c0_289 = arith.constant 0 : index
    %c0_290 = arith.constant 0 : index
    %658 = vector.load %arg13[%657, %c0_289, %c0_290] : memref<8x2x32xf32, #tpu.memory_space<vmem>>, vector<1x2x32xf32>
    %659 = vector.shape_cast %658 : vector<1x2x32xf32> to vector<2x32xf32>
    %c0_291 = arith.constant 0 : index
    %c0_292 = arith.constant 0 : index
    %660 = vector.load %arg8[%c0_291, %c0_292] : memref<32x256xf32, #tpu.memory_space<vmem>>, vector<32x256xf32>
    %cst_293 = arith.constant dense<0.000000e+00> : vector<2x256xf32>
    %661 = tpu.matmul %659, %660, %cst_293 {dimension_numbers = #tpu.dot_dimension_numbers<[1], [0], [0], [1], [0, 0, 1, 1], [], []>} : vector<2x32xf32>, vector<32x256xf32>, vector<2x256xf32> -> vector<2x256xf32>
    %662 = arith.addf %656, %661 : vector<2x256xf32>
    %c0_294 = arith.constant 0 : index
    %c0_295 = arith.constant 0 : index
    %663 = vector.load %arg9[%c0_294, %c0_295] : memref<1x256xf32, #tpu.memory_space<vmem>>, vector<1x256xf32>
    %664 = vector.broadcast %663 : vector<1x256xf32> to vector<2x256xf32>
    %665 = arith.addf %662, %664 : vector<2x256xf32>
    %666 = vector.extract_strided_slice %665 {offsets = [0, 0], sizes = [2, 128], strides = [1, 1]} : vector<2x256xf32> to vector<2x128xf32>
    %667 = arith.index_cast %c2_i32_269 : i32 to index
    %c0_296 = arith.constant 0 : index
    %c0_297 = arith.constant 0 : index
    %668 = vector.load %arg10[%667, %c0_296, %c0_297] : memref<8x2x128xf32, #tpu.memory_space<vmem>>, vector<1x2x128xf32>
    %669 = vector.shape_cast %668 : vector<1x2x128xf32> to vector<2x128xf32>
    %670 = vector.shape_cast %666 : vector<2x128xf32> to vector<1x2x128xf32>
    tpu.vector_store %arg10[%667, %c0_296, %c0_297], %670 {strides = array<i32>} : memref<8x2x128xf32, #tpu.memory_space<vmem>>, vector<1x2x128xf32>,
    %671 = vector.extract_strided_slice %665 {offsets = [0, 128], sizes = [2, 128], strides = [1, 1]} : vector<2x256xf32> to vector<2x128xf32>
    %672 = arith.index_cast %c2_i32_269 : i32 to index
    %c0_298 = arith.constant 0 : index
    %c0_299 = arith.constant 0 : index
    %673 = vector.load %arg11[%672, %c0_298, %c0_299] : memref<8x2x128xf32, #tpu.memory_space<vmem>>, vector<1x2x128xf32>
    %674 = vector.shape_cast %673 : vector<1x2x128xf32> to vector<2x128xf32>
    %675 = vector.shape_cast %671 : vector<2x128xf32> to vector<1x2x128xf32>
    tpu.vector_store %arg11[%672, %c0_298, %c0_299], %675 {strides = array<i32>} : memref<8x2x128xf32, #tpu.memory_space<vmem>>, vector<1x2x128xf32>,
    %c3_i32_300 = arith.constant 3 : i32
    %676 = arith.index_cast %c3_i32_300 : i32 to index
    %c0_301 = arith.constant 0 : index
    %c0_302 = arith.constant 0 : index
    %677 = vector.load %arg2[%676, %c0_301, %c0_302] : memref<8x2x1xf32, #tpu.memory_space<vmem>>, vector<1x2x1xf32>
    %678 = vector.shape_cast %677 : vector<1x2x1xf32> to vector<2x1xf32>
    %679 = arith.index_cast %c3_i32_300 : i32 to index
    %c0_303 = arith.constant 0 : index
    %c0_304 = arith.constant 0 : index
    %680 = vector.load %arg12[%679, %c0_303, %c0_304] : memref<8x2x128xf32, #tpu.memory_space<vmem>>, vector<1x2x128xf32>
    %681 = vector.shape_cast %680 : vector<1x2x128xf32> to vector<2x128xf32>
    %c0_305 = arith.constant 0 : index
    %c0_306 = arith.constant 0 : index
    %682 = vector.load %arg5[%c0_305, %c0_306] : memref<32x128xf32, #tpu.memory_space<vmem>>, vector<32x128xf32>
    %cst_307 = arith.constant dense<0.000000e+00> : vector<2x128xf32>
    %683 = tpu.matmul %652, %682, %cst_307 {dimension_numbers = #tpu.dot_dimension_numbers<[1], [0], [0], [1], [0, 0, 1, 1], [], []>} : vector<2x32xf32>, vector<32x128xf32>, vector<2x128xf32> -> vector<2x128xf32>
    %684 = arith.addf %681, %683 : vector<2x128xf32>
    %685 = vector.extract_strided_slice %684 {offsets = [0, 0], sizes = [2, 32], strides = [1, 1]} : vector<2x128xf32> to vector<2x32xf32>
    %cst_308 = arith.constant 0.000000e+00 : f32
    %686 = vector.broadcast %cst_308 : f32 to vector<2x32xf32>
    %687 = arith.subf %686, %685 : vector<2x32xf32>
    %688 = math.exp %687 : vector<2x32xf32>
    %cst_309 = arith.constant 1.000000e+00 : f32
    %689 = vector.broadcast %cst_309 : f32 to vector<2x32xf32>
    %690 = arith.addf %689, %688 : vector<2x32xf32>
    %cst_310 = arith.constant 1.000000e+00 : f32
    %691 = vector.broadcast %cst_310 : f32 to vector<2x32xf32>
    %692 = arith.divf %691, %690 : vector<2x32xf32>
    %693 = vector.extract_strided_slice %684 {offsets = [0, 32], sizes = [2, 32], strides = [1, 1]} : vector<2x128xf32> to vector<2x32xf32>
    %cst_311 = arith.constant 0.000000e+00 : f32
    %694 = vector.broadcast %cst_311 : f32 to vector<2x32xf32>
    %695 = arith.subf %694, %693 : vector<2x32xf32>
    %696 = math.exp %695 : vector<2x32xf32>
    %cst_312 = arith.constant 1.000000e+00 : f32
    %697 = vector.broadcast %cst_312 : f32 to vector<2x32xf32>
    %698 = arith.addf %697, %696 : vector<2x32xf32>
    %cst_313 = arith.constant 1.000000e+00 : f32
    %699 = vector.broadcast %cst_313 : f32 to vector<2x32xf32>
    %700 = arith.divf %699, %698 : vector<2x32xf32>
    %701 = vector.extract_strided_slice %684 {offsets = [0, 64], sizes = [2, 32], strides = [1, 1]} : vector<2x128xf32> to vector<2x32xf32>
    %702 = math.tanh %701 : vector<2x32xf32>
    %703 = vector.extract_strided_slice %684 {offsets = [0, 96], sizes = [2, 32], strides = [1, 1]} : vector<2x128xf32> to vector<2x32xf32>
    %cst_314 = arith.constant 0.000000e+00 : f32
    %704 = vector.broadcast %cst_314 : f32 to vector<2x32xf32>
    %705 = arith.subf %704, %703 : vector<2x32xf32>
    %706 = math.exp %705 : vector<2x32xf32>
    %cst_315 = arith.constant 1.000000e+00 : f32
    %707 = vector.broadcast %cst_315 : f32 to vector<2x32xf32>
    %708 = arith.addf %707, %706 : vector<2x32xf32>
    %cst_316 = arith.constant 1.000000e+00 : f32
    %709 = vector.broadcast %cst_316 : f32 to vector<2x32xf32>
    %710 = arith.divf %709, %708 : vector<2x32xf32>
    %711 = arith.mulf %700, %654 : vector<2x32xf32>
    %712 = arith.mulf %692, %702 : vector<2x32xf32>
    %713 = arith.addf %711, %712 : vector<2x32xf32>
    %714 = math.tanh %713 : vector<2x32xf32>
    %715 = arith.mulf %710, %714 : vector<2x32xf32>
    %716 = vector.broadcast %678 : vector<2x1xf32> to vector<2x32xf32>
    %717 = arith.mulf %716, %715 : vector<2x32xf32>
    %718 = vector.broadcast %678 : vector<2x1xf32> to vector<2x32xf32>
    %719 = arith.mulf %718, %713 : vector<2x32xf32>
    %c0_317 = arith.constant 0 : index
    %c0_318 = arith.constant 0 : index
    %720 = vector.load %arg7[%c0_317, %c0_318] : memref<32x256xf32, #tpu.memory_space<vmem>>, vector<32x256xf32>
    %cst_319 = arith.constant dense<0.000000e+00> : vector<2x256xf32>
    %721 = tpu.matmul %717, %720, %cst_319 {dimension_numbers = #tpu.dot_dimension_numbers<[1], [0], [0], [1], [0, 0, 1, 1], [], []>} : vector<2x32xf32>, vector<32x256xf32>, vector<2x256xf32> -> vector<2x256xf32>
    %722 = arith.index_cast %c3_i32_300 : i32 to index
    %c0_320 = arith.constant 0 : index
    %c0_321 = arith.constant 0 : index
    %723 = vector.load %arg13[%722, %c0_320, %c0_321] : memref<8x2x32xf32, #tpu.memory_space<vmem>>, vector<1x2x32xf32>
    %724 = vector.shape_cast %723 : vector<1x2x32xf32> to vector<2x32xf32>
    %c0_322 = arith.constant 0 : index
    %c0_323 = arith.constant 0 : index
    %725 = vector.load %arg8[%c0_322, %c0_323] : memref<32x256xf32, #tpu.memory_space<vmem>>, vector<32x256xf32>
    %cst_324 = arith.constant dense<0.000000e+00> : vector<2x256xf32>
    %726 = tpu.matmul %724, %725, %cst_324 {dimension_numbers = #tpu.dot_dimension_numbers<[1], [0], [0], [1], [0, 0, 1, 1], [], []>} : vector<2x32xf32>, vector<32x256xf32>, vector<2x256xf32> -> vector<2x256xf32>
    %727 = arith.addf %721, %726 : vector<2x256xf32>
    %c0_325 = arith.constant 0 : index
    %c0_326 = arith.constant 0 : index
    %728 = vector.load %arg9[%c0_325, %c0_326] : memref<1x256xf32, #tpu.memory_space<vmem>>, vector<1x256xf32>
    %729 = vector.broadcast %728 : vector<1x256xf32> to vector<2x256xf32>
    %730 = arith.addf %727, %729 : vector<2x256xf32>
    %731 = vector.extract_strided_slice %730 {offsets = [0, 0], sizes = [2, 128], strides = [1, 1]} : vector<2x256xf32> to vector<2x128xf32>
    %732 = arith.index_cast %c3_i32_300 : i32 to index
    %c0_327 = arith.constant 0 : index
    %c0_328 = arith.constant 0 : index
    %733 = vector.load %arg10[%732, %c0_327, %c0_328] : memref<8x2x128xf32, #tpu.memory_space<vmem>>, vector<1x2x128xf32>
    %734 = vector.shape_cast %733 : vector<1x2x128xf32> to vector<2x128xf32>
    %735 = vector.shape_cast %731 : vector<2x128xf32> to vector<1x2x128xf32>
    tpu.vector_store %arg10[%732, %c0_327, %c0_328], %735 {strides = array<i32>} : memref<8x2x128xf32, #tpu.memory_space<vmem>>, vector<1x2x128xf32>,
    %736 = vector.extract_strided_slice %730 {offsets = [0, 128], sizes = [2, 128], strides = [1, 1]} : vector<2x256xf32> to vector<2x128xf32>
    %737 = arith.index_cast %c3_i32_300 : i32 to index
    %c0_329 = arith.constant 0 : index
    %c0_330 = arith.constant 0 : index
    %738 = vector.load %arg11[%737, %c0_329, %c0_330] : memref<8x2x128xf32, #tpu.memory_space<vmem>>, vector<1x2x128xf32>
    %739 = vector.shape_cast %738 : vector<1x2x128xf32> to vector<2x128xf32>
    %740 = vector.shape_cast %736 : vector<2x128xf32> to vector<1x2x128xf32>
    tpu.vector_store %arg11[%737, %c0_329, %c0_330], %740 {strides = array<i32>} : memref<8x2x128xf32, #tpu.memory_space<vmem>>, vector<1x2x128xf32>,
    %c4_i32_331 = arith.constant 4 : i32
    %741 = arith.index_cast %c4_i32_331 : i32 to index
    %c0_332 = arith.constant 0 : index
    %c0_333 = arith.constant 0 : index
    %742 = vector.load %arg2[%741, %c0_332, %c0_333] : memref<8x2x1xf32, #tpu.memory_space<vmem>>, vector<1x2x1xf32>
    %743 = vector.shape_cast %742 : vector<1x2x1xf32> to vector<2x1xf32>
    %744 = arith.index_cast %c4_i32_331 : i32 to index
    %c0_334 = arith.constant 0 : index
    %c0_335 = arith.constant 0 : index
    %745 = vector.load %arg12[%744, %c0_334, %c0_335] : memref<8x2x128xf32, #tpu.memory_space<vmem>>, vector<1x2x128xf32>
    %746 = vector.shape_cast %745 : vector<1x2x128xf32> to vector<2x128xf32>
    %c0_336 = arith.constant 0 : index
    %c0_337 = arith.constant 0 : index
    %747 = vector.load %arg5[%c0_336, %c0_337] : memref<32x128xf32, #tpu.memory_space<vmem>>, vector<32x128xf32>
    %cst_338 = arith.constant dense<0.000000e+00> : vector<2x128xf32>
    %748 = tpu.matmul %717, %747, %cst_338 {dimension_numbers = #tpu.dot_dimension_numbers<[1], [0], [0], [1], [0, 0, 1, 1], [], []>} : vector<2x32xf32>, vector<32x128xf32>, vector<2x128xf32> -> vector<2x128xf32>
    %749 = arith.addf %746, %748 : vector<2x128xf32>
    %750 = vector.extract_strided_slice %749 {offsets = [0, 0], sizes = [2, 32], strides = [1, 1]} : vector<2x128xf32> to vector<2x32xf32>
    %cst_339 = arith.constant 0.000000e+00 : f32
    %751 = vector.broadcast %cst_339 : f32 to vector<2x32xf32>
    %752 = arith.subf %751, %750 : vector<2x32xf32>
    %753 = math.exp %752 : vector<2x32xf32>
    %cst_340 = arith.constant 1.000000e+00 : f32
    %754 = vector.broadcast %cst_340 : f32 to vector<2x32xf32>
    %755 = arith.addf %754, %753 : vector<2x32xf32>
    %cst_341 = arith.constant 1.000000e+00 : f32
    %756 = vector.broadcast %cst_341 : f32 to vector<2x32xf32>
    %757 = arith.divf %756, %755 : vector<2x32xf32>
    %758 = vector.extract_strided_slice %749 {offsets = [0, 32], sizes = [2, 32], strides = [1, 1]} : vector<2x128xf32> to vector<2x32xf32>
    %cst_342 = arith.constant 0.000000e+00 : f32
    %759 = vector.broadcast %cst_342 : f32 to vector<2x32xf32>
    %760 = arith.subf %759, %758 : vector<2x32xf32>
    %761 = math.exp %760 : vector<2x32xf32>
    %cst_343 = arith.constant 1.000000e+00 : f32
    %762 = vector.broadcast %cst_343 : f32 to vector<2x32xf32>
    %763 = arith.addf %762, %761 : vector<2x32xf32>
    %cst_344 = arith.constant 1.000000e+00 : f32
    %764 = vector.broadcast %cst_344 : f32 to vector<2x32xf32>
    %765 = arith.divf %764, %763 : vector<2x32xf32>
    %766 = vector.extract_strided_slice %749 {offsets = [0, 64], sizes = [2, 32], strides = [1, 1]} : vector<2x128xf32> to vector<2x32xf32>
    %767 = math.tanh %766 : vector<2x32xf32>
    %768 = vector.extract_strided_slice %749 {offsets = [0, 96], sizes = [2, 32], strides = [1, 1]} : vector<2x128xf32> to vector<2x32xf32>
    %cst_345 = arith.constant 0.000000e+00 : f32
    %769 = vector.broadcast %cst_345 : f32 to vector<2x32xf32>
    %770 = arith.subf %769, %768 : vector<2x32xf32>
    %771 = math.exp %770 : vector<2x32xf32>
    %cst_346 = arith.constant 1.000000e+00 : f32
    %772 = vector.broadcast %cst_346 : f32 to vector<2x32xf32>
    %773 = arith.addf %772, %771 : vector<2x32xf32>
    %cst_347 = arith.constant 1.000000e+00 : f32
    %774 = vector.broadcast %cst_347 : f32 to vector<2x32xf32>
    %775 = arith.divf %774, %773 : vector<2x32xf32>
    %776 = arith.mulf %765, %719 : vector<2x32xf32>
    %777 = arith.mulf %757, %767 : vector<2x32xf32>
    %778 = arith.addf %776, %777 : vector<2x32xf32>
    %779 = math.tanh %778 : vector<2x32xf32>
    %780 = arith.mulf %775, %779 : vector<2x32xf32>
    %781 = vector.broadcast %743 : vector<2x1xf32> to vector<2x32xf32>
    %782 = arith.mulf %781, %780 : vector<2x32xf32>
    %783 = vector.broadcast %743 : vector<2x1xf32> to vector<2x32xf32>
    %784 = arith.mulf %783, %778 : vector<2x32xf32>
    %c0_348 = arith.constant 0 : index
    %c0_349 = arith.constant 0 : index
    %785 = vector.load %arg7[%c0_348, %c0_349] : memref<32x256xf32, #tpu.memory_space<vmem>>, vector<32x256xf32>
    %cst_350 = arith.constant dense<0.000000e+00> : vector<2x256xf32>
    %786 = tpu.matmul %782, %785, %cst_350 {dimension_numbers = #tpu.dot_dimension_numbers<[1], [0], [0], [1], [0, 0, 1, 1], [], []>} : vector<2x32xf32>, vector<32x256xf32>, vector<2x256xf32> -> vector<2x256xf32>
    %787 = arith.index_cast %c4_i32_331 : i32 to index
    %c0_351 = arith.constant 0 : index
    %c0_352 = arith.constant 0 : index
    %788 = vector.load %arg13[%787, %c0_351, %c0_352] : memref<8x2x32xf32, #tpu.memory_space<vmem>>, vector<1x2x32xf32>
    %789 = vector.shape_cast %788 : vector<1x2x32xf32> to vector<2x32xf32>
    %c0_353 = arith.constant 0 : index
    %c0_354 = arith.constant 0 : index
    %790 = vector.load %arg8[%c0_353, %c0_354] : memref<32x256xf32, #tpu.memory_space<vmem>>, vector<32x256xf32>
    %cst_355 = arith.constant dense<0.000000e+00> : vector<2x256xf32>
    %791 = tpu.matmul %789, %790, %cst_355 {dimension_numbers = #tpu.dot_dimension_numbers<[1], [0], [0], [1], [0, 0, 1, 1], [], []>} : vector<2x32xf32>, vector<32x256xf32>, vector<2x256xf32> -> vector<2x256xf32>
    %792 = arith.addf %786, %791 : vector<2x256xf32>
    %c0_356 = arith.constant 0 : index
    %c0_357 = arith.constant 0 : index
    %793 = vector.load %arg9[%c0_356, %c0_357] : memref<1x256xf32, #tpu.memory_space<vmem>>, vector<1x256xf32>
    %794 = vector.broadcast %793 : vector<1x256xf32> to vector<2x256xf32>
    %795 = arith.addf %792, %794 : vector<2x256xf32>
    %796 = vector.extract_strided_slice %795 {offsets = [0, 0], sizes = [2, 128], strides = [1, 1]} : vector<2x256xf32> to vector<2x128xf32>
    %797 = arith.index_cast %c4_i32_331 : i32 to index
    %c0_358 = arith.constant 0 : index
    %c0_359 = arith.constant 0 : index
    %798 = vector.load %arg10[%797, %c0_358, %c0_359] : memref<8x2x128xf32, #tpu.memory_space<vmem>>, vector<1x2x128xf32>
    %799 = vector.shape_cast %798 : vector<1x2x128xf32> to vector<2x128xf32>
    %800 = vector.shape_cast %796 : vector<2x128xf32> to vector<1x2x128xf32>
    tpu.vector_store %arg10[%797, %c0_358, %c0_359], %800 {strides = array<i32>} : memref<8x2x128xf32, #tpu.memory_space<vmem>>, vector<1x2x128xf32>,
    %801 = vector.extract_strided_slice %795 {offsets = [0, 128], sizes = [2, 128], strides = [1, 1]} : vector<2x256xf32> to vector<2x128xf32>
    %802 = arith.index_cast %c4_i32_331 : i32 to index
    %c0_360 = arith.constant 0 : index
    %c0_361 = arith.constant 0 : index
    %803 = vector.load %arg11[%802, %c0_360, %c0_361] : memref<8x2x128xf32, #tpu.memory_space<vmem>>, vector<1x2x128xf32>
    %804 = vector.shape_cast %803 : vector<1x2x128xf32> to vector<2x128xf32>
    %805 = vector.shape_cast %801 : vector<2x128xf32> to vector<1x2x128xf32>
    tpu.vector_store %arg11[%802, %c0_360, %c0_361], %805 {strides = array<i32>} : memref<8x2x128xf32, #tpu.memory_space<vmem>>, vector<1x2x128xf32>,
    %c5_i32_362 = arith.constant 5 : i32
    %806 = arith.index_cast %c5_i32_362 : i32 to index
    %c0_363 = arith.constant 0 : index
    %c0_364 = arith.constant 0 : index
    %807 = vector.load %arg2[%806, %c0_363, %c0_364] : memref<8x2x1xf32, #tpu.memory_space<vmem>>, vector<1x2x1xf32>
    %808 = vector.shape_cast %807 : vector<1x2x1xf32> to vector<2x1xf32>
    %809 = arith.index_cast %c5_i32_362 : i32 to index
    %c0_365 = arith.constant 0 : index
    %c0_366 = arith.constant 0 : index
    %810 = vector.load %arg12[%809, %c0_365, %c0_366] : memref<8x2x128xf32, #tpu.memory_space<vmem>>, vector<1x2x128xf32>
    %811 = vector.shape_cast %810 : vector<1x2x128xf32> to vector<2x128xf32>
    %c0_367 = arith.constant 0 : index
    %c0_368 = arith.constant 0 : index
    %812 = vector.load %arg5[%c0_367, %c0_368] : memref<32x128xf32, #tpu.memory_space<vmem>>, vector<32x128xf32>
    %cst_369 = arith.constant dense<0.000000e+00> : vector<2x128xf32>
    %813 = tpu.matmul %782, %812, %cst_369 {dimension_numbers = #tpu.dot_dimension_numbers<[1], [0], [0], [1], [0, 0, 1, 1], [], []>} : vector<2x32xf32>, vector<32x128xf32>, vector<2x128xf32> -> vector<2x128xf32>
    %814 = arith.addf %811, %813 : vector<2x128xf32>
    %815 = vector.extract_strided_slice %814 {offsets = [0, 0], sizes = [2, 32], strides = [1, 1]} : vector<2x128xf32> to vector<2x32xf32>
    %cst_370 = arith.constant 0.000000e+00 : f32
    %816 = vector.broadcast %cst_370 : f32 to vector<2x32xf32>
    %817 = arith.subf %816, %815 : vector<2x32xf32>
    %818 = math.exp %817 : vector<2x32xf32>
    %cst_371 = arith.constant 1.000000e+00 : f32
    %819 = vector.broadcast %cst_371 : f32 to vector<2x32xf32>
    %820 = arith.addf %819, %818 : vector<2x32xf32>
    %cst_372 = arith.constant 1.000000e+00 : f32
    %821 = vector.broadcast %cst_372 : f32 to vector<2x32xf32>
    %822 = arith.divf %821, %820 : vector<2x32xf32>
    %823 = vector.extract_strided_slice %814 {offsets = [0, 32], sizes = [2, 32], strides = [1, 1]} : vector<2x128xf32> to vector<2x32xf32>
    %cst_373 = arith.constant 0.000000e+00 : f32
    %824 = vector.broadcast %cst_373 : f32 to vector<2x32xf32>
    %825 = arith.subf %824, %823 : vector<2x32xf32>
    %826 = math.exp %825 : vector<2x32xf32>
    %cst_374 = arith.constant 1.000000e+00 : f32
    %827 = vector.broadcast %cst_374 : f32 to vector<2x32xf32>
    %828 = arith.addf %827, %826 : vector<2x32xf32>
    %cst_375 = arith.constant 1.000000e+00 : f32
    %829 = vector.broadcast %cst_375 : f32 to vector<2x32xf32>
    %830 = arith.divf %829, %828 : vector<2x32xf32>
    %831 = vector.extract_strided_slice %814 {offsets = [0, 64], sizes = [2, 32], strides = [1, 1]} : vector<2x128xf32> to vector<2x32xf32>
    %832 = math.tanh %831 : vector<2x32xf32>
    %833 = vector.extract_strided_slice %814 {offsets = [0, 96], sizes = [2, 32], strides = [1, 1]} : vector<2x128xf32> to vector<2x32xf32>
    %cst_376 = arith.constant 0.000000e+00 : f32
    %834 = vector.broadcast %cst_376 : f32 to vector<2x32xf32>
    %835 = arith.subf %834, %833 : vector<2x32xf32>
    %836 = math.exp %835 : vector<2x32xf32>
    %cst_377 = arith.constant 1.000000e+00 : f32
    %837 = vector.broadcast %cst_377 : f32 to vector<2x32xf32>
    %838 = arith.addf %837, %836 : vector<2x32xf32>
    %cst_378 = arith.constant 1.000000e+00 : f32
    %839 = vector.broadcast %cst_378 : f32 to vector<2x32xf32>
    %840 = arith.divf %839, %838 : vector<2x32xf32>
    %841 = arith.mulf %830, %784 : vector<2x32xf32>
    %842 = arith.mulf %822, %832 : vector<2x32xf32>
    %843 = arith.addf %841, %842 : vector<2x32xf32>
    %844 = math.tanh %843 : vector<2x32xf32>
    %845 = arith.mulf %840, %844 : vector<2x32xf32>
    %846 = vector.broadcast %808 : vector<2x1xf32> to vector<2x32xf32>
    %847 = arith.mulf %846, %845 : vector<2x32xf32>
    %848 = vector.broadcast %808 : vector<2x1xf32> to vector<2x32xf32>
    %849 = arith.mulf %848, %843 : vector<2x32xf32>
    %c0_379 = arith.constant 0 : index
    %c0_380 = arith.constant 0 : index
    %850 = vector.load %arg7[%c0_379, %c0_380] : memref<32x256xf32, #tpu.memory_space<vmem>>, vector<32x256xf32>
    %cst_381 = arith.constant dense<0.000000e+00> : vector<2x256xf32>
    %851 = tpu.matmul %847, %850, %cst_381 {dimension_numbers = #tpu.dot_dimension_numbers<[1], [0], [0], [1], [0, 0, 1, 1], [], []>} : vector<2x32xf32>, vector<32x256xf32>, vector<2x256xf32> -> vector<2x256xf32>
    %852 = arith.index_cast %c5_i32_362 : i32 to index
    %c0_382 = arith.constant 0 : index
    %c0_383 = arith.constant 0 : index
    %853 = vector.load %arg13[%852, %c0_382, %c0_383] : memref<8x2x32xf32, #tpu.memory_space<vmem>>, vector<1x2x32xf32>
    %854 = vector.shape_cast %853 : vector<1x2x32xf32> to vector<2x32xf32>
    %c0_384 = arith.constant 0 : index
    %c0_385 = arith.constant 0 : index
    %855 = vector.load %arg8[%c0_384, %c0_385] : memref<32x256xf32, #tpu.memory_space<vmem>>, vector<32x256xf32>
    %cst_386 = arith.constant dense<0.000000e+00> : vector<2x256xf32>
    %856 = tpu.matmul %854, %855, %cst_386 {dimension_numbers = #tpu.dot_dimension_numbers<[1], [0], [0], [1], [0, 0, 1, 1], [], []>} : vector<2x32xf32>, vector<32x256xf32>, vector<2x256xf32> -> vector<2x256xf32>
    %857 = arith.addf %851, %856 : vector<2x256xf32>
    %c0_387 = arith.constant 0 : index
    %c0_388 = arith.constant 0 : index
    %858 = vector.load %arg9[%c0_387, %c0_388] : memref<1x256xf32, #tpu.memory_space<vmem>>, vector<1x256xf32>
    %859 = vector.broadcast %858 : vector<1x256xf32> to vector<2x256xf32>
    %860 = arith.addf %857, %859 : vector<2x256xf32>
    %861 = vector.extract_strided_slice %860 {offsets = [0, 0], sizes = [2, 128], strides = [1, 1]} : vector<2x256xf32> to vector<2x128xf32>
    %862 = arith.index_cast %c5_i32_362 : i32 to index
    %c0_389 = arith.constant 0 : index
    %c0_390 = arith.constant 0 : index
    %863 = vector.load %arg10[%862, %c0_389, %c0_390] : memref<8x2x128xf32, #tpu.memory_space<vmem>>, vector<1x2x128xf32>
    %864 = vector.shape_cast %863 : vector<1x2x128xf32> to vector<2x128xf32>
    %865 = vector.shape_cast %861 : vector<2x128xf32> to vector<1x2x128xf32>
    tpu.vector_store %arg10[%862, %c0_389, %c0_390], %865 {strides = array<i32>} : memref<8x2x128xf32, #tpu.memory_space<vmem>>, vector<1x2x128xf32>,
    %866 = vector.extract_strided_slice %860 {offsets = [0, 128], sizes = [2, 128], strides = [1, 1]} : vector<2x256xf32> to vector<2x128xf32>
    %867 = arith.index_cast %c5_i32_362 : i32 to index
    %c0_391 = arith.constant 0 : index
    %c0_392 = arith.constant 0 : index
    %868 = vector.load %arg11[%867, %c0_391, %c0_392] : memref<8x2x128xf32, #tpu.memory_space<vmem>>, vector<1x2x128xf32>
    %869 = vector.shape_cast %868 : vector<1x2x128xf32> to vector<2x128xf32>
    %870 = vector.shape_cast %866 : vector<2x128xf32> to vector<1x2x128xf32>
    tpu.vector_store %arg11[%867, %c0_391, %c0_392], %870 {strides = array<i32>} : memref<8x2x128xf32, #tpu.memory_space<vmem>>, vector<1x2x128xf32>,
    %c6_i32_393 = arith.constant 6 : i32
    %871 = arith.index_cast %c6_i32_393 : i32 to index
    %c0_394 = arith.constant 0 : index
    %c0_395 = arith.constant 0 : index
    %872 = vector.load %arg2[%871, %c0_394, %c0_395] : memref<8x2x1xf32, #tpu.memory_space<vmem>>, vector<1x2x1xf32>
    %873 = vector.shape_cast %872 : vector<1x2x1xf32> to vector<2x1xf32>
    %874 = arith.index_cast %c6_i32_393 : i32 to index
    %c0_396 = arith.constant 0 : index
    %c0_397 = arith.constant 0 : index
    %875 = vector.load %arg12[%874, %c0_396, %c0_397] : memref<8x2x128xf32, #tpu.memory_space<vmem>>, vector<1x2x128xf32>
    %876 = vector.shape_cast %875 : vector<1x2x128xf32> to vector<2x128xf32>
    %c0_398 = arith.constant 0 : index
    %c0_399 = arith.constant 0 : index
    %877 = vector.load %arg5[%c0_398, %c0_399] : memref<32x128xf32, #tpu.memory_space<vmem>>, vector<32x128xf32>
    %cst_400 = arith.constant dense<0.000000e+00> : vector<2x128xf32>
    %878 = tpu.matmul %847, %877, %cst_400 {dimension_numbers = #tpu.dot_dimension_numbers<[1], [0], [0], [1], [0, 0, 1, 1], [], []>} : vector<2x32xf32>, vector<32x128xf32>, vector<2x128xf32> -> vector<2x128xf32>
    %879 = arith.addf %876, %878 : vector<2x128xf32>
    %880 = vector.extract_strided_slice %879 {offsets = [0, 0], sizes = [2, 32], strides = [1, 1]} : vector<2x128xf32> to vector<2x32xf32>
    %cst_401 = arith.constant 0.000000e+00 : f32
    %881 = vector.broadcast %cst_401 : f32 to vector<2x32xf32>
    %882 = arith.subf %881, %880 : vector<2x32xf32>
    %883 = math.exp %882 : vector<2x32xf32>
    %cst_402 = arith.constant 1.000000e+00 : f32
    %884 = vector.broadcast %cst_402 : f32 to vector<2x32xf32>
    %885 = arith.addf %884, %883 : vector<2x32xf32>
    %cst_403 = arith.constant 1.000000e+00 : f32
    %886 = vector.broadcast %cst_403 : f32 to vector<2x32xf32>
    %887 = arith.divf %886, %885 : vector<2x32xf32>
    %888 = vector.extract_strided_slice %879 {offsets = [0, 32], sizes = [2, 32], strides = [1, 1]} : vector<2x128xf32> to vector<2x32xf32>
    %cst_404 = arith.constant 0.000000e+00 : f32
    %889 = vector.broadcast %cst_404 : f32 to vector<2x32xf32>
    %890 = arith.subf %889, %888 : vector<2x32xf32>
    %891 = math.exp %890 : vector<2x32xf32>
    %cst_405 = arith.constant 1.000000e+00 : f32
    %892 = vector.broadcast %cst_405 : f32 to vector<2x32xf32>
    %893 = arith.addf %892, %891 : vector<2x32xf32>
    %cst_406 = arith.constant 1.000000e+00 : f32
    %894 = vector.broadcast %cst_406 : f32 to vector<2x32xf32>
    %895 = arith.divf %894, %893 : vector<2x32xf32>
    %896 = vector.extract_strided_slice %879 {offsets = [0, 64], sizes = [2, 32], strides = [1, 1]} : vector<2x128xf32> to vector<2x32xf32>
    %897 = math.tanh %896 : vector<2x32xf32>
    %898 = vector.extract_strided_slice %879 {offsets = [0, 96], sizes = [2, 32], strides = [1, 1]} : vector<2x128xf32> to vector<2x32xf32>
    %cst_407 = arith.constant 0.000000e+00 : f32
    %899 = vector.broadcast %cst_407 : f32 to vector<2x32xf32>
    %900 = arith.subf %899, %898 : vector<2x32xf32>
    %901 = math.exp %900 : vector<2x32xf32>
    %cst_408 = arith.constant 1.000000e+00 : f32
    %902 = vector.broadcast %cst_408 : f32 to vector<2x32xf32>
    %903 = arith.addf %902, %901 : vector<2x32xf32>
    %cst_409 = arith.constant 1.000000e+00 : f32
    %904 = vector.broadcast %cst_409 : f32 to vector<2x32xf32>
    %905 = arith.divf %904, %903 : vector<2x32xf32>
    %906 = arith.mulf %895, %849 : vector<2x32xf32>
    %907 = arith.mulf %887, %897 : vector<2x32xf32>
    %908 = arith.addf %906, %907 : vector<2x32xf32>
    %909 = math.tanh %908 : vector<2x32xf32>
    %910 = arith.mulf %905, %909 : vector<2x32xf32>
    %911 = vector.broadcast %873 : vector<2x1xf32> to vector<2x32xf32>
    %912 = arith.mulf %911, %910 : vector<2x32xf32>
    %913 = vector.broadcast %873 : vector<2x1xf32> to vector<2x32xf32>
    %914 = arith.mulf %913, %908 : vector<2x32xf32>
    %c0_410 = arith.constant 0 : index
    %c0_411 = arith.constant 0 : index
    %915 = vector.load %arg7[%c0_410, %c0_411] : memref<32x256xf32, #tpu.memory_space<vmem>>, vector<32x256xf32>
    %cst_412 = arith.constant dense<0.000000e+00> : vector<2x256xf32>
    %916 = tpu.matmul %912, %915, %cst_412 {dimension_numbers = #tpu.dot_dimension_numbers<[1], [0], [0], [1], [0, 0, 1, 1], [], []>} : vector<2x32xf32>, vector<32x256xf32>, vector<2x256xf32> -> vector<2x256xf32>
    %917 = arith.index_cast %c6_i32_393 : i32 to index
    %c0_413 = arith.constant 0 : index
    %c0_414 = arith.constant 0 : index
    %918 = vector.load %arg13[%917, %c0_413, %c0_414] : memref<8x2x32xf32, #tpu.memory_space<vmem>>, vector<1x2x32xf32>
    %919 = vector.shape_cast %918 : vector<1x2x32xf32> to vector<2x32xf32>
    %c0_415 = arith.constant 0 : index
    %c0_416 = arith.constant 0 : index
    %920 = vector.load %arg8[%c0_415, %c0_416] : memref<32x256xf32, #tpu.memory_space<vmem>>, vector<32x256xf32>
    %cst_417 = arith.constant dense<0.000000e+00> : vector<2x256xf32>
    %921 = tpu.matmul %919, %920, %cst_417 {dimension_numbers = #tpu.dot_dimension_numbers<[1], [0], [0], [1], [0, 0, 1, 1], [], []>} : vector<2x32xf32>, vector<32x256xf32>, vector<2x256xf32> -> vector<2x256xf32>
    %922 = arith.addf %916, %921 : vector<2x256xf32>
    %c0_418 = arith.constant 0 : index
    %c0_419 = arith.constant 0 : index
    %923 = vector.load %arg9[%c0_418, %c0_419] : memref<1x256xf32, #tpu.memory_space<vmem>>, vector<1x256xf32>
    %924 = vector.broadcast %923 : vector<1x256xf32> to vector<2x256xf32>
    %925 = arith.addf %922, %924 : vector<2x256xf32>
    %926 = vector.extract_strided_slice %925 {offsets = [0, 0], sizes = [2, 128], strides = [1, 1]} : vector<2x256xf32> to vector<2x128xf32>
    %927 = arith.index_cast %c6_i32_393 : i32 to index
    %c0_420 = arith.constant 0 : index
    %c0_421 = arith.constant 0 : index
    %928 = vector.load %arg10[%927, %c0_420, %c0_421] : memref<8x2x128xf32, #tpu.memory_space<vmem>>, vector<1x2x128xf32>
    %929 = vector.shape_cast %928 : vector<1x2x128xf32> to vector<2x128xf32>
    %930 = vector.shape_cast %926 : vector<2x128xf32> to vector<1x2x128xf32>
    tpu.vector_store %arg10[%927, %c0_420, %c0_421], %930 {strides = array<i32>} : memref<8x2x128xf32, #tpu.memory_space<vmem>>, vector<1x2x128xf32>,
    %931 = vector.extract_strided_slice %925 {offsets = [0, 128], sizes = [2, 128], strides = [1, 1]} : vector<2x256xf32> to vector<2x128xf32>
    %932 = arith.index_cast %c6_i32_393 : i32 to index
    %c0_422 = arith.constant 0 : index
    %c0_423 = arith.constant 0 : index
    %933 = vector.load %arg11[%932, %c0_422, %c0_423] : memref<8x2x128xf32, #tpu.memory_space<vmem>>, vector<1x2x128xf32>
    %934 = vector.shape_cast %933 : vector<1x2x128xf32> to vector<2x128xf32>
    %935 = vector.shape_cast %931 : vector<2x128xf32> to vector<1x2x128xf32>
    tpu.vector_store %arg11[%932, %c0_422, %c0_423], %935 {strides = array<i32>} : memref<8x2x128xf32, #tpu.memory_space<vmem>>, vector<1x2x128xf32>,
    %c7_i32_424 = arith.constant 7 : i32
    %936 = arith.index_cast %c7_i32_424 : i32 to index
    %c0_425 = arith.constant 0 : index
    %c0_426 = arith.constant 0 : index
    %937 = vector.load %arg2[%936, %c0_425, %c0_426] : memref<8x2x1xf32, #tpu.memory_space<vmem>>, vector<1x2x1xf32>
    %938 = vector.shape_cast %937 : vector<1x2x1xf32> to vector<2x1xf32>
    %939 = arith.index_cast %c7_i32_424 : i32 to index
    %c0_427 = arith.constant 0 : index
    %c0_428 = arith.constant 0 : index
    %940 = vector.load %arg12[%939, %c0_427, %c0_428] : memref<8x2x128xf32, #tpu.memory_space<vmem>>, vector<1x2x128xf32>
    %941 = vector.shape_cast %940 : vector<1x2x128xf32> to vector<2x128xf32>
    %c0_429 = arith.constant 0 : index
    %c0_430 = arith.constant 0 : index
    %942 = vector.load %arg5[%c0_429, %c0_430] : memref<32x128xf32, #tpu.memory_space<vmem>>, vector<32x128xf32>
    %cst_431 = arith.constant dense<0.000000e+00> : vector<2x128xf32>
    %943 = tpu.matmul %912, %942, %cst_431 {dimension_numbers = #tpu.dot_dimension_numbers<[1], [0], [0], [1], [0, 0, 1, 1], [], []>} : vector<2x32xf32>, vector<32x128xf32>, vector<2x128xf32> -> vector<2x128xf32>
    %944 = arith.addf %941, %943 : vector<2x128xf32>
    %945 = vector.extract_strided_slice %944 {offsets = [0, 0], sizes = [2, 32], strides = [1, 1]} : vector<2x128xf32> to vector<2x32xf32>
    %cst_432 = arith.constant 0.000000e+00 : f32
    %946 = vector.broadcast %cst_432 : f32 to vector<2x32xf32>
    %947 = arith.subf %946, %945 : vector<2x32xf32>
    %948 = math.exp %947 : vector<2x32xf32>
    %cst_433 = arith.constant 1.000000e+00 : f32
    %949 = vector.broadcast %cst_433 : f32 to vector<2x32xf32>
    %950 = arith.addf %949, %948 : vector<2x32xf32>
    %cst_434 = arith.constant 1.000000e+00 : f32
    %951 = vector.broadcast %cst_434 : f32 to vector<2x32xf32>
    %952 = arith.divf %951, %950 : vector<2x32xf32>
    %953 = vector.extract_strided_slice %944 {offsets = [0, 32], sizes = [2, 32], strides = [1, 1]} : vector<2x128xf32> to vector<2x32xf32>
    %cst_435 = arith.constant 0.000000e+00 : f32
    %954 = vector.broadcast %cst_435 : f32 to vector<2x32xf32>
    %955 = arith.subf %954, %953 : vector<2x32xf32>
    %956 = math.exp %955 : vector<2x32xf32>
    %cst_436 = arith.constant 1.000000e+00 : f32
    %957 = vector.broadcast %cst_436 : f32 to vector<2x32xf32>
    %958 = arith.addf %957, %956 : vector<2x32xf32>
    %cst_437 = arith.constant 1.000000e+00 : f32
    %959 = vector.broadcast %cst_437 : f32 to vector<2x32xf32>
    %960 = arith.divf %959, %958 : vector<2x32xf32>
    %961 = vector.extract_strided_slice %944 {offsets = [0, 64], sizes = [2, 32], strides = [1, 1]} : vector<2x128xf32> to vector<2x32xf32>
    %962 = math.tanh %961 : vector<2x32xf32>
    %963 = vector.extract_strided_slice %944 {offsets = [0, 96], sizes = [2, 32], strides = [1, 1]} : vector<2x128xf32> to vector<2x32xf32>
    %cst_438 = arith.constant 0.000000e+00 : f32
    %964 = vector.broadcast %cst_438 : f32 to vector<2x32xf32>
    %965 = arith.subf %964, %963 : vector<2x32xf32>
    %966 = math.exp %965 : vector<2x32xf32>
    %cst_439 = arith.constant 1.000000e+00 : f32
    %967 = vector.broadcast %cst_439 : f32 to vector<2x32xf32>
    %968 = arith.addf %967, %966 : vector<2x32xf32>
    %cst_440 = arith.constant 1.000000e+00 : f32
    %969 = vector.broadcast %cst_440 : f32 to vector<2x32xf32>
    %970 = arith.divf %969, %968 : vector<2x32xf32>
    %971 = arith.mulf %960, %914 : vector<2x32xf32>
    %972 = arith.mulf %952, %962 : vector<2x32xf32>
    %973 = arith.addf %971, %972 : vector<2x32xf32>
    %974 = math.tanh %973 : vector<2x32xf32>
    %975 = arith.mulf %970, %974 : vector<2x32xf32>
    %976 = vector.broadcast %938 : vector<2x1xf32> to vector<2x32xf32>
    %977 = arith.mulf %976, %975 : vector<2x32xf32>
    %978 = vector.broadcast %938 : vector<2x1xf32> to vector<2x32xf32>
    %979 = arith.mulf %978, %973 : vector<2x32xf32>
    %c0_441 = arith.constant 0 : index
    %c0_442 = arith.constant 0 : index
    %980 = vector.load %arg7[%c0_441, %c0_442] : memref<32x256xf32, #tpu.memory_space<vmem>>, vector<32x256xf32>
    %cst_443 = arith.constant dense<0.000000e+00> : vector<2x256xf32>
    %981 = tpu.matmul %977, %980, %cst_443 {dimension_numbers = #tpu.dot_dimension_numbers<[1], [0], [0], [1], [0, 0, 1, 1], [], []>} : vector<2x32xf32>, vector<32x256xf32>, vector<2x256xf32> -> vector<2x256xf32>
    %982 = arith.index_cast %c7_i32_424 : i32 to index
    %c0_444 = arith.constant 0 : index
    %c0_445 = arith.constant 0 : index
    %983 = vector.load %arg13[%982, %c0_444, %c0_445] : memref<8x2x32xf32, #tpu.memory_space<vmem>>, vector<1x2x32xf32>
    %984 = vector.shape_cast %983 : vector<1x2x32xf32> to vector<2x32xf32>
    %c0_446 = arith.constant 0 : index
    %c0_447 = arith.constant 0 : index
    %985 = vector.load %arg8[%c0_446, %c0_447] : memref<32x256xf32, #tpu.memory_space<vmem>>, vector<32x256xf32>
    %cst_448 = arith.constant dense<0.000000e+00> : vector<2x256xf32>
    %986 = tpu.matmul %984, %985, %cst_448 {dimension_numbers = #tpu.dot_dimension_numbers<[1], [0], [0], [1], [0, 0, 1, 1], [], []>} : vector<2x32xf32>, vector<32x256xf32>, vector<2x256xf32> -> vector<2x256xf32>
    %987 = arith.addf %981, %986 : vector<2x256xf32>
    %c0_449 = arith.constant 0 : index
    %c0_450 = arith.constant 0 : index
    %988 = vector.load %arg9[%c0_449, %c0_450] : memref<1x256xf32, #tpu.memory_space<vmem>>, vector<1x256xf32>
    %989 = vector.broadcast %988 : vector<1x256xf32> to vector<2x256xf32>
    %990 = arith.addf %987, %989 : vector<2x256xf32>
    %991 = vector.extract_strided_slice %990 {offsets = [0, 0], sizes = [2, 128], strides = [1, 1]} : vector<2x256xf32> to vector<2x128xf32>
    %992 = arith.index_cast %c7_i32_424 : i32 to index
    %c0_451 = arith.constant 0 : index
    %c0_452 = arith.constant 0 : index
    %993 = vector.load %arg10[%992, %c0_451, %c0_452] : memref<8x2x128xf32, #tpu.memory_space<vmem>>, vector<1x2x128xf32>
    %994 = vector.shape_cast %993 : vector<1x2x128xf32> to vector<2x128xf32>
    %995 = vector.shape_cast %991 : vector<2x128xf32> to vector<1x2x128xf32>
    tpu.vector_store %arg10[%992, %c0_451, %c0_452], %995 {strides = array<i32>} : memref<8x2x128xf32, #tpu.memory_space<vmem>>, vector<1x2x128xf32>,
    %996 = vector.extract_strided_slice %990 {offsets = [0, 128], sizes = [2, 128], strides = [1, 1]} : vector<2x256xf32> to vector<2x128xf32>
    %997 = arith.index_cast %c7_i32_424 : i32 to index
    %c0_453 = arith.constant 0 : index
    %c0_454 = arith.constant 0 : index
    %998 = vector.load %arg11[%997, %c0_453, %c0_454] : memref<8x2x128xf32, #tpu.memory_space<vmem>>, vector<1x2x128xf32>
    %999 = vector.shape_cast %998 : vector<1x2x128xf32> to vector<2x128xf32>
    %1000 = vector.shape_cast %996 : vector<2x128xf32> to vector<1x2x128xf32>
    tpu.vector_store %arg11[%997, %c0_453, %c0_454], %1000 {strides = array<i32>} : memref<8x2x128xf32, #tpu.memory_space<vmem>>, vector<1x2x128xf32>,
    %c8_i32_455 = arith.constant 8 : i32
    return
  }
  func.func @transform_0(%arg0: i32) -> (i32, i32, i32) {
    %c0_i32 = arith.constant 0 : i32
    %c0_i32_0 = arith.constant 0 : i32
    %c0_i32_1 = arith.constant 0 : i32
    return %c0_i32, %arg0, %c0_i32_0 : i32, i32, i32
  }
  func.func @transform_1(%arg0: i32) -> (i32, i32, i32) {
    %c0_i32 = arith.constant 0 : i32
    %c0_i32_0 = arith.constant 0 : i32
    %c0_i32_1 = arith.constant 0 : i32
    return %c0_i32, %arg0, %c0_i32_0 : i32, i32, i32
  }
  func.func @transform_2(%arg0: i32) -> (i32, i32) {
    %c0_i32 = arith.constant 0 : i32
    %c0_i32_0 = arith.constant 0 : i32
    %c0_i32_1 = arith.constant 0 : i32
    return %c0_i32, %c0_i32_0 : i32, i32
  }
  func.func @transform_3(%arg0: i32) -> (i32, i32) {
    %c0_i32 = arith.constant 0 : i32
    %c0_i32_0 = arith.constant 0 : i32
    %c0_i32_1 = arith.constant 0 : i32
    return %c0_i32, %c0_i32_0 : i32, i32
  }
  func.func @transform_4(%arg0: i32) -> (i32, i32) {
    %c0_i32 = arith.constant 0 : i32
    %c0_i32_0 = arith.constant 0 : i32
    %c0_i32_1 = arith.constant 0 : i32
    return %c0_i32, %c0_i32_0 : i32, i32
  }
  func.func @transform_5(%arg0: i32) -> (i32, i32) {
    %c0_i32 = arith.constant 0 : i32
    %c0_i32_0 = arith.constant 0 : i32
    %c0_i32_1 = arith.constant 0 : i32
    return %c0_i32, %c0_i32_0 : i32, i32
  }
  func.func @transform_6(%arg0: i32) -> (i32, i32) {
    %c0_i32 = arith.constant 0 : i32
    %c0_i32_0 = arith.constant 0 : i32
    %c0_i32_1 = arith.constant 0 : i32
    return %c0_i32, %c0_i32_0 : i32, i32
  }
  func.func @transform_7(%arg0: i32) -> (i32, i32) {
    %c0_i32 = arith.constant 0 : i32
    %c0_i32_0 = arith.constant 0 : i32
    %c0_i32_1 = arith.constant 0 : i32
    return %c0_i32, %c0_i32_0 : i32, i32
  }
  func.func @transform_8(%arg0: i32) -> (i32, i32) {
    %c0_i32 = arith.constant 0 : i32
    %c0_i32_0 = arith.constant 0 : i32
    %c0_i32_1 = arith.constant 0 : i32
    return %c0_i32, %c0_i32_0 : i32, i32
  }
  func.func @transform_9(%arg0: i32) -> (i32, i32, i32) {
    %c0_i32 = arith.constant 0 : i32
    %c0_i32_0 = arith.constant 0 : i32
    %c0_i32_1 = arith.constant 0 : i32
    return %c0_i32, %arg0, %c0_i32_0 : i32, i32, i32
  }
  func.func @transform_10(%arg0: i32) -> (i32, i32, i32) {
    %c0_i32 = arith.constant 0 : i32
    %c0_i32_0 = arith.constant 0 : i32
    %c0_i32_1 = arith.constant 0 : i32
    return %c0_i32, %arg0, %c0_i32_0 : i32, i32, i32
  }
}

</mosaic_0001>

<llo_original>
// kernel: tpu_custom_call.1
$region0: #{tpu_custom_call.1}
  #allocation0 [shape = 'u32[]', space=smem, size = 0x4, offset = 0x4, fixed_abs, tag = 'smem constant byte address 0x4 - core index']
  #allocation1 [shape = 'u32[144,128]{1,0:T(1,128)}', space=vmem, size = 0x12000, scoped, tag = 'internal scratch']
  #allocation2 [shape = 'f32[8,2,128]{2,1,0:T(2,128)}', space=vmem, size = 0x2000, scoped, tag = 'scratch operand']
  #allocation3 [shape = 'f32[8,2,32]{2,1,0:T(2,128)}', space=vmem, size = 0x2000, scoped, tag = 'scratch operand']
  %s0 = inlined_call_operand.hbm [shape: f32[8,2,300], index: 0, kind: input, shape index: {}]
  %s1 = inlined_call_operand.vmem [shape: f32[8,2,1], index: 1, kind: input, shape index: {}]
  %s2 = inlined_call_operand.hbm [shape: f32[300,256], index: 2, kind: input, shape index: {}]
  %s3 = inlined_call_operand.vmem [shape: f32[1,256], index: 3, kind: input, shape index: {}]
  %s4 = inlined_call_operand.hbm [shape: f32[32,128], index: 4, kind: input, shape index: {}]
  %s5 = inlined_call_operand.hbm [shape: f32[32,128], index: 5, kind: input, shape index: {}]
  %s6 = inlined_call_operand.hbm [shape: f32[32,256], index: 6, kind: input, shape index: {}]
  %s7 = inlined_call_operand.hbm [shape: f32[32,256], index: 7, kind: input, shape index: {}]
  %s8 = inlined_call_operand.vmem [shape: f32[1,256], index: 8, kind: input, shape index: {}]
  %s9 = inlined_call_operand.hbm [shape: f32[8,2,128], index: 9, kind: output, shape index: {0}]
  %s10 = inlined_call_operand.hbm [shape: f32[8,2,128], index: 10, kind: output, shape index: {1}]
  %11 = xla_tuple %s9, %s10
  %s12 = sld [smem:[#allocation0]]
  $region78: #{tpu_custom_call.1} parent=0
    _
  %s14 = ssub.s32 1, %s12
  %s15 = scalar_select 0, %s14, %s12
  $region1: #{tpu_custom_call.1} parent=0
    #allocation4 [shape = 'u8[24576]{0}', space=vmem, size = 0x6000, scoped, tag = 'input window, operand 0, single buffered']
    #allocation5 [shape = 's32[1]{0}', space=sflag, size = 0x4, scoped, tag = 'scoped memory for tpu_custom_call.1']
    #allocation6 [shape = 's32[1]{0}', space=sflag, size = 0x4, scoped, tag = 'scoped memory for tpu_custom_call.1']
    #allocation7 [shape = 'u8[311296]{0}', space=vmem, size = 0x4c000, scoped, tag = 'input window, operand 2, single buffered']
    #allocation8 [shape = 's32[1]{0}', space=sflag, size = 0x4, scoped, tag = 'scoped memory for tpu_custom_call.1']
    #allocation9 [shape = 'u8[16384]{0}', space=vmem, size = 0x4000, scoped, tag = 'input window, operand 4, single buffered']
    #allocation10 [shape = 'u8[16384]{0}', space=vmem, size = 0x4000, scoped, tag = 'input window, operand 5, single buffered']
    #allocation11 [shape = 's32[1]{0}', space=sflag, size = 0x4, scoped, tag = 'scoped memory for tpu_custom_call.1']
    #allocation12 [shape = 'u8[32768]{0}', space=vmem, size = 0x8000, scoped, tag = 'input window, operand 6, single buffered']
    #allocation13 [shape = 'u8[32768]{0}', space=vmem, size = 0x8000, scoped, tag = 'input window, operand 7, single buffered']
    #allocation14 [shape = 's32[1]{0}', space=sflag, size = 0x4, scoped, tag = 'scoped memory for tpu_custom_call.1']
    #allocation15 [shape = 'u8[8192]{0}', space=vmem, size = 0x2000, scoped, tag = 'output window, operand 0, single buffered']
    #allocation16 [shape = 'u8[8192]{0}', space=vmem, size = 0x2000, scoped, tag = 'output window, operand 1, single buffered']
    #allocation17 [shape = 's32[1]{0}', space=sflag, size = 0x4, scoped, tag = 'scoped memory for tpu_custom_call.1']
    %16 = vsyncpa [#allocation5], 0
    %17 = vsyncpa [#allocation8], 0
    %18 = vsyncpa [#allocation11], 0
    %19 = vsyncpa [#allocation14], 0
    %20 = vsyncpa [#allocation6], 0
    %21 = vsyncpa [#allocation17], 0
    // Predicated region
    $region2: #{tpu_custom_call.1} parent=1 // pred_check
      _
    $region3: #{tpu_custom_call.1} parent=1 // pred_check_branch
      %23 = sbr.rel (0) target = $region5
    $region4: #{tpu_custom_call.1} parent=1 // pred_region
      %s25 = ssub.s32 768, 768
      %26 = vsyncadd [#allocation5], %s25
      %s27 = sshll.u32 [#allocation4], 4
      %s28 = int_to_ptr.vmem [resolvable:$true] %s27
      %33 = dma.hbm_to_vmem [thread:$0]  %s0, 768, %s28, [#allocation5], 96, 96, 6
    $region5: #{tpu_custom_call.1} parent=1 // pred_fallthru
      _
    // Predicated region
    $region6: #{tpu_custom_call.1} parent=1 // pred_check
      _
    $region7: #{tpu_custom_call.1} parent=1 // pred_check_branch
      %35 = sbr.rel (0) target = $region9
    $region8: #{tpu_custom_call.1} parent=1 // pred_region
      _
    $region9: #{tpu_custom_call.1} parent=1 // pred_fallthru
      _
    // Predicated region
    $region10: #{tpu_custom_call.1} parent=1 // pred_check
      _
    $region11: #{tpu_custom_call.1} parent=1 // pred_check_branch
      %37 = sbr.rel (0) target = $region13
    $region12: #{tpu_custom_call.1} parent=1 // pred_region
      %s39 = ssub.s32 9728, 9728
      %40 = vsyncadd [#allocation8], %s39
      %s41 = sshll.u32 [#allocation7], 4
      %s42 = int_to_ptr.vmem [resolvable:$true] %s41
      %47 = dma.hbm_to_vmem [thread:$0]  %s2, 9728, %s42, [#allocation8], 256, 256, 16
    $region13: #{tpu_custom_call.1} parent=1 // pred_fallthru
      _
    // Predicated region
    $region14: #{tpu_custom_call.1} parent=1 // pred_check
      _
    $region15: #{tpu_custom_call.1} parent=1 // pred_check_branch
      %49 = sbr.rel (0) target = $region17
    $region16: #{tpu_custom_call.1} parent=1 // pred_region
      _
    $region17: #{tpu_custom_call.1} parent=1 // pred_fallthru
      _
    // Predicated region
    $region18: #{tpu_custom_call.1} parent=1 // pred_check
      _
    $region19: #{tpu_custom_call.1} parent=1 // pred_check_branch
      %51 = sbr.rel (0) target = $region21
    $region20: #{tpu_custom_call.1} parent=1 // pred_region
      %s53 = ssub.s32 512, 512
      %54 = vsyncadd [#allocation8], %s53
      %s55 = sshll.u32 [#allocation9], 4
      %s56 = int_to_ptr.vmem [resolvable:$true] %s55
      %61 = dma.hbm_to_vmem [thread:$0]  %s4, 512, %s56, [#allocation8], 128, 128, 8
    $region21: #{tpu_custom_call.1} parent=1 // pred_fallthru
      _
    // Predicated region
    $region22: #{tpu_custom_call.1} parent=1 // pred_check
      _
    $region23: #{tpu_custom_call.1} parent=1 // pred_check_branch
      %63 = sbr.rel (0) target = $region25
    $region24: #{tpu_custom_call.1} parent=1 // pred_region
      %s65 = ssub.s32 512, 512
      %66 = vsyncadd [#allocation11], %s65
      %s67 = sshll.u32 [#allocation10], 4
      %s68 = int_to_ptr.vmem [resolvable:$true] %s67
      %73 = dma.hbm_to_vmem [thread:$0]  %s5, 512, %s68, [#allocation11], 128, 128, 8
    $region25: #{tpu_custom_call.1} parent=1 // pred_fallthru
      _
    // Predicated region
    $region26: #{tpu_custom_call.1} parent=1 // pred_check
      _
    $region27: #{tpu_custom_call.1} parent=1 // pred_check_branch
      %75 = sbr.rel (0) target = $region29
    $region28: #{tpu_custom_call.1} parent=1 // pred_region
      %s77 = ssub.s32 1024, 1024
      %78 = vsyncadd [#allocation11], %s77
      %s79 = sshll.u32 [#allocation12], 4
      %s80 = int_to_ptr.vmem [resolvable:$true] %s79
      %85 = dma.hbm_to_vmem [thread:$0]  %s6, 1024, %s80, [#allocation11], 256, 256, 16
    $region29: #{tpu_custom_call.1} parent=1 // pred_fallthru
      _
    // Predicated region
    $region30: #{tpu_custom_call.1} parent=1 // pred_check
      _
    $region31: #{tpu_custom_call.1} parent=1 // pred_check_branch
      %87 = sbr.rel (0) target = $region33
    $region32: #{tpu_custom_call.1} parent=1 // pred_region
      %s89 = ssub.s32 1024, 1024
      %90 = vsyncadd [#allocation14], %s89
      %s91 = sshll.u32 [#allocation13], 4
      %s92 = int_to_ptr.vmem [resolvable:$true] %s91
      %97 = dma.hbm_to_vmem [thread:$0]  %s7, 1024, %s92, [#allocation14], 256, 256, 16
    $region33: #{tpu_custom_call.1} parent=1 // pred_fallthru
      _
    // Predicated region
    $region34: #{tpu_custom_call.1} parent=1 // pred_check
      _
    $region35: #{tpu_custom_call.1} parent=1 // pred_check_branch
      %99 = sbr.rel (0) target = $region37
    $region36: #{tpu_custom_call.1} parent=1 // pred_region
      _
    $region37: #{tpu_custom_call.1} parent=1 // pred_fallthru
      _
    // Predicated region
    $region38: #{tpu_custom_call.1} parent=1 // pred_check
      _
    $region39: #{tpu_custom_call.1} parent=1 // pred_check_branch
      %101 = sbr.rel (0) target = $region41
    $region40: #{tpu_custom_call.1} parent=1 // pred_region
      %102 = dma.done [#allocation5], 768
    $region41: #{tpu_custom_call.1} parent=1 // pred_fallthru
      _
    // Predicated region
    $region42: #{tpu_custom_call.1} parent=1 // pred_check
      _
    $region43: #{tpu_custom_call.1} parent=1 // pred_check_branch
      %104 = sbr.rel (0) target = $region45
    $region44: #{tpu_custom_call.1} parent=1 // pred_region
      %105 = dma.done [#allocation8], 9728
    $region45: #{tpu_custom_call.1} parent=1 // pred_fallthru
      _
    // Predicated region
    $region46: #{tpu_custom_call.1} parent=1 // pred_check
      _
    $region47: #{tpu_custom_call.1} parent=1 // pred_check_branch
      %107 = sbr.rel (0) target = $region49
    $region48: #{tpu_custom_call.1} parent=1 // pred_region
      %108 = dma.done [#allocation8], 512
    $region49: #{tpu_custom_call.1} parent=1 // pred_fallthru
      _
    // Predicated region
    $region50: #{tpu_custom_call.1} parent=1 // pred_check
      _
    $region51: #{tpu_custom_call.1} parent=1 // pred_check_branch
      %110 = sbr.rel (0) target = $region53
    $region52: #{tpu_custom_call.1} parent=1 // pred_region
      %111 = dma.done [#allocation11], 512
    $region53: #{tpu_custom_call.1} parent=1 // pred_fallthru
      _
    // Predicated region
    $region54: #{tpu_custom_call.1} parent=1 // pred_check
      _
    $region55: #{tpu_custom_call.1} parent=1 // pred_check_branch
      %113 = sbr.rel (0) target = $region57
    $region56: #{tpu_custom_call.1} parent=1 // pred_region
      %114 = dma.done [#allocation11], 1024
    $region57: #{tpu_custom_call.1} parent=1 // pred_fallthru
      _
    // Predicated region
    $region58: #{tpu_custom_call.1} parent=1 // pred_check
      _
    $region59: #{tpu_custom_call.1} parent=1 // pred_check_branch
      %116 = sbr.rel (0) target = $region61
    $region60: #{tpu_custom_call.1} parent=1 // pred_region
      %117 = dma.done [#allocation14], 1024
    $region61: #{tpu_custom_call.1} parent=1 // pred_fallthru
      _
    %s118 = scalar_lea.vmem %s1, 14
    %v119 = vld [vmem:[%s118] sm:$0x3]
    %s120 = scalar_lea.vmem [#allocation4], 42
    %v121 = vld [vmem:[%s120] sm:$0x3f]
    %v122 = vld [vmem:[#allocation7] sm:$0xff]
    %v123 = vld [vmem:[#allocation7 + $0x8] sm:$0xff]
    %v124 = vld [vmem:[#allocation7 + $0x10] sm:$0xff]
    %v125 = vld [vmem:[#allocation7 + $0x18] sm:$0xff]
    %v126 = vld [vmem:[#allocation7 + $0x20] sm:$0xff]
    %v127 = vld [vmem:[#allocation7 + $0x28] sm:$0xff]
    %v128 = vld [vmem:[#allocation7 + $0x30] sm:$0xff]
    %v129 = vld [vmem:[#allocation7 + $0x38] sm:$0xff]
    %v130 = vld [vmem:[#allocation7 + $0x40] sm:$0xff]
    %v131 = vld [vmem:[#allocation7 + $0x48] sm:$0xff]
    %v132 = vld [vmem:[#allocation7 + $0x50] sm:$0xff]
    %v133 = vld [vmem:[#allocation7 + $0x58] sm:$0xff]
    %v134 = vld [vmem:[#allocation7 + $0x60] sm:$0xff]
    %v135 = vld [vmem:[#allocation7 + $0x68] sm:$0xff]
    %v136 = vld [vmem:[#allocation7 + $0x70] sm:$0xff]
    %v137 = vld [vmem:[#allocation7 + $0x78] sm:$0xff]
    %v138 = vld [vmem:[#allocation7 + $0x80] sm:$0xff]
    %v139 = vld [vmem:[#allocation7 + $0x88] sm:$0xff]
    %v140 = vld [vmem:[#allocation7 + $0x90] sm:$0xff]
    %v141 = vld [vmem:[#allocation7 + $0x98] sm:$0xff]
    %v142 = vld [vmem:[#allocation7 + $0xa0] sm:$0xff]
    %v143 = vld [vmem:[#allocation7 + $0xa8] sm:$0xff]
    %v144 = vld [vmem:[#allocation7 + $0xb0] sm:$0xff]
    %v145 = vld [vmem:[#allocation7 + $0xb8] sm:$0xff]
    %v146 = vld [vmem:[#allocation7 + $0xc0] sm:$0xff]
    %v147 = vld [vmem:[#allocation7 + $0xc8] sm:$0xff]
    %v148 = vld [vmem:[#allocation7 + $0xd0] sm:$0xff]
    %v149 = vld [vmem:[#allocation7 + $0xd8] sm:$0xff]
    %v150 = vld [vmem:[#allocation7 + $0xe0] sm:$0xff]
    %v151 = vld [vmem:[#allocation7 + $0xe8] sm:$0xff]
    %v152 = vld [vmem:[#allocation7 + $0xf0] sm:$0xff]
    %v153 = vld [vmem:[#allocation7 + $0xf8] sm:$0xff]
    %v154 = vld [vmem:[#allocation7 + $0x100] sm:$0xff]
    %v155 = vld [vmem:[#allocation7 + $0x108] sm:$0xff]
    %v156 = vld [vmem:[#allocation7 + $0x110] sm:$0xff]
    %v157 = vld [vmem:[#allocation7 + $0x118] sm:$0xff]
    %v158 = vld [vmem:[#allocation7 + $0x120] sm:$0xff]
    %v159 = vld [vmem:[#allocation7 + $0x128] sm:$0xff]
    %v160 = vld [vmem:[#allocation7 + $0x130] sm:$0xff]
    %v161 = vld [vmem:[#allocation7 + $0x138] sm:$0xff]
    %v162 = vld [vmem:[#allocation7 + $0x140] sm:$0xff]
    %v163 = vld [vmem:[#allocation7 + $0x148] sm:$0xff]
    %v164 = vld [vmem:[#allocation7 + $0x150] sm:$0xff]
    %v165 = vld [vmem:[#allocation7 + $0x158] sm:$0xff]
    %v166 = vld [vmem:[#allocation7 + $0x160] sm:$0xff]
    %v167 = vld [vmem:[#allocation7 + $0x168] sm:$0xff]
    %v168 = vld [vmem:[#allocation7 + $0x170] sm:$0xff]
    %v169 = vld [vmem:[#allocation7 + $0x178] sm:$0xff]
    %v170 = vld [vmem:[#allocation7 + $0x180] sm:$0xff]
    %v171 = vld [vmem:[#allocation7 + $0x188] sm:$0xff]
    %v172 = vld [vmem:[#allocation7 + $0x190] sm:$0xff]
    %v173 = vld [vmem:[#allocation7 + $0x198] sm:$0xff]
    %v174 = vld [vmem:[#allocation7 + $0x1a0] sm:$0xff]
    %v175 = vld [vmem:[#allocation7 + $0x1a8] sm:$0xff]
    %v176 = vld [vmem:[#allocation7 + $0x1b0] sm:$0xff]
    %v177 = vld [vmem:[#allocation7 + $0x1b8] sm:$0xff]
    %v178 = vld [vmem:[#allocation7 + $0x1c0] sm:$0xff]
    %v179 = vld [vmem:[#allocation7 + $0x1c8] sm:$0xff]
    %v180 = vld [vmem:[#allocation7 + $0x1d0] sm:$0xff]
    %v181 = vld [vmem:[#allocation7 + $0x1d8] sm:$0xff]
    %v182 = vld [vmem:[#allocation7 + $0x1e0] sm:$0xff]
    %v183 = vld [vmem:[#allocation7 + $0x1e8] sm:$0xff]
    %v184 = vld [vmem:[#allocation7 + $0x1f0] sm:$0xff]
    %v185 = vld [vmem:[#allocation7 + $0x1f8] sm:$0xff]
    %v186 = vld [vmem:[#allocation7 + $0x200] sm:$0xff]
    %v187 = vld [vmem:[#allocation7 + $0x208] sm:$0xff]
    %v188 = vld [vmem:[#allocation7 + $0x210] sm:$0xff]
    %v189 = vld [vmem:[#allocation7 + $0x218] sm:$0xff]
    %v190 = vld [vmem:[#allocation7 + $0x220] sm:$0xff]
    %v191 = vld [vmem:[#allocation7 + $0x228] sm:$0xff]
    %v192 = vld [vmem:[#allocation7 + $0x230] sm:$0xff]
    %v193 = vld [vmem:[#allocation7 + $0x238] sm:$0xff]
    %v194 = vld [vmem:[#allocation7 + $0x240] sm:$0xff]
    %v195 = vld [vmem:[#allocation7 + $0x248] sm:$0xff]
    %v196 = vld [vmem:[#allocation7 + $0x250] sm:$0xf]
    %v197 = vld [vmem:[#allocation7 + $0x258] sm:$0xf]
    %v198 = vld [vmem:[%s3] sm:$0x3]
    %v200 = vlaneseq
    %v201 = vshrl.u32 %v200, 7
    %v202 = vsub.s32 0, %v201
    %v203 = vrot.slane %v198, %v202
    %v204 = vlaneseq
    %v205 = vshrl.u32 %v204, 7
    %v206 = vsub.s32 1, %v205
    %v207 = vrot.slane %v198, %v206
    %v211 = vcombine.high %v121, %v121
    %v213 = vunpack.c.l.s4 1983009808
    %v214 = vunpack.c.0.s8 %v213
    %v215 = vlaneseq
    %v216 = vshrl.u32 %v215, 7
    %v217 = vsub.s32 %v214, %v216
    %v218 = vrot.slane %v121, %v217
    %v220 = vunpack.c.l.s4 1983009808
    %v221 = vunpack.c.0.s8 %v220
    %v222 = vlaneseq
    %v223 = vshrl.u32 %v222, 7
    %v224 = vsub.s32 %v221, %v223
    %v225 = vrot.slane %v211, %v224
    %v226 = vcombine.high %v218, %v218
    %vm229 = vcmask 359424
    %v230 = vsel %vm229, %v225, 0
    %vm232 = vcmask 1043456
    %v234 = vsel %vm232, %v196, 0
    %v237 = vsel %vm232, %v197, 0
    %239 = vmatprep.subr.mxu0 %v153
    %240 = vmatpush1.msra.mxu0 %v152
    %241 = vmatprep.subr.mxu0 %v151
    %242 = vmatpush1.msra.mxu0 %v150
    %243 = vmatprep.subr.mxu0 %v149
    %244 = vmatpush1.msra.mxu0 %v148
    %245 = vmatprep.subr.mxu0 %v147
    %246 = vmatpush1.msra.mxu0 %v146
    %247 = vmatprep.subr.mxu0 %v145
    %248 = vmatpush1.msra.mxu0 %v144
    %249 = vmatprep.subr.mxu0 %v143
    %250 = vmatpush1.msra.mxu0 %v142
    %251 = vmatprep.subr.mxu0 %v141
    %252 = vmatpush1.msra.mxu0 %v140
    %253 = vmatprep.subr.mxu0 %v139
    %254 = vmatpush1.msra.mxu0 %v138
    %255 = vmatprep.subr.mxu0 %v137
    %256 = vmatpush1.msra.mxu0 %v136
    %257 = vmatprep.subr.mxu0 %v135
    %258 = vmatpush1.msra.mxu0 %v134
    %259 = vmatprep.subr.mxu0 %v133
    %260 = vmatpush1.msra.mxu0 %v132
    %261 = vmatprep.subr.mxu0 %v131
    %262 = vmatpush1.msra.mxu0 %v130
    %263 = vmatprep.subr.mxu0 %v129
    %264 = vmatpush1.msra.mxu0 %v128
    %265 = vmatprep.subr.mxu0 %v127
    %266 = vmatpush1.msra.mxu0 %v126
    %267 = vmatprep.subr.mxu0 %v125
    %268 = vmatpush1.msra.mxu0 %v124
    %269 = vmatprep.subr.mxu0 %v123
    %270 = vmatpush1.msra.mxu0 %v122
    %271 = vmatprep.subr.mxu0 %v185
    %272 = vmatpush2.msra.mxu0 %v184
    %273 = vmatprep.subr.mxu0 %v183
    %274 = vmatpush2.msra.mxu0 %v182
    %275 = vmatprep.subr.mxu0 %v181
    %276 = vmatpush2.msra.mxu0 %v180
    %277 = vmatprep.subr.mxu0 %v179
    %278 = vmatpush2.msra.mxu0 %v178
    %279 = vmatprep.subr.mxu0 %v177
    %280 = vmatpush2.msra.mxu0 %v176
    %281 = vmatprep.subr.mxu0 %v175
    %282 = vmatpush2.msra.mxu0 %v174
    %283 = vmatprep.subr.mxu0 %v173
    %284 = vmatpush2.msra.mxu0 %v172
    %285 = vmatprep.subr.mxu0 %v171
    %286 = vmatpush2.msra.mxu0 %v170
    %287 = vmatprep.subr.mxu0 %v169
    %288 = vmatpush2.msra.mxu0 %v168
    %289 = vmatprep.subr.mxu0 %v167
    %290 = vmatpush2.msra.mxu0 %v166
    %291 = vmatprep.subr.mxu0 %v165
    %292 = vmatpush2.msra.mxu0 %v164
    %293 = vmatprep.subr.mxu0 %v163
    %294 = vmatpush2.msra.mxu0 %v162
    %295 = vmatprep.subr.mxu0 %v161
    %296 = vmatpush2.msra.mxu0 %v160
    %297 = vmatprep.subr.mxu0 %v159
    %298 = vmatpush2.msra.mxu0 %v158
    %299 = vmatprep.subr.mxu0 %v157
    %300 = vmatpush2.msra.mxu0 %v156
    %301 = vmatprep.subr.mxu0 %v155
    %302 = vmatpush2.msra.mxu0 %v154
    %303 = vmatprep.mubr.f32.mxu0 %v226
    %304 = vmatmul.mubr.f32.gmra.mxu0 %v218
    %v305 = vpop.f32.mrf.mxu0
    %v306 = vadd.f32 %v203, %v305
    %v307 = vpop.f32.mrf.mxu0
    %v308 = vadd.f32 %v207, %v307
    %309 = vdwg.mxu0
    %310 = vmatprep.subr.mxu0 0.0
    %311 = vmatpush1.msra.mxu0 0.0
    %312 = vmatprep.subr.mxu0 0.0
    %313 = vmatpush1.msra.mxu0 0.0
    %314 = vmatprep.subr.mxu0 0.0
    %315 = vmatpush1.msra.mxu0 0.0
    %316 = vmatprep.subr.mxu0 0.0
    %317 = vmatpush1.msra.mxu0 0.0
    %318 = vmatprep.subr.mxu0 0.0
    %319 = vmatpush1.msra.mxu0 0.0
    %320 = vmatprep.subr.mxu0 0.0
    %321 = vmatpush1.msra.mxu0 0.0
    %322 = vmatprep.subr.mxu0 0.0
    %323 = vmatpush1.msra.mxu0 0.0
    %324 = vmatprep.subr.mxu0 0.0
    %325 = vmatpush1.msra.mxu0 0.0
    %326 = vmatprep.subr.mxu0 0.0
    %327 = vmatpush1.msra.mxu0 0.0
    %328 = vmatprep.subr.mxu0 0.0
    %329 = vmatpush1.msra.mxu0 0.0
    %330 = vmatprep.subr.mxu0 %v237
    %331 = vmatpush1.msra.mxu0 %v234
    %332 = vmatprep.subr.mxu0 %v195
    %333 = vmatpush1.msra.mxu0 %v194
    %334 = vmatprep.subr.mxu0 %v193
    %335 = vmatpush1.msra.mxu0 %v192
    %336 = vmatprep.subr.mxu0 %v191
    %337 = vmatpush1.msra.mxu0 %v190
    %338 = vmatprep.subr.mxu0 %v189
    %339 = vmatpush1.msra.mxu0 %v188
    %340 = vmatprep.subr.mxu0 %v187
    %341 = vmatpush1.msra.mxu0 %v186
    %342 = vmatprep.subr.mxu0 0.0
    %343 = vmatpush2.msra.mxu0 0.0
    %344 = vmatprep.subr.mxu0 0.0
    %345 = vmatpush2.msra.mxu0 0.0
    %346 = vmatprep.subr.mxu0 0.0
    %347 = vmatpush2.msra.mxu0 0.0
    %348 = vmatprep.subr.mxu0 0.0
    %349 = vmatpush2.msra.mxu0 0.0
    %350 = vmatprep.subr.mxu0 0.0
    %351 = vmatpush2.msra.mxu0 0.0
    %352 = vmatprep.subr.mxu0 0.0
    %353 = vmatpush2.msra.mxu0 0.0
    %354 = vmatprep.subr.mxu0 0.0
    %355 = vmatpush2.msra.mxu0 0.0
    %356 = vmatprep.subr.mxu0 0.0
    %357 = vmatpush2.msra.mxu0 0.0
    %358 = vmatprep.subr.mxu0 0.0
    %359 = vmatpush2.msra.mxu0 0.0
    %360 = vmatprep.subr.mxu0 0.0
    %361 = vmatpush2.msra.mxu0 0.0
    %362 = vmatprep.subr.mxu0 0.0
    %363 = vmatpush2.msra.mxu0 0.0
    %364 = vmatprep.subr.mxu0 0.0
    %365 = vmatpush2.msra.mxu0 0.0
    %366 = vmatprep.subr.mxu0 0.0
    %367 = vmatpush2.msra.mxu0 0.0
    %368 = vmatprep.subr.mxu0 0.0
    %369 = vmatpush2.msra.mxu0 0.0
    %370 = vmatprep.subr.mxu0 0.0
    %371 = vmatpush2.msra.mxu0 0.0
    %372 = vmatprep.subr.mxu0 0.0
    %373 = vmatpush2.msra.mxu0 0.0
    %374 = vmatprep.mubr.f32.mxu0 0.0
    %375 = vmatmul.mubr.f32.gmra.mxu0 %v230
    %v376 = vpop.f32.mrf.mxu0
    %v377 = vadd.f32 %v306, %v376
    %v378 = vpop.f32.mrf.mxu0
    %v379 = vadd.f32 %v308, %v378
    %380 = vdwg.mxu0
    %s381 = scalar_lea.vmem [#allocation2], 14
    %382 = vst [vmem:[%s381] sm:$0x3] %v377
    %v383 = vld [vmem:[#allocation10] sm:$0xff]
    %v384 = vld [vmem:[#allocation10 + $0x8] sm:$0xff]
    %v385 = vld [vmem:[#allocation10 + $0x10] sm:$0xff]
    %v386 = vld [vmem:[#allocation10 + $0x18] sm:$0xff]
    %vm387 = vcmask 261120
    %v389 = vsel %vm387, 0.0, 0
    %391 = vmatprep.subr.mxu0 0.0
    %392 = vmatpush1.msra.mxu0 0.0
    %393 = vmatprep.subr.mxu0 0.0
    %394 = vmatpush1.msra.mxu0 0.0
    %395 = vmatprep.subr.mxu0 0.0
    %396 = vmatpush1.msra.mxu0 0.0
    %397 = vmatprep.subr.mxu0 0.0
    %398 = vmatpush1.msra.mxu0 0.0
    %399 = vmatprep.subr.mxu0 0.0
    %400 = vmatpush1.msra.mxu0 0.0
    %401 = vmatprep.subr.mxu0 0.0
    %402 = vmatpush1.msra.mxu0 0.0
    %403 = vmatprep.subr.mxu0 0.0
    %404 = vmatpush1.msra.mxu0 0.0
    %405 = vmatprep.subr.mxu0 0.0
    %406 = vmatpush1.msra.mxu0 0.0
    %407 = vmatprep.subr.mxu0 0.0
    %408 = vmatpush1.msra.mxu0 0.0
    %409 = vmatprep.subr.mxu0 0.0
    %410 = vmatpush1.msra.mxu0 0.0
    %411 = vmatprep.subr.mxu0 0.0
    %412 = vmatpush1.msra.mxu0 0.0
    %413 = vmatprep.subr.mxu0 0.0
    %414 = vmatpush1.msra.mxu0 0.0
    %415 = vmatprep.subr.mxu0 0.0
    %416 = vmatpush1.msra.mxu0 %v386
    %417 = vmatprep.subr.mxu0 0.0
    %418 = vmatpush1.msra.mxu0 %v385
    %419 = vmatprep.subr.mxu0 0.0
    %420 = vmatpush1.msra.mxu0 %v384
    %421 = vmatprep.subr.mxu0 0.0
    %422 = vmatpush1.msra.mxu0 %v383
    %423 = vmatprep.subr.mxu0 0.0
    %424 = vmatpush2.msra.mxu0 0.0
    %425 = vmatprep.subr.mxu0 0.0
    %426 = vmatpush2.msra.mxu0 0.0
    %427 = vmatprep.subr.mxu0 0.0
    %428 = vmatpush2.msra.mxu0 0.0
    %429 = vmatprep.subr.mxu0 0.0
    %430 = vmatpush2.msra.mxu0 0.0
    %431 = vmatprep.subr.mxu0 0.0
    %432 = vmatpush2.msra.mxu0 0.0
    %433 = vmatprep.subr.mxu0 0.0
    %434 = vmatpush2.msra.mxu0 0.0
    %435 = vmatprep.subr.mxu0 0.0
    %436 = vmatpush2.msra.mxu0 0.0
    %437 = vmatprep.subr.mxu0 0.0
    %438 = vmatpush2.msra.mxu0 0.0
    %439 = vmatprep.subr.mxu0 0.0
    %440 = vmatpush2.msra.mxu0 0.0
    %441 = vmatprep.subr.mxu0 0.0
    %442 = vmatpush2.msra.mxu0 0.0
    %443 = vmatprep.subr.mxu0 0.0
    %444 = vmatpush2.msra.mxu0 0.0
    %445 = vmatprep.subr.mxu0 0.0
    %446 = vmatpush2.msra.mxu0 0.0
    %447 = vmatprep.subr.mxu0 0.0
    %448 = vmatpush2.msra.mxu0 0.0
    %449 = vmatprep.subr.mxu0 0.0
    %450 = vmatpush2.msra.mxu0 0.0
    %451 = vmatprep.subr.mxu0 0.0
    %452 = vmatpush2.msra.mxu0 0.0
    %453 = vmatprep.subr.mxu0 0.0
    %454 = vmatpush2.msra.mxu0 0.0
    %455 = vmatprep.mubr.f32.mxu0 0.0
    %456 = vmatmul.mubr.f32.gmra.mxu0 %v389
    %v457 = vpop.f32.mrf.mxu0
    %v458 = vadd.f32 0.0, %v457
    %v459 = vpop.f32.mrf.mxu0
    %460 = vdwg.mxu0
    %v461 = vadd.f32 %v379, %v458
    %v462 = vsub.f32 0.0, %v461
    %v463 = vmul.f32 %v462, 1.442695
    %v464 = vpow.pop %v463
    %v465 = vadd.f32 %v464, 1.0
    %v466 = vrcp.pop %v465
    %v467 = vmul.f32 1.0, %v466
    %v468 = vtanh.pop %v461
    %v469 = vmul.f32 %v467, 0.0
    %471 = vrot.lane.b32.xlu0 %v468, 64
    %v472 = vpop.permute.xlu0 %471
    %v474 = vmul.f32 %v467, %v472
    %476 = vrot.lane.b32.xlu0 %v474, 32
    %v477 = vpop.permute.xlu0 %476
    %v479 = vadd.f32 %v469, %v477
    %v480 = vtanh.pop %v479
    %482 = vrot.lane.b32.xlu0 %v480, 64
    %v483 = vpop.permute.xlu0 %482
    %v485 = vmul.f32 %v467, %v483
    %487 = vset.pattern.permute.xlu0 0
    %488 = vperm.xlu0 %487, %v119
    %v489 = vpop.permute.xlu0 %488
    %v491 = vmul.f32 %v489, %v485
    %v492 = vmul.f32 %v489, %v479
    %494 = vrot.lane.b32.xlu0 %v491, 32
    %v495 = vpop.permute.xlu0 %494
    %s497 = scalar_lea.vmem [#allocation3], 14
    %vm498 = vcmask 254976
    %499 = vst.msk [vmem:[%s497] sm:$0x3] %vm498, %v495
    %s500 = scalar_lea.vmem %s1, 12
    %v501 = vld [vmem:[%s500] sm:$0x3]
    %s502 = scalar_lea.vmem [#allocation4], 36
    %v503 = vld [vmem:[%s502] sm:$0x3f]
    %v504 = vld [vmem:[#allocation7] sm:$0xff]
    %v505 = vld [vmem:[#allocation7 + $0x8] sm:$0xff]
    %v506 = vld [vmem:[#allocation7 + $0x10] sm:$0xff]
    %v507 = vld [vmem:[#allocation7 + $0x18] sm:$0xff]
    %v508 = vld [vmem:[#allocation7 + $0x20] sm:$0xff]
    %v509 = vld [vmem:[#allocation7 + $0x28] sm:$0xff]
    %v510 = vld [vmem:[#allocation7 + $0x30] sm:$0xff]
    %v511 = vld [vmem:[#allocation7 + $0x38] sm:$0xff]
    %v512 = vld [vmem:[#allocation7 + $0x40] sm:$0xff]
    %v513 = vld [vmem:[#allocation7 + $0x48] sm:$0xff]
    %v514 = vld [vmem:[#allocation7 + $0x50] sm:$0xff]
    %v515 = vld [vmem:[#allocation7 + $0x58] sm:$0xff]
    %v516 = vld [vmem:[#allocation7 + $0x60] sm:$0xff]
    %v517 = vld [vmem:[#allocation7 + $0x68] sm:$0xff]
    %v518 = vld [vmem:[#allocation7 + $0x70] sm:$0xff]
    %v519 = vld [vmem:[#allocation7 + $0x78] sm:$0xff]
    %v520 = vld [vmem:[#allocation7 + $0x80] sm:$0xff]
    %v521 = vld [vmem:[#allocation7 + $0x88] sm:$0xff]
    %v522 = vld [vmem:[#allocation7 + $0x90] sm:$0xff]
    %v523 = vld [vmem:[#allocation7 + $0x98] sm:$0xff]
    %v524 = vld [vmem:[#allocation7 + $0xa0] sm:$0xff]
    %v525 = vld [vmem:[#allocation7 + $0xa8] sm:$0xff]
    %v526 = vld [vmem:[#allocation7 + $0xb0] sm:$0xff]
    %v527 = vld [vmem:[#allocation7 + $0xb8] sm:$0xff]
    %v528 = vld [vmem:[#allocation7 + $0xc0] sm:$0xff]
    %v529 = vld [vmem:[#allocation7 + $0xc8] sm:$0xff]
    %v530 = vld [vmem:[#allocation7 + $0xd0] sm:$0xff]
    %v531 = vld [vmem:[#allocation7 + $0xd8] sm:$0xff]
    %v532 = vld [vmem:[#allocation7 + $0xe0] sm:$0xff]
    %v533 = vld [vmem:[#allocation7 + $0xe8] sm:$0xff]
    %v534 = vld [vmem:[#allocation7 + $0xf0] sm:$0xff]
    %v535 = vld [vmem:[#allocation7 + $0xf8] sm:$0xff]
    %v536 = vld [vmem:[#allocation7 + $0x100] sm:$0xff]
    %v537 = vld [vmem:[#allocation7 + $0x108] sm:$0xff]
    %v538 = vld [vmem:[#allocation7 + $0x110] sm:$0xff]
    %v539 = vld [vmem:[#allocation7 + $0x118] sm:$0xff]
    %v540 = vld [vmem:[#allocation7 + $0x120] sm:$0xff]
    %v541 = vld [vmem:[#allocation7 + $0x128] sm:$0xff]
    %v542 = vld [vmem:[#allocation7 + $0x130] sm:$0xff]
    %v543 = vld [vmem:[#allocation7 + $0x138] sm:$0xff]
    %v544 = vld [vmem:[#allocation7 + $0x140] sm:$0xff]
    %v545 = vld [vmem:[#allocation7 + $0x148] sm:$0xff]
    %v546 = vld [vmem:[#allocation7 + $0x150] sm:$0xff]
    %v547 = vld [vmem:[#allocation7 + $0x158] sm:$0xff]
    %v548 = vld [vmem:[#allocation7 + $0x160] sm:$0xff]
    %v549 = vld [vmem:[#allocation7 + $0x168] sm:$0xff]
    %v550 = vld [vmem:[#allocation7 + $0x170] sm:$0xff]
    %v551 = vld [vmem:[#allocation7 + $0x178] sm:$0xff]
    %v552 = vld [vmem:[#allocation7 + $0x180] sm:$0xff]
    %v553 = vld [vmem:[#allocation7 + $0x188] sm:$0xff]
    %v554 = vld [vmem:[#allocation7 + $0x190] sm:$0xff]
    %v555 = vld [vmem:[#allocation7 + $0x198] sm:$0xff]
    %v556 = vld [vmem:[#allocation7 + $0x1a0] sm:$0xff]
    %v557 = vld [vmem:[#allocation7 + $0x1a8] sm:$0xff]
    %v558 = vld [vmem:[#allocation7 + $0x1b0] sm:$0xff]
    %v559 = vld [vmem:[#allocation7 + $0x1b8] sm:$0xff]
    %v560 = vld [vmem:[#allocation7 + $0x1c0] sm:$0xff]
    %v561 = vld [vmem:[#allocation7 + $0x1c8] sm:$0xff]
    %v562 = vld [vmem:[#allocation7 + $0x1d0] sm:$0xff]
    %v563 = vld [vmem:[#allocation7 + $0x1d8] sm:$0xff]
    %v564 = vld [vmem:[#allocation7 + $0x1e0] sm:$0xff]
    %v565 = vld [vmem:[#allocation7 + $0x1e8] sm:$0xff]
    %v566 = vld [vmem:[#allocation7 + $0x1f0] sm:$0xff]
    %v567 = vld [vmem:[#allocation7 + $0x1f8] sm:$0xff]
    %v568 = vld [vmem:[#allocation7 + $0x200] sm:$0xff]
    %v569 = vld [vmem:[#allocation7 + $0x208] sm:$0xff]
    %v570 = vld [vmem:[#allocation7 + $0x210] sm:$0xff]
    %v571 = vld [vmem:[#allocation7 + $0x218] sm:$0xff]
    %v572 = vld [vmem:[#allocation7 + $0x220] sm:$0xff]
    %v573 = vld [vmem:[#allocation7 + $0x228] sm:$0xff]
    %v574 = vld [vmem:[#allocation7 + $0x230] sm:$0xff]
    %v575 = vld [vmem:[#allocation7 + $0x238] sm:$0xff]
    %v576 = vld [vmem:[#allocation7 + $0x240] sm:$0xff]
    %v577 = vld [vmem:[#allocation7 + $0x248] sm:$0xff]
    %v578 = vld [vmem:[#allocation7 + $0x250] sm:$0xf]
    %v579 = vld [vmem:[#allocation7 + $0x258] sm:$0xf]
    %v580 = vld [vmem:[%s3] sm:$0x3]
    %v582 = vlaneseq
    %v583 = vshrl.u32 %v582, 7
    %v584 = vsub.s32 0, %v583
    %v585 = vrot.slane %v580, %v584
    %v586 = vlaneseq
    %v587 = vshrl.u32 %v586, 7
    %v588 = vsub.s32 1, %v587
    %v589 = vrot.slane %v580, %v588
    %v593 = vcombine.high %v503, %v503
    %v595 = vunpack.c.l.s4 1983009808
    %v596 = vunpack.c.0.s8 %v595
    %v597 = vlaneseq
    %v598 = vshrl.u32 %v597, 7
    %v599 = vsub.s32 %v596, %v598
    %v600 = vrot.slane %v503, %v599
    %v602 = vunpack.c.l.s4 1983009808
    %v603 = vunpack.c.0.s8 %v602
    %v604 = vlaneseq
    %v605 = vshrl.u32 %v604, 7
    %v606 = vsub.s32 %v603, %v605
    %v607 = vrot.slane %v593, %v606
    %v608 = vcombine.high %v600, %v600
    %v611 = vsel %vm229, %v607, 0
    %v614 = vsel %vm232, %v578, 0
    %v617 = vsel %vm232, %v579, 0
    %619 = vmatprep.subr.mxu0 %v535
    %620 = vmatpush1.msra.mxu0 %v534
    %621 = vmatprep.subr.mxu0 %v533
    %622 = vmatpush1.msra.mxu0 %v532
    %623 = vmatprep.subr.mxu0 %v531
    %624 = vmatpush1.msra.mxu0 %v530
    %625 = vmatprep.subr.mxu0 %v529
    %626 = vmatpush1.msra.mxu0 %v528
    %627 = vmatprep.subr.mxu0 %v527
    %628 = vmatpush1.msra.mxu0 %v526
    %629 = vmatprep.subr.mxu0 %v525
    %630 = vmatpush1.msra.mxu0 %v524
    %631 = vmatprep.subr.mxu0 %v523
    %632 = vmatpush1.msra.mxu0 %v522
    %633 = vmatprep.subr.mxu0 %v521
    %634 = vmatpush1.msra.mxu0 %v520
    %635 = vmatprep.subr.mxu0 %v519
    %636 = vmatpush1.msra.mxu0 %v518
    %637 = vmatprep.subr.mxu0 %v517
    %638 = vmatpush1.msra.mxu0 %v516
    %639 = vmatprep.subr.mxu0 %v515
    %640 = vmatpush1.msra.mxu0 %v514
    %641 = vmatprep.subr.mxu0 %v513
    %642 = vmatpush1.msra.mxu0 %v512
    %643 = vmatprep.subr.mxu0 %v511
    %644 = vmatpush1.msra.mxu0 %v510
    %645 = vmatprep.subr.mxu0 %v509
    %646 = vmatpush1.msra.mxu0 %v508
    %647 = vmatprep.subr.mxu0 %v507
    %648 = vmatpush1.msra.mxu0 %v506
    %649 = vmatprep.subr.mxu0 %v505
    %650 = vmatpush1.msra.mxu0 %v504
    %651 = vmatprep.subr.mxu0 %v567
    %652 = vmatpush2.msra.mxu0 %v566
    %653 = vmatprep.subr.mxu0 %v565
    %654 = vmatpush2.msra.mxu0 %v564
    %655 = vmatprep.subr.mxu0 %v563
    %656 = vmatpush2.msra.mxu0 %v562
    %657 = vmatprep.subr.mxu0 %v561
    %658 = vmatpush2.msra.mxu0 %v560
    %659 = vmatprep.subr.mxu0 %v559
    %660 = vmatpush2.msra.mxu0 %v558
    %661 = vmatprep.subr.mxu0 %v557
    %662 = vmatpush2.msra.mxu0 %v556
    %663 = vmatprep.subr.mxu0 %v555
    %664 = vmatpush2.msra.mxu0 %v554
    %665 = vmatprep.subr.mxu0 %v553
    %666 = vmatpush2.msra.mxu0 %v552
    %667 = vmatprep.subr.mxu0 %v551
    %668 = vmatpush2.msra.mxu0 %v550
    %669 = vmatprep.subr.mxu0 %v549
    %670 = vmatpush2.msra.mxu0 %v548
    %671 = vmatprep.subr.mxu0 %v547
    %672 = vmatpush2.msra.mxu0 %v546
    %673 = vmatprep.subr.mxu0 %v545
    %674 = vmatpush2.msra.mxu0 %v544
    %675 = vmatprep.subr.mxu0 %v543
    %676 = vmatpush2.msra.mxu0 %v542
    %677 = vmatprep.subr.mxu0 %v541
    %678 = vmatpush2.msra.mxu0 %v540
    %679 = vmatprep.subr.mxu0 %v539
    %680 = vmatpush2.msra.mxu0 %v538
    %681 = vmatprep.subr.mxu0 %v537
    %682 = vmatpush2.msra.mxu0 %v536
    %683 = vmatprep.mubr.f32.mxu0 %v608
    %684 = vmatmul.mubr.f32.gmra.mxu0 %v600
    %v685 = vpop.f32.mrf.mxu0
    %v686 = vadd.f32 %v585, %v685
    %v687 = vpop.f32.mrf.mxu0
    %v688 = vadd.f32 %v589, %v687
    %689 = vdwg.mxu0
    %690 = vmatprep.subr.mxu0 0.0
    %691 = vmatpush1.msra.mxu0 0.0
    %692 = vmatprep.subr.mxu0 0.0
    %693 = vmatpush1.msra.mxu0 0.0
    %694 = vmatprep.subr.mxu0 0.0
    %695 = vmatpush1.msra.mxu0 0.0
    %696 = vmatprep.subr.mxu0 0.0
    %697 = vmatpush1.msra.mxu0 0.0
    %698 = vmatprep.subr.mxu0 0.0
    %699 = vmatpush1.msra.mxu0 0.0
    %700 = vmatprep.subr.mxu0 0.0
    %701 = vmatpush1.msra.mxu0 0.0
    %702 = vmatprep.subr.mxu0 0.0
    %703 = vmatpush1.msra.mxu0 0.0
    %704 = vmatprep.subr.mxu0 0.0
    %705 = vmatpush1.msra.mxu0 0.0
    %706 = vmatprep.subr.mxu0 0.0
    %707 = vmatpush1.msra.mxu0 0.0
    %708 = vmatprep.subr.mxu0 0.0
    %709 = vmatpush1.msra.mxu0 0.0
    %710 = vmatprep.subr.mxu0 %v617
    %711 = vmatpush1.msra.mxu0 %v614
    %712 = vmatprep.subr.mxu0 %v577
    %713 = vmatpush1.msra.mxu0 %v576
    %714 = vmatprep.subr.mxu0 %v575
    %715 = vmatpush1.msra.mxu0 %v574
    %716 = vmatprep.subr.mxu0 %v573
    %717 = vmatpush1.msra.mxu0 %v572
    %718 = vmatprep.subr.mxu0 %v571
    %719 = vmatpush1.msra.mxu0 %v570
    %720 = vmatprep.subr.mxu0 %v569
    %721 = vmatpush1.msra.mxu0 %v568
    %722 = vmatprep.subr.mxu0 0.0
    %723 = vmatpush2.msra.mxu0 0.0
    %724 = vmatprep.subr.mxu0 0.0
    %725 = vmatpush2.msra.mxu0 0.0
    %726 = vmatprep.subr.mxu0 0.0
    %727 = vmatpush2.msra.mxu0 0.0
    %728 = vmatprep.subr.mxu0 0.0
    %729 = vmatpush2.msra.mxu0 0.0
    %730 = vmatprep.subr.mxu0 0.0
    %731 = vmatpush2.msra.mxu0 0.0
    %732 = vmatprep.subr.mxu0 0.0
    %733 = vmatpush2.msra.mxu0 0.0
    %734 = vmatprep.subr.mxu0 0.0
    %735 = vmatpush2.msra.mxu0 0.0
    %736 = vmatprep.subr.mxu0 0.0
    %737 = vmatpush2.msra.mxu0 0.0
    %738 = vmatprep.subr.mxu0 0.0
    %739 = vmatpush2.msra.mxu0 0.0
    %740 = vmatprep.subr.mxu0 0.0
    %741 = vmatpush2.msra.mxu0 0.0
    %742 = vmatprep.subr.mxu0 0.0
    %743 = vmatpush2.msra.mxu0 0.0
    %744 = vmatprep.subr.mxu0 0.0
    %745 = vmatpush2.msra.mxu0 0.0
    %746 = vmatprep.subr.mxu0 0.0
    %747 = vmatpush2.msra.mxu0 0.0
    %748 = vmatprep.subr.mxu0 0.0
    %749 = vmatpush2.msra.mxu0 0.0
    %750 = vmatprep.subr.mxu0 0.0
    %751 = vmatpush2.msra.mxu0 0.0
    %752 = vmatprep.subr.mxu0 0.0
    %753 = vmatpush2.msra.mxu0 0.0
    %754 = vmatprep.mubr.f32.mxu0 0.0
    %755 = vmatmul.mubr.f32.gmra.mxu0 %v611
    %v756 = vpop.f32.mrf.mxu0
    %v757 = vadd.f32 %v686, %v756
    %v758 = vpop.f32.mrf.mxu0
    %v759 = vadd.f32 %v688, %v758
    %760 = vdwg.mxu0
    %s761 = scalar_lea.vmem [#allocation2], 12
    %762 = vst [vmem:[%s761] sm:$0x3] %v757
    %v763 = vld [vmem:[#allocation10] sm:$0xff]
    %v764 = vld [vmem:[#allocation10 + $0x8] sm:$0xff]
    %v765 = vld [vmem:[#allocation10 + $0x10] sm:$0xff]
    %v766 = vld [vmem:[#allocation10 + $0x18] sm:$0xff]
    %v767 = vsel %vm387, %v495, 0
    %769 = vmatprep.subr.mxu0 0.0
    %770 = vmatpush1.msra.mxu0 0.0
    %771 = vmatprep.subr.mxu0 0.0
    %772 = vmatpush1.msra.mxu0 0.0
    %773 = vmatprep.subr.mxu0 0.0
    %774 = vmatpush1.msra.mxu0 0.0
    %775 = vmatprep.subr.mxu0 0.0
    %776 = vmatpush1.msra.mxu0 0.0
    %777 = vmatprep.subr.mxu0 0.0
    %778 = vmatpush1.msra.mxu0 0.0
    %779 = vmatprep.subr.mxu0 0.0
    %780 = vmatpush1.msra.mxu0 0.0
    %781 = vmatprep.subr.mxu0 0.0
    %782 = vmatpush1.msra.mxu0 0.0
    %783 = vmatprep.subr.mxu0 0.0
    %784 = vmatpush1.msra.mxu0 0.0
    %785 = vmatprep.subr.mxu0 0.0
    %786 = vmatpush1.msra.mxu0 0.0
    %787 = vmatprep.subr.mxu0 0.0
    %788 = vmatpush1.msra.mxu0 0.0
    %789 = vmatprep.subr.mxu0 0.0
    %790 = vmatpush1.msra.mxu0 0.0
    %791 = vmatprep.subr.mxu0 0.0
    %792 = vmatpush1.msra.mxu0 0.0
    %793 = vmatprep.subr.mxu0 0.0
    %794 = vmatpush1.msra.mxu0 %v766
    %795 = vmatprep.subr.mxu0 0.0
    %796 = vmatpush1.msra.mxu0 %v765
    %797 = vmatprep.subr.mxu0 0.0
    %798 = vmatpush1.msra.mxu0 %v764
    %799 = vmatprep.subr.mxu0 0.0
    %800 = vmatpush1.msra.mxu0 %v763
    %801 = vmatprep.subr.mxu0 0.0
    %802 = vmatpush2.msra.mxu0 0.0
    %803 = vmatprep.subr.mxu0 0.0
    %804 = vmatpush2.msra.mxu0 0.0
    %805 = vmatprep.subr.mxu0 0.0
    %806 = vmatpush2.msra.mxu0 0.0
    %807 = vmatprep.subr.mxu0 0.0
    %808 = vmatpush2.msra.mxu0 0.0
    %809 = vmatprep.subr.mxu0 0.0
    %810 = vmatpush2.msra.mxu0 0.0
    %811 = vmatprep.subr.mxu0 0.0
    %812 = vmatpush2.msra.mxu0 0.0
    %813 = vmatprep.subr.mxu0 0.0
    %814 = vmatpush2.msra.mxu0 0.0
    %815 = vmatprep.subr.mxu0 0.0
    %816 = vmatpush2.msra.mxu0 0.0
    %817 = vmatprep.subr.mxu0 0.0
    %818 = vmatpush2.msra.mxu0 0.0
    %819 = vmatprep.subr.mxu0 0.0
    %820 = vmatpush2.msra.mxu0 0.0
    %821 = vmatprep.subr.mxu0 0.0
    %822 = vmatpush2.msra.mxu0 0.0
    %823 = vmatprep.subr.mxu0 0.0
    %824 = vmatpush2.msra.mxu0 0.0
    %825 = vmatprep.subr.mxu0 0.0
    %826 = vmatpush2.msra.mxu0 0.0
    %827 = vmatprep.subr.mxu0 0.0
    %828 = vmatpush2.msra.mxu0 0.0
    %829 = vmatprep.subr.mxu0 0.0
    %830 = vmatpush2.msra.mxu0 0.0
    %831 = vmatprep.subr.mxu0 0.0
    %832 = vmatpush2.msra.mxu0 0.0
    %833 = vmatprep.mubr.f32.mxu0 0.0
    %834 = vmatmul.mubr.f32.gmra.mxu0 %v767
    %v835 = vpop.f32.mrf.mxu0
    %v836 = vadd.f32 0.0, %v835
    %v837 = vpop.f32.mrf.mxu0
    %838 = vdwg.mxu0
    %v839 = vadd.f32 %v759, %v836
    %v840 = vsub.f32 0.0, %v839
    %v841 = vmul.f32 %v840, 1.442695
    %v842 = vpow.pop %v841
    %v843 = vadd.f32 %v842, 1.0
    %v844 = vrcp.pop %v843
    %v845 = vmul.f32 1.0, %v844
    %v846 = vtanh.pop %v839
    %v847 = vmul.f32 %v845, %v492
    %849 = vrot.lane.b32.xlu0 %v846, 64
    %v850 = vpop.permute.xlu0 %849
    %v852 = vmul.f32 %v845, %v850
    %854 = vrot.lane.b32.xlu0 %v852, 32
    %v855 = vpop.permute.xlu0 %854
    %v857 = vadd.f32 %v847, %v855
    %v858 = vtanh.pop %v857
    %860 = vrot.lane.b32.xlu0 %v858, 64
    %v861 = vpop.permute.xlu0 %860
    %v863 = vmul.f32 %v845, %v861
    %865 = vset.pattern.permute.xlu0 0
    %866 = vperm.xlu0 %865, %v501
    %v867 = vpop.permute.xlu0 %866
    %v869 = vmul.f32 %v867, %v863
    %v870 = vmul.f32 %v867, %v857
    %872 = vrot.lane.b32.xlu0 %v869, 32
    %v873 = vpop.permute.xlu0 %872
    %s875 = scalar_lea.vmem [#allocation3], 12
    %876 = vst.msk [vmem:[%s875] sm:$0x3] %vm498, %v873
    %s877 = scalar_lea.vmem %s1, 10
    %v878 = vld [vmem:[%s877] sm:$0x3]
    %s879 = scalar_lea.vmem [#allocation4], 30
    %v880 = vld [vmem:[%s879] sm:$0x3f]
    %v881 = vld [vmem:[#allocation7] sm:$0xff]
    %v882 = vld [vmem:[#allocation7 + $0x8] sm:$0xff]
    %v883 = vld [vmem:[#allocation7 + $0x10] sm:$0xff]
    %v884 = vld [vmem:[#allocation7 + $0x18] sm:$0xff]
    %v885 = vld [vmem:[#allocation7 + $0x20] sm:$0xff]
    %v886 = vld [vmem:[#allocation7 + $0x28] sm:$0xff]
    %v887 = vld [vmem:[#allocation7 + $0x30] sm:$0xff]
    %v888 = vld [vmem:[#allocation7 + $0x38] sm:$0xff]
    %v889 = vld [vmem:[#allocation7 + $0x40] sm:$0xff]
    %v890 = vld [vmem:[#allocation7 + $0x48] sm:$0xff]
    %v891 = vld [vmem:[#allocation7 + $0x50] sm:$0xff]
    %v892 = vld [vmem:[#allocation7 + $0x58] sm:$0xff]
    %v893 = vld [vmem:[#allocation7 + $0x60] sm:$0xff]
    %v894 = vld [vmem:[#allocation7 + $0x68] sm:$0xff]
    %v895 = vld [vmem:[#allocation7 + $0x70] sm:$0xff]
    %v896 = vld [vmem:[#allocation7 + $0x78] sm:$0xff]
    %v897 = vld [vmem:[#allocation7 + $0x80] sm:$0xff]
    %v898 = vld [vmem:[#allocation7 + $0x88] sm:$0xff]
    %v899 = vld [vmem:[#allocation7 + $0x90] sm:$0xff]
    %v900 = vld [vmem:[#allocation7 + $0x98] sm:$0xff]
    %v901 = vld [vmem:[#allocation7 + $0xa0] sm:$0xff]
    %v902 = vld [vmem:[#allocation7 + $0xa8] sm:$0xff]
    %v903 = vld [vmem:[#allocation7 + $0xb0] sm:$0xff]
    %v904 = vld [vmem:[#allocation7 + $0xb8] sm:$0xff]
    %v905 = vld [vmem:[#allocation7 + $0xc0] sm:$0xff]
    %v906 = vld [vmem:[#allocation7 + $0xc8] sm:$0xff]
    %v907 = vld [vmem:[#allocation7 + $0xd0] sm:$0xff]
    %v908 = vld [vmem:[#allocation7 + $0xd8] sm:$0xff]
    %v909 = vld [vmem:[#allocation7 + $0xe0] sm:$0xff]
    %v910 = vld [vmem:[#allocation7 + $0xe8] sm:$0xff]
    %v911 = vld [vmem:[#allocation7 + $0xf0] sm:$0xff]
    %v912 = vld [vmem:[#allocation7 + $0xf8] sm:$0xff]
    %v913 = vld [vmem:[#allocation7 + $0x100] sm:$0xff]
    %v914 = vld [vmem:[#allocation7 + $0x108] sm:$0xff]
    %v915 = vld [vmem:[#allocation7 + $0x110] sm:$0xff]
    %v916 = vld [vmem:[#allocation7 + $0x118] sm:$0xff]
    %v917 = vld [vmem:[#allocation7 + $0x120] sm:$0xff]
    %v918 = vld [vmem:[#allocation7 + $0x128] sm:$0xff]
    %v919 = vld [vmem:[#allocation7 + $0x130] sm:$0xff]
    %v920 = vld [vmem:[#allocation7 + $0x138] sm:$0xff]
    %v921 = vld [vmem:[#allocation7 + $0x140] sm:$0xff]
    %v922 = vld [vmem:[#allocation7 + $0x148] sm:$0xff]
    %v923 = vld [vmem:[#allocation7 + $0x150] sm:$0xff]
    %v924 = vld [vmem:[#allocation7 + $0x158] sm:$0xff]
    %v925 = vld [vmem:[#allocation7 + $0x160] sm:$0xff]
    %v926 = vld [vmem:[#allocation7 + $0x168] sm:$0xff]
    %v927 = vld [vmem:[#allocation7 + $0x170] sm:$0xff]
    %v928 = vld [vmem:[#allocation7 + $0x178] sm:$0xff]
    %v929 = vld [vmem:[#allocation7 + $0x180] sm:$0xff]
    %v930 = vld [vmem:[#allocation7 + $0x188] sm:$0xff]
    %v931 = vld [vmem:[#allocation7 + $0x190] sm:$0xff]
    %v932 = vld [vmem:[#allocation7 + $0x198] sm:$0xff]
    %v933 = vld [vmem:[#allocation7 + $0x1a0] sm:$0xff]
    %v934 = vld [vmem:[#allocation7 + $0x1a8] sm:$0xff]
    %v935 = vld [vmem:[#allocation7 + $0x1b0] sm:$0xff]
    %v936 = vld [vmem:[#allocation7 + $0x1b8] sm:$0xff]
    %v937 = vld [vmem:[#allocation7 + $0x1c0] sm:$0xff]
    %v938 = vld [vmem:[#allocation7 + $0x1c8] sm:$0xff]
    %v939 = vld [vmem:[#allocation7 + $0x1d0] sm:$0xff]
    %v940 = vld [vmem:[#allocation7 + $0x1d8] sm:$0xff]
    %v941 = vld [vmem:[#allocation7 + $0x1e0] sm:$0xff]
    %v942 = vld [vmem:[#allocation7 + $0x1e8] sm:$0xff]
    %v943 = vld [vmem:[#allocation7 + $0x1f0] sm:$0xff]
    %v944 = vld [vmem:[#allocation7 + $0x1f8] sm:$0xff]
    %v945 = vld [vmem:[#allocation7 + $0x200] sm:$0xff]
    %v946 = vld [vmem:[#allocation7 + $0x208] sm:$0xff]
    %v947 = vld [vmem:[#allocation7 + $0x210] sm:$0xff]
    %v948 = vld [vmem:[#allocation7 + $0x218] sm:$0xff]
    %v949 = vld [vmem:[#allocation7 + $0x220] sm:$0xff]
    %v950 = vld [vmem:[#allocation7 + $0x228] sm:$0xff]
    %v951 = vld [vmem:[#allocation7 + $0x230] sm:$0xff]
    %v952 = vld [vmem:[#allocation7 + $0x238] sm:$0xff]
    %v953 = vld [vmem:[#allocation7 + $0x240] sm:$0xff]
    %v954 = vld [vmem:[#allocation7 + $0x248] sm:$0xff]
    %v955 = vld [vmem:[#allocation7 + $0x250] sm:$0xf]
    %v956 = vld [vmem:[#allocation7 + $0x258] sm:$0xf]
    %v957 = vld [vmem:[%s3] sm:$0x3]
    %v959 = vlaneseq
    %v960 = vshrl.u32 %v959, 7
    %v961 = vsub.s32 0, %v960
    %v962 = vrot.slane %v957, %v961
    %v963 = vlaneseq
    %v964 = vshrl.u32 %v963, 7
    %v965 = vsub.s32 1, %v964
    %v966 = vrot.slane %v957, %v965
    %v970 = vcombine.high %v880, %v880
    %v972 = vunpack.c.l.s4 1983009808
    %v973 = vunpack.c.0.s8 %v972
    %v974 = vlaneseq
    %v975 = vshrl.u32 %v974, 7
    %v976 = vsub.s32 %v973, %v975
    %v977 = vrot.slane %v880, %v976
    %v979 = vunpack.c.l.s4 1983009808
    %v980 = vunpack.c.0.s8 %v979
    %v981 = vlaneseq
    %v982 = vshrl.u32 %v981, 7
    %v983 = vsub.s32 %v980, %v982
    %v984 = vrot.slane %v970, %v983
    %v985 = vcombine.high %v977, %v977
    %v988 = vsel %vm229, %v984, 0
    %v991 = vsel %vm232, %v955, 0
    %v994 = vsel %vm232, %v956, 0
    %996 = vmatprep.subr.mxu0 %v912
    %997 = vmatpush1.msra.mxu0 %v911
    %998 = vmatprep.subr.mxu0 %v910
    %999 = vmatpush1.msra.mxu0 %v909
    %1000 = vmatprep.subr.mxu0 %v908
    %1001 = vmatpush1.msra.mxu0 %v907
    %1002 = vmatprep.subr.mxu0 %v906
    %1003 = vmatpush1.msra.mxu0 %v905
    %1004 = vmatprep.subr.mxu0 %v904
    %1005 = vmatpush1.msra.mxu0 %v903
    %1006 = vmatprep.subr.mxu0 %v902
    %1007 = vmatpush1.msra.mxu0 %v901
    %1008 = vmatprep.subr.mxu0 %v900
    %1009 = vmatpush1.msra.mxu0 %v899
    %1010 = vmatprep.subr.mxu0 %v898
    %1011 = vmatpush1.msra.mxu0 %v897
    %1012 = vmatprep.subr.mxu0 %v896
    %1013 = vmatpush1.msra.mxu0 %v895
    %1014 = vmatprep.subr.mxu0 %v894
    %1015 = vmatpush1.msra.mxu0 %v893
    %1016 = vmatprep.subr.mxu0 %v892
    %1017 = vmatpush1.msra.mxu0 %v891
    %1018 = vmatprep.subr.mxu0 %v890
    %1019 = vmatpush1.msra.mxu0 %v889
    %1020 = vmatprep.subr.mxu0 %v888
    %1021 = vmatpush1.msra.mxu0 %v887
    %1022 = vmatprep.subr.mxu0 %v886
    %1023 = vmatpush1.msra.mxu0 %v885
    %1024 = vmatprep.subr.mxu0 %v884
    %1025 = vmatpush1.msra.mxu0 %v883
    %1026 = vmatprep.subr.mxu0 %v882
    %1027 = vmatpush1.msra.mxu0 %v881
    %1028 = vmatprep.subr.mxu0 %v944
    %1029 = vmatpush2.msra.mxu0 %v943
    %1030 = vmatprep.subr.mxu0 %v942
    %1031 = vmatpush2.msra.mxu0 %v941
    %1032 = vmatprep.subr.mxu0 %v940
    %1033 = vmatpush2.msra.mxu0 %v939
    %1034 = vmatprep.subr.mxu0 %v938
    %1035 = vmatpush2.msra.mxu0 %v937
    %1036 = vmatprep.subr.mxu0 %v936
    %1037 = vmatpush2.msra.mxu0 %v935
    %1038 = vmatprep.subr.mxu0 %v934
    %1039 = vmatpush2.msra.mxu0 %v933
    %1040 = vmatprep.subr.mxu0 %v932
    %1041 = vmatpush2.msra.mxu0 %v931
    %1042 = vmatprep.subr.mxu0 %v930
    %1043 = vmatpush2.msra.mxu0 %v929
    %1044 = vmatprep.subr.mxu0 %v928
    %1045 = vmatpush2.msra.mxu0 %v927
    %1046 = vmatprep.subr.mxu0 %v926
    %1047 = vmatpush2.msra.mxu0 %v925
    %1048 = vmatprep.subr.mxu0 %v924
    %1049 = vmatpush2.msra.mxu0 %v923
    %1050 = vmatprep.subr.mxu0 %v922
    %1051 = vmatpush2.msra.mxu0 %v921
    %1052 = vmatprep.subr.mxu0 %v920
    %1053 = vmatpush2.msra.mxu0 %v919
    %1054 = vmatprep.subr.mxu0 %v918
    %1055 = vmatpush2.msra.mxu0 %v917
    %1056 = vmatprep.subr.mxu0 %v916
    %1057 = vmatpush2.msra.mxu0 %v915
    %1058 = vmatprep.subr.mxu0 %v914
    %1059 = vmatpush2.msra.mxu0 %v913
    %1060 = vmatprep.mubr.f32.mxu0 %v985
    %1061 = vmatmul.mubr.f32.gmra.mxu0 %v977
    %v1062 = vpop.f32.mrf.mxu0
    %v1063 = vadd.f32 %v962, %v1062
    %v1064 = vpop.f32.mrf.mxu0
    %v1065 = vadd.f32 %v966, %v1064
    %1066 = vdwg.mxu0
    %1067 = vmatprep.subr.mxu0 0.0
    %1068 = vmatpush1.msra.mxu0 0.0
    %1069 = vmatprep.subr.mxu0 0.0
    %1070 = vmatpush1.msra.mxu0 0.0
    %1071 = vmatprep.subr.mxu0 0.0
    %1072 = vmatpush1.msra.mxu0 0.0
    %1073 = vmatprep.subr.mxu0 0.0
    %1074 = vmatpush1.msra.mxu0 0.0
    %1075 = vmatprep.subr.mxu0 0.0
    %1076 = vmatpush1.msra.mxu0 0.0
    %1077 = vmatprep.subr.mxu0 0.0
    %1078 = vmatpush1.msra.mxu0 0.0
    %1079 = vmatprep.subr.mxu0 0.0
    %1080 = vmatpush1.msra.mxu0 0.0
    %1081 = vmatprep.subr.mxu0 0.0
    %1082 = vmatpush1.msra.mxu0 0.0
    %1083 = vmatprep.subr.mxu0 0.0
    %1084 = vmatpush1.msra.mxu0 0.0
    %1085 = vmatprep.subr.mxu0 0.0
    %1086 = vmatpush1.msra.mxu0 0.0
    %1087 = vmatprep.subr.mxu0 %v994
    %1088 = vmatpush1.msra.mxu0 %v991
    %1089 = vmatprep.subr.mxu0 %v954
    %1090 = vmatpush1.msra.mxu0 %v953
    %1091 = vmatprep.subr.mxu0 %v952
    %1092 = vmatpush1.msra.mxu0 %v951
    %1093 = vmatprep.subr.mxu0 %v950
    %1094 = vmatpush1.msra.mxu0 %v949
    %1095 = vmatprep.subr.mxu0 %v948
    %1096 = vmatpush1.msra.mxu0 %v947
    %1097 = vmatprep.subr.mxu0 %v946
    %1098 = vmatpush1.msra.mxu0 %v945
    %1099 = vmatprep.subr.mxu0 0.0
    %1100 = vmatpush2.msra.mxu0 0.0
    %1101 = vmatprep.subr.mxu0 0.0
    %1102 = vmatpush2.msra.mxu0 0.0
    %1103 = vmatprep.subr.mxu0 0.0
    %1104 = vmatpush2.msra.mxu0 0.0
    %1105 = vmatprep.subr.mxu0 0.0
    %1106 = vmatpush2.msra.mxu0 0.0
    %1107 = vmatprep.subr.mxu0 0.0
    %1108 = vmatpush2.msra.mxu0 0.0
    %1109 = vmatprep.subr.mxu0 0.0
    %1110 = vmatpush2.msra.mxu0 0.0
    %1111 = vmatprep.subr.mxu0 0.0
    %1112 = vmatpush2.msra.mxu0 0.0
    %1113 = vmatprep.subr.mxu0 0.0
    %1114 = vmatpush2.msra.mxu0 0.0
    %1115 = vmatprep.subr.mxu0 0.0
    %1116 = vmatpush2.msra.mxu0 0.0
    %1117 = vmatprep.subr.mxu0 0.0
    %1118 = vmatpush2.msra.mxu0 0.0
    %1119 = vmatprep.subr.mxu0 0.0
    %1120 = vmatpush2.msra.mxu0 0.0
    %1121 = vmatprep.subr.mxu0 0.0
    %1122 = vmatpush2.msra.mxu0 0.0
    %1123 = vmatprep.subr.mxu0 0.0
    %1124 = vmatpush2.msra.mxu0 0.0
    %1125 = vmatprep.subr.mxu0 0.0
    %1126 = vmatpush2.msra.mxu0 0.0
    %1127 = vmatprep.subr.mxu0 0.0
    %1128 = vmatpush2.msra.mxu0 0.0
    %1129 = vmatprep.subr.mxu0 0.0
    %1130 = vmatpush2.msra.mxu0 0.0
    %1131 = vmatprep.mubr.f32.mxu0 0.0
    %1132 = vmatmul.mubr.f32.gmra.mxu0 %v988
    %v1133 = vpop.f32.mrf.mxu0
    %v1134 = vadd.f32 %v1063, %v1133
    %v1135 = vpop.f32.mrf.mxu0
    %v1136 = vadd.f32 %v1065, %v1135
    %1137 = vdwg.mxu0
    %s1138 = scalar_lea.vmem [#allocation2], 10
    %1139 = vst [vmem:[%s1138] sm:$0x3] %v1134
    %v1140 = vld [vmem:[#allocation10] sm:$0xff]
    %v1141 = vld [vmem:[#allocation10 + $0x8] sm:$0xff]
    %v1142 = vld [vmem:[#allocation10 + $0x10] sm:$0xff]
    %v1143 = vld [vmem:[#allocation10 + $0x18] sm:$0xff]
    %v1144 = vsel %vm387, %v873, 0
    %1146 = vmatprep.subr.mxu0 0.0
    %1147 = vmatpush1.msra.mxu0 0.0
    %1148 = vmatprep.subr.mxu0 0.0
    %1149 = vmatpush1.msra.mxu0 0.0
    %1150 = vmatprep.subr.mxu0 0.0
    %1151 = vmatpush1.msra.mxu0 0.0
    %1152 = vmatprep.subr.mxu0 0.0
    %1153 = vmatpush1.msra.mxu0 0.0
    %1154 = vmatprep.subr.mxu0 0.0
    %1155 = vmatpush1.msra.mxu0 0.0
    %1156 = vmatprep.subr.mxu0 0.0
    %1157 = vmatpush1.msra.mxu0 0.0
    %1158 = vmatprep.subr.mxu0 0.0
    %1159 = vmatpush1.msra.mxu0 0.0
    %1160 = vmatprep.subr.mxu0 0.0
    %1161 = vmatpush1.msra.mxu0 0.0
    %1162 = vmatprep.subr.mxu0 0.0
    %1163 = vmatpush1.msra.mxu0 0.0
    %1164 = vmatprep.subr.mxu0 0.0
    %1165 = vmatpush1.msra.mxu0 0.0
    %1166 = vmatprep.subr.mxu0 0.0
    %1167 = vmatpush1.msra.mxu0 0.0
    %1168 = vmatprep.subr.mxu0 0.0
    %1169 = vmatpush1.msra.mxu0 0.0
    %1170 = vmatprep.subr.mxu0 0.0
    %1171 = vmatpush1.msra.mxu0 %v1143
    %1172 = vmatprep.subr.mxu0 0.0
    %1173 = vmatpush1.msra.mxu0 %v1142
    %1174 = vmatprep.subr.mxu0 0.0
    %1175 = vmatpush1.msra.mxu0 %v1141
    %1176 = vmatprep.subr.mxu0 0.0
    %1177 = vmatpush1.msra.mxu0 %v1140
    %1178 = vmatprep.subr.mxu0 0.0
    %1179 = vmatpush2.msra.mxu0 0.0
    %1180 = vmatprep.subr.mxu0 0.0
    %1181 = vmatpush2.msra.mxu0 0.0
    %1182 = vmatprep.subr.mxu0 0.0
    %1183 = vmatpush2.msra.mxu0 0.0
    %1184 = vmatprep.subr.mxu0 0.0
    %1185 = vmatpush2.msra.mxu0 0.0
    %1186 = vmatprep.subr.mxu0 0.0
    %1187 = vmatpush2.msra.mxu0 0.0
    %1188 = vmatprep.subr.mxu0 0.0
    %1189 = vmatpush2.msra.mxu0 0.0
    %1190 = vmatprep.subr.mxu0 0.0
    %1191 = vmatpush2.msra.mxu0 0.0
    %1192 = vmatprep.subr.mxu0 0.0
    %1193 = vmatpush2.msra.mxu0 0.0
    %1194 = vmatprep.subr.mxu0 0.0
    %1195 = vmatpush2.msra.mxu0 0.0
    %1196 = vmatprep.subr.mxu0 0.0
    %1197 = vmatpush2.msra.mxu0 0.0
    %1198 = vmatprep.subr.mxu0 0.0
    %1199 = vmatpush2.msra.mxu0 0.0
    %1200 = vmatprep.subr.mxu0 0.0
    %1201 = vmatpush2.msra.mxu0 0.0
    %1202 = vmatprep.subr.mxu0 0.0
    %1203 = vmatpush2.msra.mxu0 0.0
    %1204 = vmatprep.subr.mxu0 0.0
    %1205 = vmatpush2.msra.mxu0 0.0
    %1206 = vmatprep.subr.mxu0 0.0
    %1207 = vmatpush2.msra.mxu0 0.0
    %1208 = vmatprep.subr.mxu0 0.0
    %1209 = vmatpush2.msra.mxu0 0.0
    %1210 = vmatprep.mubr.f32.mxu0 0.0
    %1211 = vmatmul.mubr.f32.gmra.mxu0 %v1144
    %v1212 = vpop.f32.mrf.mxu0
    %v1213 = vadd.f32 0.0, %v1212
    %v1214 = vpop.f32.mrf.mxu0
    %1215 = vdwg.mxu0
    %v1216 = vadd.f32 %v1136, %v1213
    %v1217 = vsub.f32 0.0, %v1216
    %v1218 = vmul.f32 %v1217, 1.442695
    %v1219 = vpow.pop %v1218
    %v1220 = vadd.f32 %v1219, 1.0
    %v1221 = vrcp.pop %v1220
    %v1222 = vmul.f32 1.0, %v1221
    %v1223 = vtanh.pop %v1216
    %v1224 = vmul.f32 %v1222, %v870
    %1226 = vrot.lane.b32.xlu0 %v1223, 64
    %v1227 = vpop.permute.xlu0 %1226
    %v1229 = vmul.f32 %v1222, %v1227
    %1231 = vrot.lane.b32.xlu0 %v1229, 32
    %v1232 = vpop.permute.xlu0 %1231
    %v1234 = vadd.f32 %v1224, %v1232
    %v1235 = vtanh.pop %v1234
    %1237 = vrot.lane.b32.xlu0 %v1235, 64
    %v1238 = vpop.permute.xlu0 %1237
    %v1240 = vmul.f32 %v1222, %v1238
    %1242 = vset.pattern.permute.xlu0 0
    %1243 = vperm.xlu0 %1242, %v878
    %v1244 = vpop.permute.xlu0 %1243
    %v1246 = vmul.f32 %v1244, %v1240
    %v1247 = vmul.f32 %v1244, %v1234
    %1249 = vrot.lane.b32.xlu0 %v1246, 32
    %v1250 = vpop.permute.xlu0 %1249
    %s1252 = scalar_lea.vmem [#allocation3], 10
    %1253 = vst.msk [vmem:[%s1252] sm:$0x3] %vm498, %v1250
    %s1254 = scalar_lea.vmem %s1, 8
    %v1255 = vld [vmem:[%s1254] sm:$0x3]
    %s1256 = scalar_lea.vmem [#allocation4], 24
    %v1257 = vld [vmem:[%s1256] sm:$0x3f]
    %v1258 = vld [vmem:[#allocation7] sm:$0xff]
    %v1259 = vld [vmem:[#allocation7 + $0x8] sm:$0xff]
    %v1260 = vld [vmem:[#allocation7 + $0x10] sm:$0xff]
    %v1261 = vld [vmem:[#allocation7 + $0x18] sm:$0xff]
    %v1262 = vld [vmem:[#allocation7 + $0x20] sm:$0xff]
    %v1263 = vld [vmem:[#allocation7 + $0x28] sm:$0xff]
    %v1264 = vld [vmem:[#allocation7 + $0x30] sm:$0xff]
    %v1265 = vld [vmem:[#allocation7 + $0x38] sm:$0xff]
    %v1266 = vld [vmem:[#allocation7 + $0x40] sm:$0xff]
    %v1267 = vld [vmem:[#allocation7 + $0x48] sm:$0xff]
    %v1268 = vld [vmem:[#allocation7 + $0x50] sm:$0xff]
    %v1269 = vld [vmem:[#allocation7 + $0x58] sm:$0xff]
    %v1270 = vld [vmem:[#allocation7 + $0x60] sm:$0xff]
    %v1271 = vld [vmem:[#allocation7 + $0x68] sm:$0xff]
    %v1272 = vld [vmem:[#allocation7 + $0x70] sm:$0xff]
    %v1273 = vld [vmem:[#allocation7 + $0x78] sm:$0xff]
    %v1274 = vld [vmem:[#allocation7 + $0x80] sm:$0xff]
    %v1275 = vld [vmem:[#allocation7 + $0x88] sm:$0xff]
    %v1276 = vld [vmem:[#allocation7 + $0x90] sm:$0xff]
    %v1277 = vld [vmem:[#allocation7 + $0x98] sm:$0xff]
    %v1278 = vld [vmem:[#allocation7 + $0xa0] sm:$0xff]
    %v1279 = vld [vmem:[#allocation7 + $0xa8] sm:$0xff]
    %v1280 = vld [vmem:[#allocation7 + $0xb0] sm:$0xff]
    %v1281 = vld [vmem:[#allocation7 + $0xb8] sm:$0xff]
    %v1282 = vld [vmem:[#allocation7 + $0xc0] sm:$0xff]
    %v1283 = vld [vmem:[#allocation7 + $0xc8] sm:$0xff]
    %v1284 = vld [vmem:[#allocation7 + $0xd0] sm:$0xff]
    %v1285 = vld [vmem:[#allocation7 + $0xd8] sm:$0xff]
    %v1286 = vld [vmem:[#allocation7 + $0xe0] sm:$0xff]
    %v1287 = vld [vmem:[#allocation7 + $0xe8] sm:$0xff]
    %v1288 = vld [vmem:[#allocation7 + $0xf0] sm:$0xff]
    %v1289 = vld [vmem:[#allocation7 + $0xf8] sm:$0xff]
    %v1290 = vld [vmem:[#allocation7 + $0x100] sm:$0xff]
    %v1291 = vld [vmem:[#allocation7 + $0x108] sm:$0xff]
    %v1292 = vld [vmem:[#allocation7 + $0x110] sm:$0xff]
    %v1293 = vld [vmem:[#allocation7 + $0x118] sm:$0xff]
    %v1294 = vld [vmem:[#allocation7 + $0x120] sm:$0xff]
    %v1295 = vld [vmem:[#allocation7 + $0x128] sm:$0xff]
    %v1296 = vld [vmem:[#allocation7 + $0x130] sm:$0xff]
    %v1297 = vld [vmem:[#allocation7 + $0x138] sm:$0xff]
    %v1298 = vld [vmem:[#allocation7 + $0x140] sm:$0xff]
    %v1299 = vld [vmem:[#allocation7 + $0x148] sm:$0xff]
    %v1300 = vld [vmem:[#allocation7 + $0x150] sm:$0xff]
    %v1301 = vld [vmem:[#allocation7 + $0x158] sm:$0xff]
    %v1302 = vld [vmem:[#allocation7 + $0x160] sm:$0xff]
    %v1303 = vld [vmem:[#allocation7 + $0x168] sm:$0xff]
    %v1304 = vld [vmem:[#allocation7 + $0x170] sm:$0xff]
    %v1305 = vld [vmem:[#allocation7 + $0x178] sm:$0xff]
    %v1306 = vld [vmem:[#allocation7 + $0x180] sm:$0xff]
    %v1307 = vld [vmem:[#allocation7 + $0x188] sm:$0xff]
    %v1308 = vld [vmem:[#allocation7 + $0x190] sm:$0xff]
    %v1309 = vld [vmem:[#allocation7 + $0x198] sm:$0xff]
    %v1310 = vld [vmem:[#allocation7 + $0x1a0] sm:$0xff]
    %v1311 = vld [vmem:[#allocation7 + $0x1a8] sm:$0xff]
    %v1312 = vld [vmem:[#allocation7 + $0x1b0] sm:$0xff]
    %v1313 = vld [vmem:[#allocation7 + $0x1b8] sm:$0xff]
    %v1314 = vld [vmem:[#allocation7 + $0x1c0] sm:$0xff]
    %v1315 = vld [vmem:[#allocation7 + $0x1c8] sm:$0xff]
    %v1316 = vld [vmem:[#allocation7 + $0x1d0] sm:$0xff]
    %v1317 = vld [vmem:[#allocation7 + $0x1d8] sm:$0xff]
    %v1318 = vld [vmem:[#allocation7 + $0x1e0] sm:$0xff]
    %v1319 = vld [vmem:[#allocation7 + $0x1e8] sm:$0xff]
    %v1320 = vld [vmem:[#allocation7 + $0x1f0] sm:$0xff]
    %v1321 = vld [vmem:[#allocation7 + $0x1f8] sm:$0xff]
    %v1322 = vld [vmem:[#allocation7 + $0x200] sm:$0xff]
    %v1323 = vld [vmem:[#allocation7 + $0x208] sm:$0xff]
    %v1324 = vld [vmem:[#allocation7 + $0x210] sm:$0xff]
    %v1325 = vld [vmem:[#allocation7 + $0x218] sm:$0xff]
    %v1326 = vld [vmem:[#allocation7 + $0x220] sm:$0xff]
    %v1327 = vld [vmem:[#allocation7 + $0x228] sm:$0xff]
    %v1328 = vld [vmem:[#allocation7 + $0x230] sm:$0xff]
    %v1329 = vld [vmem:[#allocation7 + $0x238] sm:$0xff]
    %v1330 = vld [vmem:[#allocation7 + $0x240] sm:$0xff]
    %v1331 = vld [vmem:[#allocation7 + $0x248] sm:$0xff]
    %v1332 = vld [vmem:[#allocation7 + $0x250] sm:$0xf]
    %v1333 = vld [vmem:[#allocation7 + $0x258] sm:$0xf]
    %v1334 = vld [vmem:[%s3] sm:$0x3]
    %v1336 = vlaneseq
    %v1337 = vshrl.u32 %v1336, 7
    %v1338 = vsub.s32 0, %v1337
    %v1339 = vrot.slane %v1334, %v1338
    %v1340 = vlaneseq
    %v1341 = vshrl.u32 %v1340, 7
    %v1342 = vsub.s32 1, %v1341
    %v1343 = vrot.slane %v1334, %v1342
    %v1347 = vcombine.high %v1257, %v1257
    %v1349 = vunpack.c.l.s4 1983009808
    %v1350 = vunpack.c.0.s8 %v1349
    %v1351 = vlaneseq
    %v1352 = vshrl.u32 %v1351, 7
    %v1353 = vsub.s32 %v1350, %v1352
    %v1354 = vrot.slane %v1257, %v1353
    %v1356 = vunpack.c.l.s4 1983009808
    %v1357 = vunpack.c.0.s8 %v1356
    %v1358 = vlaneseq
    %v1359 = vshrl.u32 %v1358, 7
    %v1360 = vsub.s32 %v1357, %v1359
    %v1361 = vrot.slane %v1347, %v1360
    %v1362 = vcombine.high %v1354, %v1354
    %v1365 = vsel %vm229, %v1361, 0
    %v1368 = vsel %vm232, %v1332, 0
    %v1371 = vsel %vm232, %v1333, 0
    %1373 = vmatprep.subr.mxu0 %v1289
    %1374 = vmatpush1.msra.mxu0 %v1288
    %1375 = vmatprep.subr.mxu0 %v1287
    %1376 = vmatpush1.msra.mxu0 %v1286
    %1377 = vmatprep.subr.mxu0 %v1285
    %1378 = vmatpush1.msra.mxu0 %v1284
    %1379 = vmatprep.subr.mxu0 %v1283
    %1380 = vmatpush1.msra.mxu0 %v1282
    %1381 = vmatprep.subr.mxu0 %v1281
    %1382 = vmatpush1.msra.mxu0 %v1280
    %1383 = vmatprep.subr.mxu0 %v1279
    %1384 = vmatpush1.msra.mxu0 %v1278
    %1385 = vmatprep.subr.mxu0 %v1277
    %1386 = vmatpush1.msra.mxu0 %v1276
    %1387 = vmatprep.subr.mxu0 %v1275
    %1388 = vmatpush1.msra.mxu0 %v1274
    %1389 = vmatprep.subr.mxu0 %v1273
    %1390 = vmatpush1.msra.mxu0 %v1272
    %1391 = vmatprep.subr.mxu0 %v1271
    %1392 = vmatpush1.msra.mxu0 %v1270
    %1393 = vmatprep.subr.mxu0 %v1269
    %1394 = vmatpush1.msra.mxu0 %v1268
    %1395 = vmatprep.subr.mxu0 %v1267
    %1396 = vmatpush1.msra.mxu0 %v1266
    %1397 = vmatprep.subr.mxu0 %v1265
    %1398 = vmatpush1.msra.mxu0 %v1264
    %1399 = vmatprep.subr.mxu0 %v1263
    %1400 = vmatpush1.msra.mxu0 %v1262
    %1401 = vmatprep.subr.mxu0 %v1261
    %1402 = vmatpush1.msra.mxu0 %v1260
    %1403 = vmatprep.subr.mxu0 %v1259
    %1404 = vmatpush1.msra.mxu0 %v1258
    %1405 = vmatprep.subr.mxu0 %v1321
    %1406 = vmatpush2.msra.mxu0 %v1320
    %1407 = vmatprep.subr.mxu0 %v1319
    %1408 = vmatpush2.msra.mxu0 %v1318
    %1409 = vmatprep.subr.mxu0 %v1317
    %1410 = vmatpush2.msra.mxu0 %v1316
    %1411 = vmatprep.subr.mxu0 %v1315
    %1412 = vmatpush2.msra.mxu0 %v1314
    %1413 = vmatprep.subr.mxu0 %v1313
    %1414 = vmatpush2.msra.mxu0 %v1312
    %1415 = vmatprep.subr.mxu0 %v1311
    %1416 = vmatpush2.msra.mxu0 %v1310
    %1417 = vmatprep.subr.mxu0 %v1309
    %1418 = vmatpush2.msra.mxu0 %v1308
    %1419 = vmatprep.subr.mxu0 %v1307
    %1420 = vmatpush2.msra.mxu0 %v1306
    %1421 = vmatprep.subr.mxu0 %v1305
    %1422 = vmatpush2.msra.mxu0 %v1304
    %1423 = vmatprep.subr.mxu0 %v1303
    %1424 = vmatpush2.msra.mxu0 %v1302
    %1425 = vmatprep.subr.mxu0 %v1301
    %1426 = vmatpush2.msra.mxu0 %v1300
    %1427 = vmatprep.subr.mxu0 %v1299
    %1428 = vmatpush2.msra.mxu0 %v1298
    %1429 = vmatprep.subr.mxu0 %v1297
    %1430 = vmatpush2.msra.mxu0 %v1296
    %1431 = vmatprep.subr.mxu0 %v1295
    %1432 = vmatpush2.msra.mxu0 %v1294
    %1433 = vmatprep.subr.mxu0 %v1293
    %1434 = vmatpush2.msra.mxu0 %v1292
    %1435 = vmatprep.subr.mxu0 %v1291
    %1436 = vmatpush2.msra.mxu0 %v1290
    %1437 = vmatprep.mubr.f32.mxu0 %v1362
    %1438 = vmatmul.mubr.f32.gmra.mxu0 %v1354
    %v1439 = vpop.f32.mrf.mxu0
    %v1440 = vadd.f32 %v1339, %v1439
    %v1441 = vpop.f32.mrf.mxu0
    %v1442 = vadd.f32 %v1343, %v1441
    %1443 = vdwg.mxu0
    %1444 = vmatprep.subr.mxu0 0.0
    %1445 = vmatpush1.msra.mxu0 0.0
    %1446 = vmatprep.subr.mxu0 0.0
    %1447 = vmatpush1.msra.mxu0 0.0
    %1448 = vmatprep.subr.mxu0 0.0
    %1449 = vmatpush1.msra.mxu0 0.0
    %1450 = vmatprep.subr.mxu0 0.0
    %1451 = vmatpush1.msra.mxu0 0.0
    %1452 = vmatprep.subr.mxu0 0.0
    %1453 = vmatpush1.msra.mxu0 0.0
    %1454 = vmatprep.subr.mxu0 0.0
    %1455 = vmatpush1.msra.mxu0 0.0
    %1456 = vmatprep.subr.mxu0 0.0
    %1457 = vmatpush1.msra.mxu0 0.0
    %1458 = vmatprep.subr.mxu0 0.0
    %1459 = vmatpush1.msra.mxu0 0.0
    %1460 = vmatprep.subr.mxu0 0.0
    %1461 = vmatpush1.msra.mxu0 0.0
    %1462 = vmatprep.subr.mxu0 0.0
    %1463 = vmatpush1.msra.mxu0 0.0
    %1464 = vmatprep.subr.mxu0 %v1371
    %1465 = vmatpush1.msra.mxu0 %v1368
    %1466 = vmatprep.subr.mxu0 %v1331
    %1467 = vmatpush1.msra.mxu0 %v1330
    %1468 = vmatprep.subr.mxu0 %v1329
    %1469 = vmatpush1.msra.mxu0 %v1328
    %1470 = vmatprep.subr.mxu0 %v1327
    %1471 = vmatpush1.msra.mxu0 %v1326
    %1472 = vmatprep.subr.mxu0 %v1325
    %1473 = vmatpush1.msra.mxu0 %v1324
    %1474 = vmatprep.subr.mxu0 %v1323
    %1475 = vmatpush1.msra.mxu0 %v1322
    %1476 = vmatprep.subr.mxu0 0.0
    %1477 = vmatpush2.msra.mxu0 0.0
    %1478 = vmatprep.subr.mxu0 0.0
    %1479 = vmatpush2.msra.mxu0 0.0
    %1480 = vmatprep.subr.mxu0 0.0
    %1481 = vmatpush2.msra.mxu0 0.0
    %1482 = vmatprep.subr.mxu0 0.0
    %1483 = vmatpush2.msra.mxu0 0.0
    %1484 = vmatprep.subr.mxu0 0.0
    %1485 = vmatpush2.msra.mxu0 0.0
    %1486 = vmatprep.subr.mxu0 0.0
    %1487 = vmatpush2.msra.mxu0 0.0
    %1488 = vmatprep.subr.mxu0 0.0
    %1489 = vmatpush2.msra.mxu0 0.0
    %1490 = vmatprep.subr.mxu0 0.0
    %1491 = vmatpush2.msra.mxu0 0.0
    %1492 = vmatprep.subr.mxu0 0.0
    %1493 = vmatpush2.msra.mxu0 0.0
    %1494 = vmatprep.subr.mxu0 0.0
    %1495 = vmatpush2.msra.mxu0 0.0
    %1496 = vmatprep.subr.mxu0 0.0
    %1497 = vmatpush2.msra.mxu0 0.0
    %1498 = vmatprep.subr.mxu0 0.0
    %1499 = vmatpush2.msra.mxu0 0.0
    %1500 = vmatprep.subr.mxu0 0.0
    %1501 = vmatpush2.msra.mxu0 0.0
    %1502 = vmatprep.subr.mxu0 0.0
    %1503 = vmatpush2.msra.mxu0 0.0
    %1504 = vmatprep.subr.mxu0 0.0
    %1505 = vmatpush2.msra.mxu0 0.0
    %1506 = vmatprep.subr.mxu0 0.0
    %1507 = vmatpush2.msra.mxu0 0.0
    %1508 = vmatprep.mubr.f32.mxu0 0.0
    %1509 = vmatmul.mubr.f32.gmra.mxu0 %v1365
    %v1510 = vpop.f32.mrf.mxu0
    %v1511 = vadd.f32 %v1440, %v1510
    %v1512 = vpop.f32.mrf.mxu0
    %v1513 = vadd.f32 %v1442, %v1512
    %1514 = vdwg.mxu0
    %s1515 = scalar_lea.vmem [#allocation2], 8
    %1516 = vst [vmem:[%s1515] sm:$0x3] %v1511
    %v1517 = vld [vmem:[#allocation10] sm:$0xff]
    %v1518 = vld [vmem:[#allocation10 + $0x8] sm:$0xff]
    %v1519 = vld [vmem:[#allocation10 + $0x10] sm:$0xff]
    %v1520 = vld [vmem:[#allocation10 + $0x18] sm:$0xff]
    %v1521 = vsel %vm387, %v1250, 0
    %1523 = vmatprep.subr.mxu0 0.0
    %1524 = vmatpush1.msra.mxu0 0.0
    %1525 = vmatprep.subr.mxu0 0.0
    %1526 = vmatpush1.msra.mxu0 0.0
    %1527 = vmatprep.subr.mxu0 0.0
    %1528 = vmatpush1.msra.mxu0 0.0
    %1529 = vmatprep.subr.mxu0 0.0
    %1530 = vmatpush1.msra.mxu0 0.0
    %1531 = vmatprep.subr.mxu0 0.0
    %1532 = vmatpush1.msra.mxu0 0.0
    %1533 = vmatprep.subr.mxu0 0.0
    %1534 = vmatpush1.msra.mxu0 0.0
    %1535 = vmatprep.subr.mxu0 0.0
    %1536 = vmatpush1.msra.mxu0 0.0
    %1537 = vmatprep.subr.mxu0 0.0
    %1538 = vmatpush1.msra.mxu0 0.0
    %1539 = vmatprep.subr.mxu0 0.0
    %1540 = vmatpush1.msra.mxu0 0.0
    %1541 = vmatprep.subr.mxu0 0.0
    %1542 = vmatpush1.msra.mxu0 0.0
    %1543 = vmatprep.subr.mxu0 0.0
    %1544 = vmatpush1.msra.mxu0 0.0
    %1545 = vmatprep.subr.mxu0 0.0
    %1546 = vmatpush1.msra.mxu0 0.0
    %1547 = vmatprep.subr.mxu0 0.0
    %1548 = vmatpush1.msra.mxu0 %v1520
    %1549 = vmatprep.subr.mxu0 0.0
    %1550 = vmatpush1.msra.mxu0 %v1519
    %1551 = vmatprep.subr.mxu0 0.0
    %1552 = vmatpush1.msra.mxu0 %v1518
    %1553 = vmatprep.subr.mxu0 0.0
    %1554 = vmatpush1.msra.mxu0 %v1517
    %1555 = vmatprep.subr.mxu0 0.0
    %1556 = vmatpush2.msra.mxu0 0.0
    %1557 = vmatprep.subr.mxu0 0.0
    %1558 = vmatpush2.msra.mxu0 0.0
    %1559 = vmatprep.subr.mxu0 0.0
    %1560 = vmatpush2.msra.mxu0 0.0
    %1561 = vmatprep.subr.mxu0 0.0
    %1562 = vmatpush2.msra.mxu0 0.0
    %1563 = vmatprep.subr.mxu0 0.0
    %1564 = vmatpush2.msra.mxu0 0.0
    %1565 = vmatprep.subr.mxu0 0.0
    %1566 = vmatpush2.msra.mxu0 0.0
    %1567 = vmatprep.subr.mxu0 0.0
    %1568 = vmatpush2.msra.mxu0 0.0
    %1569 = vmatprep.subr.mxu0 0.0
    %1570 = vmatpush2.msra.mxu0 0.0
    %1571 = vmatprep.subr.mxu0 0.0
    %1572 = vmatpush2.msra.mxu0 0.0
    %1573 = vmatprep.subr.mxu0 0.0
    %1574 = vmatpush2.msra.mxu0 0.0
    %1575 = vmatprep.subr.mxu0 0.0
    %1576 = vmatpush2.msra.mxu0 0.0
    %1577 = vmatprep.subr.mxu0 0.0
    %1578 = vmatpush2.msra.mxu0 0.0
    %1579 = vmatprep.subr.mxu0 0.0
    %1580 = vmatpush2.msra.mxu0 0.0
    %1581 = vmatprep.subr.mxu0 0.0
    %1582 = vmatpush2.msra.mxu0 0.0
    %1583 = vmatprep.subr.mxu0 0.0
    %1584 = vmatpush2.msra.mxu0 0.0
    %1585 = vmatprep.subr.mxu0 0.0
    %1586 = vmatpush2.msra.mxu0 0.0
    %1587 = vmatprep.mubr.f32.mxu0 0.0
    %1588 = vmatmul.mubr.f32.gmra.mxu0 %v1521
    %v1589 = vpop.f32.mrf.mxu0
    %v1590 = vadd.f32 0.0, %v1589
    %v1591 = vpop.f32.mrf.mxu0
    %1592 = vdwg.mxu0
    %v1593 = vadd.f32 %v1513, %v1590
    %v1594 = vsub.f32 0.0, %v1593
    %v1595 = vmul.f32 %v1594, 1.442695
    %v1596 = vpow.pop %v1595
    %v1597 = vadd.f32 %v1596, 1.0
    %v1598 = vrcp.pop %v1597
    %v1599 = vmul.f32 1.0, %v1598
    %v1600 = vtanh.pop %v1593
    %v1601 = vmul.f32 %v1599, %v1247
    %1603 = vrot.lane.b32.xlu0 %v1600, 64
    %v1604 = vpop.permute.xlu0 %1603
    %v1606 = vmul.f32 %v1599, %v1604
    %1608 = vrot.lane.b32.xlu0 %v1606, 32
    %v1609 = vpop.permute.xlu0 %1608
    %v1611 = vadd.f32 %v1601, %v1609
    %v1612 = vtanh.pop %v1611
    %1614 = vrot.lane.b32.xlu0 %v1612, 64
    %v1615 = vpop.permute.xlu0 %1614
    %v1617 = vmul.f32 %v1599, %v1615
    %1619 = vset.pattern.permute.xlu0 0
    %1620 = vperm.xlu0 %1619, %v1255
    %v1621 = vpop.permute.xlu0 %1620
    %v1623 = vmul.f32 %v1621, %v1617
    %v1624 = vmul.f32 %v1621, %v1611
    %1626 = vrot.lane.b32.xlu0 %v1623, 32
    %v1627 = vpop.permute.xlu0 %1626
    %s1629 = scalar_lea.vmem [#allocation3], 8
    %1630 = vst.msk [vmem:[%s1629] sm:$0x3] %vm498, %v1627
    %s1631 = scalar_lea.vmem %s1, 6
    %v1632 = vld [vmem:[%s1631] sm:$0x3]
    %s1633 = scalar_lea.vmem [#allocation4], 18
    %v1634 = vld [vmem:[%s1633] sm:$0x3f]
    %v1635 = vld [vmem:[#allocation7] sm:$0xff]
    %v1636 = vld [vmem:[#allocation7 + $0x8] sm:$0xff]
    %v1637 = vld [vmem:[#allocation7 + $0x10] sm:$0xff]
    %v1638 = vld [vmem:[#allocation7 + $0x18] sm:$0xff]
    %v1639 = vld [vmem:[#allocation7 + $0x20] sm:$0xff]
    %v1640 = vld [vmem:[#allocation7 + $0x28] sm:$0xff]
    %v1641 = vld [vmem:[#allocation7 + $0x30] sm:$0xff]
    %v1642 = vld [vmem:[#allocation7 + $0x38] sm:$0xff]
    %v1643 = vld [vmem:[#allocation7 + $0x40] sm:$0xff]
    %v1644 = vld [vmem:[#allocation7 + $0x48] sm:$0xff]
    %v1645 = vld [vmem:[#allocation7 + $0x50] sm:$0xff]
    %v1646 = vld [vmem:[#allocation7 + $0x58] sm:$0xff]
    %v1647 = vld [vmem:[#allocation7 + $0x60] sm:$0xff]
    %v1648 = vld [vmem:[#allocation7 + $0x68] sm:$0xff]
    %v1649 = vld [vmem:[#allocation7 + $0x70] sm:$0xff]
    %v1650 = vld [vmem:[#allocation7 + $0x78] sm:$0xff]
    %v1651 = vld [vmem:[#allocation7 + $0x80] sm:$0xff]
    %v1652 = vld [vmem:[#allocation7 + $0x88] sm:$0xff]
    %v1653 = vld [vmem:[#allocation7 + $0x90] sm:$0xff]
    %v1654 = vld [vmem:[#allocation7 + $0x98] sm:$0xff]
    %v1655 = vld [vmem:[#allocation7 + $0xa0] sm:$0xff]
    %v1656 = vld [vmem:[#allocation7 + $0xa8] sm:$0xff]
    %v1657 = vld [vmem:[#allocation7 + $0xb0] sm:$0xff]
    %v1658 = vld [vmem:[#allocation7 + $0xb8] sm:$0xff]
    %v1659 = vld [vmem:[#allocation7 + $0xc0] sm:$0xff]
    %v1660 = vld [vmem:[#allocation7 + $0xc8] sm:$0xff]
    %v1661 = vld [vmem:[#allocation7 + $0xd0] sm:$0xff]
    %v1662 = vld [vmem:[#allocation7 + $0xd8] sm:$0xff]
    %v1663 = vld [vmem:[#allocation7 + $0xe0] sm:$0xff]
    %v1664 = vld [vmem:[#allocation7 + $0xe8] sm:$0xff]
    %v1665 = vld [vmem:[#allocation7 + $0xf0] sm:$0xff]
    %v1666 = vld [vmem:[#allocation7 + $0xf8] sm:$0xff]
    %v1667 = vld [vmem:[#allocation7 + $0x100] sm:$0xff]
    %v1668 = vld [vmem:[#allocation7 + $0x108] sm:$0xff]
    %v1669 = vld [vmem:[#allocation7 + $0x110] sm:$0xff]
    %v1670 = vld [vmem:[#allocation7 + $0x118] sm:$0xff]
    %v1671 = vld [vmem:[#allocation7 + $0x120] sm:$0xff]
    %v1672 = vld [vmem:[#allocation7 + $0x128] sm:$0xff]
    %v1673 = vld [vmem:[#allocation7 + $0x130] sm:$0xff]
    %v1674 = vld [vmem:[#allocation7 + $0x138] sm:$0xff]
    %v1675 = vld [vmem:[#allocation7 + $0x140] sm:$0xff]
    %v1676 = vld [vmem:[#allocation7 + $0x148] sm:$0xff]
    %v1677 = vld [vmem:[#allocation7 + $0x150] sm:$0xff]
    %v1678 = vld [vmem:[#allocation7 + $0x158] sm:$0xff]
    %v1679 = vld [vmem:[#allocation7 + $0x160] sm:$0xff]
    %v1680 = vld [vmem:[#allocation7 + $0x168] sm:$0xff]
    %v1681 = vld [vmem:[#allocation7 + $0x170] sm:$0xff]
    %v1682 = vld [vmem:[#allocation7 + $0x178] sm:$0xff]
    %v1683 = vld [vmem:[#allocation7 + $0x180] sm:$0xff]
    %v1684 = vld [vmem:[#allocation7 + $0x188] sm:$0xff]
    %v1685 = vld [vmem:[#allocation7 + $0x190] sm:$0xff]
    %v1686 = vld [vmem:[#allocation7 + $0x198] sm:$0xff]
    %v1687 = vld [vmem:[#allocation7 + $0x1a0] sm:$0xff]
    %v1688 = vld [vmem:[#allocation7 + $0x1a8] sm:$0xff]
    %v1689 = vld [vmem:[#allocation7 + $0x1b0] sm:$0xff]
    %v1690 = vld [vmem:[#allocation7 + $0x1b8] sm:$0xff]
    %v1691 = vld [vmem:[#allocation7 + $0x1c0] sm:$0xff]
    %v1692 = vld [vmem:[#allocation7 + $0x1c8] sm:$0xff]
    %v1693 = vld [vmem:[#allocation7 + $0x1d0] sm:$0xff]
    %v1694 = vld [vmem:[#allocation7 + $0x1d8] sm:$0xff]
    %v1695 = vld [vmem:[#allocation7 + $0x1e0] sm:$0xff]
    %v1696 = vld [vmem:[#allocation7 + $0x1e8] sm:$0xff]
    %v1697 = vld [vmem:[#allocation7 + $0x1f0] sm:$0xff]
    %v1698 = vld [vmem:[#allocation7 + $0x1f8] sm:$0xff]
    %v1699 = vld [vmem:[#allocation7 + $0x200] sm:$0xff]
    %v1700 = vld [vmem:[#allocation7 + $0x208] sm:$0xff]
    %v1701 = vld [vmem:[#allocation7 + $0x210] sm:$0xff]
    %v1702 = vld [vmem:[#allocation7 + $0x218] sm:$0xff]
    %v1703 = vld [vmem:[#allocation7 + $0x220] sm:$0xff]
    %v1704 = vld [vmem:[#allocation7 + $0x228] sm:$0xff]
    %v1705 = vld [vmem:[#allocation7 + $0x230] sm:$0xff]
    %v1706 = vld [vmem:[#allocation7 + $0x238] sm:$0xff]
    %v1707 = vld [vmem:[#allocation7 + $0x240] sm:$0xff]
    %v1708 = vld [vmem:[#allocation7 + $0x248] sm:$0xff]
    %v1709 = vld [vmem:[#allocation7 + $0x250] sm:$0xf]
    %v1710 = vld [vmem:[#allocation7 + $0x258] sm:$0xf]
    %v1711 = vld [vmem:[%s3] sm:$0x3]
    %v1713 = vlaneseq
    %v1714 = vshrl.u32 %v1713, 7
    %v1715 = vsub.s32 0, %v1714
    %v1716 = vrot.slane %v1711, %v1715
    %v1717 = vlaneseq
    %v1718 = vshrl.u32 %v1717, 7
    %v1719 = vsub.s32 1, %v1718
    %v1720 = vrot.slane %v1711, %v1719
    %v1724 = vcombine.high %v1634, %v1634
    %v1726 = vunpack.c.l.s4 1983009808
    %v1727 = vunpack.c.0.s8 %v1726
    %v1728 = vlaneseq
    %v1729 = vshrl.u32 %v1728, 7
    %v1730 = vsub.s32 %v1727, %v1729
    %v1731 = vrot.slane %v1634, %v1730
    %v1733 = vunpack.c.l.s4 1983009808
    %v1734 = vunpack.c.0.s8 %v1733
    %v1735 = vlaneseq
    %v1736 = vshrl.u32 %v1735, 7
    %v1737 = vsub.s32 %v1734, %v1736
    %v1738 = vrot.slane %v1724, %v1737
    %v1739 = vcombine.high %v1731, %v1731
    %v1742 = vsel %vm229, %v1738, 0
    %v1745 = vsel %vm232, %v1709, 0
    %v1748 = vsel %vm232, %v1710, 0
    %1750 = vmatprep.subr.mxu0 %v1666
    %1751 = vmatpush1.msra.mxu0 %v1665
    %1752 = vmatprep.subr.mxu0 %v1664
    %1753 = vmatpush1.msra.mxu0 %v1663
    %1754 = vmatprep.subr.mxu0 %v1662
    %1755 = vmatpush1.msra.mxu0 %v1661
    %1756 = vmatprep.subr.mxu0 %v1660
    %1757 = vmatpush1.msra.mxu0 %v1659
    %1758 = vmatprep.subr.mxu0 %v1658
    %1759 = vmatpush1.msra.mxu0 %v1657
    %1760 = vmatprep.subr.mxu0 %v1656
    %1761 = vmatpush1.msra.mxu0 %v1655
    %1762 = vmatprep.subr.mxu0 %v1654
    %1763 = vmatpush1.msra.mxu0 %v1653
    %1764 = vmatprep.subr.mxu0 %v1652
    %1765 = vmatpush1.msra.mxu0 %v1651
    %1766 = vmatprep.subr.mxu0 %v1650
    %1767 = vmatpush1.msra.mxu0 %v1649
    %1768 = vmatprep.subr.mxu0 %v1648
    %1769 = vmatpush1.msra.mxu0 %v1647
    %1770 = vmatprep.subr.mxu0 %v1646
    %1771 = vmatpush1.msra.mxu0 %v1645
    %1772 = vmatprep.subr.mxu0 %v1644
    %1773 = vmatpush1.msra.mxu0 %v1643
    %1774 = vmatprep.subr.mxu0 %v1642
    %1775 = vmatpush1.msra.mxu0 %v1641
    %1776 = vmatprep.subr.mxu0 %v1640
    %1777 = vmatpush1.msra.mxu0 %v1639
    %1778 = vmatprep.subr.mxu0 %v1638
    %1779 = vmatpush1.msra.mxu0 %v1637
    %1780 = vmatprep.subr.mxu0 %v1636
    %1781 = vmatpush1.msra.mxu0 %v1635
    %1782 = vmatprep.subr.mxu0 %v1698
    %1783 = vmatpush2.msra.mxu0 %v1697
    %1784 = vmatprep.subr.mxu0 %v1696
    %1785 = vmatpush2.msra.mxu0 %v1695
    %1786 = vmatprep.subr.mxu0 %v1694
    %1787 = vmatpush2.msra.mxu0 %v1693
    %1788 = vmatprep.subr.mxu0 %v1692
    %1789 = vmatpush2.msra.mxu0 %v1691
    %1790 = vmatprep.subr.mxu0 %v1690
    %1791 = vmatpush2.msra.mxu0 %v1689
    %1792 = vmatprep.subr.mxu0 %v1688
    %1793 = vmatpush2.msra.mxu0 %v1687
    %1794 = vmatprep.subr.mxu0 %v1686
    %1795 = vmatpush2.msra.mxu0 %v1685
    %1796 = vmatprep.subr.mxu0 %v1684
    %1797 = vmatpush2.msra.mxu0 %v1683
    %1798 = vmatprep.subr.mxu0 %v1682
    %1799 = vmatpush2.msra.mxu0 %v1681
    %1800 = vmatprep.subr.mxu0 %v1680
    %1801 = vmatpush2.msra.mxu0 %v1679
    %1802 = vmatprep.subr.mxu0 %v1678
    %1803 = vmatpush2.msra.mxu0 %v1677
    %1804 = vmatprep.subr.mxu0 %v1676
    %1805 = vmatpush2.msra.mxu0 %v1675
    %1806 = vmatprep.subr.mxu0 %v1674
    %1807 = vmatpush2.msra.mxu0 %v1673
    %1808 = vmatprep.subr.mxu0 %v1672
    %1809 = vmatpush2.msra.mxu0 %v1671
    %1810 = vmatprep.subr.mxu0 %v1670
    %1811 = vmatpush2.msra.mxu0 %v1669
    %1812 = vmatprep.subr.mxu0 %v1668
    %1813 = vmatpush2.msra.mxu0 %v1667
    %1814 = vmatprep.mubr.f32.mxu0 %v1739
    %1815 = vmatmul.mubr.f32.gmra.mxu0 %v1731
    %v1816 = vpop.f32.mrf.mxu0
    %v1817 = vadd.f32 %v1716, %v1816
    %v1818 = vpop.f32.mrf.mxu0
    %v1819 = vadd.f32 %v1720, %v1818
    %1820 = vdwg.mxu0
    %1821 = vmatprep.subr.mxu0 0.0
    %1822 = vmatpush1.msra.mxu0 0.0
    %1823 = vmatprep.subr.mxu0 0.0
    %1824 = vmatpush1.msra.mxu0 0.0
    %1825 = vmatprep.subr.mxu0 0.0
    %1826 = vmatpush1.msra.mxu0 0.0
    %1827 = vmatprep.subr.mxu0 0.0
    %1828 = vmatpush1.msra.mxu0 0.0
    %1829 = vmatprep.subr.mxu0 0.0
    %1830 = vmatpush1.msra.mxu0 0.0
    %1831 = vmatprep.subr.mxu0 0.0
    %1832 = vmatpush1.msra.mxu0 0.0
    %1833 = vmatprep.subr.mxu0 0.0
    %1834 = vmatpush1.msra.mxu0 0.0
    %1835 = vmatprep.subr.mxu0 0.0
    %1836 = vmatpush1.msra.mxu0 0.0
    %1837 = vmatprep.subr.mxu0 0.0
    %1838 = vmatpush1.msra.mxu0 0.0
    %1839 = vmatprep.subr.mxu0 0.0
    %1840 = vmatpush1.msra.mxu0 0.0
    %1841 = vmatprep.subr.mxu0 %v1748
    %1842 = vmatpush1.msra.mxu0 %v1745
    %1843 = vmatprep.subr.mxu0 %v1708
    %1844 = vmatpush1.msra.mxu0 %v1707
    %1845 = vmatprep.subr.mxu0 %v1706
    %1846 = vmatpush1.msra.mxu0 %v1705
    %1847 = vmatprep.subr.mxu0 %v1704
    %1848 = vmatpush1.msra.mxu0 %v1703
    %1849 = vmatprep.subr.mxu0 %v1702
    %1850 = vmatpush1.msra.mxu0 %v1701
    %1851 = vmatprep.subr.mxu0 %v1700
    %1852 = vmatpush1.msra.mxu0 %v1699
    %1853 = vmatprep.subr.mxu0 0.0
    %1854 = vmatpush2.msra.mxu0 0.0
    %1855 = vmatprep.subr.mxu0 0.0
    %1856 = vmatpush2.msra.mxu0 0.0
    %1857 = vmatprep.subr.mxu0 0.0
    %1858 = vmatpush2.msra.mxu0 0.0
    %1859 = vmatprep.subr.mxu0 0.0
    %1860 = vmatpush2.msra.mxu0 0.0
    %1861 = vmatprep.subr.mxu0 0.0
    %1862 = vmatpush2.msra.mxu0 0.0
    %1863 = vmatprep.subr.mxu0 0.0
    %1864 = vmatpush2.msra.mxu0 0.0
    %1865 = vmatprep.subr.mxu0 0.0
    %1866 = vmatpush2.msra.mxu0 0.0
    %1867 = vmatprep.subr.mxu0 0.0
    %1868 = vmatpush2.msra.mxu0 0.0
    %1869 = vmatprep.subr.mxu0 0.0
    %1870 = vmatpush2.msra.mxu0 0.0
    %1871 = vmatprep.subr.mxu0 0.0
    %1872 = vmatpush2.msra.mxu0 0.0
    %1873 = vmatprep.subr.mxu0 0.0
    %1874 = vmatpush2.msra.mxu0 0.0
    %1875 = vmatprep.subr.mxu0 0.0
    %1876 = vmatpush2.msra.mxu0 0.0
    %1877 = vmatprep.subr.mxu0 0.0
    %1878 = vmatpush2.msra.mxu0 0.0
    %1879 = vmatprep.subr.mxu0 0.0
    %1880 = vmatpush2.msra.mxu0 0.0
    %1881 = vmatprep.subr.mxu0 0.0
    %1882 = vmatpush2.msra.mxu0 0.0
    %1883 = vmatprep.subr.mxu0 0.0
    %1884 = vmatpush2.msra.mxu0 0.0
    %1885 = vmatprep.mubr.f32.mxu0 0.0
    %1886 = vmatmul.mubr.f32.gmra.mxu0 %v1742
    %v1887 = vpop.f32.mrf.mxu0
    %v1888 = vadd.f32 %v1817, %v1887
    %v1889 = vpop.f32.mrf.mxu0
    %v1890 = vadd.f32 %v1819, %v1889
    %1891 = vdwg.mxu0
    %s1892 = scalar_lea.vmem [#allocation2], 6
    %1893 = vst [vmem:[%s1892] sm:$0x3] %v1888
    %v1894 = vld [vmem:[#allocation10] sm:$0xff]
    %v1895 = vld [vmem:[#allocation10 + $0x8] sm:$0xff]
    %v1896 = vld [vmem:[#allocation10 + $0x10] sm:$0xff]
    %v1897 = vld [vmem:[#allocation10 + $0x18] sm:$0xff]
    %v1898 = vsel %vm387, %v1627, 0
    %1900 = vmatprep.subr.mxu0 0.0
    %1901 = vmatpush1.msra.mxu0 0.0
    %1902 = vmatprep.subr.mxu0 0.0
    %1903 = vmatpush1.msra.mxu0 0.0
    %1904 = vmatprep.subr.mxu0 0.0
    %1905 = vmatpush1.msra.mxu0 0.0
    %1906 = vmatprep.subr.mxu0 0.0
    %1907 = vmatpush1.msra.mxu0 0.0
    %1908 = vmatprep.subr.mxu0 0.0
    %1909 = vmatpush1.msra.mxu0 0.0
    %1910 = vmatprep.subr.mxu0 0.0
    %1911 = vmatpush1.msra.mxu0 0.0
    %1912 = vmatprep.subr.mxu0 0.0
    %1913 = vmatpush1.msra.mxu0 0.0
    %1914 = vmatprep.subr.mxu0 0.0
    %1915 = vmatpush1.msra.mxu0 0.0
    %1916 = vmatprep.subr.mxu0 0.0
    %1917 = vmatpush1.msra.mxu0 0.0
    %1918 = vmatprep.subr.mxu0 0.0
    %1919 = vmatpush1.msra.mxu0 0.0
    %1920 = vmatprep.subr.mxu0 0.0
    %1921 = vmatpush1.msra.mxu0 0.0
    %1922 = vmatprep.subr.mxu0 0.0
    %1923 = vmatpush1.msra.mxu0 0.0
    %1924 = vmatprep.subr.mxu0 0.0
    %1925 = vmatpush1.msra.mxu0 %v1897
    %1926 = vmatprep.subr.mxu0 0.0
    %1927 = vmatpush1.msra.mxu0 %v1896
    %1928 = vmatprep.subr.mxu0 0.0
    %1929 = vmatpush1.msra.mxu0 %v1895
    %1930 = vmatprep.subr.mxu0 0.0
    %1931 = vmatpush1.msra.mxu0 %v1894
    %1932 = vmatprep.subr.mxu0 0.0
    %1933 = vmatpush2.msra.mxu0 0.0
    %1934 = vmatprep.subr.mxu0 0.0
    %1935 = vmatpush2.msra.mxu0 0.0
    %1936 = vmatprep.subr.mxu0 0.0
    %1937 = vmatpush2.msra.mxu0 0.0
    %1938 = vmatprep.subr.mxu0 0.0
    %1939 = vmatpush2.msra.mxu0 0.0
    %1940 = vmatprep.subr.mxu0 0.0
    %1941 = vmatpush2.msra.mxu0 0.0
    %1942 = vmatprep.subr.mxu0 0.0
    %1943 = vmatpush2.msra.mxu0 0.0
    %1944 = vmatprep.subr.mxu0 0.0
    %1945 = vmatpush2.msra.mxu0 0.0
    %1946 = vmatprep.subr.mxu0 0.0
    %1947 = vmatpush2.msra.mxu0 0.0
    %1948 = vmatprep.subr.mxu0 0.0
    %1949 = vmatpush2.msra.mxu0 0.0
    %1950 = vmatprep.subr.mxu0 0.0
    %1951 = vmatpush2.msra.mxu0 0.0
    %1952 = vmatprep.subr.mxu0 0.0
    %1953 = vmatpush2.msra.mxu0 0.0
    %1954 = vmatprep.subr.mxu0 0.0
    %1955 = vmatpush2.msra.mxu0 0.0
    %1956 = vmatprep.subr.mxu0 0.0
    %1957 = vmatpush2.msra.mxu0 0.0
    %1958 = vmatprep.subr.mxu0 0.0
    %1959 = vmatpush2.msra.mxu0 0.0
    %1960 = vmatprep.subr.mxu0 0.0
    %1961 = vmatpush2.msra.mxu0 0.0
    %1962 = vmatprep.subr.mxu0 0.0
    %1963 = vmatpush2.msra.mxu0 0.0
    %1964 = vmatprep.mubr.f32.mxu0 0.0
    %1965 = vmatmul.mubr.f32.gmra.mxu0 %v1898
    %v1966 = vpop.f32.mrf.mxu0
    %v1967 = vadd.f32 0.0, %v1966
    %v1968 = vpop.f32.mrf.mxu0
    %1969 = vdwg.mxu0
    %v1970 = vadd.f32 %v1890, %v1967
    %v1971 = vsub.f32 0.0, %v1970
    %v1972 = vmul.f32 %v1971, 1.442695
    %v1973 = vpow.pop %v1972
    %v1974 = vadd.f32 %v1973, 1.0
    %v1975 = vrcp.pop %v1974
    %v1976 = vmul.f32 1.0, %v1975
    %v1977 = vtanh.pop %v1970
    %v1978 = vmul.f32 %v1976, %v1624
    %1980 = vrot.lane.b32.xlu0 %v1977, 64
    %v1981 = vpop.permute.xlu0 %1980
    %v1983 = vmul.f32 %v1976, %v1981
    %1985 = vrot.lane.b32.xlu0 %v1983, 32
    %v1986 = vpop.permute.xlu0 %1985
    %v1988 = vadd.f32 %v1978, %v1986
    %v1989 = vtanh.pop %v1988
    %1991 = vrot.lane.b32.xlu0 %v1989, 64
    %v1992 = vpop.permute.xlu0 %1991
    %v1994 = vmul.f32 %v1976, %v1992
    %1996 = vset.pattern.permute.xlu0 0
    %1997 = vperm.xlu0 %1996, %v1632
    %v1998 = vpop.permute.xlu0 %1997
    %v2000 = vmul.f32 %v1998, %v1994
    %v2001 = vmul.f32 %v1998, %v1988
    %2003 = vrot.lane.b32.xlu0 %v2000, 32
    %v2004 = vpop.permute.xlu0 %2003
    %s2006 = scalar_lea.vmem [#allocation3], 6
    %2007 = vst.msk [vmem:[%s2006] sm:$0x3] %vm498, %v2004
    %s2008 = scalar_lea.vmem %s1, 4
    %v2009 = vld [vmem:[%s2008] sm:$0x3]
    %s2010 = scalar_lea.vmem [#allocation4], 12
    %v2011 = vld [vmem:[%s2010] sm:$0x3f]
    %v2012 = vld [vmem:[#allocation7] sm:$0xff]
    %v2013 = vld [vmem:[#allocation7 + $0x8] sm:$0xff]
    %v2014 = vld [vmem:[#allocation7 + $0x10] sm:$0xff]
    %v2015 = vld [vmem:[#allocation7 + $0x18] sm:$0xff]
    %v2016 = vld [vmem:[#allocation7 + $0x20] sm:$0xff]
    %v2017 = vld [vmem:[#allocation7 + $0x28] sm:$0xff]
    %v2018 = vld [vmem:[#allocation7 + $0x30] sm:$0xff]
    %v2019 = vld [vmem:[#allocation7 + $0x38] sm:$0xff]
    %v2020 = vld [vmem:[#allocation7 + $0x40] sm:$0xff]
    %v2021 = vld [vmem:[#allocation7 + $0x48] sm:$0xff]
    %v2022 = vld [vmem:[#allocation7 + $0x50] sm:$0xff]
    %v2023 = vld [vmem:[#allocation7 + $0x58] sm:$0xff]
    %v2024 = vld [vmem:[#allocation7 + $0x60] sm:$0xff]
    %v2025 = vld [vmem:[#allocation7 + $0x68] sm:$0xff]
    %v2026 = vld [vmem:[#allocation7 + $0x70] sm:$0xff]
    %v2027 = vld [vmem:[#allocation7 + $0x78] sm:$0xff]
    %v2028 = vld [vmem:[#allocation7 + $0x80] sm:$0xff]
    %v2029 = vld [vmem:[#allocation7 + $0x88] sm:$0xff]
    %v2030 = vld [vmem:[#allocation7 + $0x90] sm:$0xff]
    %v2031 = vld [vmem:[#allocation7 + $0x98] sm:$0xff]
    %v2032 = vld [vmem:[#allocation7 + $0xa0] sm:$0xff]
    %v2033 = vld [vmem:[#allocation7 + $0xa8] sm:$0xff]
    %v2034 = vld [vmem:[#allocation7 + $0xb0] sm:$0xff]
    %v2035 = vld [vmem:[#allocation7 + $0xb8] sm:$0xff]
    %v2036 = vld [vmem:[#allocation7 + $0xc0] sm:$0xff]
    %v2037 = vld [vmem:[#allocation7 + $0xc8] sm:$0xff]
    %v2038 = vld [vmem:[#allocation7 + $0xd0] sm:$0xff]
    %v2039 = vld [vmem:[#allocation7 + $0xd8] sm:$0xff]
    %v2040 = vld [vmem:[#allocation7 + $0xe0] sm:$0xff]
    %v2041 = vld [vmem:[#allocation7 + $0xe8] sm:$0xff]
    %v2042 = vld [vmem:[#allocation7 + $0xf0] sm:$0xff]
    %v2043 = vld [vmem:[#allocation7 + $0xf8] sm:$0xff]
    %v2044 = vld [vmem:[#allocation7 + $0x100] sm:$0xff]
    %v2045 = vld [vmem:[#allocation7 + $0x108] sm:$0xff]
    %v2046 = vld [vmem:[#allocation7 + $0x110] sm:$0xff]
    %v2047 = vld [vmem:[#allocation7 + $0x118] sm:$0xff]
    %v2048 = vld [vmem:[#allocation7 + $0x120] sm:$0xff]
    %v2049 = vld [vmem:[#allocation7 + $0x128] sm:$0xff]
    %v2050 = vld [vmem:[#allocation7 + $0x130] sm:$0xff]
    %v2051 = vld [vmem:[#allocation7 + $0x138] sm:$0xff]
    %v2052 = vld [vmem:[#allocation7 + $0x140] sm:$0xff]
    %v2053 = vld [vmem:[#allocation7 + $0x148] sm:$0xff]
    %v2054 = vld [vmem:[#allocation7 + $0x150] sm:$0xff]
    %v2055 = vld [vmem:[#allocation7 + $0x158] sm:$0xff]
    %v2056 = vld [vmem:[#allocation7 + $0x160] sm:$0xff]
    %v2057 = vld [vmem:[#allocation7 + $0x168] sm:$0xff]
    %v2058 = vld [vmem:[#allocation7 + $0x170] sm:$0xff]
    %v2059 = vld [vmem:[#allocation7 + $0x178] sm:$0xff]
    %v2060 = vld [vmem:[#allocation7 + $0x180] sm:$0xff]
    %v2061 = vld [vmem:[#allocation7 + $0x188] sm:$0xff]
    %v2062 = vld [vmem:[#allocation7 + $0x190] sm:$0xff]
    %v2063 = vld [vmem:[#allocation7 + $0x198] sm:$0xff]
    %v2064 = vld [vmem:[#allocation7 + $0x1a0] sm:$0xff]
    %v2065 = vld [vmem:[#allocation7 + $0x1a8] sm:$0xff]
    %v2066 = vld [vmem:[#allocation7 + $0x1b0] sm:$0xff]
    %v2067 = vld [vmem:[#allocation7 + $0x1b8] sm:$0xff]
    %v2068 = vld [vmem:[#allocation7 + $0x1c0] sm:$0xff]
    %v2069 = vld [vmem:[#allocation7 + $0x1c8] sm:$0xff]
    %v2070 = vld [vmem:[#allocation7 + $0x1d0] sm:$0xff]
    %v2071 = vld [vmem:[#allocation7 + $0x1d8] sm:$0xff]
    %v2072 = vld [vmem:[#allocation7 + $0x1e0] sm:$0xff]
    %v2073 = vld [vmem:[#allocation7 + $0x1e8] sm:$0xff]
    %v2074 = vld [vmem:[#allocation7 + $0x1f0] sm:$0xff]
    %v2075 = vld [vmem:[#allocation7 + $0x1f8] sm:$0xff]
    %v2076 = vld [vmem:[#allocation7 + $0x200] sm:$0xff]
    %v2077 = vld [vmem:[#allocation7 + $0x208] sm:$0xff]
    %v2078 = vld [vmem:[#allocation7 + $0x210] sm:$0xff]
    %v2079 = vld [vmem:[#allocation7 + $0x218] sm:$0xff]
    %v2080 = vld [vmem:[#allocation7 + $0x220] sm:$0xff]
    %v2081 = vld [vmem:[#allocation7 + $0x228] sm:$0xff]
    %v2082 = vld [vmem:[#allocation7 + $0x230] sm:$0xff]
    %v2083 = vld [vmem:[#allocation7 + $0x238] sm:$0xff]
    %v2084 = vld [vmem:[#allocation7 + $0x240] sm:$0xff]
    %v2085 = vld [vmem:[#allocation7 + $0x248] sm:$0xff]
    %v2086 = vld [vmem:[#allocation7 + $0x250] sm:$0xf]
    %v2087 = vld [vmem:[#allocation7 + $0x258] sm:$0xf]
    %v2088 = vld [vmem:[%s3] sm:$0x3]
    %v2090 = vlaneseq
    %v2091 = vshrl.u32 %v2090, 7
    %v2092 = vsub.s32 0, %v2091
    %v2093 = vrot.slane %v2088, %v2092
    %v2094 = vlaneseq
    %v2095 = vshrl.u32 %v2094, 7
    %v2096 = vsub.s32 1, %v2095
    %v2097 = vrot.slane %v2088, %v2096
    %v2101 = vcombine.high %v2011, %v2011
    %v2103 = vunpack.c.l.s4 1983009808
    %v2104 = vunpack.c.0.s8 %v2103
    %v2105 = vlaneseq
    %v2106 = vshrl.u32 %v2105, 7
    %v2107 = vsub.s32 %v2104, %v2106
    %v2108 = vrot.slane %v2011, %v2107
    %v2110 = vunpack.c.l.s4 1983009808
    %v2111 = vunpack.c.0.s8 %v2110
    %v2112 = vlaneseq
    %v2113 = vshrl.u32 %v2112, 7
    %v2114 = vsub.s32 %v2111, %v2113
    %v2115 = vrot.slane %v2101, %v2114
    %v2116 = vcombine.high %v2108, %v2108
    %v2119 = vsel %vm229, %v2115, 0
    %v2122 = vsel %vm232, %v2086, 0
    %v2125 = vsel %vm232, %v2087, 0
    %2127 = vmatprep.subr.mxu0 %v2043
    %2128 = vmatpush1.msra.mxu0 %v2042
    %2129 = vmatprep.subr.mxu0 %v2041
    %2130 = vmatpush1.msra.mxu0 %v2040
    %2131 = vmatprep.subr.mxu0 %v2039
    %2132 = vmatpush1.msra.mxu0 %v2038
    %2133 = vmatprep.subr.mxu0 %v2037
    %2134 = vmatpush1.msra.mxu0 %v2036
    %2135 = vmatprep.subr.mxu0 %v2035
    %2136 = vmatpush1.msra.mxu0 %v2034
    %2137 = vmatprep.subr.mxu0 %v2033
    %2138 = vmatpush1.msra.mxu0 %v2032
    %2139 = vmatprep.subr.mxu0 %v2031
    %2140 = vmatpush1.msra.mxu0 %v2030
    %2141 = vmatprep.subr.mxu0 %v2029
    %2142 = vmatpush1.msra.mxu0 %v2028
    %2143 = vmatprep.subr.mxu0 %v2027
    %2144 = vmatpush1.msra.mxu0 %v2026
    %2145 = vmatprep.subr.mxu0 %v2025
    %2146 = vmatpush1.msra.mxu0 %v2024
    %2147 = vmatprep.subr.mxu0 %v2023
    %2148 = vmatpush1.msra.mxu0 %v2022
    %2149 = vmatprep.subr.mxu0 %v2021
    %2150 = vmatpush1.msra.mxu0 %v2020
    %2151 = vmatprep.subr.mxu0 %v2019
    %2152 = vmatpush1.msra.mxu0 %v2018
    %2153 = vmatprep.subr.mxu0 %v2017
    %2154 = vmatpush1.msra.mxu0 %v2016
    %2155 = vmatprep.subr.mxu0 %v2015
    %2156 = vmatpush1.msra.mxu0 %v2014
    %2157 = vmatprep.subr.mxu0 %v2013
    %2158 = vmatpush1.msra.mxu0 %v2012
    %2159 = vmatprep.subr.mxu0 %v2075
    %2160 = vmatpush2.msra.mxu0 %v2074
    %2161 = vmatprep.subr.mxu0 %v2073
    %2162 = vmatpush2.msra.mxu0 %v2072
    %2163 = vmatprep.subr.mxu0 %v2071
    %2164 = vmatpush2.msra.mxu0 %v2070
    %2165 = vmatprep.subr.mxu0 %v2069
    %2166 = vmatpush2.msra.mxu0 %v2068
    %2167 = vmatprep.subr.mxu0 %v2067
    %2168 = vmatpush2.msra.mxu0 %v2066
    %2169 = vmatprep.subr.mxu0 %v2065
    %2170 = vmatpush2.msra.mxu0 %v2064
    %2171 = vmatprep.subr.mxu0 %v2063
    %2172 = vmatpush2.msra.mxu0 %v2062
    %2173 = vmatprep.subr.mxu0 %v2061
    %2174 = vmatpush2.msra.mxu0 %v2060
    %2175 = vmatprep.subr.mxu0 %v2059
    %2176 = vmatpush2.msra.mxu0 %v2058
    %2177 = vmatprep.subr.mxu0 %v2057
    %2178 = vmatpush2.msra.mxu0 %v2056
    %2179 = vmatprep.subr.mxu0 %v2055
    %2180 = vmatpush2.msra.mxu0 %v2054
    %2181 = vmatprep.subr.mxu0 %v2053
    %2182 = vmatpush2.msra.mxu0 %v2052
    %2183 = vmatprep.subr.mxu0 %v2051
    %2184 = vmatpush2.msra.mxu0 %v2050
    %2185 = vmatprep.subr.mxu0 %v2049
    %2186 = vmatpush2.msra.mxu0 %v2048
    %2187 = vmatprep.subr.mxu0 %v2047
    %2188 = vmatpush2.msra.mxu0 %v2046
    %2189 = vmatprep.subr.mxu0 %v2045
    %2190 = vmatpush2.msra.mxu0 %v2044
    %2191 = vmatprep.mubr.f32.mxu0 %v2116
    %2192 = vmatmul.mubr.f32.gmra.mxu0 %v2108
    %v2193 = vpop.f32.mrf.mxu0
    %v2194 = vadd.f32 %v2093, %v2193
    %v2195 = vpop.f32.mrf.mxu0
    %v2196 = vadd.f32 %v2097, %v2195
    %2197 = vdwg.mxu0
    %2198 = vmatprep.subr.mxu0 0.0
    %2199 = vmatpush1.msra.mxu0 0.0
    %2200 = vmatprep.subr.mxu0 0.0
    %2201 = vmatpush1.msra.mxu0 0.0
    %2202 = vmatprep.subr.mxu0 0.0
    %2203 = vmatpush1.msra.mxu0 0.0
    %2204 = vmatprep.subr.mxu0 0.0
    %2205 = vmatpush1.msra.mxu0 0.0
    %2206 = vmatprep.subr.mxu0 0.0
    %2207 = vmatpush1.msra.mxu0 0.0
    %2208 = vmatprep.subr.mxu0 0.0
    %2209 = vmatpush1.msra.mxu0 0.0
    %2210 = vmatprep.subr.mxu0 0.0
    %2211 = vmatpush1.msra.mxu0 0.0
    %2212 = vmatprep.subr.mxu0 0.0
    %2213 = vmatpush1.msra.mxu0 0.0
    %2214 = vmatprep.subr.mxu0 0.0
    %2215 = vmatpush1.msra.mxu0 0.0
    %2216 = vmatprep.subr.mxu0 0.0
    %2217 = vmatpush1.msra.mxu0 0.0
    %2218 = vmatprep.subr.mxu0 %v2125
    %2219 = vmatpush1.msra.mxu0 %v2122
    %2220 = vmatprep.subr.mxu0 %v2085
    %2221 = vmatpush1.msra.mxu0 %v2084
    %2222 = vmatprep.subr.mxu0 %v2083
    %2223 = vmatpush1.msra.mxu0 %v2082
    %2224 = vmatprep.subr.mxu0 %v2081
    %2225 = vmatpush1.msra.mxu0 %v2080
    %2226 = vmatprep.subr.mxu0 %v2079
    %2227 = vmatpush1.msra.mxu0 %v2078
    %2228 = vmatprep.subr.mxu0 %v2077
    %2229 = vmatpush1.msra.mxu0 %v2076
    %2230 = vmatprep.subr.mxu0 0.0
    %2231 = vmatpush2.msra.mxu0 0.0
    %2232 = vmatprep.subr.mxu0 0.0
    %2233 = vmatpush2.msra.mxu0 0.0
    %2234 = vmatprep.subr.mxu0 0.0
    %2235 = vmatpush2.msra.mxu0 0.0
    %2236 = vmatprep.subr.mxu0 0.0
    %2237 = vmatpush2.msra.mxu0 0.0
    %2238 = vmatprep.subr.mxu0 0.0
    %2239 = vmatpush2.msra.mxu0 0.0
    %2240 = vmatprep.subr.mxu0 0.0
    %2241 = vmatpush2.msra.mxu0 0.0
    %2242 = vmatprep.subr.mxu0 0.0
    %2243 = vmatpush2.msra.mxu0 0.0
    %2244 = vmatprep.subr.mxu0 0.0
    %2245 = vmatpush2.msra.mxu0 0.0
    %2246 = vmatprep.subr.mxu0 0.0
    %2247 = vmatpush2.msra.mxu0 0.0
    %2248 = vmatprep.subr.mxu0 0.0
    %2249 = vmatpush2.msra.mxu0 0.0
    %2250 = vmatprep.subr.mxu0 0.0
    %2251 = vmatpush2.msra.mxu0 0.0
    %2252 = vmatprep.subr.mxu0 0.0
    %2253 = vmatpush2.msra.mxu0 0.0
    %2254 = vmatprep.subr.mxu0 0.0
    %2255 = vmatpush2.msra.mxu0 0.0
    %2256 = vmatprep.subr.mxu0 0.0
    %2257 = vmatpush2.msra.mxu0 0.0
    %2258 = vmatprep.subr.mxu0 0.0
    %2259 = vmatpush2.msra.mxu0 0.0
    %2260 = vmatprep.subr.mxu0 0.0
    %2261 = vmatpush2.msra.mxu0 0.0
    %2262 = vmatprep.mubr.f32.mxu0 0.0
    %2263 = vmatmul.mubr.f32.gmra.mxu0 %v2119
    %v2264 = vpop.f32.mrf.mxu0
    %v2265 = vadd.f32 %v2194, %v2264
    %v2266 = vpop.f32.mrf.mxu0
    %v2267 = vadd.f32 %v2196, %v2266
    %2268 = vdwg.mxu0
    %s2269 = scalar_lea.vmem [#allocation2], 4
    %2270 = vst [vmem:[%s2269] sm:$0x3] %v2265
    %v2271 = vld [vmem:[#allocation10] sm:$0xff]
    %v2272 = vld [vmem:[#allocation10 + $0x8] sm:$0xff]
    %v2273 = vld [vmem:[#allocation10 + $0x10] sm:$0xff]
    %v2274 = vld [vmem:[#allocation10 + $0x18] sm:$0xff]
    %v2275 = vsel %vm387, %v2004, 0
    %2277 = vmatprep.subr.mxu0 0.0
    %2278 = vmatpush1.msra.mxu0 0.0
    %2279 = vmatprep.subr.mxu0 0.0
    %2280 = vmatpush1.msra.mxu0 0.0
    %2281 = vmatprep.subr.mxu0 0.0
    %2282 = vmatpush1.msra.mxu0 0.0
    %2283 = vmatprep.subr.mxu0 0.0
    %2284 = vmatpush1.msra.mxu0 0.0
    %2285 = vmatprep.subr.mxu0 0.0
    %2286 = vmatpush1.msra.mxu0 0.0
    %2287 = vmatprep.subr.mxu0 0.0
    %2288 = vmatpush1.msra.mxu0 0.0
    %2289 = vmatprep.subr.mxu0 0.0
    %2290 = vmatpush1.msra.mxu0 0.0
    %2291 = vmatprep.subr.mxu0 0.0
    %2292 = vmatpush1.msra.mxu0 0.0
    %2293 = vmatprep.subr.mxu0 0.0
    %2294 = vmatpush1.msra.mxu0 0.0
    %2295 = vmatprep.subr.mxu0 0.0
    %2296 = vmatpush1.msra.mxu0 0.0
    %2297 = vmatprep.subr.mxu0 0.0
    %2298 = vmatpush1.msra.mxu0 0.0
    %2299 = vmatprep.subr.mxu0 0.0
    %2300 = vmatpush1.msra.mxu0 0.0
    %2301 = vmatprep.subr.mxu0 0.0
    %2302 = vmatpush1.msra.mxu0 %v2274
    %2303 = vmatprep.subr.mxu0 0.0
    %2304 = vmatpush1.msra.mxu0 %v2273
    %2305 = vmatprep.subr.mxu0 0.0
    %2306 = vmatpush1.msra.mxu0 %v2272
    %2307 = vmatprep.subr.mxu0 0.0
    %2308 = vmatpush1.msra.mxu0 %v2271
    %2309 = vmatprep.subr.mxu0 0.0
    %2310 = vmatpush2.msra.mxu0 0.0
    %2311 = vmatprep.subr.mxu0 0.0
    %2312 = vmatpush2.msra.mxu0 0.0
    %2313 = vmatprep.subr.mxu0 0.0
    %2314 = vmatpush2.msra.mxu0 0.0
    %2315 = vmatprep.subr.mxu0 0.0
    %2316 = vmatpush2.msra.mxu0 0.0
    %2317 = vmatprep.subr.mxu0 0.0
    %2318 = vmatpush2.msra.mxu0 0.0
    %2319 = vmatprep.subr.mxu0 0.0
    %2320 = vmatpush2.msra.mxu0 0.0
    %2321 = vmatprep.subr.mxu0 0.0
    %2322 = vmatpush2.msra.mxu0 0.0
    %2323 = vmatprep.subr.mxu0 0.0
    %2324 = vmatpush2.msra.mxu0 0.0
    %2325 = vmatprep.subr.mxu0 0.0
    %2326 = vmatpush2.msra.mxu0 0.0
    %2327 = vmatprep.subr.mxu0 0.0
    %2328 = vmatpush2.msra.mxu0 0.0
    %2329 = vmatprep.subr.mxu0 0.0
    %2330 = vmatpush2.msra.mxu0 0.0
    %2331 = vmatprep.subr.mxu0 0.0
    %2332 = vmatpush2.msra.mxu0 0.0
    %2333 = vmatprep.subr.mxu0 0.0
    %2334 = vmatpush2.msra.mxu0 0.0
    %2335 = vmatprep.subr.mxu0 0.0
    %2336 = vmatpush2.msra.mxu0 0.0
    %2337 = vmatprep.subr.mxu0 0.0
    %2338 = vmatpush2.msra.mxu0 0.0
    %2339 = vmatprep.subr.mxu0 0.0
    %2340 = vmatpush2.msra.mxu0 0.0
    %2341 = vmatprep.mubr.f32.mxu0 0.0
    %2342 = vmatmul.mubr.f32.gmra.mxu0 %v2275
    %v2343 = vpop.f32.mrf.mxu0
    %v2344 = vadd.f32 0.0, %v2343
    %v2345 = vpop.f32.mrf.mxu0
    %2346 = vdwg.mxu0
    %v2347 = vadd.f32 %v2267, %v2344
    %v2348 = vsub.f32 0.0, %v2347
    %v2349 = vmul.f32 %v2348, 1.442695
    %v2350 = vpow.pop %v2349
    %v2351 = vadd.f32 %v2350, 1.0
    %v2352 = vrcp.pop %v2351
    %v2353 = vmul.f32 1.0, %v2352
    %v2354 = vtanh.pop %v2347
    %v2355 = vmul.f32 %v2353, %v2001
    %2357 = vrot.lane.b32.xlu0 %v2354, 64
    %v2358 = vpop.permute.xlu0 %2357
    %v2360 = vmul.f32 %v2353, %v2358
    %2362 = vrot.lane.b32.xlu0 %v2360, 32
    %v2363 = vpop.permute.xlu0 %2362
    %v2365 = vadd.f32 %v2355, %v2363
    %v2366 = vtanh.pop %v2365
    %2368 = vrot.lane.b32.xlu0 %v2366, 64
    %v2369 = vpop.permute.xlu0 %2368
    %v2371 = vmul.f32 %v2353, %v2369
    %2373 = vset.pattern.permute.xlu0 0
    %2374 = vperm.xlu0 %2373, %v2009
    %v2375 = vpop.permute.xlu0 %2374
    %v2377 = vmul.f32 %v2375, %v2371
    %v2378 = vmul.f32 %v2375, %v2365
    %2380 = vrot.lane.b32.xlu0 %v2377, 32
    %v2381 = vpop.permute.xlu0 %2380
    %s2383 = scalar_lea.vmem [#allocation3], 4
    %2384 = vst.msk [vmem:[%s2383] sm:$0x3] %vm498, %v2381
    %s2385 = scalar_lea.vmem %s1, 2
    %v2386 = vld [vmem:[%s2385] sm:$0x3]
    %s2387 = scalar_lea.vmem [#allocation4], 6
    %v2388 = vld [vmem:[%s2387] sm:$0x3f]
    %v2389 = vld [vmem:[#allocation7] sm:$0xff]
    %v2390 = vld [vmem:[#allocation7 + $0x8] sm:$0xff]
    %v2391 = vld [vmem:[#allocation7 + $0x10] sm:$0xff]
    %v2392 = vld [vmem:[#allocation7 + $0x18] sm:$0xff]
    %v2393 = vld [vmem:[#allocation7 + $0x20] sm:$0xff]
    %v2394 = vld [vmem:[#allocation7 + $0x28] sm:$0xff]
    %v2395 = vld [vmem:[#allocation7 + $0x30] sm:$0xff]
    %v2396 = vld [vmem:[#allocation7 + $0x38] sm:$0xff]
    %v2397 = vld [vmem:[#allocation7 + $0x40] sm:$0xff]
    %v2398 = vld [vmem:[#allocation7 + $0x48] sm:$0xff]
    %v2399 = vld [vmem:[#allocation7 + $0x50] sm:$0xff]
    %v2400 = vld [vmem:[#allocation7 + $0x58] sm:$0xff]
    %v2401 = vld [vmem:[#allocation7 + $0x60] sm:$0xff]
    %v2402 = vld [vmem:[#allocation7 + $0x68] sm:$0xff]
    %v2403 = vld [vmem:[#allocation7 + $0x70] sm:$0xff]
    %v2404 = vld [vmem:[#allocation7 + $0x78] sm:$0xff]
    %v2405 = vld [vmem:[#allocation7 + $0x80] sm:$0xff]
    %v2406 = vld [vmem:[#allocation7 + $0x88] sm:$0xff]
    %v2407 = vld [vmem:[#allocation7 + $0x90] sm:$0xff]
    %v2408 = vld [vmem:[#allocation7 + $0x98] sm:$0xff]
    %v2409 = vld [vmem:[#allocation7 + $0xa0] sm:$0xff]
    %v2410 = vld [vmem:[#allocation7 + $0xa8] sm:$0xff]
    %v2411 = vld [vmem:[#allocation7 + $0xb0] sm:$0xff]
    %v2412 = vld [vmem:[#allocation7 + $0xb8] sm:$0xff]
    %v2413 = vld [vmem:[#allocation7 + $0xc0] sm:$0xff]
    %v2414 = vld [vmem:[#allocation7 + $0xc8] sm:$0xff]
    %v2415 = vld [vmem:[#allocation7 + $0xd0] sm:$0xff]
    %v2416 = vld [vmem:[#allocation7 + $0xd8] sm:$0xff]
    %v2417 = vld [vmem:[#allocation7 + $0xe0] sm:$0xff]
    %v2418 = vld [vmem:[#allocation7 + $0xe8] sm:$0xff]
    %v2419 = vld [vmem:[#allocation7 + $0xf0] sm:$0xff]
    %v2420 = vld [vmem:[#allocation7 + $0xf8] sm:$0xff]
    %v2421 = vld [vmem:[#allocation7 + $0x100] sm:$0xff]
    %v2422 = vld [vmem:[#allocation7 + $0x108] sm:$0xff]
    %v2423 = vld [vmem:[#allocation7 + $0x110] sm:$0xff]
    %v2424 = vld [vmem:[#allocation7 + $0x118] sm:$0xff]
    %v2425 = vld [vmem:[#allocation7 + $0x120] sm:$0xff]
    %v2426 = vld [vmem:[#allocation7 + $0x128] sm:$0xff]
    %v2427 = vld [vmem:[#allocation7 + $0x130] sm:$0xff]
    %v2428 = vld [vmem:[#allocation7 + $0x138] sm:$0xff]
    %v2429 = vld [vmem:[#allocation7 + $0x140] sm:$0xff]
    %v2430 = vld [vmem:[#allocation7 + $0x148] sm:$0xff]
    %v2431 = vld [vmem:[#allocation7 + $0x150] sm:$0xff]
    %v2432 = vld [vmem:[#allocation7 + $0x158] sm:$0xff]
    %v2433 = vld [vmem:[#allocation7 + $0x160] sm:$0xff]
    %v2434 = vld [vmem:[#allocation7 + $0x168] sm:$0xff]
    %v2435 = vld [vmem:[#allocation7 + $0x170] sm:$0xff]
    %v2436 = vld [vmem:[#allocation7 + $0x178] sm:$0xff]
    %v2437 = vld [vmem:[#allocation7 + $0x180] sm:$0xff]
    %v2438 = vld [vmem:[#allocation7 + $0x188] sm:$0xff]
    %v2439 = vld [vmem:[#allocation7 + $0x190] sm:$0xff]
    %v2440 = vld [vmem:[#allocation7 + $0x198] sm:$0xff]
    %v2441 = vld [vmem:[#allocation7 + $0x1a0] sm:$0xff]
    %v2442 = vld [vmem:[#allocation7 + $0x1a8] sm:$0xff]
    %v2443 = vld [vmem:[#allocation7 + $0x1b0] sm:$0xff]
    %v2444 = vld [vmem:[#allocation7 + $0x1b8] sm:$0xff]
    %v2445 = vld [vmem:[#allocation7 + $0x1c0] sm:$0xff]
    %v2446 = vld [vmem:[#allocation7 + $0x1c8] sm:$0xff]
    %v2447 = vld [vmem:[#allocation7 + $0x1d0] sm:$0xff]
    %v2448 = vld [vmem:[#allocation7 + $0x1d8] sm:$0xff]
    %v2449 = vld [vmem:[#allocation7 + $0x1e0] sm:$0xff]
    %v2450 = vld [vmem:[#allocation7 + $0x1e8] sm:$0xff]
    %v2451 = vld [vmem:[#allocation7 + $0x1f0] sm:$0xff]
    %v2452 = vld [vmem:[#allocation7 + $0x1f8] sm:$0xff]
    %v2453 = vld [vmem:[#allocation7 + $0x200] sm:$0xff]
    %v2454 = vld [vmem:[#allocation7 + $0x208] sm:$0xff]
    %v2455 = vld [vmem:[#allocation7 + $0x210] sm:$0xff]
    %v2456 = vld [vmem:[#allocation7 + $0x218] sm:$0xff]
    %v2457 = vld [vmem:[#allocation7 + $0x220] sm:$0xff]
    %v2458 = vld [vmem:[#allocation7 + $0x228] sm:$0xff]
    %v2459 = vld [vmem:[#allocation7 + $0x230] sm:$0xff]
    %v2460 = vld [vmem:[#allocation7 + $0x238] sm:$0xff]
    %v2461 = vld [vmem:[#allocation7 + $0x240] sm:$0xff]
    %v2462 = vld [vmem:[#allocation7 + $0x248] sm:$0xff]
    %v2463 = vld [vmem:[#allocation7 + $0x250] sm:$0xf]
    %v2464 = vld [vmem:[#allocation7 + $0x258] sm:$0xf]
    %v2465 = vld [vmem:[%s3] sm:$0x3]
    %v2467 = vlaneseq
    %v2468 = vshrl.u32 %v2467, 7
    %v2469 = vsub.s32 0, %v2468
    %v2470 = vrot.slane %v2465, %v2469
    %v2471 = vlaneseq
    %v2472 = vshrl.u32 %v2471, 7
    %v2473 = vsub.s32 1, %v2472
    %v2474 = vrot.slane %v2465, %v2473
    %v2478 = vcombine.high %v2388, %v2388
    %v2480 = vunpack.c.l.s4 1983009808
    %v2481 = vunpack.c.0.s8 %v2480
    %v2482 = vlaneseq
    %v2483 = vshrl.u32 %v2482, 7
    %v2484 = vsub.s32 %v2481, %v2483
    %v2485 = vrot.slane %v2388, %v2484
    %v2487 = vunpack.c.l.s4 1983009808
    %v2488 = vunpack.c.0.s8 %v2487
    %v2489 = vlaneseq
    %v2490 = vshrl.u32 %v2489, 7
    %v2491 = vsub.s32 %v2488, %v2490
    %v2492 = vrot.slane %v2478, %v2491
    %v2493 = vcombine.high %v2485, %v2485
    %v2496 = vsel %vm229, %v2492, 0
    %v2499 = vsel %vm232, %v2463, 0
    %v2502 = vsel %vm232, %v2464, 0
    %2504 = vmatprep.subr.mxu0 %v2420
    %2505 = vmatpush1.msra.mxu0 %v2419
    %2506 = vmatprep.subr.mxu0 %v2418
    %2507 = vmatpush1.msra.mxu0 %v2417
    %2508 = vmatprep.subr.mxu0 %v2416
    %2509 = vmatpush1.msra.mxu0 %v2415
    %2510 = vmatprep.subr.mxu0 %v2414
    %2511 = vmatpush1.msra.mxu0 %v2413
    %2512 = vmatprep.subr.mxu0 %v2412
    %2513 = vmatpush1.msra.mxu0 %v2411
    %2514 = vmatprep.subr.mxu0 %v2410
    %2515 = vmatpush1.msra.mxu0 %v2409
    %2516 = vmatprep.subr.mxu0 %v2408
    %2517 = vmatpush1.msra.mxu0 %v2407
    %2518 = vmatprep.subr.mxu0 %v2406
    %2519 = vmatpush1.msra.mxu0 %v2405
    %2520 = vmatprep.subr.mxu0 %v2404
    %2521 = vmatpush1.msra.mxu0 %v2403
    %2522 = vmatprep.subr.mxu0 %v2402
    %2523 = vmatpush1.msra.mxu0 %v2401
    %2524 = vmatprep.subr.mxu0 %v2400
    %2525 = vmatpush1.msra.mxu0 %v2399
    %2526 = vmatprep.subr.mxu0 %v2398
    %2527 = vmatpush1.msra.mxu0 %v2397
    %2528 = vmatprep.subr.mxu0 %v2396
    %2529 = vmatpush1.msra.mxu0 %v2395
    %2530 = vmatprep.subr.mxu0 %v2394
    %2531 = vmatpush1.msra.mxu0 %v2393
    %2532 = vmatprep.subr.mxu0 %v2392
    %2533 = vmatpush1.msra.mxu0 %v2391
    %2534 = vmatprep.subr.mxu0 %v2390
    %2535 = vmatpush1.msra.mxu0 %v2389
    %2536 = vmatprep.subr.mxu0 %v2452
    %2537 = vmatpush2.msra.mxu0 %v2451
    %2538 = vmatprep.subr.mxu0 %v2450
    %2539 = vmatpush2.msra.mxu0 %v2449
    %2540 = vmatprep.subr.mxu0 %v2448
    %2541 = vmatpush2.msra.mxu0 %v2447
    %2542 = vmatprep.subr.mxu0 %v2446
    %2543 = vmatpush2.msra.mxu0 %v2445
    %2544 = vmatprep.subr.mxu0 %v2444
    %2545 = vmatpush2.msra.mxu0 %v2443
    %2546 = vmatprep.subr.mxu0 %v2442
    %2547 = vmatpush2.msra.mxu0 %v2441
    %2548 = vmatprep.subr.mxu0 %v2440
    %2549 = vmatpush2.msra.mxu0 %v2439
    %2550 = vmatprep.subr.mxu0 %v2438
    %2551 = vmatpush2.msra.mxu0 %v2437
    %2552 = vmatprep.subr.mxu0 %v2436
    %2553 = vmatpush2.msra.mxu0 %v2435
    %2554 = vmatprep.subr.mxu0 %v2434
    %2555 = vmatpush2.msra.mxu0 %v2433
    %2556 = vmatprep.subr.mxu0 %v2432
    %2557 = vmatpush2.msra.mxu0 %v2431
    %2558 = vmatprep.subr.mxu0 %v2430
    %2559 = vmatpush2.msra.mxu0 %v2429
    %2560 = vmatprep.subr.mxu0 %v2428
    %2561 = vmatpush2.msra.mxu0 %v2427
    %2562 = vmatprep.subr.mxu0 %v2426
    %2563 = vmatpush2.msra.mxu0 %v2425
    %2564 = vmatprep.subr.mxu0 %v2424
    %2565 = vmatpush2.msra.mxu0 %v2423
    %2566 = vmatprep.subr.mxu0 %v2422
    %2567 = vmatpush2.msra.mxu0 %v2421
    %2568 = vmatprep.mubr.f32.mxu0 %v2493
    %2569 = vmatmul.mubr.f32.gmra.mxu0 %v2485
    %v2570 = vpop.f32.mrf.mxu0
    %v2571 = vadd.f32 %v2470, %v2570
    %v2572 = vpop.f32.mrf.mxu0
    %v2573 = vadd.f32 %v2474, %v2572
    %2574 = vdwg.mxu0
    %2575 = vmatprep.subr.mxu0 0.0
    %2576 = vmatpush1.msra.mxu0 0.0
    %2577 = vmatprep.subr.mxu0 0.0
    %2578 = vmatpush1.msra.mxu0 0.0
    %2579 = vmatprep.subr.mxu0 0.0
    %2580 = vmatpush1.msra.mxu0 0.0
    %2581 = vmatprep.subr.mxu0 0.0
    %2582 = vmatpush1.msra.mxu0 0.0
    %2583 = vmatprep.subr.mxu0 0.0
    %2584 = vmatpush1.msra.mxu0 0.0
    %2585 = vmatprep.subr.mxu0 0.0
    %2586 = vmatpush1.msra.mxu0 0.0
    %2587 = vmatprep.subr.mxu0 0.0
    %2588 = vmatpush1.msra.mxu0 0.0
    %2589 = vmatprep.subr.mxu0 0.0
    %2590 = vmatpush1.msra.mxu0 0.0
    %2591 = vmatprep.subr.mxu0 0.0
    %2592 = vmatpush1.msra.mxu0 0.0
    %2593 = vmatprep.subr.mxu0 0.0
    %2594 = vmatpush1.msra.mxu0 0.0
    %2595 = vmatprep.subr.mxu0 %v2502
    %2596 = vmatpush1.msra.mxu0 %v2499
    %2597 = vmatprep.subr.mxu0 %v2462
    %2598 = vmatpush1.msra.mxu0 %v2461
    %2599 = vmatprep.subr.mxu0 %v2460
    %2600 = vmatpush1.msra.mxu0 %v2459
    %2601 = vmatprep.subr.mxu0 %v2458
    %2602 = vmatpush1.msra.mxu0 %v2457
    %2603 = vmatprep.subr.mxu0 %v2456
    %2604 = vmatpush1.msra.mxu0 %v2455
    %2605 = vmatprep.subr.mxu0 %v2454
    %2606 = vmatpush1.msra.mxu0 %v2453
    %2607 = vmatprep.subr.mxu0 0.0
    %2608 = vmatpush2.msra.mxu0 0.0
    %2609 = vmatprep.subr.mxu0 0.0
    %2610 = vmatpush2.msra.mxu0 0.0
    %2611 = vmatprep.subr.mxu0 0.0
    %2612 = vmatpush2.msra.mxu0 0.0
    %2613 = vmatprep.subr.mxu0 0.0
    %2614 = vmatpush2.msra.mxu0 0.0
    %2615 = vmatprep.subr.mxu0 0.0
    %2616 = vmatpush2.msra.mxu0 0.0
    %2617 = vmatprep.subr.mxu0 0.0
    %2618 = vmatpush2.msra.mxu0 0.0
    %2619 = vmatprep.subr.mxu0 0.0
    %2620 = vmatpush2.msra.mxu0 0.0
    %2621 = vmatprep.subr.mxu0 0.0
    %2622 = vmatpush2.msra.mxu0 0.0
    %2623 = vmatprep.subr.mxu0 0.0
    %2624 = vmatpush2.msra.mxu0 0.0
    %2625 = vmatprep.subr.mxu0 0.0
    %2626 = vmatpush2.msra.mxu0 0.0
    %2627 = vmatprep.subr.mxu0 0.0
    %2628 = vmatpush2.msra.mxu0 0.0
    %2629 = vmatprep.subr.mxu0 0.0
    %2630 = vmatpush2.msra.mxu0 0.0
    %2631 = vmatprep.subr.mxu0 0.0
    %2632 = vmatpush2.msra.mxu0 0.0
    %2633 = vmatprep.subr.mxu0 0.0
    %2634 = vmatpush2.msra.mxu0 0.0
    %2635 = vmatprep.subr.mxu0 0.0
    %2636 = vmatpush2.msra.mxu0 0.0
    %2637 = vmatprep.subr.mxu0 0.0
    %2638 = vmatpush2.msra.mxu0 0.0
    %2639 = vmatprep.mubr.f32.mxu0 0.0
    %2640 = vmatmul.mubr.f32.gmra.mxu0 %v2496
    %v2641 = vpop.f32.mrf.mxu0
    %v2642 = vadd.f32 %v2571, %v2641
    %v2643 = vpop.f32.mrf.mxu0
    %v2644 = vadd.f32 %v2573, %v2643
    %2645 = vdwg.mxu0
    %s2646 = scalar_lea.vmem [#allocation2], 2
    %2647 = vst [vmem:[%s2646] sm:$0x3] %v2642
    %v2648 = vld [vmem:[#allocation10] sm:$0xff]
    %v2649 = vld [vmem:[#allocation10 + $0x8] sm:$0xff]
    %v2650 = vld [vmem:[#allocation10 + $0x10] sm:$0xff]
    %v2651 = vld [vmem:[#allocation10 + $0x18] sm:$0xff]
    %v2652 = vsel %vm387, %v2381, 0
    %2654 = vmatprep.subr.mxu0 0.0
    %2655 = vmatpush1.msra.mxu0 0.0
    %2656 = vmatprep.subr.mxu0 0.0
    %2657 = vmatpush1.msra.mxu0 0.0
    %2658 = vmatprep.subr.mxu0 0.0
    %2659 = vmatpush1.msra.mxu0 0.0
    %2660 = vmatprep.subr.mxu0 0.0
    %2661 = vmatpush1.msra.mxu0 0.0
    %2662 = vmatprep.subr.mxu0 0.0
    %2663 = vmatpush1.msra.mxu0 0.0
    %2664 = vmatprep.subr.mxu0 0.0
    %2665 = vmatpush1.msra.mxu0 0.0
    %2666 = vmatprep.subr.mxu0 0.0
    %2667 = vmatpush1.msra.mxu0 0.0
    %2668 = vmatprep.subr.mxu0 0.0
    %2669 = vmatpush1.msra.mxu0 0.0
    %2670 = vmatprep.subr.mxu0 0.0
    %2671 = vmatpush1.msra.mxu0 0.0
    %2672 = vmatprep.subr.mxu0 0.0
    %2673 = vmatpush1.msra.mxu0 0.0
    %2674 = vmatprep.subr.mxu0 0.0
    %2675 = vmatpush1.msra.mxu0 0.0
    %2676 = vmatprep.subr.mxu0 0.0
    %2677 = vmatpush1.msra.mxu0 0.0
    %2678 = vmatprep.subr.mxu0 0.0
    %2679 = vmatpush1.msra.mxu0 %v2651
    %2680 = vmatprep.subr.mxu0 0.0
    %2681 = vmatpush1.msra.mxu0 %v2650
    %2682 = vmatprep.subr.mxu0 0.0
    %2683 = vmatpush1.msra.mxu0 %v2649
    %2684 = vmatprep.subr.mxu0 0.0
    %2685 = vmatpush1.msra.mxu0 %v2648
    %2686 = vmatprep.subr.mxu0 0.0
    %2687 = vmatpush2.msra.mxu0 0.0
    %2688 = vmatprep.subr.mxu0 0.0
    %2689 = vmatpush2.msra.mxu0 0.0
    %2690 = vmatprep.subr.mxu0 0.0
    %2691 = vmatpush2.msra.mxu0 0.0
    %2692 = vmatprep.subr.mxu0 0.0
    %2693 = vmatpush2.msra.mxu0 0.0
    %2694 = vmatprep.subr.mxu0 0.0
    %2695 = vmatpush2.msra.mxu0 0.0
    %2696 = vmatprep.subr.mxu0 0.0
    %2697 = vmatpush2.msra.mxu0 0.0
    %2698 = vmatprep.subr.mxu0 0.0
    %2699 = vmatpush2.msra.mxu0 0.0
    %2700 = vmatprep.subr.mxu0 0.0
    %2701 = vmatpush2.msra.mxu0 0.0
    %2702 = vmatprep.subr.mxu0 0.0
    %2703 = vmatpush2.msra.mxu0 0.0
    %2704 = vmatprep.subr.mxu0 0.0
    %2705 = vmatpush2.msra.mxu0 0.0
    %2706 = vmatprep.subr.mxu0 0.0
    %2707 = vmatpush2.msra.mxu0 0.0
    %2708 = vmatprep.subr.mxu0 0.0
    %2709 = vmatpush2.msra.mxu0 0.0
    %2710 = vmatprep.subr.mxu0 0.0
    %2711 = vmatpush2.msra.mxu0 0.0
    %2712 = vmatprep.subr.mxu0 0.0
    %2713 = vmatpush2.msra.mxu0 0.0
    %2714 = vmatprep.subr.mxu0 0.0
    %2715 = vmatpush2.msra.mxu0 0.0
    %2716 = vmatprep.subr.mxu0 0.0
    %2717 = vmatpush2.msra.mxu0 0.0
    %2718 = vmatprep.mubr.f32.mxu0 0.0
    %2719 = vmatmul.mubr.f32.gmra.mxu0 %v2652
    %v2720 = vpop.f32.mrf.mxu0
    %v2721 = vadd.f32 0.0, %v2720
    %v2722 = vpop.f32.mrf.mxu0
    %2723 = vdwg.mxu0
    %v2724 = vadd.f32 %v2644, %v2721
    %v2725 = vsub.f32 0.0, %v2724
    %v2726 = vmul.f32 %v2725, 1.442695
    %v2727 = vpow.pop %v2726
    %v2728 = vadd.f32 %v2727, 1.0
    %v2729 = vrcp.pop %v2728
    %v2730 = vmul.f32 1.0, %v2729
    %v2731 = vtanh.pop %v2724
    %v2732 = vmul.f32 %v2730, %v2378
    %2734 = vrot.lane.b32.xlu0 %v2731, 64
    %v2735 = vpop.permute.xlu0 %2734
    %v2737 = vmul.f32 %v2730, %v2735
    %2739 = vrot.lane.b32.xlu0 %v2737, 32
    %v2740 = vpop.permute.xlu0 %2739
    %v2742 = vadd.f32 %v2732, %v2740
    %v2743 = vtanh.pop %v2742
    %2745 = vrot.lane.b32.xlu0 %v2743, 64
    %v2746 = vpop.permute.xlu0 %2745
    %v2748 = vmul.f32 %v2730, %v2746
    %2750 = vset.pattern.permute.xlu0 0
    %2751 = vperm.xlu0 %2750, %v2386
    %v2752 = vpop.permute.xlu0 %2751
    %v2754 = vmul.f32 %v2752, %v2748
    %v2755 = vmul.f32 %v2752, %v2742
    %2757 = vrot.lane.b32.xlu0 %v2754, 32
    %v2758 = vpop.permute.xlu0 %2757
    %s2760 = scalar_lea.vmem [#allocation3], 2
    %2761 = vst.msk [vmem:[%s2760] sm:$0x3] %vm498, %v2758
    %v2762 = vld [vmem:[%s1] sm:$0x3]
    %v2763 = vld [vmem:[#allocation4] sm:$0x3f]
    %v2764 = vld [vmem:[#allocation7] sm:$0xff]
    %v2765 = vld [vmem:[#allocation7 + $0x8] sm:$0xff]
    %v2766 = vld [vmem:[#allocation7 + $0x10] sm:$0xff]
    %v2767 = vld [vmem:[#allocation7 + $0x18] sm:$0xff]
    %v2768 = vld [vmem:[#allocation7 + $0x20] sm:$0xff]
    %v2769 = vld [vmem:[#allocation7 + $0x28] sm:$0xff]
    %v2770 = vld [vmem:[#allocation7 + $0x30] sm:$0xff]
    %v2771 = vld [vmem:[#allocation7 + $0x38] sm:$0xff]
    %v2772 = vld [vmem:[#allocation7 + $0x40] sm:$0xff]
    %v2773 = vld [vmem:[#allocation7 + $0x48] sm:$0xff]
    %v2774 = vld [vmem:[#allocation7 + $0x50] sm:$0xff]
    %v2775 = vld [vmem:[#allocation7 + $0x58] sm:$0xff]
    %v2776 = vld [vmem:[#allocation7 + $0x60] sm:$0xff]
    %v2777 = vld [vmem:[#allocation7 + $0x68] sm:$0xff]
    %v2778 = vld [vmem:[#allocation7 + $0x70] sm:$0xff]
    %v2779 = vld [vmem:[#allocation7 + $0x78] sm:$0xff]
    %v2780 = vld [vmem:[#allocation7 + $0x80] sm:$0xff]
    %v2781 = vld [vmem:[#allocation7 + $0x88] sm:$0xff]
    %v2782 = vld [vmem:[#allocation7 + $0x90] sm:$0xff]
    %v2783 = vld [vmem:[#allocation7 + $0x98] sm:$0xff]
    %v2784 = vld [vmem:[#allocation7 + $0xa0] sm:$0xff]
    %v2785 = vld [vmem:[#allocation7 + $0xa8] sm:$0xff]
    %v2786 = vld [vmem:[#allocation7 + $0xb0] sm:$0xff]
    %v2787 = vld [vmem:[#allocation7 + $0xb8] sm:$0xff]
    %v2788 = vld [vmem:[#allocation7 + $0xc0] sm:$0xff]
    %v2789 = vld [vmem:[#allocation7 + $0xc8] sm:$0xff]
    %v2790 = vld [vmem:[#allocation7 + $0xd0] sm:$0xff]
    %v2791 = vld [vmem:[#allocation7 + $0xd8] sm:$0xff]
    %v2792 = vld [vmem:[#allocation7 + $0xe0] sm:$0xff]
    %v2793 = vld [vmem:[#allocation7 + $0xe8] sm:$0xff]
    %v2794 = vld [vmem:[#allocation7 + $0xf0] sm:$0xff]
    %v2795 = vld [vmem:[#allocation7 + $0xf8] sm:$0xff]
    %v2796 = vld [vmem:[#allocation7 + $0x100] sm:$0xff]
    %v2797 = vld [vmem:[#allocation7 + $0x108] sm:$0xff]
    %v2798 = vld [vmem:[#allocation7 + $0x110] sm:$0xff]
    %v2799 = vld [vmem:[#allocation7 + $0x118] sm:$0xff]
    %v2800 = vld [vmem:[#allocation7 + $0x120] sm:$0xff]
    %v2801 = vld [vmem:[#allocation7 + $0x128] sm:$0xff]
    %v2802 = vld [vmem:[#allocation7 + $0x130] sm:$0xff]
    %v2803 = vld [vmem:[#allocation7 + $0x138] sm:$0xff]
    %v2804 = vld [vmem:[#allocation7 + $0x140] sm:$0xff]
    %v2805 = vld [vmem:[#allocation7 + $0x148] sm:$0xff]
    %v2806 = vld [vmem:[#allocation7 + $0x150] sm:$0xff]
    %v2807 = vld [vmem:[#allocation7 + $0x158] sm:$0xff]
    %v2808 = vld [vmem:[#allocation7 + $0x160] sm:$0xff]
    %v2809 = vld [vmem:[#allocation7 + $0x168] sm:$0xff]
    %v2810 = vld [vmem:[#allocation7 + $0x170] sm:$0xff]
    %v2811 = vld [vmem:[#allocation7 + $0x178] sm:$0xff]
    %v2812 = vld [vmem:[#allocation7 + $0x180] sm:$0xff]
    %v2813 = vld [vmem:[#allocation7 + $0x188] sm:$0xff]
    %v2814 = vld [vmem:[#allocation7 + $0x190] sm:$0xff]
    %v2815 = vld [vmem:[#allocation7 + $0x198] sm:$0xff]
    %v2816 = vld [vmem:[#allocation7 + $0x1a0] sm:$0xff]
    %v2817 = vld [vmem:[#allocation7 + $0x1a8] sm:$0xff]
    %v2818 = vld [vmem:[#allocation7 + $0x1b0] sm:$0xff]
    %v2819 = vld [vmem:[#allocation7 + $0x1b8] sm:$0xff]
    %v2820 = vld [vmem:[#allocation7 + $0x1c0] sm:$0xff]
    %v2821 = vld [vmem:[#allocation7 + $0x1c8] sm:$0xff]
    %v2822 = vld [vmem:[#allocation7 + $0x1d0] sm:$0xff]
    %v2823 = vld [vmem:[#allocation7 + $0x1d8] sm:$0xff]
    %v2824 = vld [vmem:[#allocation7 + $0x1e0] sm:$0xff]
    %v2825 = vld [vmem:[#allocation7 + $0x1e8] sm:$0xff]
    %v2826 = vld [vmem:[#allocation7 + $0x1f0] sm:$0xff]
    %v2827 = vld [vmem:[#allocation7 + $0x1f8] sm:$0xff]
    %v2828 = vld [vmem:[#allocation7 + $0x200] sm:$0xff]
    %v2829 = vld [vmem:[#allocation7 + $0x208] sm:$0xff]
    %v2830 = vld [vmem:[#allocation7 + $0x210] sm:$0xff]
    %v2831 = vld [vmem:[#allocation7 + $0x218] sm:$0xff]
    %v2832 = vld [vmem:[#allocation7 + $0x220] sm:$0xff]
    %v2833 = vld [vmem:[#allocation7 + $0x228] sm:$0xff]
    %v2834 = vld [vmem:[#allocation7 + $0x230] sm:$0xff]
    %v2835 = vld [vmem:[#allocation7 + $0x238] sm:$0xff]
    %v2836 = vld [vmem:[#allocation7 + $0x240] sm:$0xff]
    %v2837 = vld [vmem:[#allocation7 + $0x248] sm:$0xff]
    %v2838 = vld [vmem:[#allocation7 + $0x250] sm:$0xf]
    %v2839 = vld [vmem:[#allocation7 + $0x258] sm:$0xf]
    %v2840 = vld [vmem:[%s3] sm:$0x3]
    %v2842 = vlaneseq
    %v2843 = vshrl.u32 %v2842, 7
    %v2844 = vsub.s32 0, %v2843
    %v2845 = vrot.slane %v2840, %v2844
    %v2846 = vlaneseq
    %v2847 = vshrl.u32 %v2846, 7
    %v2848 = vsub.s32 1, %v2847
    %v2849 = vrot.slane %v2840, %v2848
    %v2853 = vcombine.high %v2763, %v2763
    %v2855 = vunpack.c.l.s4 1983009808
    %v2856 = vunpack.c.0.s8 %v2855
    %v2857 = vlaneseq
    %v2858 = vshrl.u32 %v2857, 7
    %v2859 = vsub.s32 %v2856, %v2858
    %v2860 = vrot.slane %v2763, %v2859
    %v2862 = vunpack.c.l.s4 1983009808
    %v2863 = vunpack.c.0.s8 %v2862
    %v2864 = vlaneseq
    %v2865 = vshrl.u32 %v2864, 7
    %v2866 = vsub.s32 %v2863, %v2865
    %v2867 = vrot.slane %v2853, %v2866
    %v2868 = vcombine.high %v2860, %v2860
    %v2871 = vsel %vm229, %v2867, 0
    %v2874 = vsel %vm232, %v2838, 0
    %v2877 = vsel %vm232, %v2839, 0
    %2879 = vmatprep.subr.mxu0 %v2795
    %2880 = vmatpush1.msra.mxu0 %v2794
    %2881 = vmatprep.subr.mxu0 %v2793
    %2882 = vmatpush1.msra.mxu0 %v2792
    %2883 = vmatprep.subr.mxu0 %v2791
    %2884 = vmatpush1.msra.mxu0 %v2790
    %2885 = vmatprep.subr.mxu0 %v2789
    %2886 = vmatpush1.msra.mxu0 %v2788
    %2887 = vmatprep.subr.mxu0 %v2787
    %2888 = vmatpush1.msra.mxu0 %v2786
    %2889 = vmatprep.subr.mxu0 %v2785
    %2890 = vmatpush1.msra.mxu0 %v2784
    %2891 = vmatprep.subr.mxu0 %v2783
    %2892 = vmatpush1.msra.mxu0 %v2782
    %2893 = vmatprep.subr.mxu0 %v2781
    %2894 = vmatpush1.msra.mxu0 %v2780
    %2895 = vmatprep.subr.mxu0 %v2779
    %2896 = vmatpush1.msra.mxu0 %v2778
    %2897 = vmatprep.subr.mxu0 %v2777
    %2898 = vmatpush1.msra.mxu0 %v2776
    %2899 = vmatprep.subr.mxu0 %v2775
    %2900 = vmatpush1.msra.mxu0 %v2774
    %2901 = vmatprep.subr.mxu0 %v2773
    %2902 = vmatpush1.msra.mxu0 %v2772
    %2903 = vmatprep.subr.mxu0 %v2771
    %2904 = vmatpush1.msra.mxu0 %v2770
    %2905 = vmatprep.subr.mxu0 %v2769
    %2906 = vmatpush1.msra.mxu0 %v2768
    %2907 = vmatprep.subr.mxu0 %v2767
    %2908 = vmatpush1.msra.mxu0 %v2766
    %2909 = vmatprep.subr.mxu0 %v2765
    %2910 = vmatpush1.msra.mxu0 %v2764
    %2911 = vmatprep.subr.mxu0 %v2827
    %2912 = vmatpush2.msra.mxu0 %v2826
    %2913 = vmatprep.subr.mxu0 %v2825
    %2914 = vmatpush2.msra.mxu0 %v2824
    %2915 = vmatprep.subr.mxu0 %v2823
    %2916 = vmatpush2.msra.mxu0 %v2822
    %2917 = vmatprep.subr.mxu0 %v2821
    %2918 = vmatpush2.msra.mxu0 %v2820
    %2919 = vmatprep.subr.mxu0 %v2819
    %2920 = vmatpush2.msra.mxu0 %v2818
    %2921 = vmatprep.subr.mxu0 %v2817
    %2922 = vmatpush2.msra.mxu0 %v2816
    %2923 = vmatprep.subr.mxu0 %v2815
    %2924 = vmatpush2.msra.mxu0 %v2814
    %2925 = vmatprep.subr.mxu0 %v2813
    %2926 = vmatpush2.msra.mxu0 %v2812
    %2927 = vmatprep.subr.mxu0 %v2811
    %2928 = vmatpush2.msra.mxu0 %v2810
    %2929 = vmatprep.subr.mxu0 %v2809
    %2930 = vmatpush2.msra.mxu0 %v2808
    %2931 = vmatprep.subr.mxu0 %v2807
    %2932 = vmatpush2.msra.mxu0 %v2806
    %2933 = vmatprep.subr.mxu0 %v2805
    %2934 = vmatpush2.msra.mxu0 %v2804
    %2935 = vmatprep.subr.mxu0 %v2803
    %2936 = vmatpush2.msra.mxu0 %v2802
    %2937 = vmatprep.subr.mxu0 %v2801
    %2938 = vmatpush2.msra.mxu0 %v2800
    %2939 = vmatprep.subr.mxu0 %v2799
    %2940 = vmatpush2.msra.mxu0 %v2798
    %2941 = vmatprep.subr.mxu0 %v2797
    %2942 = vmatpush2.msra.mxu0 %v2796
    %2943 = vmatprep.mubr.f32.mxu0 %v2868
    %2944 = vmatmul.mubr.f32.gmra.mxu0 %v2860
    %v2945 = vpop.f32.mrf.mxu0
    %v2946 = vadd.f32 %v2845, %v2945
    %v2947 = vpop.f32.mrf.mxu0
    %v2948 = vadd.f32 %v2849, %v2947
    %2949 = vdwg.mxu0
    %2950 = vmatprep.subr.mxu0 0.0
    %2951 = vmatpush1.msra.mxu0 0.0
    %2952 = vmatprep.subr.mxu0 0.0
    %2953 = vmatpush1.msra.mxu0 0.0
    %2954 = vmatprep.subr.mxu0 0.0
    %2955 = vmatpush1.msra.mxu0 0.0
    %2956 = vmatprep.subr.mxu0 0.0
    %2957 = vmatpush1.msra.mxu0 0.0
    %2958 = vmatprep.subr.mxu0 0.0
    %2959 = vmatpush1.msra.mxu0 0.0
    %2960 = vmatprep.subr.mxu0 0.0
    %2961 = vmatpush1.msra.mxu0 0.0
    %2962 = vmatprep.subr.mxu0 0.0
    %2963 = vmatpush1.msra.mxu0 0.0
    %2964 = vmatprep.subr.mxu0 0.0
    %2965 = vmatpush1.msra.mxu0 0.0
    %2966 = vmatprep.subr.mxu0 0.0
    %2967 = vmatpush1.msra.mxu0 0.0
    %2968 = vmatprep.subr.mxu0 0.0
    %2969 = vmatpush1.msra.mxu0 0.0
    %2970 = vmatprep.subr.mxu0 %v2877
    %2971 = vmatpush1.msra.mxu0 %v2874
    %2972 = vmatprep.subr.mxu0 %v2837
    %2973 = vmatpush1.msra.mxu0 %v2836
    %2974 = vmatprep.subr.mxu0 %v2835
    %2975 = vmatpush1.msra.mxu0 %v2834
    %2976 = vmatprep.subr.mxu0 %v2833
    %2977 = vmatpush1.msra.mxu0 %v2832
    %2978 = vmatprep.subr.mxu0 %v2831
    %2979 = vmatpush1.msra.mxu0 %v2830
    %2980 = vmatprep.subr.mxu0 %v2829
    %2981 = vmatpush1.msra.mxu0 %v2828
    %2982 = vmatprep.subr.mxu0 0.0
    %2983 = vmatpush2.msra.mxu0 0.0
    %2984 = vmatprep.subr.mxu0 0.0
    %2985 = vmatpush2.msra.mxu0 0.0
    %2986 = vmatprep.subr.mxu0 0.0
    %2987 = vmatpush2.msra.mxu0 0.0
    %2988 = vmatprep.subr.mxu0 0.0
    %2989 = vmatpush2.msra.mxu0 0.0
    %2990 = vmatprep.subr.mxu0 0.0
    %2991 = vmatpush2.msra.mxu0 0.0
    %2992 = vmatprep.subr.mxu0 0.0
    %2993 = vmatpush2.msra.mxu0 0.0
    %2994 = vmatprep.subr.mxu0 0.0
    %2995 = vmatpush2.msra.mxu0 0.0
    %2996 = vmatprep.subr.mxu0 0.0
    %2997 = vmatpush2.msra.mxu0 0.0
    %2998 = vmatprep.subr.mxu0 0.0
    %2999 = vmatpush2.msra.mxu0 0.0
    %3000 = vmatprep.subr.mxu0 0.0
    %3001 = vmatpush2.msra.mxu0 0.0
    %3002 = vmatprep.subr.mxu0 0.0
    %3003 = vmatpush2.msra.mxu0 0.0
    %3004 = vmatprep.subr.mxu0 0.0
    %3005 = vmatpush2.msra.mxu0 0.0
    %3006 = vmatprep.subr.mxu0 0.0
    %3007 = vmatpush2.msra.mxu0 0.0
    %3008 = vmatprep.subr.mxu0 0.0
    %3009 = vmatpush2.msra.mxu0 0.0
    %3010 = vmatprep.subr.mxu0 0.0
    %3011 = vmatpush2.msra.mxu0 0.0
    %3012 = vmatprep.subr.mxu0 0.0
    %3013 = vmatpush2.msra.mxu0 0.0
    %3014 = vmatprep.mubr.f32.mxu0 0.0
    %3015 = vmatmul.mubr.f32.gmra.mxu0 %v2871
    %v3016 = vpop.f32.mrf.mxu0
    %v3017 = vadd.f32 %v2946, %v3016
    %v3018 = vpop.f32.mrf.mxu0
    %v3019 = vadd.f32 %v2948, %v3018
    %3020 = vdwg.mxu0
    %3021 = vst [vmem:[#allocation2] sm:$0x3] %v3017
    %v3022 = vld [vmem:[#allocation10] sm:$0xff]
    %v3023 = vld [vmem:[#allocation10 + $0x8] sm:$0xff]
    %v3024 = vld [vmem:[#allocation10 + $0x10] sm:$0xff]
    %v3025 = vld [vmem:[#allocation10 + $0x18] sm:$0xff]
    %v3026 = vsel %vm387, %v2758, 0
    %3028 = vmatprep.subr.mxu0 0.0
    %3029 = vmatpush1.msra.mxu0 0.0
    %3030 = vmatprep.subr.mxu0 0.0
    %3031 = vmatpush1.msra.mxu0 0.0
    %3032 = vmatprep.subr.mxu0 0.0
    %3033 = vmatpush1.msra.mxu0 0.0
    %3034 = vmatprep.subr.mxu0 0.0
    %3035 = vmatpush1.msra.mxu0 0.0
    %3036 = vmatprep.subr.mxu0 0.0
    %3037 = vmatpush1.msra.mxu0 0.0
    %3038 = vmatprep.subr.mxu0 0.0
    %3039 = vmatpush1.msra.mxu0 0.0
    %3040 = vmatprep.subr.mxu0 0.0
    %3041 = vmatpush1.msra.mxu0 0.0
    %3042 = vmatprep.subr.mxu0 0.0
    %3043 = vmatpush1.msra.mxu0 0.0
    %3044 = vmatprep.subr.mxu0 0.0
    %3045 = vmatpush1.msra.mxu0 0.0
    %3046 = vmatprep.subr.mxu0 0.0
    %3047 = vmatpush1.msra.mxu0 0.0
    %3048 = vmatprep.subr.mxu0 0.0
    %3049 = vmatpush1.msra.mxu0 0.0
    %3050 = vmatprep.subr.mxu0 0.0
    %3051 = vmatpush1.msra.mxu0 0.0
    %3052 = vmatprep.subr.mxu0 0.0
    %3053 = vmatpush1.msra.mxu0 %v3025
    %3054 = vmatprep.subr.mxu0 0.0
    %3055 = vmatpush1.msra.mxu0 %v3024
    %3056 = vmatprep.subr.mxu0 0.0
    %3057 = vmatpush1.msra.mxu0 %v3023
    %3058 = vmatprep.subr.mxu0 0.0
    %3059 = vmatpush1.msra.mxu0 %v3022
    %3060 = vmatprep.subr.mxu0 0.0
    %3061 = vmatpush2.msra.mxu0 0.0
    %3062 = vmatprep.subr.mxu0 0.0
    %3063 = vmatpush2.msra.mxu0 0.0
    %3064 = vmatprep.subr.mxu0 0.0
    %3065 = vmatpush2.msra.mxu0 0.0
    %3066 = vmatprep.subr.mxu0 0.0
    %3067 = vmatpush2.msra.mxu0 0.0
    %3068 = vmatprep.subr.mxu0 0.0
    %3069 = vmatpush2.msra.mxu0 0.0
    %3070 = vmatprep.subr.mxu0 0.0
    %3071 = vmatpush2.msra.mxu0 0.0
    %3072 = vmatprep.subr.mxu0 0.0
    %3073 = vmatpush2.msra.mxu0 0.0
    %3074 = vmatprep.subr.mxu0 0.0
    %3075 = vmatpush2.msra.mxu0 0.0
    %3076 = vmatprep.subr.mxu0 0.0
    %3077 = vmatpush2.msra.mxu0 0.0
    %3078 = vmatprep.subr.mxu0 0.0
    %3079 = vmatpush2.msra.mxu0 0.0
    %3080 = vmatprep.subr.mxu0 0.0
    %3081 = vmatpush2.msra.mxu0 0.0
    %3082 = vmatprep.subr.mxu0 0.0
    %3083 = vmatpush2.msra.mxu0 0.0
    %3084 = vmatprep.subr.mxu0 0.0
    %3085 = vmatpush2.msra.mxu0 0.0
    %3086 = vmatprep.subr.mxu0 0.0
    %3087 = vmatpush2.msra.mxu0 0.0
    %3088 = vmatprep.subr.mxu0 0.0
    %3089 = vmatpush2.msra.mxu0 0.0
    %3090 = vmatprep.subr.mxu0 0.0
    %3091 = vmatpush2.msra.mxu0 0.0
    %3092 = vmatprep.mubr.f32.mxu0 0.0
    %3093 = vmatmul.mubr.f32.gmra.mxu0 %v3026
    %v3094 = vpop.f32.mrf.mxu0
    %v3095 = vadd.f32 0.0, %v3094
    %v3096 = vpop.f32.mrf.mxu0
    %3097 = vdwg.mxu0
    %v3098 = vadd.f32 %v3019, %v3095
    %v3099 = vsub.f32 0.0, %v3098
    %v3100 = vmul.f32 %v3099, 1.442695
    %v3101 = vpow.pop %v3100
    %v3102 = vadd.f32 %v3101, 1.0
    %v3103 = vrcp.pop %v3102
    %v3104 = vmul.f32 1.0, %v3103
    %v3105 = vtanh.pop %v3098
    %v3106 = vmul.f32 %v3104, %v2755
    %3108 = vrot.lane.b32.xlu0 %v3105, 64
    %v3109 = vpop.permute.xlu0 %3108
    %v3111 = vmul.f32 %v3104, %v3109
    %3113 = vrot.lane.b32.xlu0 %v3111, 32
    %v3114 = vpop.permute.xlu0 %3113
    %v3116 = vadd.f32 %v3106, %v3114
    %v3117 = vtanh.pop %v3116
    %3119 = vrot.lane.b32.xlu0 %v3117, 64
    %v3120 = vpop.permute.xlu0 %3119
    %v3122 = vmul.f32 %v3104, %v3120
    %3124 = vset.pattern.permute.xlu0 0
    %3125 = vperm.xlu0 %3124, %v2762
    %v3126 = vpop.permute.xlu0 %3125
    %v3128 = vmul.f32 %v3126, %v3122
    %3130 = vrot.lane.b32.xlu0 %v3128, 32
    %v3131 = vpop.permute.xlu0 %3130
    %3133 = vst.msk [vmem:[#allocation3] sm:$0x3] %vm498, %v3131
    %v3134 = vld [vmem:[%s1] sm:$0x3]
    %v3135 = vld [vmem:[#allocation2] sm:$0x3]
    %v3136 = vld [vmem:[#allocation9] sm:$0xff]
    %v3137 = vld [vmem:[#allocation9 + $0x8] sm:$0xff]
    %v3138 = vld [vmem:[#allocation9 + $0x10] sm:$0xff]
    %v3139 = vld [vmem:[#allocation9 + $0x18] sm:$0xff]
    %3140 = vmatprep.subr.mxu0 0.0
    %3141 = vmatpush1.msra.mxu0 0.0
    %3142 = vmatprep.subr.mxu0 0.0
    %3143 = vmatpush1.msra.mxu0 0.0
    %3144 = vmatprep.subr.mxu0 0.0
    %3145 = vmatpush1.msra.mxu0 0.0
    %3146 = vmatprep.subr.mxu0 0.0
    %3147 = vmatpush1.msra.mxu0 0.0
    %3148 = vmatprep.subr.mxu0 0.0
    %3149 = vmatpush1.msra.mxu0 0.0
    %3150 = vmatprep.subr.mxu0 0.0
    %3151 = vmatpush1.msra.mxu0 0.0
    %3152 = vmatprep.subr.mxu0 0.0
    %3153 = vmatpush1.msra.mxu0 0.0
    %3154 = vmatprep.subr.mxu0 0.0
    %3155 = vmatpush1.msra.mxu0 0.0
    %3156 = vmatprep.subr.mxu0 0.0
    %3157 = vmatpush1.msra.mxu0 0.0
    %3158 = vmatprep.subr.mxu0 0.0
    %3159 = vmatpush1.msra.mxu0 0.0
    %3160 = vmatprep.subr.mxu0 0.0
    %3161 = vmatpush1.msra.mxu0 0.0
    %3162 = vmatprep.subr.mxu0 0.0
    %3163 = vmatpush1.msra.mxu0 0.0
    %3164 = vmatprep.subr.mxu0 0.0
    %3165 = vmatpush1.msra.mxu0 %v3139
    %3166 = vmatprep.subr.mxu0 0.0
    %3167 = vmatpush1.msra.mxu0 %v3138
    %3168 = vmatprep.subr.mxu0 0.0
    %3169 = vmatpush1.msra.mxu0 %v3137
    %3170 = vmatprep.subr.mxu0 0.0
    %3171 = vmatpush1.msra.mxu0 %v3136
    %3172 = vmatprep.subr.mxu0 0.0
    %3173 = vmatpush2.msra.mxu0 0.0
    %3174 = vmatprep.subr.mxu0 0.0
    %3175 = vmatpush2.msra.mxu0 0.0
    %3176 = vmatprep.subr.mxu0 0.0
    %3177 = vmatpush2.msra.mxu0 0.0
    %3178 = vmatprep.subr.mxu0 0.0
    %3179 = vmatpush2.msra.mxu0 0.0
    %3180 = vmatprep.subr.mxu0 0.0
    %3181 = vmatpush2.msra.mxu0 0.0
    %3182 = vmatprep.subr.mxu0 0.0
    %3183 = vmatpush2.msra.mxu0 0.0
    %3184 = vmatprep.subr.mxu0 0.0
    %3185 = vmatpush2.msra.mxu0 0.0
    %3186 = vmatprep.subr.mxu0 0.0
    %3187 = vmatpush2.msra.mxu0 0.0
    %3188 = vmatprep.subr.mxu0 0.0
    %3189 = vmatpush2.msra.mxu0 0.0
    %3190 = vmatprep.subr.mxu0 0.0
    %3191 = vmatpush2.msra.mxu0 0.0
    %3192 = vmatprep.subr.mxu0 0.0
    %3193 = vmatpush2.msra.mxu0 0.0
    %3194 = vmatprep.subr.mxu0 0.0
    %3195 = vmatpush2.msra.mxu0 0.0
    %3196 = vmatprep.subr.mxu0 0.0
    %3197 = vmatpush2.msra.mxu0 0.0
    %3198 = vmatprep.subr.mxu0 0.0
    %3199 = vmatpush2.msra.mxu0 0.0
    %3200 = vmatprep.subr.mxu0 0.0
    %3201 = vmatpush2.msra.mxu0 0.0
    %3202 = vmatprep.subr.mxu0 0.0
    %3203 = vmatpush2.msra.mxu0 0.0
    %3204 = vmatprep.mubr.f32.mxu0 0.0
    %3205 = vmatmul.mubr.f32.gmra.mxu0 %v389
    %v3206 = vpop.f32.mrf.mxu0
    %v3207 = vadd.f32 0.0, %v3206
    %v3208 = vpop.f32.mrf.mxu0
    %3209 = vdwg.mxu0
    %v3210 = vadd.f32 %v3135, %v3207
    %v3211 = vsub.f32 0.0, %v3210
    %v3212 = vmul.f32 %v3211, 1.442695
    %v3213 = vpow.pop %v3212
    %v3214 = vadd.f32 %v3213, 1.0
    %v3215 = vrcp.pop %v3214
    %v3216 = vmul.f32 1.0, %v3215
    %v3217 = vtanh.pop %v3210
    %v3218 = vmul.f32 %v3216, 0.0
    %3220 = vrot.lane.b32.xlu0 %v3217, 64
    %v3221 = vpop.permute.xlu0 %3220
    %v3223 = vmul.f32 %v3216, %v3221
    %3225 = vrot.lane.b32.xlu0 %v3223, 32
    %v3226 = vpop.permute.xlu0 %3225
    %v3228 = vadd.f32 %v3218, %v3226
    %v3229 = vtanh.pop %v3228
    %3231 = vrot.lane.b32.xlu0 %v3229, 64
    %v3232 = vpop.permute.xlu0 %3231
    %v3234 = vmul.f32 %v3216, %v3232
    %3236 = vset.pattern.permute.xlu0 0
    %3237 = vperm.xlu0 %3236, %v3134
    %v3238 = vpop.permute.xlu0 %3237
    %v3240 = vmul.f32 %v3238, %v3234
    %v3241 = vmul.f32 %v3238, %v3228
    %v3242 = vld [vmem:[#allocation12] sm:$0xff]
    %v3243 = vld [vmem:[#allocation12 + $0x8] sm:$0xff]
    %v3244 = vld [vmem:[#allocation12 + $0x10] sm:$0xff]
    %v3245 = vld [vmem:[#allocation12 + $0x18] sm:$0xff]
    %v3246 = vld [vmem:[#allocation12 + $0x20] sm:$0xff]
    %v3247 = vld [vmem:[#allocation12 + $0x28] sm:$0xff]
    %v3248 = vld [vmem:[#allocation12 + $0x30] sm:$0xff]
    %v3249 = vld [vmem:[#allocation12 + $0x38] sm:$0xff]
    %v3250 = vld [vmem:[#allocation3] sm:$0x3]
    %v3251 = vld [vmem:[#allocation13] sm:$0xff]
    %v3252 = vld [vmem:[#allocation13 + $0x8] sm:$0xff]
    %v3253 = vld [vmem:[#allocation13 + $0x10] sm:$0xff]
    %v3254 = vld [vmem:[#allocation13 + $0x18] sm:$0xff]
    %v3255 = vld [vmem:[#allocation13 + $0x20] sm:$0xff]
    %v3256 = vld [vmem:[#allocation13 + $0x28] sm:$0xff]
    %v3257 = vld [vmem:[#allocation13 + $0x30] sm:$0xff]
    %v3258 = vld [vmem:[#allocation13 + $0x38] sm:$0xff]
    %v3260 = vsel %vm387, %v3250, 0
    %3262 = vmatprep.subr.mxu0 0.0
    %3263 = vmatpush1.msra.mxu0 0.0
    %3264 = vmatprep.subr.mxu0 0.0
    %3265 = vmatpush1.msra.mxu0 0.0
    %3266 = vmatprep.subr.mxu0 0.0
    %3267 = vmatpush1.msra.mxu0 0.0
    %3268 = vmatprep.subr.mxu0 0.0
    %3269 = vmatpush1.msra.mxu0 0.0
    %3270 = vmatprep.subr.mxu0 0.0
    %3271 = vmatpush1.msra.mxu0 0.0
    %3272 = vmatprep.subr.mxu0 0.0
    %3273 = vmatpush1.msra.mxu0 0.0
    %3274 = vmatprep.subr.mxu0 0.0
    %3275 = vmatpush1.msra.mxu0 0.0
    %3276 = vmatprep.subr.mxu0 0.0
    %3277 = vmatpush1.msra.mxu0 0.0
    %3278 = vmatprep.subr.mxu0 0.0
    %3279 = vmatpush1.msra.mxu0 0.0
    %3280 = vmatprep.subr.mxu0 0.0
    %3281 = vmatpush1.msra.mxu0 0.0
    %3282 = vmatprep.subr.mxu0 0.0
    %3283 = vmatpush1.msra.mxu0 0.0
    %3284 = vmatprep.subr.mxu0 0.0
    %3285 = vmatpush1.msra.mxu0 0.0
    %3286 = vmatprep.subr.mxu0 %v3258
    %3287 = vmatpush1.msra.mxu0 %v3257
    %3288 = vmatprep.subr.mxu0 %v3256
    %3289 = vmatpush1.msra.mxu0 %v3255
    %3290 = vmatprep.subr.mxu0 %v3254
    %3291 = vmatpush1.msra.mxu0 %v3253
    %3292 = vmatprep.subr.mxu0 %v3252
    %3293 = vmatpush1.msra.mxu0 %v3251
    %3294 = vmatprep.subr.mxu0 0.0
    %3295 = vmatpush2.msra.mxu0 0.0
    %3296 = vmatprep.subr.mxu0 0.0
    %3297 = vmatpush2.msra.mxu0 0.0
    %3298 = vmatprep.subr.mxu0 0.0
    %3299 = vmatpush2.msra.mxu0 0.0
    %3300 = vmatprep.subr.mxu0 0.0
    %3301 = vmatpush2.msra.mxu0 0.0
    %3302 = vmatprep.subr.mxu0 0.0
    %3303 = vmatpush2.msra.mxu0 0.0
    %3304 = vmatprep.subr.mxu0 0.0
    %3305 = vmatpush2.msra.mxu0 0.0
    %3306 = vmatprep.subr.mxu0 0.0
    %3307 = vmatpush2.msra.mxu0 0.0
    %3308 = vmatprep.subr.mxu0 0.0
    %3309 = vmatpush2.msra.mxu0 0.0
    %3310 = vmatprep.subr.mxu0 0.0
    %3311 = vmatpush2.msra.mxu0 0.0
    %3312 = vmatprep.subr.mxu0 0.0
    %3313 = vmatpush2.msra.mxu0 0.0
    %3314 = vmatprep.subr.mxu0 0.0
    %3315 = vmatpush2.msra.mxu0 0.0
    %3316 = vmatprep.subr.mxu0 0.0
    %3317 = vmatpush2.msra.mxu0 0.0
    %3318 = vmatprep.subr.mxu0 0.0
    %3319 = vmatpush2.msra.mxu0 0.0
    %3320 = vmatprep.subr.mxu0 0.0
    %3321 = vmatpush2.msra.mxu0 0.0
    %3322 = vmatprep.subr.mxu0 0.0
    %3323 = vmatpush2.msra.mxu0 0.0
    %3324 = vmatprep.subr.mxu0 0.0
    %3325 = vmatpush2.msra.mxu0 0.0
    %3326 = vmatprep.mubr.f32.mxu0 0.0
    %3327 = vmatmul.mubr.f32.gmra.mxu0 %v3260
    %v3328 = vpop.f32.mrf.mxu0
    %v3329 = vadd.f32 0.0, %v3328
    %v3330 = vpop.f32.mrf.mxu0
    %v3331 = vadd.f32 0.0, %v3330
    %3332 = vdwg.mxu0
    %3334 = vrot.lane.b32.xlu0 %v3240, 32
    %v3335 = vpop.permute.xlu0 %3334
    %v3336 = vsel %vm387, %v3335, 0
    %3338 = vmatprep.subr.mxu0 0.0
    %3339 = vmatpush1.msra.mxu0 0.0
    %3340 = vmatprep.subr.mxu0 0.0
    %3341 = vmatpush1.msra.mxu0 0.0
    %3342 = vmatprep.subr.mxu0 0.0
    %3343 = vmatpush1.msra.mxu0 0.0
    %3344 = vmatprep.subr.mxu0 0.0
    %3345 = vmatpush1.msra.mxu0 0.0
    %3346 = vmatprep.subr.mxu0 0.0
    %3347 = vmatpush1.msra.mxu0 0.0
    %3348 = vmatprep.subr.mxu0 0.0
    %3349 = vmatpush1.msra.mxu0 0.0
    %3350 = vmatprep.subr.mxu0 0.0
    %3351 = vmatpush1.msra.mxu0 0.0
    %3352 = vmatprep.subr.mxu0 0.0
    %3353 = vmatpush1.msra.mxu0 0.0
    %3354 = vmatprep.subr.mxu0 0.0
    %3355 = vmatpush1.msra.mxu0 0.0
    %3356 = vmatprep.subr.mxu0 0.0
    %3357 = vmatpush1.msra.mxu0 0.0
    %3358 = vmatprep.subr.mxu0 0.0
    %3359 = vmatpush1.msra.mxu0 0.0
    %3360 = vmatprep.subr.mxu0 0.0
    %3361 = vmatpush1.msra.mxu0 0.0
    %3362 = vmatprep.subr.mxu0 %v3249
    %3363 = vmatpush1.msra.mxu0 %v3248
    %3364 = vmatprep.subr.mxu0 %v3247
    %3365 = vmatpush1.msra.mxu0 %v3246
    %3366 = vmatprep.subr.mxu0 %v3245
    %3367 = vmatpush1.msra.mxu0 %v3244
    %3368 = vmatprep.subr.mxu0 %v3243
    %3369 = vmatpush1.msra.mxu0 %v3242
    %3370 = vmatprep.subr.mxu0 0.0
    %3371 = vmatpush2.msra.mxu0 0.0
    %3372 = vmatprep.subr.mxu0 0.0
    %3373 = vmatpush2.msra.mxu0 0.0
    %3374 = vmatprep.subr.mxu0 0.0
    %3375 = vmatpush2.msra.mxu0 0.0
    %3376 = vmatprep.subr.mxu0 0.0
    %3377 = vmatpush2.msra.mxu0 0.0
    %3378 = vmatprep.subr.mxu0 0.0
    %3379 = vmatpush2.msra.mxu0 0.0
    %3380 = vmatprep.subr.mxu0 0.0
    %3381 = vmatpush2.msra.mxu0 0.0
    %3382 = vmatprep.subr.mxu0 0.0
    %3383 = vmatpush2.msra.mxu0 0.0
    %3384 = vmatprep.subr.mxu0 0.0
    %3385 = vmatpush2.msra.mxu0 0.0
    %3386 = vmatprep.subr.mxu0 0.0
    %3387 = vmatpush2.msra.mxu0 0.0
    %3388 = vmatprep.subr.mxu0 0.0
    %3389 = vmatpush2.msra.mxu0 0.0
    %3390 = vmatprep.subr.mxu0 0.0
    %3391 = vmatpush2.msra.mxu0 0.0
    %3392 = vmatprep.subr.mxu0 0.0
    %3393 = vmatpush2.msra.mxu0 0.0
    %3394 = vmatprep.subr.mxu0 0.0
    %3395 = vmatpush2.msra.mxu0 0.0
    %3396 = vmatprep.subr.mxu0 0.0
    %3397 = vmatpush2.msra.mxu0 0.0
    %3398 = vmatprep.subr.mxu0 0.0
    %3399 = vmatpush2.msra.mxu0 0.0
    %3400 = vmatprep.subr.mxu0 0.0
    %3401 = vmatpush2.msra.mxu0 0.0
    %3402 = vmatprep.mubr.f32.mxu0 0.0
    %3403 = vmatmul.mubr.f32.gmra.mxu0 %v3336
    %v3404 = vpop.f32.mrf.mxu0
    %v3405 = vadd.f32 %v3329, %v3404
    %v3406 = vpop.f32.mrf.mxu0
    %v3407 = vadd.f32 %v3331, %v3406
    %3408 = vdwg.mxu0
    %v3409 = vld [vmem:[%s8] sm:$0x3]
    %v3411 = vlaneseq
    %v3412 = vshrl.u32 %v3411, 7
    %v3413 = vsub.s32 0, %v3412
    %v3414 = vrot.slane %v3409, %v3413
    %v3415 = vlaneseq
    %v3416 = vshrl.u32 %v3415, 7
    %v3417 = vsub.s32 1, %v3416
    %v3418 = vrot.slane %v3409, %v3417
    %v3421 = vadd.f32 %v3405, %v3414
    %v3422 = vadd.f32 %v3407, %v3418
    %3423 = vst [vmem:[#allocation15] sm:$0x3] %v3421
    %3424 = vst [vmem:[#allocation16] sm:$0x3] %v3422
    %v3425 = vld [vmem:[%s2385] sm:$0x3]
    %v3426 = vld [vmem:[%s2646] sm:$0x3]
    %v3427 = vld [vmem:[#allocation9] sm:$0xff]
    %v3428 = vld [vmem:[#allocation9 + $0x8] sm:$0xff]
    %v3429 = vld [vmem:[#allocation9 + $0x10] sm:$0xff]
    %v3430 = vld [vmem:[#allocation9 + $0x18] sm:$0xff]
    %3431 = vmatprep.subr.mxu0 0.0
    %3432 = vmatpush1.msra.mxu0 0.0
    %3433 = vmatprep.subr.mxu0 0.0
    %3434 = vmatpush1.msra.mxu0 0.0
    %3435 = vmatprep.subr.mxu0 0.0
    %3436 = vmatpush1.msra.mxu0 0.0
    %3437 = vmatprep.subr.mxu0 0.0
    %3438 = vmatpush1.msra.mxu0 0.0
    %3439 = vmatprep.subr.mxu0 0.0
    %3440 = vmatpush1.msra.mxu0 0.0
    %3441 = vmatprep.subr.mxu0 0.0
    %3442 = vmatpush1.msra.mxu0 0.0
    %3443 = vmatprep.subr.mxu0 0.0
    %3444 = vmatpush1.msra.mxu0 0.0
    %3445 = vmatprep.subr.mxu0 0.0
    %3446 = vmatpush1.msra.mxu0 0.0
    %3447 = vmatprep.subr.mxu0 0.0
    %3448 = vmatpush1.msra.mxu0 0.0
    %3449 = vmatprep.subr.mxu0 0.0
    %3450 = vmatpush1.msra.mxu0 0.0
    %3451 = vmatprep.subr.mxu0 0.0
    %3452 = vmatpush1.msra.mxu0 0.0
    %3453 = vmatprep.subr.mxu0 0.0
    %3454 = vmatpush1.msra.mxu0 0.0
    %3455 = vmatprep.subr.mxu0 0.0
    %3456 = vmatpush1.msra.mxu0 %v3430
    %3457 = vmatprep.subr.mxu0 0.0
    %3458 = vmatpush1.msra.mxu0 %v3429
    %3459 = vmatprep.subr.mxu0 0.0
    %3460 = vmatpush1.msra.mxu0 %v3428
    %3461 = vmatprep.subr.mxu0 0.0
    %3462 = vmatpush1.msra.mxu0 %v3427
    %3463 = vmatprep.subr.mxu0 0.0
    %3464 = vmatpush2.msra.mxu0 0.0
    %3465 = vmatprep.subr.mxu0 0.0
    %3466 = vmatpush2.msra.mxu0 0.0
    %3467 = vmatprep.subr.mxu0 0.0
    %3468 = vmatpush2.msra.mxu0 0.0
    %3469 = vmatprep.subr.mxu0 0.0
    %3470 = vmatpush2.msra.mxu0 0.0
    %3471 = vmatprep.subr.mxu0 0.0
    %3472 = vmatpush2.msra.mxu0 0.0
    %3473 = vmatprep.subr.mxu0 0.0
    %3474 = vmatpush2.msra.mxu0 0.0
    %3475 = vmatprep.subr.mxu0 0.0
    %3476 = vmatpush2.msra.mxu0 0.0
    %3477 = vmatprep.subr.mxu0 0.0
    %3478 = vmatpush2.msra.mxu0 0.0
    %3479 = vmatprep.subr.mxu0 0.0
    %3480 = vmatpush2.msra.mxu0 0.0
    %3481 = vmatprep.subr.mxu0 0.0
    %3482 = vmatpush2.msra.mxu0 0.0
    %3483 = vmatprep.subr.mxu0 0.0
    %3484 = vmatpush2.msra.mxu0 0.0
    %3485 = vmatprep.subr.mxu0 0.0
    %3486 = vmatpush2.msra.mxu0 0.0
    %3487 = vmatprep.subr.mxu0 0.0
    %3488 = vmatpush2.msra.mxu0 0.0
    %3489 = vmatprep.subr.mxu0 0.0
    %3490 = vmatpush2.msra.mxu0 0.0
    %3491 = vmatprep.subr.mxu0 0.0
    %3492 = vmatpush2.msra.mxu0 0.0
    %3493 = vmatprep.subr.mxu0 0.0
    %3494 = vmatpush2.msra.mxu0 0.0
    %3495 = vmatprep.mubr.f32.mxu0 0.0
    %3496 = vmatmul.mubr.f32.gmra.mxu0 %v3336
    %v3497 = vpop.f32.mrf.mxu0
    %v3498 = vadd.f32 0.0, %v3497
    %v3499 = vpop.f32.mrf.mxu0
    %3500 = vdwg.mxu0
    %v3501 = vadd.f32 %v3426, %v3498
    %v3502 = vsub.f32 0.0, %v3501
    %v3503 = vmul.f32 %v3502, 1.442695
    %v3504 = vpow.pop %v3503
    %v3505 = vadd.f32 %v3504, 1.0
    %v3506 = vrcp.pop %v3505
    %v3507 = vmul.f32 1.0, %v3506
    %v3508 = vtanh.pop %v3501
    %v3509 = vmul.f32 %v3507, %v3241
    %3511 = vrot.lane.b32.xlu0 %v3508, 64
    %v3512 = vpop.permute.xlu0 %3511
    %v3514 = vmul.f32 %v3507, %v3512
    %3516 = vrot.lane.b32.xlu0 %v3514, 32
    %v3517 = vpop.permute.xlu0 %3516
    %v3519 = vadd.f32 %v3509, %v3517
    %v3520 = vtanh.pop %v3519
    %3522 = vrot.lane.b32.xlu0 %v3520, 64
    %v3523 = vpop.permute.xlu0 %3522
    %v3525 = vmul.f32 %v3507, %v3523
    %3527 = vset.pattern.permute.xlu0 0
    %3528 = vperm.xlu0 %3527, %v3425
    %v3529 = vpop.permute.xlu0 %3528
    %v3531 = vmul.f32 %v3529, %v3525
    %v3532 = vmul.f32 %v3529, %v3519
    %v3533 = vld [vmem:[#allocation12] sm:$0xff]
    %v3534 = vld [vmem:[#allocation12 + $0x8] sm:$0xff]
    %v3535 = vld [vmem:[#allocation12 + $0x10] sm:$0xff]
    %v3536 = vld [vmem:[#allocation12 + $0x18] sm:$0xff]
    %v3537 = vld [vmem:[#allocation12 + $0x20] sm:$0xff]
    %v3538 = vld [vmem:[#allocation12 + $0x28] sm:$0xff]
    %v3539 = vld [vmem:[#allocation12 + $0x30] sm:$0xff]
    %v3540 = vld [vmem:[#allocation12 + $0x38] sm:$0xff]
    %v3541 = vld [vmem:[%s2760] sm:$0x3]
    %v3542 = vld [vmem:[#allocation13] sm:$0xff]
    %v3543 = vld [vmem:[#allocation13 + $0x8] sm:$0xff]
    %v3544 = vld [vmem:[#allocation13 + $0x10] sm:$0xff]
    %v3545 = vld [vmem:[#allocation13 + $0x18] sm:$0xff]
    %v3546 = vld [vmem:[#allocation13 + $0x20] sm:$0xff]
    %v3547 = vld [vmem:[#allocation13 + $0x28] sm:$0xff]
    %v3548 = vld [vmem:[#allocation13 + $0x30] sm:$0xff]
    %v3549 = vld [vmem:[#allocation13 + $0x38] sm:$0xff]
    %v3551 = vsel %vm387, %v3541, 0
    %3553 = vmatprep.subr.mxu0 0.0
    %3554 = vmatpush1.msra.mxu0 0.0
    %3555 = vmatprep.subr.mxu0 0.0
    %3556 = vmatpush1.msra.mxu0 0.0
    %3557 = vmatprep.subr.mxu0 0.0
    %3558 = vmatpush1.msra.mxu0 0.0
    %3559 = vmatprep.subr.mxu0 0.0
    %3560 = vmatpush1.msra.mxu0 0.0
    %3561 = vmatprep.subr.mxu0 0.0
    %3562 = vmatpush1.msra.mxu0 0.0
    %3563 = vmatprep.subr.mxu0 0.0
    %3564 = vmatpush1.msra.mxu0 0.0
    %3565 = vmatprep.subr.mxu0 0.0
    %3566 = vmatpush1.msra.mxu0 0.0
    %3567 = vmatprep.subr.mxu0 0.0
    %3568 = vmatpush1.msra.mxu0 0.0
    %3569 = vmatprep.subr.mxu0 0.0
    %3570 = vmatpush1.msra.mxu0 0.0
    %3571 = vmatprep.subr.mxu0 0.0
    %3572 = vmatpush1.msra.mxu0 0.0
    %3573 = vmatprep.subr.mxu0 0.0
    %3574 = vmatpush1.msra.mxu0 0.0
    %3575 = vmatprep.subr.mxu0 0.0
    %3576 = vmatpush1.msra.mxu0 0.0
    %3577 = vmatprep.subr.mxu0 %v3549
    %3578 = vmatpush1.msra.mxu0 %v3548
    %3579 = vmatprep.subr.mxu0 %v3547
    %3580 = vmatpush1.msra.mxu0 %v3546
    %3581 = vmatprep.subr.mxu0 %v3545
    %3582 = vmatpush1.msra.mxu0 %v3544
    %3583 = vmatprep.subr.mxu0 %v3543
    %3584 = vmatpush1.msra.mxu0 %v3542
    %3585 = vmatprep.subr.mxu0 0.0
    %3586 = vmatpush2.msra.mxu0 0.0
    %3587 = vmatprep.subr.mxu0 0.0
    %3588 = vmatpush2.msra.mxu0 0.0
    %3589 = vmatprep.subr.mxu0 0.0
    %3590 = vmatpush2.msra.mxu0 0.0
    %3591 = vmatprep.subr.mxu0 0.0
    %3592 = vmatpush2.msra.mxu0 0.0
    %3593 = vmatprep.subr.mxu0 0.0
    %3594 = vmatpush2.msra.mxu0 0.0
    %3595 = vmatprep.subr.mxu0 0.0
    %3596 = vmatpush2.msra.mxu0 0.0
    %3597 = vmatprep.subr.mxu0 0.0
    %3598 = vmatpush2.msra.mxu0 0.0
    %3599 = vmatprep.subr.mxu0 0.0
    %3600 = vmatpush2.msra.mxu0 0.0
    %3601 = vmatprep.subr.mxu0 0.0
    %3602 = vmatpush2.msra.mxu0 0.0
    %3603 = vmatprep.subr.mxu0 0.0
    %3604 = vmatpush2.msra.mxu0 0.0
    %3605 = vmatprep.subr.mxu0 0.0
    %3606 = vmatpush2.msra.mxu0 0.0
    %3607 = vmatprep.subr.mxu0 0.0
    %3608 = vmatpush2.msra.mxu0 0.0
    %3609 = vmatprep.subr.mxu0 0.0
    %3610 = vmatpush2.msra.mxu0 0.0
    %3611 = vmatprep.subr.mxu0 0.0
    %3612 = vmatpush2.msra.mxu0 0.0
    %3613 = vmatprep.subr.mxu0 0.0
    %3614 = vmatpush2.msra.mxu0 0.0
    %3615 = vmatprep.subr.mxu0 0.0
    %3616 = vmatpush2.msra.mxu0 0.0
    %3617 = vmatprep.mubr.f32.mxu0 0.0
    %3618 = vmatmul.mubr.f32.gmra.mxu0 %v3551
    %v3619 = vpop.f32.mrf.mxu0
    %v3620 = vadd.f32 0.0, %v3619
    %v3621 = vpop.f32.mrf.mxu0
    %v3622 = vadd.f32 0.0, %v3621
    %3623 = vdwg.mxu0
    %3625 = vrot.lane.b32.xlu0 %v3531, 32
    %v3626 = vpop.permute.xlu0 %3625
    %v3627 = vsel %vm387, %v3626, 0
    %3629 = vmatprep.subr.mxu0 0.0
    %3630 = vmatpush1.msra.mxu0 0.0
    %3631 = vmatprep.subr.mxu0 0.0
    %3632 = vmatpush1.msra.mxu0 0.0
    %3633 = vmatprep.subr.mxu0 0.0
    %3634 = vmatpush1.msra.mxu0 0.0
    %3635 = vmatprep.subr.mxu0 0.0
    %3636 = vmatpush1.msra.mxu0 0.0
    %3637 = vmatprep.subr.mxu0 0.0
    %3638 = vmatpush1.msra.mxu0 0.0
    %3639 = vmatprep.subr.mxu0 0.0
    %3640 = vmatpush1.msra.mxu0 0.0
    %3641 = vmatprep.subr.mxu0 0.0
    %3642 = vmatpush1.msra.mxu0 0.0
    %3643 = vmatprep.subr.mxu0 0.0
    %3644 = vmatpush1.msra.mxu0 0.0
    %3645 = vmatprep.subr.mxu0 0.0
    %3646 = vmatpush1.msra.mxu0 0.0
    %3647 = vmatprep.subr.mxu0 0.0
    %3648 = vmatpush1.msra.mxu0 0.0
    %3649 = vmatprep.subr.mxu0 0.0
    %3650 = vmatpush1.msra.mxu0 0.0
    %3651 = vmatprep.subr.mxu0 0.0
    %3652 = vmatpush1.msra.mxu0 0.0
    %3653 = vmatprep.subr.mxu0 %v3540
    %3654 = vmatpush1.msra.mxu0 %v3539
    %3655 = vmatprep.subr.mxu0 %v3538
    %3656 = vmatpush1.msra.mxu0 %v3537
    %3657 = vmatprep.subr.mxu0 %v3536
    %3658 = vmatpush1.msra.mxu0 %v3535
    %3659 = vmatprep.subr.mxu0 %v3534
    %3660 = vmatpush1.msra.mxu0 %v3533
    %3661 = vmatprep.subr.mxu0 0.0
    %3662 = vmatpush2.msra.mxu0 0.0
    %3663 = vmatprep.subr.mxu0 0.0
    %3664 = vmatpush2.msra.mxu0 0.0
    %3665 = vmatprep.subr.mxu0 0.0
    %3666 = vmatpush2.msra.mxu0 0.0
    %3667 = vmatprep.subr.mxu0 0.0
    %3668 = vmatpush2.msra.mxu0 0.0
    %3669 = vmatprep.subr.mxu0 0.0
    %3670 = vmatpush2.msra.mxu0 0.0
    %3671 = vmatprep.subr.mxu0 0.0
    %3672 = vmatpush2.msra.mxu0 0.0
    %3673 = vmatprep.subr.mxu0 0.0
    %3674 = vmatpush2.msra.mxu0 0.0
    %3675 = vmatprep.subr.mxu0 0.0
    %3676 = vmatpush2.msra.mxu0 0.0
    %3677 = vmatprep.subr.mxu0 0.0
    %3678 = vmatpush2.msra.mxu0 0.0
    %3679 = vmatprep.subr.mxu0 0.0
    %3680 = vmatpush2.msra.mxu0 0.0
    %3681 = vmatprep.subr.mxu0 0.0
    %3682 = vmatpush2.msra.mxu0 0.0
    %3683 = vmatprep.subr.mxu0 0.0
    %3684 = vmatpush2.msra.mxu0 0.0
    %3685 = vmatprep.subr.mxu0 0.0
    %3686 = vmatpush2.msra.mxu0 0.0
    %3687 = vmatprep.subr.mxu0 0.0
    %3688 = vmatpush2.msra.mxu0 0.0
    %3689 = vmatprep.subr.mxu0 0.0
    %3690 = vmatpush2.msra.mxu0 0.0
    %3691 = vmatprep.subr.mxu0 0.0
    %3692 = vmatpush2.msra.mxu0 0.0
    %3693 = vmatprep.mubr.f32.mxu0 0.0
    %3694 = vmatmul.mubr.f32.gmra.mxu0 %v3627
    %v3695 = vpop.f32.mrf.mxu0
    %v3696 = vadd.f32 %v3620, %v3695
    %v3697 = vpop.f32.mrf.mxu0
    %v3698 = vadd.f32 %v3622, %v3697
    %3699 = vdwg.mxu0
    %v3700 = vld [vmem:[%s8] sm:$0x3]
    %v3702 = vlaneseq
    %v3703 = vshrl.u32 %v3702, 7
    %v3704 = vsub.s32 0, %v3703
    %v3705 = vrot.slane %v3700, %v3704
    %v3706 = vlaneseq
    %v3707 = vshrl.u32 %v3706, 7
    %v3708 = vsub.s32 1, %v3707
    %v3709 = vrot.slane %v3700, %v3708
    %v3712 = vadd.f32 %v3696, %v3705
    %v3713 = vadd.f32 %v3698, %v3709
    %s3714 = scalar_lea.vmem [#allocation15], 2
    %3715 = vst [vmem:[%s3714] sm:$0x3] %v3712
    %s3716 = scalar_lea.vmem [#allocation16], 2
    %3717 = vst [vmem:[%s3716] sm:$0x3] %v3713
    %v3718 = vld [vmem:[%s2008] sm:$0x3]
    %v3719 = vld [vmem:[%s2269] sm:$0x3]
    %v3720 = vld [vmem:[#allocation9] sm:$0xff]
    %v3721 = vld [vmem:[#allocation9 + $0x8] sm:$0xff]
    %v3722 = vld [vmem:[#allocation9 + $0x10] sm:$0xff]
    %v3723 = vld [vmem:[#allocation9 + $0x18] sm:$0xff]
    %3724 = vmatprep.subr.mxu0 0.0
    %3725 = vmatpush1.msra.mxu0 0.0
    %3726 = vmatprep.subr.mxu0 0.0
    %3727 = vmatpush1.msra.mxu0 0.0
    %3728 = vmatprep.subr.mxu0 0.0
    %3729 = vmatpush1.msra.mxu0 0.0
    %3730 = vmatprep.subr.mxu0 0.0
    %3731 = vmatpush1.msra.mxu0 0.0
    %3732 = vmatprep.subr.mxu0 0.0
    %3733 = vmatpush1.msra.mxu0 0.0
    %3734 = vmatprep.subr.mxu0 0.0
    %3735 = vmatpush1.msra.mxu0 0.0
    %3736 = vmatprep.subr.mxu0 0.0
    %3737 = vmatpush1.msra.mxu0 0.0
    %3738 = vmatprep.subr.mxu0 0.0
    %3739 = vmatpush1.msra.mxu0 0.0
    %3740 = vmatprep.subr.mxu0 0.0
    %3741 = vmatpush1.msra.mxu0 0.0
    %3742 = vmatprep.subr.mxu0 0.0
    %3743 = vmatpush1.msra.mxu0 0.0
    %3744 = vmatprep.subr.mxu0 0.0
    %3745 = vmatpush1.msra.mxu0 0.0
    %3746 = vmatprep.subr.mxu0 0.0
    %3747 = vmatpush1.msra.mxu0 0.0
    %3748 = vmatprep.subr.mxu0 0.0
    %3749 = vmatpush1.msra.mxu0 %v3723
    %3750 = vmatprep.subr.mxu0 0.0
    %3751 = vmatpush1.msra.mxu0 %v3722
    %3752 = vmatprep.subr.mxu0 0.0
    %3753 = vmatpush1.msra.mxu0 %v3721
    %3754 = vmatprep.subr.mxu0 0.0
    %3755 = vmatpush1.msra.mxu0 %v3720
    %3756 = vmatprep.subr.mxu0 0.0
    %3757 = vmatpush2.msra.mxu0 0.0
    %3758 = vmatprep.subr.mxu0 0.0
    %3759 = vmatpush2.msra.mxu0 0.0
    %3760 = vmatprep.subr.mxu0 0.0
    %3761 = vmatpush2.msra.mxu0 0.0
    %3762 = vmatprep.subr.mxu0 0.0
    %3763 = vmatpush2.msra.mxu0 0.0
    %3764 = vmatprep.subr.mxu0 0.0
    %3765 = vmatpush2.msra.mxu0 0.0
    %3766 = vmatprep.subr.mxu0 0.0
    %3767 = vmatpush2.msra.mxu0 0.0
    %3768 = vmatprep.subr.mxu0 0.0
    %3769 = vmatpush2.msra.mxu0 0.0
    %3770 = vmatprep.subr.mxu0 0.0
    %3771 = vmatpush2.msra.mxu0 0.0
    %3772 = vmatprep.subr.mxu0 0.0
    %3773 = vmatpush2.msra.mxu0 0.0
    %3774 = vmatprep.subr.mxu0 0.0
    %3775 = vmatpush2.msra.mxu0 0.0
    %3776 = vmatprep.subr.mxu0 0.0
    %3777 = vmatpush2.msra.mxu0 0.0
    %3778 = vmatprep.subr.mxu0 0.0
    %3779 = vmatpush2.msra.mxu0 0.0
    %3780 = vmatprep.subr.mxu0 0.0
    %3781 = vmatpush2.msra.mxu0 0.0
    %3782 = vmatprep.subr.mxu0 0.0
    %3783 = vmatpush2.msra.mxu0 0.0
    %3784 = vmatprep.subr.mxu0 0.0
    %3785 = vmatpush2.msra.mxu0 0.0
    %3786 = vmatprep.subr.mxu0 0.0
    %3787 = vmatpush2.msra.mxu0 0.0
    %3788 = vmatprep.mubr.f32.mxu0 0.0
    %3789 = vmatmul.mubr.f32.gmra.mxu0 %v3627
    %v3790 = vpop.f32.mrf.mxu0
    %v3791 = vadd.f32 0.0, %v3790
    %v3792 = vpop.f32.mrf.mxu0
    %3793 = vdwg.mxu0
    %v3794 = vadd.f32 %v3719, %v3791
    %v3795 = vsub.f32 0.0, %v3794
    %v3796 = vmul.f32 %v3795, 1.442695
    %v3797 = vpow.pop %v3796
    %v3798 = vadd.f32 %v3797, 1.0
    %v3799 = vrcp.pop %v3798
    %v3800 = vmul.f32 1.0, %v3799
    %v3801 = vtanh.pop %v3794
    %v3802 = vmul.f32 %v3800, %v3532
    %3804 = vrot.lane.b32.xlu0 %v3801, 64
    %v3805 = vpop.permute.xlu0 %3804
    %v3807 = vmul.f32 %v3800, %v3805
    %3809 = vrot.lane.b32.xlu0 %v3807, 32
    %v3810 = vpop.permute.xlu0 %3809
    %v3812 = vadd.f32 %v3802, %v3810
    %v3813 = vtanh.pop %v3812
    %3815 = vrot.lane.b32.xlu0 %v3813, 64
    %v3816 = vpop.permute.xlu0 %3815
    %v3818 = vmul.f32 %v3800, %v3816
    %3820 = vset.pattern.permute.xlu0 0
    %3821 = vperm.xlu0 %3820, %v3718
    %v3822 = vpop.permute.xlu0 %3821
    %v3824 = vmul.f32 %v3822, %v3818
    %v3825 = vmul.f32 %v3822, %v3812
    %v3826 = vld [vmem:[#allocation12] sm:$0xff]
    %v3827 = vld [vmem:[#allocation12 + $0x8] sm:$0xff]
    %v3828 = vld [vmem:[#allocation12 + $0x10] sm:$0xff]
    %v3829 = vld [vmem:[#allocation12 + $0x18] sm:$0xff]
    %v3830 = vld [vmem:[#allocation12 + $0x20] sm:$0xff]
    %v3831 = vld [vmem:[#allocation12 + $0x28] sm:$0xff]
    %v3832 = vld [vmem:[#allocation12 + $0x30] sm:$0xff]
    %v3833 = vld [vmem:[#allocation12 + $0x38] sm:$0xff]
    %v3834 = vld [vmem:[%s2383] sm:$0x3]
    %v3835 = vld [vmem:[#allocation13] sm:$0xff]
    %v3836 = vld [vmem:[#allocation13 + $0x8] sm:$0xff]
    %v3837 = vld [vmem:[#allocation13 + $0x10] sm:$0xff]
    %v3838 = vld [vmem:[#allocation13 + $0x18] sm:$0xff]
    %v3839 = vld [vmem:[#allocation13 + $0x20] sm:$0xff]
    %v3840 = vld [vmem:[#allocation13 + $0x28] sm:$0xff]
    %v3841 = vld [vmem:[#allocation13 + $0x30] sm:$0xff]
    %v3842 = vld [vmem:[#allocation13 + $0x38] sm:$0xff]
    %v3844 = vsel %vm387, %v3834, 0
    %3846 = vmatprep.subr.mxu0 0.0
    %3847 = vmatpush1.msra.mxu0 0.0
    %3848 = vmatprep.subr.mxu0 0.0
    %3849 = vmatpush1.msra.mxu0 0.0
    %3850 = vmatprep.subr.mxu0 0.0
    %3851 = vmatpush1.msra.mxu0 0.0
    %3852 = vmatprep.subr.mxu0 0.0
    %3853 = vmatpush1.msra.mxu0 0.0
    %3854 = vmatprep.subr.mxu0 0.0
    %3855 = vmatpush1.msra.mxu0 0.0
    %3856 = vmatprep.subr.mxu0 0.0
    %3857 = vmatpush1.msra.mxu0 0.0
    %3858 = vmatprep.subr.mxu0 0.0
    %3859 = vmatpush1.msra.mxu0 0.0
    %3860 = vmatprep.subr.mxu0 0.0
    %3861 = vmatpush1.msra.mxu0 0.0
    %3862 = vmatprep.subr.mxu0 0.0
    %3863 = vmatpush1.msra.mxu0 0.0
    %3864 = vmatprep.subr.mxu0 0.0
    %3865 = vmatpush1.msra.mxu0 0.0
    %3866 = vmatprep.subr.mxu0 0.0
    %3867 = vmatpush1.msra.mxu0 0.0
    %3868 = vmatprep.subr.mxu0 0.0
    %3869 = vmatpush1.msra.mxu0 0.0
    %3870 = vmatprep.subr.mxu0 %v3842
    %3871 = vmatpush1.msra.mxu0 %v3841
    %3872 = vmatprep.subr.mxu0 %v3840
    %3873 = vmatpush1.msra.mxu0 %v3839
    %3874 = vmatprep.subr.mxu0 %v3838
    %3875 = vmatpush1.msra.mxu0 %v3837
    %3876 = vmatprep.subr.mxu0 %v3836
    %3877 = vmatpush1.msra.mxu0 %v3835
    %3878 = vmatprep.subr.mxu0 0.0
    %3879 = vmatpush2.msra.mxu0 0.0
    %3880 = vmatprep.subr.mxu0 0.0
    %3881 = vmatpush2.msra.mxu0 0.0
    %3882 = vmatprep.subr.mxu0 0.0
    %3883 = vmatpush2.msra.mxu0 0.0
    %3884 = vmatprep.subr.mxu0 0.0
    %3885 = vmatpush2.msra.mxu0 0.0
    %3886 = vmatprep.subr.mxu0 0.0
    %3887 = vmatpush2.msra.mxu0 0.0
    %3888 = vmatprep.subr.mxu0 0.0
    %3889 = vmatpush2.msra.mxu0 0.0
    %3890 = vmatprep.subr.mxu0 0.0
    %3891 = vmatpush2.msra.mxu0 0.0
    %3892 = vmatprep.subr.mxu0 0.0
    %3893 = vmatpush2.msra.mxu0 0.0
    %3894 = vmatprep.subr.mxu0 0.0
    %3895 = vmatpush2.msra.mxu0 0.0
    %3896 = vmatprep.subr.mxu0 0.0
    %3897 = vmatpush2.msra.mxu0 0.0
    %3898 = vmatprep.subr.mxu0 0.0
    %3899 = vmatpush2.msra.mxu0 0.0
    %3900 = vmatprep.subr.mxu0 0.0
    %3901 = vmatpush2.msra.mxu0 0.0
    %3902 = vmatprep.subr.mxu0 0.0
    %3903 = vmatpush2.msra.mxu0 0.0
    %3904 = vmatprep.subr.mxu0 0.0
    %3905 = vmatpush2.msra.mxu0 0.0
    %3906 = vmatprep.subr.mxu0 0.0
    %3907 = vmatpush2.msra.mxu0 0.0
    %3908 = vmatprep.subr.mxu0 0.0
    %3909 = vmatpush2.msra.mxu0 0.0
    %3910 = vmatprep.mubr.f32.mxu0 0.0
    %3911 = vmatmul.mubr.f32.gmra.mxu0 %v3844
    %v3912 = vpop.f32.mrf.mxu0
    %v3913 = vadd.f32 0.0, %v3912
    %v3914 = vpop.f32.mrf.mxu0
    %v3915 = vadd.f32 0.0, %v3914
    %3916 = vdwg.mxu0
    %3918 = vrot.lane.b32.xlu0 %v3824, 32
    %v3919 = vpop.permute.xlu0 %3918
    %v3920 = vsel %vm387, %v3919, 0
    %3922 = vmatprep.subr.mxu0 0.0
    %3923 = vmatpush1.msra.mxu0 0.0
    %3924 = vmatprep.subr.mxu0 0.0
    %3925 = vmatpush1.msra.mxu0 0.0
    %3926 = vmatprep.subr.mxu0 0.0
    %3927 = vmatpush1.msra.mxu0 0.0
    %3928 = vmatprep.subr.mxu0 0.0
    %3929 = vmatpush1.msra.mxu0 0.0
    %3930 = vmatprep.subr.mxu0 0.0
    %3931 = vmatpush1.msra.mxu0 0.0
    %3932 = vmatprep.subr.mxu0 0.0
    %3933 = vmatpush1.msra.mxu0 0.0
    %3934 = vmatprep.subr.mxu0 0.0
    %3935 = vmatpush1.msra.mxu0 0.0
    %3936 = vmatprep.subr.mxu0 0.0
    %3937 = vmatpush1.msra.mxu0 0.0
    %3938 = vmatprep.subr.mxu0 0.0
    %3939 = vmatpush1.msra.mxu0 0.0
    %3940 = vmatprep.subr.mxu0 0.0
    %3941 = vmatpush1.msra.mxu0 0.0
    %3942 = vmatprep.subr.mxu0 0.0
    %3943 = vmatpush1.msra.mxu0 0.0
    %3944 = vmatprep.subr.mxu0 0.0
    %3945 = vmatpush1.msra.mxu0 0.0
    %3946 = vmatprep.subr.mxu0 %v3833
    %3947 = vmatpush1.msra.mxu0 %v3832
    %3948 = vmatprep.subr.mxu0 %v3831
    %3949 = vmatpush1.msra.mxu0 %v3830
    %3950 = vmatprep.subr.mxu0 %v3829
    %3951 = vmatpush1.msra.mxu0 %v3828
    %3952 = vmatprep.subr.mxu0 %v3827
    %3953 = vmatpush1.msra.mxu0 %v3826
    %3954 = vmatprep.subr.mxu0 0.0
    %3955 = vmatpush2.msra.mxu0 0.0
    %3956 = vmatprep.subr.mxu0 0.0
    %3957 = vmatpush2.msra.mxu0 0.0
    %3958 = vmatprep.subr.mxu0 0.0
    %3959 = vmatpush2.msra.mxu0 0.0
    %3960 = vmatprep.subr.mxu0 0.0
    %3961 = vmatpush2.msra.mxu0 0.0
    %3962 = vmatprep.subr.mxu0 0.0
    %3963 = vmatpush2.msra.mxu0 0.0
    %3964 = vmatprep.subr.mxu0 0.0
    %3965 = vmatpush2.msra.mxu0 0.0
    %3966 = vmatprep.subr.mxu0 0.0
    %3967 = vmatpush2.msra.mxu0 0.0
    %3968 = vmatprep.subr.mxu0 0.0
    %3969 = vmatpush2.msra.mxu0 0.0
    %3970 = vmatprep.subr.mxu0 0.0
    %3971 = vmatpush2.msra.mxu0 0.0
    %3972 = vmatprep.subr.mxu0 0.0
    %3973 = vmatpush2.msra.mxu0 0.0
    %3974 = vmatprep.subr.mxu0 0.0
    %3975 = vmatpush2.msra.mxu0 0.0
    %3976 = vmatprep.subr.mxu0 0.0
    %3977 = vmatpush2.msra.mxu0 0.0
    %3978 = vmatprep.subr.mxu0 0.0
    %3979 = vmatpush2.msra.mxu0 0.0
    %3980 = vmatprep.subr.mxu0 0.0
    %3981 = vmatpush2.msra.mxu0 0.0
    %3982 = vmatprep.subr.mxu0 0.0
    %3983 = vmatpush2.msra.mxu0 0.0
    %3984 = vmatprep.subr.mxu0 0.0
    %3985 = vmatpush2.msra.mxu0 0.0
    %3986 = vmatprep.mubr.f32.mxu0 0.0
    %3987 = vmatmul.mubr.f32.gmra.mxu0 %v3920
    %v3988 = vpop.f32.mrf.mxu0
    %v3989 = vadd.f32 %v3913, %v3988
    %v3990 = vpop.f32.mrf.mxu0
    %v3991 = vadd.f32 %v3915, %v3990
    %3992 = vdwg.mxu0
    %v3993 = vld [vmem:[%s8] sm:$0x3]
    %v3995 = vlaneseq
    %v3996 = vshrl.u32 %v3995, 7
    %v3997 = vsub.s32 0, %v3996
    %v3998 = vrot.slane %v3993, %v3997
    %v3999 = vlaneseq
    %v4000 = vshrl.u32 %v3999, 7
    %v4001 = vsub.s32 1, %v4000
    %v4002 = vrot.slane %v3993, %v4001
    %v4005 = vadd.f32 %v3989, %v3998
    %v4006 = vadd.f32 %v3991, %v4002
    %s4007 = scalar_lea.vmem [#allocation15], 4
    %4008 = vst [vmem:[%s4007] sm:$0x3] %v4005
    %s4009 = scalar_lea.vmem [#allocation16], 4
    %4010 = vst [vmem:[%s4009] sm:$0x3] %v4006
    %v4011 = vld [vmem:[%s1631] sm:$0x3]
    %v4012 = vld [vmem:[%s1892] sm:$0x3]
    %v4013 = vld [vmem:[#allocation9] sm:$0xff]
    %v4014 = vld [vmem:[#allocation9 + $0x8] sm:$0xff]
    %v4015 = vld [vmem:[#allocation9 + $0x10] sm:$0xff]
    %v4016 = vld [vmem:[#allocation9 + $0x18] sm:$0xff]
    %4017 = vmatprep.subr.mxu0 0.0
    %4018 = vmatpush1.msra.mxu0 0.0
    %4019 = vmatprep.subr.mxu0 0.0
    %4020 = vmatpush1.msra.mxu0 0.0
    %4021 = vmatprep.subr.mxu0 0.0
    %4022 = vmatpush1.msra.mxu0 0.0
    %4023 = vmatprep.subr.mxu0 0.0
    %4024 = vmatpush1.msra.mxu0 0.0
    %4025 = vmatprep.subr.mxu0 0.0
    %4026 = vmatpush1.msra.mxu0 0.0
    %4027 = vmatprep.subr.mxu0 0.0
    %4028 = vmatpush1.msra.mxu0 0.0
    %4029 = vmatprep.subr.mxu0 0.0
    %4030 = vmatpush1.msra.mxu0 0.0
    %4031 = vmatprep.subr.mxu0 0.0
    %4032 = vmatpush1.msra.mxu0 0.0
    %4033 = vmatprep.subr.mxu0 0.0
    %4034 = vmatpush1.msra.mxu0 0.0
    %4035 = vmatprep.subr.mxu0 0.0
    %4036 = vmatpush1.msra.mxu0 0.0
    %4037 = vmatprep.subr.mxu0 0.0
    %4038 = vmatpush1.msra.mxu0 0.0
    %4039 = vmatprep.subr.mxu0 0.0
    %4040 = vmatpush1.msra.mxu0 0.0
    %4041 = vmatprep.subr.mxu0 0.0
    %4042 = vmatpush1.msra.mxu0 %v4016
    %4043 = vmatprep.subr.mxu0 0.0
    %4044 = vmatpush1.msra.mxu0 %v4015
    %4045 = vmatprep.subr.mxu0 0.0
    %4046 = vmatpush1.msra.mxu0 %v4014
    %4047 = vmatprep.subr.mxu0 0.0
    %4048 = vmatpush1.msra.mxu0 %v4013
    %4049 = vmatprep.subr.mxu0 0.0
    %4050 = vmatpush2.msra.mxu0 0.0
    %4051 = vmatprep.subr.mxu0 0.0
    %4052 = vmatpush2.msra.mxu0 0.0
    %4053 = vmatprep.subr.mxu0 0.0
    %4054 = vmatpush2.msra.mxu0 0.0
    %4055 = vmatprep.subr.mxu0 0.0
    %4056 = vmatpush2.msra.mxu0 0.0
    %4057 = vmatprep.subr.mxu0 0.0
    %4058 = vmatpush2.msra.mxu0 0.0
    %4059 = vmatprep.subr.mxu0 0.0
    %4060 = vmatpush2.msra.mxu0 0.0
    %4061 = vmatprep.subr.mxu0 0.0
    %4062 = vmatpush2.msra.mxu0 0.0
    %4063 = vmatprep.subr.mxu0 0.0
    %4064 = vmatpush2.msra.mxu0 0.0
    %4065 = vmatprep.subr.mxu0 0.0
    %4066 = vmatpush2.msra.mxu0 0.0
    %4067 = vmatprep.subr.mxu0 0.0
    %4068 = vmatpush2.msra.mxu0 0.0
    %4069 = vmatprep.subr.mxu0 0.0
    %4070 = vmatpush2.msra.mxu0 0.0
    %4071 = vmatprep.subr.mxu0 0.0
    %4072 = vmatpush2.msra.mxu0 0.0
    %4073 = vmatprep.subr.mxu0 0.0
    %4074 = vmatpush2.msra.mxu0 0.0
    %4075 = vmatprep.subr.mxu0 0.0
    %4076 = vmatpush2.msra.mxu0 0.0
    %4077 = vmatprep.subr.mxu0 0.0
    %4078 = vmatpush2.msra.mxu0 0.0
    %4079 = vmatprep.subr.mxu0 0.0
    %4080 = vmatpush2.msra.mxu0 0.0
    %4081 = vmatprep.mubr.f32.mxu0 0.0
    %4082 = vmatmul.mubr.f32.gmra.mxu0 %v3920
    %v4083 = vpop.f32.mrf.mxu0
    %v4084 = vadd.f32 0.0, %v4083
    %v4085 = vpop.f32.mrf.mxu0
    %4086 = vdwg.mxu0
    %v4087 = vadd.f32 %v4012, %v4084
    %v4088 = vsub.f32 0.0, %v4087
    %v4089 = vmul.f32 %v4088, 1.442695
    %v4090 = vpow.pop %v4089
    %v4091 = vadd.f32 %v4090, 1.0
    %v4092 = vrcp.pop %v4091
    %v4093 = vmul.f32 1.0, %v4092
    %v4094 = vtanh.pop %v4087
    %v4095 = vmul.f32 %v4093, %v3825
    %4097 = vrot.lane.b32.xlu0 %v4094, 64
    %v4098 = vpop.permute.xlu0 %4097
    %v4100 = vmul.f32 %v4093, %v4098
    %4102 = vrot.lane.b32.xlu0 %v4100, 32
    %v4103 = vpop.permute.xlu0 %4102
    %v4105 = vadd.f32 %v4095, %v4103
    %v4106 = vtanh.pop %v4105
    %4108 = vrot.lane.b32.xlu0 %v4106, 64
    %v4109 = vpop.permute.xlu0 %4108
    %v4111 = vmul.f32 %v4093, %v4109
    %4113 = vset.pattern.permute.xlu0 0
    %4114 = vperm.xlu0 %4113, %v4011
    %v4115 = vpop.permute.xlu0 %4114
    %v4117 = vmul.f32 %v4115, %v4111
    %v4118 = vmul.f32 %v4115, %v4105
    %v4119 = vld [vmem:[#allocation12] sm:$0xff]
    %v4120 = vld [vmem:[#allocation12 + $0x8] sm:$0xff]
    %v4121 = vld [vmem:[#allocation12 + $0x10] sm:$0xff]
    %v4122 = vld [vmem:[#allocation12 + $0x18] sm:$0xff]
    %v4123 = vld [vmem:[#allocation12 + $0x20] sm:$0xff]
    %v4124 = vld [vmem:[#allocation12 + $0x28] sm:$0xff]
    %v4125 = vld [vmem:[#allocation12 + $0x30] sm:$0xff]
    %v4126 = vld [vmem:[#allocation12 + $0x38] sm:$0xff]
    %v4127 = vld [vmem:[%s2006] sm:$0x3]
    %v4128 = vld [vmem:[#allocation13] sm:$0xff]
    %v4129 = vld [vmem:[#allocation13 + $0x8] sm:$0xff]
    %v4130 = vld [vmem:[#allocation13 + $0x10] sm:$0xff]
    %v4131 = vld [vmem:[#allocation13 + $0x18] sm:$0xff]
    %v4132 = vld [vmem:[#allocation13 + $0x20] sm:$0xff]
    %v4133 = vld [vmem:[#allocation13 + $0x28] sm:$0xff]
    %v4134 = vld [vmem:[#allocation13 + $0x30] sm:$0xff]
    %v4135 = vld [vmem:[#allocation13 + $0x38] sm:$0xff]
    %v4137 = vsel %vm387, %v4127, 0
    %4139 = vmatprep.subr.mxu0 0.0
    %4140 = vmatpush1.msra.mxu0 0.0
    %4141 = vmatprep.subr.mxu0 0.0
    %4142 = vmatpush1.msra.mxu0 0.0
    %4143 = vmatprep.subr.mxu0 0.0
    %4144 = vmatpush1.msra.mxu0 0.0
    %4145 = vmatprep.subr.mxu0 0.0
    %4146 = vmatpush1.msra.mxu0 0.0
    %4147 = vmatprep.subr.mxu0 0.0
    %4148 = vmatpush1.msra.mxu0 0.0
    %4149 = vmatprep.subr.mxu0 0.0
    %4150 = vmatpush1.msra.mxu0 0.0
    %4151 = vmatprep.subr.mxu0 0.0
    %4152 = vmatpush1.msra.mxu0 0.0
    %4153 = vmatprep.subr.mxu0 0.0
    %4154 = vmatpush1.msra.mxu0 0.0
    %4155 = vmatprep.subr.mxu0 0.0
    %4156 = vmatpush1.msra.mxu0 0.0
    %4157 = vmatprep.subr.mxu0 0.0
    %4158 = vmatpush1.msra.mxu0 0.0
    %4159 = vmatprep.subr.mxu0 0.0
    %4160 = vmatpush1.msra.mxu0 0.0
    %4161 = vmatprep.subr.mxu0 0.0
    %4162 = vmatpush1.msra.mxu0 0.0
    %4163 = vmatprep.subr.mxu0 %v4135
    %4164 = vmatpush1.msra.mxu0 %v4134
    %4165 = vmatprep.subr.mxu0 %v4133
    %4166 = vmatpush1.msra.mxu0 %v4132
    %4167 = vmatprep.subr.mxu0 %v4131
    %4168 = vmatpush1.msra.mxu0 %v4130
    %4169 = vmatprep.subr.mxu0 %v4129
    %4170 = vmatpush1.msra.mxu0 %v4128
    %4171 = vmatprep.subr.mxu0 0.0
    %4172 = vmatpush2.msra.mxu0 0.0
    %4173 = vmatprep.subr.mxu0 0.0
    %4174 = vmatpush2.msra.mxu0 0.0
    %4175 = vmatprep.subr.mxu0 0.0
    %4176 = vmatpush2.msra.mxu0 0.0
    %4177 = vmatprep.subr.mxu0 0.0
    %4178 = vmatpush2.msra.mxu0 0.0
    %4179 = vmatprep.subr.mxu0 0.0
    %4180 = vmatpush2.msra.mxu0 0.0
    %4181 = vmatprep.subr.mxu0 0.0
    %4182 = vmatpush2.msra.mxu0 0.0
    %4183 = vmatprep.subr.mxu0 0.0
    %4184 = vmatpush2.msra.mxu0 0.0
    %4185 = vmatprep.subr.mxu0 0.0
    %4186 = vmatpush2.msra.mxu0 0.0
    %4187 = vmatprep.subr.mxu0 0.0
    %4188 = vmatpush2.msra.mxu0 0.0
    %4189 = vmatprep.subr.mxu0 0.0
    %4190 = vmatpush2.msra.mxu0 0.0
    %4191 = vmatprep.subr.mxu0 0.0
    %4192 = vmatpush2.msra.mxu0 0.0
    %4193 = vmatprep.subr.mxu0 0.0
    %4194 = vmatpush2.msra.mxu0 0.0
    %4195 = vmatprep.subr.mxu0 0.0
    %4196 = vmatpush2.msra.mxu0 0.0
    %4197 = vmatprep.subr.mxu0 0.0
    %4198 = vmatpush2.msra.mxu0 0.0
    %4199 = vmatprep.subr.mxu0 0.0
    %4200 = vmatpush2.msra.mxu0 0.0
    %4201 = vmatprep.subr.mxu0 0.0
    %4202 = vmatpush2.msra.mxu0 0.0
    %4203 = vmatprep.mubr.f32.mxu0 0.0
    %4204 = vmatmul.mubr.f32.gmra.mxu0 %v4137
    %v4205 = vpop.f32.mrf.mxu0
    %v4206 = vadd.f32 0.0, %v4205
    %v4207 = vpop.f32.mrf.mxu0
    %v4208 = vadd.f32 0.0, %v4207
    %4209 = vdwg.mxu0
    %4211 = vrot.lane.b32.xlu0 %v4117, 32
    %v4212 = vpop.permute.xlu0 %4211
    %v4213 = vsel %vm387, %v4212, 0
    %4215 = vmatprep.subr.mxu0 0.0
    %4216 = vmatpush1.msra.mxu0 0.0
    %4217 = vmatprep.subr.mxu0 0.0
    %4218 = vmatpush1.msra.mxu0 0.0
    %4219 = vmatprep.subr.mxu0 0.0
    %4220 = vmatpush1.msra.mxu0 0.0
    %4221 = vmatprep.subr.mxu0 0.0
    %4222 = vmatpush1.msra.mxu0 0.0
    %4223 = vmatprep.subr.mxu0 0.0
    %4224 = vmatpush1.msra.mxu0 0.0
    %4225 = vmatprep.subr.mxu0 0.0
    %4226 = vmatpush1.msra.mxu0 0.0
    %4227 = vmatprep.subr.mxu0 0.0
    %4228 = vmatpush1.msra.mxu0 0.0
    %4229 = vmatprep.subr.mxu0 0.0
    %4230 = vmatpush1.msra.mxu0 0.0
    %4231 = vmatprep.subr.mxu0 0.0
    %4232 = vmatpush1.msra.mxu0 0.0
    %4233 = vmatprep.subr.mxu0 0.0
    %4234 = vmatpush1.msra.mxu0 0.0
    %4235 = vmatprep.subr.mxu0 0.0
    %4236 = vmatpush1.msra.mxu0 0.0
    %4237 = vmatprep.subr.mxu0 0.0
    %4238 = vmatpush1.msra.mxu0 0.0
    %4239 = vmatprep.subr.mxu0 %v4126
    %4240 = vmatpush1.msra.mxu0 %v4125
    %4241 = vmatprep.subr.mxu0 %v4124
    %4242 = vmatpush1.msra.mxu0 %v4123
    %4243 = vmatprep.subr.mxu0 %v4122
    %4244 = vmatpush1.msra.mxu0 %v4121
    %4245 = vmatprep.subr.mxu0 %v4120
    %4246 = vmatpush1.msra.mxu0 %v4119
    %4247 = vmatprep.subr.mxu0 0.0
    %4248 = vmatpush2.msra.mxu0 0.0
    %4249 = vmatprep.subr.mxu0 0.0
    %4250 = vmatpush2.msra.mxu0 0.0
    %4251 = vmatprep.subr.mxu0 0.0
    %4252 = vmatpush2.msra.mxu0 0.0
    %4253 = vmatprep.subr.mxu0 0.0
    %4254 = vmatpush2.msra.mxu0 0.0
    %4255 = vmatprep.subr.mxu0 0.0
    %4256 = vmatpush2.msra.mxu0 0.0
    %4257 = vmatprep.subr.mxu0 0.0
    %4258 = vmatpush2.msra.mxu0 0.0
    %4259 = vmatprep.subr.mxu0 0.0
    %4260 = vmatpush2.msra.mxu0 0.0
    %4261 = vmatprep.subr.mxu0 0.0
    %4262 = vmatpush2.msra.mxu0 0.0
    %4263 = vmatprep.subr.mxu0 0.0
    %4264 = vmatpush2.msra.mxu0 0.0
    %4265 = vmatprep.subr.mxu0 0.0
    %4266 = vmatpush2.msra.mxu0 0.0
    %4267 = vmatprep.subr.mxu0 0.0
    %4268 = vmatpush2.msra.mxu0 0.0
    %4269 = vmatprep.subr.mxu0 0.0
    %4270 = vmatpush2.msra.mxu0 0.0
    %4271 = vmatprep.subr.mxu0 0.0
    %4272 = vmatpush2.msra.mxu0 0.0
    %4273 = vmatprep.subr.mxu0 0.0
    %4274 = vmatpush2.msra.mxu0 0.0
    %4275 = vmatprep.subr.mxu0 0.0
    %4276 = vmatpush2.msra.mxu0 0.0
    %4277 = vmatprep.subr.mxu0 0.0
    %4278 = vmatpush2.msra.mxu0 0.0
    %4279 = vmatprep.mubr.f32.mxu0 0.0
    %4280 = vmatmul.mubr.f32.gmra.mxu0 %v4213
    %v4281 = vpop.f32.mrf.mxu0
    %v4282 = vadd.f32 %v4206, %v4281
    %v4283 = vpop.f32.mrf.mxu0
    %v4284 = vadd.f32 %v4208, %v4283
    %4285 = vdwg.mxu0
    %v4286 = vld [vmem:[%s8] sm:$0x3]
    %v4288 = vlaneseq
    %v4289 = vshrl.u32 %v4288, 7
    %v4290 = vsub.s32 0, %v4289
    %v4291 = vrot.slane %v4286, %v4290
    %v4292 = vlaneseq
    %v4293 = vshrl.u32 %v4292, 7
    %v4294 = vsub.s32 1, %v4293
    %v4295 = vrot.slane %v4286, %v4294
    %v4298 = vadd.f32 %v4282, %v4291
    %v4299 = vadd.f32 %v4284, %v4295
    %s4300 = scalar_lea.vmem [#allocation15], 6
    %4301 = vst [vmem:[%s4300] sm:$0x3] %v4298
    %s4302 = scalar_lea.vmem [#allocation16], 6
    %4303 = vst [vmem:[%s4302] sm:$0x3] %v4299
    %v4304 = vld [vmem:[%s1254] sm:$0x3]
    %v4305 = vld [vmem:[%s1515] sm:$0x3]
    %v4306 = vld [vmem:[#allocation9] sm:$0xff]
    %v4307 = vld [vmem:[#allocation9 + $0x8] sm:$0xff]
    %v4308 = vld [vmem:[#allocation9 + $0x10] sm:$0xff]
    %v4309 = vld [vmem:[#allocation9 + $0x18] sm:$0xff]
    %4310 = vmatprep.subr.mxu0 0.0
    %4311 = vmatpush1.msra.mxu0 0.0
    %4312 = vmatprep.subr.mxu0 0.0
    %4313 = vmatpush1.msra.mxu0 0.0
    %4314 = vmatprep.subr.mxu0 0.0
    %4315 = vmatpush1.msra.mxu0 0.0
    %4316 = vmatprep.subr.mxu0 0.0
    %4317 = vmatpush1.msra.mxu0 0.0
    %4318 = vmatprep.subr.mxu0 0.0
    %4319 = vmatpush1.msra.mxu0 0.0
    %4320 = vmatprep.subr.mxu0 0.0
    %4321 = vmatpush1.msra.mxu0 0.0
    %4322 = vmatprep.subr.mxu0 0.0
    %4323 = vmatpush1.msra.mxu0 0.0
    %4324 = vmatprep.subr.mxu0 0.0
    %4325 = vmatpush1.msra.mxu0 0.0
    %4326 = vmatprep.subr.mxu0 0.0
    %4327 = vmatpush1.msra.mxu0 0.0
    %4328 = vmatprep.subr.mxu0 0.0
    %4329 = vmatpush1.msra.mxu0 0.0
    %4330 = vmatprep.subr.mxu0 0.0
    %4331 = vmatpush1.msra.mxu0 0.0
    %4332 = vmatprep.subr.mxu0 0.0
    %4333 = vmatpush1.msra.mxu0 0.0
    %4334 = vmatprep.subr.mxu0 0.0
    %4335 = vmatpush1.msra.mxu0 %v4309
    %4336 = vmatprep.subr.mxu0 0.0
    %4337 = vmatpush1.msra.mxu0 %v4308
    %4338 = vmatprep.subr.mxu0 0.0
    %4339 = vmatpush1.msra.mxu0 %v4307
    %4340 = vmatprep.subr.mxu0 0.0
    %4341 = vmatpush1.msra.mxu0 %v4306
    %4342 = vmatprep.subr.mxu0 0.0
    %4343 = vmatpush2.msra.mxu0 0.0
    %4344 = vmatprep.subr.mxu0 0.0
    %4345 = vmatpush2.msra.mxu0 0.0
    %4346 = vmatprep.subr.mxu0 0.0
    %4347 = vmatpush2.msra.mxu0 0.0
    %4348 = vmatprep.subr.mxu0 0.0
    %4349 = vmatpush2.msra.mxu0 0.0
    %4350 = vmatprep.subr.mxu0 0.0
    %4351 = vmatpush2.msra.mxu0 0.0
    %4352 = vmatprep.subr.mxu0 0.0
    %4353 = vmatpush2.msra.mxu0 0.0
    %4354 = vmatprep.subr.mxu0 0.0
    %4355 = vmatpush2.msra.mxu0 0.0
    %4356 = vmatprep.subr.mxu0 0.0
    %4357 = vmatpush2.msra.mxu0 0.0
    %4358 = vmatprep.subr.mxu0 0.0
    %4359 = vmatpush2.msra.mxu0 0.0
    %4360 = vmatprep.subr.mxu0 0.0
    %4361 = vmatpush2.msra.mxu0 0.0
    %4362 = vmatprep.subr.mxu0 0.0
    %4363 = vmatpush2.msra.mxu0 0.0
    %4364 = vmatprep.subr.mxu0 0.0
    %4365 = vmatpush2.msra.mxu0 0.0
    %4366 = vmatprep.subr.mxu0 0.0
    %4367 = vmatpush2.msra.mxu0 0.0
    %4368 = vmatprep.subr.mxu0 0.0
    %4369 = vmatpush2.msra.mxu0 0.0
    %4370 = vmatprep.subr.mxu0 0.0
    %4371 = vmatpush2.msra.mxu0 0.0
    %4372 = vmatprep.subr.mxu0 0.0
    %4373 = vmatpush2.msra.mxu0 0.0
    %4374 = vmatprep.mubr.f32.mxu0 0.0
    %4375 = vmatmul.mubr.f32.gmra.mxu0 %v4213
    %v4376 = vpop.f32.mrf.mxu0
    %v4377 = vadd.f32 0.0, %v4376
    %v4378 = vpop.f32.mrf.mxu0
    %4379 = vdwg.mxu0
    %v4380 = vadd.f32 %v4305, %v4377
    %v4381 = vsub.f32 0.0, %v4380
    %v4382 = vmul.f32 %v4381, 1.442695
    %v4383 = vpow.pop %v4382
    %v4384 = vadd.f32 %v4383, 1.0
    %v4385 = vrcp.pop %v4384
    %v4386 = vmul.f32 1.0, %v4385
    %v4387 = vtanh.pop %v4380
    %v4388 = vmul.f32 %v4386, %v4118
    %4390 = vrot.lane.b32.xlu0 %v4387, 64
    %v4391 = vpop.permute.xlu0 %4390
    %v4393 = vmul.f32 %v4386, %v4391
    %4395 = vrot.lane.b32.xlu0 %v4393, 32
    %v4396 = vpop.permute.xlu0 %4395
    %v4398 = vadd.f32 %v4388, %v4396
    %v4399 = vtanh.pop %v4398
    %4401 = vrot.lane.b32.xlu0 %v4399, 64
    %v4402 = vpop.permute.xlu0 %4401
    %v4404 = vmul.f32 %v4386, %v4402
    %4406 = vset.pattern.permute.xlu0 0
    %4407 = vperm.xlu0 %4406, %v4304
    %v4408 = vpop.permute.xlu0 %4407
    %v4410 = vmul.f32 %v4408, %v4404
    %v4411 = vmul.f32 %v4408, %v4398
    %v4412 = vld [vmem:[#allocation12] sm:$0xff]
    %v4413 = vld [vmem:[#allocation12 + $0x8] sm:$0xff]
    %v4414 = vld [vmem:[#allocation12 + $0x10] sm:$0xff]
    %v4415 = vld [vmem:[#allocation12 + $0x18] sm:$0xff]
    %v4416 = vld [vmem:[#allocation12 + $0x20] sm:$0xff]
    %v4417 = vld [vmem:[#allocation12 + $0x28] sm:$0xff]
    %v4418 = vld [vmem:[#allocation12 + $0x30] sm:$0xff]
    %v4419 = vld [vmem:[#allocation12 + $0x38] sm:$0xff]
    %v4420 = vld [vmem:[%s1629] sm:$0x3]
    %v4421 = vld [vmem:[#allocation13] sm:$0xff]
    %v4422 = vld [vmem:[#allocation13 + $0x8] sm:$0xff]
    %v4423 = vld [vmem:[#allocation13 + $0x10] sm:$0xff]
    %v4424 = vld [vmem:[#allocation13 + $0x18] sm:$0xff]
    %v4425 = vld [vmem:[#allocation13 + $0x20] sm:$0xff]
    %v4426 = vld [vmem:[#allocation13 + $0x28] sm:$0xff]
    %v4427 = vld [vmem:[#allocation13 + $0x30] sm:$0xff]
    %v4428 = vld [vmem:[#allocation13 + $0x38] sm:$0xff]
    %v4430 = vsel %vm387, %v4420, 0
    %4432 = vmatprep.subr.mxu0 0.0
    %4433 = vmatpush1.msra.mxu0 0.0
    %4434 = vmatprep.subr.mxu0 0.0
    %4435 = vmatpush1.msra.mxu0 0.0
    %4436 = vmatprep.subr.mxu0 0.0
    %4437 = vmatpush1.msra.mxu0 0.0
    %4438 = vmatprep.subr.mxu0 0.0
    %4439 = vmatpush1.msra.mxu0 0.0
    %4440 = vmatprep.subr.mxu0 0.0
    %4441 = vmatpush1.msra.mxu0 0.0
    %4442 = vmatprep.subr.mxu0 0.0
    %4443 = vmatpush1.msra.mxu0 0.0
    %4444 = vmatprep.subr.mxu0 0.0
    %4445 = vmatpush1.msra.mxu0 0.0
    %4446 = vmatprep.subr.mxu0 0.0
    %4447 = vmatpush1.msra.mxu0 0.0
    %4448 = vmatprep.subr.mxu0 0.0
    %4449 = vmatpush1.msra.mxu0 0.0
    %4450 = vmatprep.subr.mxu0 0.0
    %4451 = vmatpush1.msra.mxu0 0.0
    %4452 = vmatprep.subr.mxu0 0.0
    %4453 = vmatpush1.msra.mxu0 0.0
    %4454 = vmatprep.subr.mxu0 0.0
    %4455 = vmatpush1.msra.mxu0 0.0
    %4456 = vmatprep.subr.mxu0 %v4428
    %4457 = vmatpush1.msra.mxu0 %v4427
    %4458 = vmatprep.subr.mxu0 %v4426
    %4459 = vmatpush1.msra.mxu0 %v4425
    %4460 = vmatprep.subr.mxu0 %v4424
    %4461 = vmatpush1.msra.mxu0 %v4423
    %4462 = vmatprep.subr.mxu0 %v4422
    %4463 = vmatpush1.msra.mxu0 %v4421
    %4464 = vmatprep.subr.mxu0 0.0
    %4465 = vmatpush2.msra.mxu0 0.0
    %4466 = vmatprep.subr.mxu0 0.0
    %4467 = vmatpush2.msra.mxu0 0.0
    %4468 = vmatprep.subr.mxu0 0.0
    %4469 = vmatpush2.msra.mxu0 0.0
    %4470 = vmatprep.subr.mxu0 0.0
    %4471 = vmatpush2.msra.mxu0 0.0
    %4472 = vmatprep.subr.mxu0 0.0
    %4473 = vmatpush2.msra.mxu0 0.0
    %4474 = vmatprep.subr.mxu0 0.0
    %4475 = vmatpush2.msra.mxu0 0.0
    %4476 = vmatprep.subr.mxu0 0.0
    %4477 = vmatpush2.msra.mxu0 0.0
    %4478 = vmatprep.subr.mxu0 0.0
    %4479 = vmatpush2.msra.mxu0 0.0
    %4480 = vmatprep.subr.mxu0 0.0
    %4481 = vmatpush2.msra.mxu0 0.0
    %4482 = vmatprep.subr.mxu0 0.0
    %4483 = vmatpush2.msra.mxu0 0.0
    %4484 = vmatprep.subr.mxu0 0.0
    %4485 = vmatpush2.msra.mxu0 0.0
    %4486 = vmatprep.subr.mxu0 0.0
    %4487 = vmatpush2.msra.mxu0 0.0
    %4488 = vmatprep.subr.mxu0 0.0
    %4489 = vmatpush2.msra.mxu0 0.0
    %4490 = vmatprep.subr.mxu0 0.0
    %4491 = vmatpush2.msra.mxu0 0.0
    %4492 = vmatprep.subr.mxu0 0.0
    %4493 = vmatpush2.msra.mxu0 0.0
    %4494 = vmatprep.subr.mxu0 0.0
    %4495 = vmatpush2.msra.mxu0 0.0
    %4496 = vmatprep.mubr.f32.mxu0 0.0
    %4497 = vmatmul.mubr.f32.gmra.mxu0 %v4430
    %v4498 = vpop.f32.mrf.mxu0
    %v4499 = vadd.f32 0.0, %v4498
    %v4500 = vpop.f32.mrf.mxu0
    %v4501 = vadd.f32 0.0, %v4500
    %4502 = vdwg.mxu0
    %4504 = vrot.lane.b32.xlu0 %v4410, 32
    %v4505 = vpop.permute.xlu0 %4504
    %v4506 = vsel %vm387, %v4505, 0
    %4508 = vmatprep.subr.mxu0 0.0
    %4509 = vmatpush1.msra.mxu0 0.0
    %4510 = vmatprep.subr.mxu0 0.0
    %4511 = vmatpush1.msra.mxu0 0.0
    %4512 = vmatprep.subr.mxu0 0.0
    %4513 = vmatpush1.msra.mxu0 0.0
    %4514 = vmatprep.subr.mxu0 0.0
    %4515 = vmatpush1.msra.mxu0 0.0
    %4516 = vmatprep.subr.mxu0 0.0
    %4517 = vmatpush1.msra.mxu0 0.0
    %4518 = vmatprep.subr.mxu0 0.0
    %4519 = vmatpush1.msra.mxu0 0.0
    %4520 = vmatprep.subr.mxu0 0.0
    %4521 = vmatpush1.msra.mxu0 0.0
    %4522 = vmatprep.subr.mxu0 0.0
    %4523 = vmatpush1.msra.mxu0 0.0
    %4524 = vmatprep.subr.mxu0 0.0
    %4525 = vmatpush1.msra.mxu0 0.0
    %4526 = vmatprep.subr.mxu0 0.0
    %4527 = vmatpush1.msra.mxu0 0.0
    %4528 = vmatprep.subr.mxu0 0.0
    %4529 = vmatpush1.msra.mxu0 0.0
    %4530 = vmatprep.subr.mxu0 0.0
    %4531 = vmatpush1.msra.mxu0 0.0
    %4532 = vmatprep.subr.mxu0 %v4419
    %4533 = vmatpush1.msra.mxu0 %v4418
    %4534 = vmatprep.subr.mxu0 %v4417
    %4535 = vmatpush1.msra.mxu0 %v4416
    %4536 = vmatprep.subr.mxu0 %v4415
    %4537 = vmatpush1.msra.mxu0 %v4414
    %4538 = vmatprep.subr.mxu0 %v4413
    %4539 = vmatpush1.msra.mxu0 %v4412
    %4540 = vmatprep.subr.mxu0 0.0
    %4541 = vmatpush2.msra.mxu0 0.0
    %4542 = vmatprep.subr.mxu0 0.0
    %4543 = vmatpush2.msra.mxu0 0.0
    %4544 = vmatprep.subr.mxu0 0.0
    %4545 = vmatpush2.msra.mxu0 0.0
    %4546 = vmatprep.subr.mxu0 0.0
    %4547 = vmatpush2.msra.mxu0 0.0
    %4548 = vmatprep.subr.mxu0 0.0
    %4549 = vmatpush2.msra.mxu0 0.0
    %4550 = vmatprep.subr.mxu0 0.0
    %4551 = vmatpush2.msra.mxu0 0.0
    %4552 = vmatprep.subr.mxu0 0.0
    %4553 = vmatpush2.msra.mxu0 0.0
    %4554 = vmatprep.subr.mxu0 0.0
    %4555 = vmatpush2.msra.mxu0 0.0
    %4556 = vmatprep.subr.mxu0 0.0
    %4557 = vmatpush2.msra.mxu0 0.0
    %4558 = vmatprep.subr.mxu0 0.0
    %4559 = vmatpush2.msra.mxu0 0.0
    %4560 = vmatprep.subr.mxu0 0.0
    %4561 = vmatpush2.msra.mxu0 0.0
    %4562 = vmatprep.subr.mxu0 0.0
    %4563 = vmatpush2.msra.mxu0 0.0
    %4564 = vmatprep.subr.mxu0 0.0
    %4565 = vmatpush2.msra.mxu0 0.0
    %4566 = vmatprep.subr.mxu0 0.0
    %4567 = vmatpush2.msra.mxu0 0.0
    %4568 = vmatprep.subr.mxu0 0.0
    %4569 = vmatpush2.msra.mxu0 0.0
    %4570 = vmatprep.subr.mxu0 0.0
    %4571 = vmatpush2.msra.mxu0 0.0
    %4572 = vmatprep.mubr.f32.mxu0 0.0
    %4573 = vmatmul.mubr.f32.gmra.mxu0 %v4506
    %v4574 = vpop.f32.mrf.mxu0
    %v4575 = vadd.f32 %v4499, %v4574
    %v4576 = vpop.f32.mrf.mxu0
    %v4577 = vadd.f32 %v4501, %v4576
    %4578 = vdwg.mxu0
    %v4579 = vld [vmem:[%s8] sm:$0x3]
    %v4581 = vlaneseq
    %v4582 = vshrl.u32 %v4581, 7
    %v4583 = vsub.s32 0, %v4582
    %v4584 = vrot.slane %v4579, %v4583
    %v4585 = vlaneseq
    %v4586 = vshrl.u32 %v4585, 7
    %v4587 = vsub.s32 1, %v4586
    %v4588 = vrot.slane %v4579, %v4587
    %v4591 = vadd.f32 %v4575, %v4584
    %v4592 = vadd.f32 %v4577, %v4588
    %s4593 = scalar_lea.vmem [#allocation15], 8
    %4594 = vst [vmem:[%s4593] sm:$0x3] %v4591
    %s4595 = scalar_lea.vmem [#allocation16], 8
    %4596 = vst [vmem:[%s4595] sm:$0x3] %v4592
    %v4597 = vld [vmem:[%s877] sm:$0x3]
    %v4598 = vld [vmem:[%s1138] sm:$0x3]
    %v4599 = vld [vmem:[#allocation9] sm:$0xff]
    %v4600 = vld [vmem:[#allocation9 + $0x8] sm:$0xff]
    %v4601 = vld [vmem:[#allocation9 + $0x10] sm:$0xff]
    %v4602 = vld [vmem:[#allocation9 + $0x18] sm:$0xff]
    %4603 = vmatprep.subr.mxu0 0.0
    %4604 = vmatpush1.msra.mxu0 0.0
    %4605 = vmatprep.subr.mxu0 0.0
    %4606 = vmatpush1.msra.mxu0 0.0
    %4607 = vmatprep.subr.mxu0 0.0
    %4608 = vmatpush1.msra.mxu0 0.0
    %4609 = vmatprep.subr.mxu0 0.0
    %4610 = vmatpush1.msra.mxu0 0.0
    %4611 = vmatprep.subr.mxu0 0.0
    %4612 = vmatpush1.msra.mxu0 0.0
    %4613 = vmatprep.subr.mxu0 0.0
    %4614 = vmatpush1.msra.mxu0 0.0
    %4615 = vmatprep.subr.mxu0 0.0
    %4616 = vmatpush1.msra.mxu0 0.0
    %4617 = vmatprep.subr.mxu0 0.0
    %4618 = vmatpush1.msra.mxu0 0.0
    %4619 = vmatprep.subr.mxu0 0.0
    %4620 = vmatpush1.msra.mxu0 0.0
    %4621 = vmatprep.subr.mxu0 0.0
    %4622 = vmatpush1.msra.mxu0 0.0
    %4623 = vmatprep.subr.mxu0 0.0
    %4624 = vmatpush1.msra.mxu0 0.0
    %4625 = vmatprep.subr.mxu0 0.0
    %4626 = vmatpush1.msra.mxu0 0.0
    %4627 = vmatprep.subr.mxu0 0.0
    %4628 = vmatpush1.msra.mxu0 %v4602
    %4629 = vmatprep.subr.mxu0 0.0
    %4630 = vmatpush1.msra.mxu0 %v4601
    %4631 = vmatprep.subr.mxu0 0.0
    %4632 = vmatpush1.msra.mxu0 %v4600
    %4633 = vmatprep.subr.mxu0 0.0
    %4634 = vmatpush1.msra.mxu0 %v4599
    %4635 = vmatprep.subr.mxu0 0.0
    %4636 = vmatpush2.msra.mxu0 0.0
    %4637 = vmatprep.subr.mxu0 0.0
    %4638 = vmatpush2.msra.mxu0 0.0
    %4639 = vmatprep.subr.mxu0 0.0
    %4640 = vmatpush2.msra.mxu0 0.0
    %4641 = vmatprep.subr.mxu0 0.0
    %4642 = vmatpush2.msra.mxu0 0.0
    %4643 = vmatprep.subr.mxu0 0.0
    %4644 = vmatpush2.msra.mxu0 0.0
    %4645 = vmatprep.subr.mxu0 0.0
    %4646 = vmatpush2.msra.mxu0 0.0
    %4647 = vmatprep.subr.mxu0 0.0
    %4648 = vmatpush2.msra.mxu0 0.0
    %4649 = vmatprep.subr.mxu0 0.0
    %4650 = vmatpush2.msra.mxu0 0.0
    %4651 = vmatprep.subr.mxu0 0.0
    %4652 = vmatpush2.msra.mxu0 0.0
    %4653 = vmatprep.subr.mxu0 0.0
    %4654 = vmatpush2.msra.mxu0 0.0
    %4655 = vmatprep.subr.mxu0 0.0
    %4656 = vmatpush2.msra.mxu0 0.0
    %4657 = vmatprep.subr.mxu0 0.0
    %4658 = vmatpush2.msra.mxu0 0.0
    %4659 = vmatprep.subr.mxu0 0.0
    %4660 = vmatpush2.msra.mxu0 0.0
    %4661 = vmatprep.subr.mxu0 0.0
    %4662 = vmatpush2.msra.mxu0 0.0
    %4663 = vmatprep.subr.mxu0 0.0
    %4664 = vmatpush2.msra.mxu0 0.0
    %4665 = vmatprep.subr.mxu0 0.0
    %4666 = vmatpush2.msra.mxu0 0.0
    %4667 = vmatprep.mubr.f32.mxu0 0.0
    %4668 = vmatmul.mubr.f32.gmra.mxu0 %v4506
    %v4669 = vpop.f32.mrf.mxu0
    %v4670 = vadd.f32 0.0, %v4669
    %v4671 = vpop.f32.mrf.mxu0
    %4672 = vdwg.mxu0
    %v4673 = vadd.f32 %v4598, %v4670
    %v4674 = vsub.f32 0.0, %v4673
    %v4675 = vmul.f32 %v4674, 1.442695
    %v4676 = vpow.pop %v4675
    %v4677 = vadd.f32 %v4676, 1.0
    %v4678 = vrcp.pop %v4677
    %v4679 = vmul.f32 1.0, %v4678
    %v4680 = vtanh.pop %v4673
    %v4681 = vmul.f32 %v4679, %v4411
    %4683 = vrot.lane.b32.xlu0 %v4680, 64
    %v4684 = vpop.permute.xlu0 %4683
    %v4686 = vmul.f32 %v4679, %v4684
    %4688 = vrot.lane.b32.xlu0 %v4686, 32
    %v4689 = vpop.permute.xlu0 %4688
    %v4691 = vadd.f32 %v4681, %v4689
    %v4692 = vtanh.pop %v4691
    %4694 = vrot.lane.b32.xlu0 %v4692, 64
    %v4695 = vpop.permute.xlu0 %4694
    %v4697 = vmul.f32 %v4679, %v4695
    %4699 = vset.pattern.permute.xlu0 0
    %4700 = vperm.xlu0 %4699, %v4597
    %v4701 = vpop.permute.xlu0 %4700
    %v4703 = vmul.f32 %v4701, %v4697
    %v4704 = vmul.f32 %v4701, %v4691
    %v4705 = vld [vmem:[#allocation12] sm:$0xff]
    %v4706 = vld [vmem:[#allocation12 + $0x8] sm:$0xff]
    %v4707 = vld [vmem:[#allocation12 + $0x10] sm:$0xff]
    %v4708 = vld [vmem:[#allocation12 + $0x18] sm:$0xff]
    %v4709 = vld [vmem:[#allocation12 + $0x20] sm:$0xff]
    %v4710 = vld [vmem:[#allocation12 + $0x28] sm:$0xff]
    %v4711 = vld [vmem:[#allocation12 + $0x30] sm:$0xff]
    %v4712 = vld [vmem:[#allocation12 + $0x38] sm:$0xff]
    %v4713 = vld [vmem:[%s1252] sm:$0x3]
    %v4714 = vld [vmem:[#allocation13] sm:$0xff]
    %v4715 = vld [vmem:[#allocation13 + $0x8] sm:$0xff]
    %v4716 = vld [vmem:[#allocation13 + $0x10] sm:$0xff]
    %v4717 = vld [vmem:[#allocation13 + $0x18] sm:$0xff]
    %v4718 = vld [vmem:[#allocation13 + $0x20] sm:$0xff]
    %v4719 = vld [vmem:[#allocation13 + $0x28] sm:$0xff]
    %v4720 = vld [vmem:[#allocation13 + $0x30] sm:$0xff]
    %v4721 = vld [vmem:[#allocation13 + $0x38] sm:$0xff]
    %v4723 = vsel %vm387, %v4713, 0
    %4725 = vmatprep.subr.mxu0 0.0
    %4726 = vmatpush1.msra.mxu0 0.0
    %4727 = vmatprep.subr.mxu0 0.0
    %4728 = vmatpush1.msra.mxu0 0.0
    %4729 = vmatprep.subr.mxu0 0.0
    %4730 = vmatpush1.msra.mxu0 0.0
    %4731 = vmatprep.subr.mxu0 0.0
    %4732 = vmatpush1.msra.mxu0 0.0
    %4733 = vmatprep.subr.mxu0 0.0
    %4734 = vmatpush1.msra.mxu0 0.0
    %4735 = vmatprep.subr.mxu0 0.0
    %4736 = vmatpush1.msra.mxu0 0.0
    %4737 = vmatprep.subr.mxu0 0.0
    %4738 = vmatpush1.msra.mxu0 0.0
    %4739 = vmatprep.subr.mxu0 0.0
    %4740 = vmatpush1.msra.mxu0 0.0
    %4741 = vmatprep.subr.mxu0 0.0
    %4742 = vmatpush1.msra.mxu0 0.0
    %4743 = vmatprep.subr.mxu0 0.0
    %4744 = vmatpush1.msra.mxu0 0.0
    %4745 = vmatprep.subr.mxu0 0.0
    %4746 = vmatpush1.msra.mxu0 0.0
    %4747 = vmatprep.subr.mxu0 0.0
    %4748 = vmatpush1.msra.mxu0 0.0
    %4749 = vmatprep.subr.mxu0 %v4721
    %4750 = vmatpush1.msra.mxu0 %v4720
    %4751 = vmatprep.subr.mxu0 %v4719
    %4752 = vmatpush1.msra.mxu0 %v4718
    %4753 = vmatprep.subr.mxu0 %v4717
    %4754 = vmatpush1.msra.mxu0 %v4716
    %4755 = vmatprep.subr.mxu0 %v4715
    %4756 = vmatpush1.msra.mxu0 %v4714
    %4757 = vmatprep.subr.mxu0 0.0
    %4758 = vmatpush2.msra.mxu0 0.0
    %4759 = vmatprep.subr.mxu0 0.0
    %4760 = vmatpush2.msra.mxu0 0.0
    %4761 = vmatprep.subr.mxu0 0.0
    %4762 = vmatpush2.msra.mxu0 0.0
    %4763 = vmatprep.subr.mxu0 0.0
    %4764 = vmatpush2.msra.mxu0 0.0
    %4765 = vmatprep.subr.mxu0 0.0
    %4766 = vmatpush2.msra.mxu0 0.0
    %4767 = vmatprep.subr.mxu0 0.0
    %4768 = vmatpush2.msra.mxu0 0.0
    %4769 = vmatprep.subr.mxu0 0.0
    %4770 = vmatpush2.msra.mxu0 0.0
    %4771 = vmatprep.subr.mxu0 0.0
    %4772 = vmatpush2.msra.mxu0 0.0
    %4773 = vmatprep.subr.mxu0 0.0
    %4774 = vmatpush2.msra.mxu0 0.0
    %4775 = vmatprep.subr.mxu0 0.0
    %4776 = vmatpush2.msra.mxu0 0.0
    %4777 = vmatprep.subr.mxu0 0.0
    %4778 = vmatpush2.msra.mxu0 0.0
    %4779 = vmatprep.subr.mxu0 0.0
    %4780 = vmatpush2.msra.mxu0 0.0
    %4781 = vmatprep.subr.mxu0 0.0
    %4782 = vmatpush2.msra.mxu0 0.0
    %4783 = vmatprep.subr.mxu0 0.0
    %4784 = vmatpush2.msra.mxu0 0.0
    %4785 = vmatprep.subr.mxu0 0.0
    %4786 = vmatpush2.msra.mxu0 0.0
    %4787 = vmatprep.subr.mxu0 0.0
    %4788 = vmatpush2.msra.mxu0 0.0
    %4789 = vmatprep.mubr.f32.mxu0 0.0
    %4790 = vmatmul.mubr.f32.gmra.mxu0 %v4723
    %v4791 = vpop.f32.mrf.mxu0
    %v4792 = vadd.f32 0.0, %v4791
    %v4793 = vpop.f32.mrf.mxu0
    %v4794 = vadd.f32 0.0, %v4793
    %4795 = vdwg.mxu0
    %4797 = vrot.lane.b32.xlu0 %v4703, 32
    %v4798 = vpop.permute.xlu0 %4797
    %v4799 = vsel %vm387, %v4798, 0
    %4801 = vmatprep.subr.mxu0 0.0
    %4802 = vmatpush1.msra.mxu0 0.0
    %4803 = vmatprep.subr.mxu0 0.0
    %4804 = vmatpush1.msra.mxu0 0.0
    %4805 = vmatprep.subr.mxu0 0.0
    %4806 = vmatpush1.msra.mxu0 0.0
    %4807 = vmatprep.subr.mxu0 0.0
    %4808 = vmatpush1.msra.mxu0 0.0
    %4809 = vmatprep.subr.mxu0 0.0
    %4810 = vmatpush1.msra.mxu0 0.0
    %4811 = vmatprep.subr.mxu0 0.0
    %4812 = vmatpush1.msra.mxu0 0.0
    %4813 = vmatprep.subr.mxu0 0.0
    %4814 = vmatpush1.msra.mxu0 0.0
    %4815 = vmatprep.subr.mxu0 0.0
    %4816 = vmatpush1.msra.mxu0 0.0
    %4817 = vmatprep.subr.mxu0 0.0
    %4818 = vmatpush1.msra.mxu0 0.0
    %4819 = vmatprep.subr.mxu0 0.0
    %4820 = vmatpush1.msra.mxu0 0.0
    %4821 = vmatprep.subr.mxu0 0.0
    %4822 = vmatpush1.msra.mxu0 0.0
    %4823 = vmatprep.subr.mxu0 0.0
    %4824 = vmatpush1.msra.mxu0 0.0
    %4825 = vmatprep.subr.mxu0 %v4712
    %4826 = vmatpush1.msra.mxu0 %v4711
    %4827 = vmatprep.subr.mxu0 %v4710
    %4828 = vmatpush1.msra.mxu0 %v4709
    %4829 = vmatprep.subr.mxu0 %v4708
    %4830 = vmatpush1.msra.mxu0 %v4707
    %4831 = vmatprep.subr.mxu0 %v4706
    %4832 = vmatpush1.msra.mxu0 %v4705
    %4833 = vmatprep.subr.mxu0 0.0
    %4834 = vmatpush2.msra.mxu0 0.0
    %4835 = vmatprep.subr.mxu0 0.0
    %4836 = vmatpush2.msra.mxu0 0.0
    %4837 = vmatprep.subr.mxu0 0.0
    %4838 = vmatpush2.msra.mxu0 0.0
    %4839 = vmatprep.subr.mxu0 0.0
    %4840 = vmatpush2.msra.mxu0 0.0
    %4841 = vmatprep.subr.mxu0 0.0
    %4842 = vmatpush2.msra.mxu0 0.0
    %4843 = vmatprep.subr.mxu0 0.0
    %4844 = vmatpush2.msra.mxu0 0.0
    %4845 = vmatprep.subr.mxu0 0.0
    %4846 = vmatpush2.msra.mxu0 0.0
    %4847 = vmatprep.subr.mxu0 0.0
    %4848 = vmatpush2.msra.mxu0 0.0
    %4849 = vmatprep.subr.mxu0 0.0
    %4850 = vmatpush2.msra.mxu0 0.0
    %4851 = vmatprep.subr.mxu0 0.0
    %4852 = vmatpush2.msra.mxu0 0.0
    %4853 = vmatprep.subr.mxu0 0.0
    %4854 = vmatpush2.msra.mxu0 0.0
    %4855 = vmatprep.subr.mxu0 0.0
    %4856 = vmatpush2.msra.mxu0 0.0
    %4857 = vmatprep.subr.mxu0 0.0
    %4858 = vmatpush2.msra.mxu0 0.0
    %4859 = vmatprep.subr.mxu0 0.0
    %4860 = vmatpush2.msra.mxu0 0.0
    %4861 = vmatprep.subr.mxu0 0.0
    %4862 = vmatpush2.msra.mxu0 0.0
    %4863 = vmatprep.subr.mxu0 0.0
    %4864 = vmatpush2.msra.mxu0 0.0
    %4865 = vmatprep.mubr.f32.mxu0 0.0
    %4866 = vmatmul.mubr.f32.gmra.mxu0 %v4799
    %v4867 = vpop.f32.mrf.mxu0
    %v4868 = vadd.f32 %v4792, %v4867
    %v4869 = vpop.f32.mrf.mxu0
    %v4870 = vadd.f32 %v4794, %v4869
    %4871 = vdwg.mxu0
    %v4872 = vld [vmem:[%s8] sm:$0x3]
    %v4874 = vlaneseq
    %v4875 = vshrl.u32 %v4874, 7
    %v4876 = vsub.s32 0, %v4875
    %v4877 = vrot.slane %v4872, %v4876
    %v4878 = vlaneseq
    %v4879 = vshrl.u32 %v4878, 7
    %v4880 = vsub.s32 1, %v4879
    %v4881 = vrot.slane %v4872, %v4880
    %v4884 = vadd.f32 %v4868, %v4877
    %v4885 = vadd.f32 %v4870, %v4881
    %s4886 = scalar_lea.vmem [#allocation15], 10
    %4887 = vst [vmem:[%s4886] sm:$0x3] %v4884
    %s4888 = scalar_lea.vmem [#allocation16], 10
    %4889 = vst [vmem:[%s4888] sm:$0x3] %v4885
    %v4890 = vld [vmem:[%s500] sm:$0x3]
    %v4891 = vld [vmem:[%s761] sm:$0x3]
    %v4892 = vld [vmem:[#allocation9] sm:$0xff]
    %v4893 = vld [vmem:[#allocation9 + $0x8] sm:$0xff]
    %v4894 = vld [vmem:[#allocation9 + $0x10] sm:$0xff]
    %v4895 = vld [vmem:[#allocation9 + $0x18] sm:$0xff]
    %4896 = vmatprep.subr.mxu0 0.0
    %4897 = vmatpush1.msra.mxu0 0.0
    %4898 = vmatprep.subr.mxu0 0.0
    %4899 = vmatpush1.msra.mxu0 0.0
    %4900 = vmatprep.subr.mxu0 0.0
    %4901 = vmatpush1.msra.mxu0 0.0
    %4902 = vmatprep.subr.mxu0 0.0
    %4903 = vmatpush1.msra.mxu0 0.0
    %4904 = vmatprep.subr.mxu0 0.0
    %4905 = vmatpush1.msra.mxu0 0.0
    %4906 = vmatprep.subr.mxu0 0.0
    %4907 = vmatpush1.msra.mxu0 0.0
    %4908 = vmatprep.subr.mxu0 0.0
    %4909 = vmatpush1.msra.mxu0 0.0
    %4910 = vmatprep.subr.mxu0 0.0
    %4911 = vmatpush1.msra.mxu0 0.0
    %4912 = vmatprep.subr.mxu0 0.0
    %4913 = vmatpush1.msra.mxu0 0.0
    %4914 = vmatprep.subr.mxu0 0.0
    %4915 = vmatpush1.msra.mxu0 0.0
    %4916 = vmatprep.subr.mxu0 0.0
    %4917 = vmatpush1.msra.mxu0 0.0
    %4918 = vmatprep.subr.mxu0 0.0
    %4919 = vmatpush1.msra.mxu0 0.0
    %4920 = vmatprep.subr.mxu0 0.0
    %4921 = vmatpush1.msra.mxu0 %v4895
    %4922 = vmatprep.subr.mxu0 0.0
    %4923 = vmatpush1.msra.mxu0 %v4894
    %4924 = vmatprep.subr.mxu0 0.0
    %4925 = vmatpush1.msra.mxu0 %v4893
    %4926 = vmatprep.subr.mxu0 0.0
    %4927 = vmatpush1.msra.mxu0 %v4892
    %4928 = vmatprep.subr.mxu0 0.0
    %4929 = vmatpush2.msra.mxu0 0.0
    %4930 = vmatprep.subr.mxu0 0.0
    %4931 = vmatpush2.msra.mxu0 0.0
    %4932 = vmatprep.subr.mxu0 0.0
    %4933 = vmatpush2.msra.mxu0 0.0
    %4934 = vmatprep.subr.mxu0 0.0
    %4935 = vmatpush2.msra.mxu0 0.0
    %4936 = vmatprep.subr.mxu0 0.0
    %4937 = vmatpush2.msra.mxu0 0.0
    %4938 = vmatprep.subr.mxu0 0.0
    %4939 = vmatpush2.msra.mxu0 0.0
    %4940 = vmatprep.subr.mxu0 0.0
    %4941 = vmatpush2.msra.mxu0 0.0
    %4942 = vmatprep.subr.mxu0 0.0
    %4943 = vmatpush2.msra.mxu0 0.0
    %4944 = vmatprep.subr.mxu0 0.0
    %4945 = vmatpush2.msra.mxu0 0.0
    %4946 = vmatprep.subr.mxu0 0.0
    %4947 = vmatpush2.msra.mxu0 0.0
    %4948 = vmatprep.subr.mxu0 0.0
    %4949 = vmatpush2.msra.mxu0 0.0
    %4950 = vmatprep.subr.mxu0 0.0
    %4951 = vmatpush2.msra.mxu0 0.0
    %4952 = vmatprep.subr.mxu0 0.0
    %4953 = vmatpush2.msra.mxu0 0.0
    %4954 = vmatprep.subr.mxu0 0.0
    %4955 = vmatpush2.msra.mxu0 0.0
    %4956 = vmatprep.subr.mxu0 0.0
    %4957 = vmatpush2.msra.mxu0 0.0
    %4958 = vmatprep.subr.mxu0 0.0
    %4959 = vmatpush2.msra.mxu0 0.0
    %4960 = vmatprep.mubr.f32.mxu0 0.0
    %4961 = vmatmul.mubr.f32.gmra.mxu0 %v4799
    %v4962 = vpop.f32.mrf.mxu0
    %v4963 = vadd.f32 0.0, %v4962
    %v4964 = vpop.f32.mrf.mxu0
    %4965 = vdwg.mxu0
    %v4966 = vadd.f32 %v4891, %v4963
    %v4967 = vsub.f32 0.0, %v4966
    %v4968 = vmul.f32 %v4967, 1.442695
    %v4969 = vpow.pop %v4968
    %v4970 = vadd.f32 %v4969, 1.0
    %v4971 = vrcp.pop %v4970
    %v4972 = vmul.f32 1.0, %v4971
    %v4973 = vtanh.pop %v4966
    %v4974 = vmul.f32 %v4972, %v4704
    %4976 = vrot.lane.b32.xlu0 %v4973, 64
    %v4977 = vpop.permute.xlu0 %4976
    %v4979 = vmul.f32 %v4972, %v4977
    %4981 = vrot.lane.b32.xlu0 %v4979, 32
    %v4982 = vpop.permute.xlu0 %4981
    %v4984 = vadd.f32 %v4974, %v4982
    %v4985 = vtanh.pop %v4984
    %4987 = vrot.lane.b32.xlu0 %v4985, 64
    %v4988 = vpop.permute.xlu0 %4987
    %v4990 = vmul.f32 %v4972, %v4988
    %4992 = vset.pattern.permute.xlu0 0
    %4993 = vperm.xlu0 %4992, %v4890
    %v4994 = vpop.permute.xlu0 %4993
    %v4996 = vmul.f32 %v4994, %v4990
    %v4997 = vmul.f32 %v4994, %v4984
    %v4998 = vld [vmem:[#allocation12] sm:$0xff]
    %v4999 = vld [vmem:[#allocation12 + $0x8] sm:$0xff]
    %v5000 = vld [vmem:[#allocation12 + $0x10] sm:$0xff]
    %v5001 = vld [vmem:[#allocation12 + $0x18] sm:$0xff]
    %v5002 = vld [vmem:[#allocation12 + $0x20] sm:$0xff]
    %v5003 = vld [vmem:[#allocation12 + $0x28] sm:$0xff]
    %v5004 = vld [vmem:[#allocation12 + $0x30] sm:$0xff]
    %v5005 = vld [vmem:[#allocation12 + $0x38] sm:$0xff]
    %v5006 = vld [vmem:[%s875] sm:$0x3]
    %v5007 = vld [vmem:[#allocation13] sm:$0xff]
    %v5008 = vld [vmem:[#allocation13 + $0x8] sm:$0xff]
    %v5009 = vld [vmem:[#allocation13 + $0x10] sm:$0xff]
    %v5010 = vld [vmem:[#allocation13 + $0x18] sm:$0xff]
    %v5011 = vld [vmem:[#allocation13 + $0x20] sm:$0xff]
    %v5012 = vld [vmem:[#allocation13 + $0x28] sm:$0xff]
    %v5013 = vld [vmem:[#allocation13 + $0x30] sm:$0xff]
    %v5014 = vld [vmem:[#allocation13 + $0x38] sm:$0xff]
    %v5016 = vsel %vm387, %v5006, 0
    %5018 = vmatprep.subr.mxu0 0.0
    %5019 = vmatpush1.msra.mxu0 0.0
    %5020 = vmatprep.subr.mxu0 0.0
    %5021 = vmatpush1.msra.mxu0 0.0
    %5022 = vmatprep.subr.mxu0 0.0
    %5023 = vmatpush1.msra.mxu0 0.0
    %5024 = vmatprep.subr.mxu0 0.0
    %5025 = vmatpush1.msra.mxu0 0.0
    %5026 = vmatprep.subr.mxu0 0.0
    %5027 = vmatpush1.msra.mxu0 0.0
    %5028 = vmatprep.subr.mxu0 0.0
    %5029 = vmatpush1.msra.mxu0 0.0
    %5030 = vmatprep.subr.mxu0 0.0
    %5031 = vmatpush1.msra.mxu0 0.0
    %5032 = vmatprep.subr.mxu0 0.0
    %5033 = vmatpush1.msra.mxu0 0.0
    %5034 = vmatprep.subr.mxu0 0.0
    %5035 = vmatpush1.msra.mxu0 0.0
    %5036 = vmatprep.subr.mxu0 0.0
    %5037 = vmatpush1.msra.mxu0 0.0
    %5038 = vmatprep.subr.mxu0 0.0
    %5039 = vmatpush1.msra.mxu0 0.0
    %5040 = vmatprep.subr.mxu0 0.0
    %5041 = vmatpush1.msra.mxu0 0.0
    %5042 = vmatprep.subr.mxu0 %v5014
    %5043 = vmatpush1.msra.mxu0 %v5013
    %5044 = vmatprep.subr.mxu0 %v5012
    %5045 = vmatpush1.msra.mxu0 %v5011
    %5046 = vmatprep.subr.mxu0 %v5010
    %5047 = vmatpush1.msra.mxu0 %v5009
    %5048 = vmatprep.subr.mxu0 %v5008
    %5049 = vmatpush1.msra.mxu0 %v5007
    %5050 = vmatprep.subr.mxu0 0.0
    %5051 = vmatpush2.msra.mxu0 0.0
    %5052 = vmatprep.subr.mxu0 0.0
    %5053 = vmatpush2.msra.mxu0 0.0
    %5054 = vmatprep.subr.mxu0 0.0
    %5055 = vmatpush2.msra.mxu0 0.0
    %5056 = vmatprep.subr.mxu0 0.0
    %5057 = vmatpush2.msra.mxu0 0.0
    %5058 = vmatprep.subr.mxu0 0.0
    %5059 = vmatpush2.msra.mxu0 0.0
    %5060 = vmatprep.subr.mxu0 0.0
    %5061 = vmatpush2.msra.mxu0 0.0
    %5062 = vmatprep.subr.mxu0 0.0
    %5063 = vmatpush2.msra.mxu0 0.0
    %5064 = vmatprep.subr.mxu0 0.0
    %5065 = vmatpush2.msra.mxu0 0.0
    %5066 = vmatprep.subr.mxu0 0.0
    %5067 = vmatpush2.msra.mxu0 0.0
    %5068 = vmatprep.subr.mxu0 0.0
    %5069 = vmatpush2.msra.mxu0 0.0
    %5070 = vmatprep.subr.mxu0 0.0
    %5071 = vmatpush2.msra.mxu0 0.0
    %5072 = vmatprep.subr.mxu0 0.0
    %5073 = vmatpush2.msra.mxu0 0.0
    %5074 = vmatprep.subr.mxu0 0.0
    %5075 = vmatpush2.msra.mxu0 0.0
    %5076 = vmatprep.subr.mxu0 0.0
    %5077 = vmatpush2.msra.mxu0 0.0
    %5078 = vmatprep.subr.mxu0 0.0
    %5079 = vmatpush2.msra.mxu0 0.0
    %5080 = vmatprep.subr.mxu0 0.0
    %5081 = vmatpush2.msra.mxu0 0.0
    %5082 = vmatprep.mubr.f32.mxu0 0.0
    %5083 = vmatmul.mubr.f32.gmra.mxu0 %v5016
    %v5084 = vpop.f32.mrf.mxu0
    %v5085 = vadd.f32 0.0, %v5084
    %v5086 = vpop.f32.mrf.mxu0
    %v5087 = vadd.f32 0.0, %v5086
    %5088 = vdwg.mxu0
    %5090 = vrot.lane.b32.xlu0 %v4996, 32
    %v5091 = vpop.permute.xlu0 %5090
    %v5092 = vsel %vm387, %v5091, 0
    %5094 = vmatprep.subr.mxu0 0.0
    %5095 = vmatpush1.msra.mxu0 0.0
    %5096 = vmatprep.subr.mxu0 0.0
    %5097 = vmatpush1.msra.mxu0 0.0
    %5098 = vmatprep.subr.mxu0 0.0
    %5099 = vmatpush1.msra.mxu0 0.0
    %5100 = vmatprep.subr.mxu0 0.0
    %5101 = vmatpush1.msra.mxu0 0.0
    %5102 = vmatprep.subr.mxu0 0.0
    %5103 = vmatpush1.msra.mxu0 0.0
    %5104 = vmatprep.subr.mxu0 0.0
    %5105 = vmatpush1.msra.mxu0 0.0
    %5106 = vmatprep.subr.mxu0 0.0
    %5107 = vmatpush1.msra.mxu0 0.0
    %5108 = vmatprep.subr.mxu0 0.0
    %5109 = vmatpush1.msra.mxu0 0.0
    %5110 = vmatprep.subr.mxu0 0.0
    %5111 = vmatpush1.msra.mxu0 0.0
    %5112 = vmatprep.subr.mxu0 0.0
    %5113 = vmatpush1.msra.mxu0 0.0
    %5114 = vmatprep.subr.mxu0 0.0
    %5115 = vmatpush1.msra.mxu0 0.0
    %5116 = vmatprep.subr.mxu0 0.0
    %5117 = vmatpush1.msra.mxu0 0.0
    %5118 = vmatprep.subr.mxu0 %v5005
    %5119 = vmatpush1.msra.mxu0 %v5004
    %5120 = vmatprep.subr.mxu0 %v5003
    %5121 = vmatpush1.msra.mxu0 %v5002
    %5122 = vmatprep.subr.mxu0 %v5001
    %5123 = vmatpush1.msra.mxu0 %v5000
    %5124 = vmatprep.subr.mxu0 %v4999
    %5125 = vmatpush1.msra.mxu0 %v4998
    %5126 = vmatprep.subr.mxu0 0.0
    %5127 = vmatpush2.msra.mxu0 0.0
    %5128 = vmatprep.subr.mxu0 0.0
    %5129 = vmatpush2.msra.mxu0 0.0
    %5130 = vmatprep.subr.mxu0 0.0
    %5131 = vmatpush2.msra.mxu0 0.0
    %5132 = vmatprep.subr.mxu0 0.0
    %5133 = vmatpush2.msra.mxu0 0.0
    %5134 = vmatprep.subr.mxu0 0.0
    %5135 = vmatpush2.msra.mxu0 0.0
    %5136 = vmatprep.subr.mxu0 0.0
    %5137 = vmatpush2.msra.mxu0 0.0
    %5138 = vmatprep.subr.mxu0 0.0
    %5139 = vmatpush2.msra.mxu0 0.0
    %5140 = vmatprep.subr.mxu0 0.0
    %5141 = vmatpush2.msra.mxu0 0.0
    %5142 = vmatprep.subr.mxu0 0.0
    %5143 = vmatpush2.msra.mxu0 0.0
    %5144 = vmatprep.subr.mxu0 0.0
    %5145 = vmatpush2.msra.mxu0 0.0
    %5146 = vmatprep.subr.mxu0 0.0
    %5147 = vmatpush2.msra.mxu0 0.0
    %5148 = vmatprep.subr.mxu0 0.0
    %5149 = vmatpush2.msra.mxu0 0.0
    %5150 = vmatprep.subr.mxu0 0.0
    %5151 = vmatpush2.msra.mxu0 0.0
    %5152 = vmatprep.subr.mxu0 0.0
    %5153 = vmatpush2.msra.mxu0 0.0
    %5154 = vmatprep.subr.mxu0 0.0
    %5155 = vmatpush2.msra.mxu0 0.0
    %5156 = vmatprep.subr.mxu0 0.0
    %5157 = vmatpush2.msra.mxu0 0.0
    %5158 = vmatprep.mubr.f32.mxu0 0.0
    %5159 = vmatmul.mubr.f32.gmra.mxu0 %v5092
    %v5160 = vpop.f32.mrf.mxu0
    %v5161 = vadd.f32 %v5085, %v5160
    %v5162 = vpop.f32.mrf.mxu0
    %v5163 = vadd.f32 %v5087, %v5162
    %5164 = vdwg.mxu0
    %v5165 = vld [vmem:[%s8] sm:$0x3]
    %v5167 = vlaneseq
    %v5168 = vshrl.u32 %v5167, 7
    %v5169 = vsub.s32 0, %v5168
    %v5170 = vrot.slane %v5165, %v5169
    %v5171 = vlaneseq
    %v5172 = vshrl.u32 %v5171, 7
    %v5173 = vsub.s32 1, %v5172
    %v5174 = vrot.slane %v5165, %v5173
    %v5177 = vadd.f32 %v5161, %v5170
    %v5178 = vadd.f32 %v5163, %v5174
    %s5179 = scalar_lea.vmem [#allocation15], 12
    %5180 = vst [vmem:[%s5179] sm:$0x3] %v5177
    %s5181 = scalar_lea.vmem [#allocation16], 12
    %5182 = vst [vmem:[%s5181] sm:$0x3] %v5178
    %v5183 = vld [vmem:[%s118] sm:$0x3]
    %v5184 = vld [vmem:[%s381] sm:$0x3]
    %v5185 = vld [vmem:[#allocation9] sm:$0xff]
    %v5186 = vld [vmem:[#allocation9 + $0x8] sm:$0xff]
    %v5187 = vld [vmem:[#allocation9 + $0x10] sm:$0xff]
    %v5188 = vld [vmem:[#allocation9 + $0x18] sm:$0xff]
    %5189 = vmatprep.subr.mxu0 0.0
    %5190 = vmatpush1.msra.mxu0 0.0
    %5191 = vmatprep.subr.mxu0 0.0
    %5192 = vmatpush1.msra.mxu0 0.0
    %5193 = vmatprep.subr.mxu0 0.0
    %5194 = vmatpush1.msra.mxu0 0.0
    %5195 = vmatprep.subr.mxu0 0.0
    %5196 = vmatpush1.msra.mxu0 0.0
    %5197 = vmatprep.subr.mxu0 0.0
    %5198 = vmatpush1.msra.mxu0 0.0
    %5199 = vmatprep.subr.mxu0 0.0
    %5200 = vmatpush1.msra.mxu0 0.0
    %5201 = vmatprep.subr.mxu0 0.0
    %5202 = vmatpush1.msra.mxu0 0.0
    %5203 = vmatprep.subr.mxu0 0.0
    %5204 = vmatpush1.msra.mxu0 0.0
    %5205 = vmatprep.subr.mxu0 0.0
    %5206 = vmatpush1.msra.mxu0 0.0
    %5207 = vmatprep.subr.mxu0 0.0
    %5208 = vmatpush1.msra.mxu0 0.0
    %5209 = vmatprep.subr.mxu0 0.0
    %5210 = vmatpush1.msra.mxu0 0.0
    %5211 = vmatprep.subr.mxu0 0.0
    %5212 = vmatpush1.msra.mxu0 0.0
    %5213 = vmatprep.subr.mxu0 0.0
    %5214 = vmatpush1.msra.mxu0 %v5188
    %5215 = vmatprep.subr.mxu0 0.0
    %5216 = vmatpush1.msra.mxu0 %v5187
    %5217 = vmatprep.subr.mxu0 0.0
    %5218 = vmatpush1.msra.mxu0 %v5186
    %5219 = vmatprep.subr.mxu0 0.0
    %5220 = vmatpush1.msra.mxu0 %v5185
    %5221 = vmatprep.subr.mxu0 0.0
    %5222 = vmatpush2.msra.mxu0 0.0
    %5223 = vmatprep.subr.mxu0 0.0
    %5224 = vmatpush2.msra.mxu0 0.0
    %5225 = vmatprep.subr.mxu0 0.0
    %5226 = vmatpush2.msra.mxu0 0.0
    %5227 = vmatprep.subr.mxu0 0.0
    %5228 = vmatpush2.msra.mxu0 0.0
    %5229 = vmatprep.subr.mxu0 0.0
    %5230 = vmatpush2.msra.mxu0 0.0
    %5231 = vmatprep.subr.mxu0 0.0
    %5232 = vmatpush2.msra.mxu0 0.0
    %5233 = vmatprep.subr.mxu0 0.0
    %5234 = vmatpush2.msra.mxu0 0.0
    %5235 = vmatprep.subr.mxu0 0.0
    %5236 = vmatpush2.msra.mxu0 0.0
    %5237 = vmatprep.subr.mxu0 0.0
    %5238 = vmatpush2.msra.mxu0 0.0
    %5239 = vmatprep.subr.mxu0 0.0
    %5240 = vmatpush2.msra.mxu0 0.0
    %5241 = vmatprep.subr.mxu0 0.0
    %5242 = vmatpush2.msra.mxu0 0.0
    %5243 = vmatprep.subr.mxu0 0.0
    %5244 = vmatpush2.msra.mxu0 0.0
    %5245 = vmatprep.subr.mxu0 0.0
    %5246 = vmatpush2.msra.mxu0 0.0
    %5247 = vmatprep.subr.mxu0 0.0
    %5248 = vmatpush2.msra.mxu0 0.0
    %5249 = vmatprep.subr.mxu0 0.0
    %5250 = vmatpush2.msra.mxu0 0.0
    %5251 = vmatprep.subr.mxu0 0.0
    %5252 = vmatpush2.msra.mxu0 0.0
    %5253 = vmatprep.mubr.f32.mxu0 0.0
    %5254 = vmatmul.mubr.f32.gmra.mxu0 %v5092
    %v5255 = vpop.f32.mrf.mxu0
    %v5256 = vadd.f32 0.0, %v5255
    %v5257 = vpop.f32.mrf.mxu0
    %5258 = vdwg.mxu0
    %v5259 = vadd.f32 %v5184, %v5256
    %v5260 = vsub.f32 0.0, %v5259
    %v5261 = vmul.f32 %v5260, 1.442695
    %v5262 = vpow.pop %v5261
    %v5263 = vadd.f32 %v5262, 1.0
    %v5264 = vrcp.pop %v5263
    %v5265 = vmul.f32 1.0, %v5264
    %v5266 = vtanh.pop %v5259
    %v5267 = vmul.f32 %v5265, %v4997
    %5269 = vrot.lane.b32.xlu0 %v5266, 64
    %v5270 = vpop.permute.xlu0 %5269
    %v5272 = vmul.f32 %v5265, %v5270
    %5274 = vrot.lane.b32.xlu0 %v5272, 32
    %v5275 = vpop.permute.xlu0 %5274
    %v5277 = vadd.f32 %v5267, %v5275
    %v5278 = vtanh.pop %v5277
    %5280 = vrot.lane.b32.xlu0 %v5278, 64
    %v5281 = vpop.permute.xlu0 %5280
    %v5283 = vmul.f32 %v5265, %v5281
    %5285 = vset.pattern.permute.xlu0 0
    %5286 = vperm.xlu0 %5285, %v5183
    %v5287 = vpop.permute.xlu0 %5286
    %v5289 = vmul.f32 %v5287, %v5283
    %v5290 = vld [vmem:[#allocation12] sm:$0xff]
    %v5291 = vld [vmem:[#allocation12 + $0x8] sm:$0xff]
    %v5292 = vld [vmem:[#allocation12 + $0x10] sm:$0xff]
    %v5293 = vld [vmem:[#allocation12 + $0x18] sm:$0xff]
    %v5294 = vld [vmem:[#allocation12 + $0x20] sm:$0xff]
    %v5295 = vld [vmem:[#allocation12 + $0x28] sm:$0xff]
    %v5296 = vld [vmem:[#allocation12 + $0x30] sm:$0xff]
    %v5297 = vld [vmem:[#allocation12 + $0x38] sm:$0xff]
    %v5298 = vld [vmem:[%s497] sm:$0x3]
    %v5299 = vld [vmem:[#allocation13] sm:$0xff]
    %v5300 = vld [vmem:[#allocation13 + $0x8] sm:$0xff]
    %v5301 = vld [vmem:[#allocation13 + $0x10] sm:$0xff]
    %v5302 = vld [vmem:[#allocation13 + $0x18] sm:$0xff]
    %v5303 = vld [vmem:[#allocation13 + $0x20] sm:$0xff]
    %v5304 = vld [vmem:[#allocation13 + $0x28] sm:$0xff]
    %v5305 = vld [vmem:[#allocation13 + $0x30] sm:$0xff]
    %v5306 = vld [vmem:[#allocation13 + $0x38] sm:$0xff]
    %v5308 = vsel %vm387, %v5298, 0
    %5310 = vmatprep.subr.mxu0 0.0
    %5311 = vmatpush1.msra.mxu0 0.0
    %5312 = vmatprep.subr.mxu0 0.0
    %5313 = vmatpush1.msra.mxu0 0.0
    %5314 = vmatprep.subr.mxu0 0.0
    %5315 = vmatpush1.msra.mxu0 0.0
    %5316 = vmatprep.subr.mxu0 0.0
    %5317 = vmatpush1.msra.mxu0 0.0
    %5318 = vmatprep.subr.mxu0 0.0
    %5319 = vmatpush1.msra.mxu0 0.0
    %5320 = vmatprep.subr.mxu0 0.0
    %5321 = vmatpush1.msra.mxu0 0.0
    %5322 = vmatprep.subr.mxu0 0.0
    %5323 = vmatpush1.msra.mxu0 0.0
    %5324 = vmatprep.subr.mxu0 0.0
    %5325 = vmatpush1.msra.mxu0 0.0
    %5326 = vmatprep.subr.mxu0 0.0
    %5327 = vmatpush1.msra.mxu0 0.0
    %5328 = vmatprep.subr.mxu0 0.0
    %5329 = vmatpush1.msra.mxu0 0.0
    %5330 = vmatprep.subr.mxu0 0.0
    %5331 = vmatpush1.msra.mxu0 0.0
    %5332 = vmatprep.subr.mxu0 0.0
    %5333 = vmatpush1.msra.mxu0 0.0
    %5334 = vmatprep.subr.mxu0 %v5306
    %5335 = vmatpush1.msra.mxu0 %v5305
    %5336 = vmatprep.subr.mxu0 %v5304
    %5337 = vmatpush1.msra.mxu0 %v5303
    %5338 = vmatprep.subr.mxu0 %v5302
    %5339 = vmatpush1.msra.mxu0 %v5301
    %5340 = vmatprep.subr.mxu0 %v5300
    %5341 = vmatpush1.msra.mxu0 %v5299
    %5342 = vmatprep.subr.mxu0 0.0
    %5343 = vmatpush2.msra.mxu0 0.0
    %5344 = vmatprep.subr.mxu0 0.0
    %5345 = vmatpush2.msra.mxu0 0.0
    %5346 = vmatprep.subr.mxu0 0.0
    %5347 = vmatpush2.msra.mxu0 0.0
    %5348 = vmatprep.subr.mxu0 0.0
    %5349 = vmatpush2.msra.mxu0 0.0
    %5350 = vmatprep.subr.mxu0 0.0
    %5351 = vmatpush2.msra.mxu0 0.0
    %5352 = vmatprep.subr.mxu0 0.0
    %5353 = vmatpush2.msra.mxu0 0.0
    %5354 = vmatprep.subr.mxu0 0.0
    %5355 = vmatpush2.msra.mxu0 0.0
    %5356 = vmatprep.subr.mxu0 0.0
    %5357 = vmatpush2.msra.mxu0 0.0
    %5358 = vmatprep.subr.mxu0 0.0
    %5359 = vmatpush2.msra.mxu0 0.0
    %5360 = vmatprep.subr.mxu0 0.0
    %5361 = vmatpush2.msra.mxu0 0.0
    %5362 = vmatprep.subr.mxu0 0.0
    %5363 = vmatpush2.msra.mxu0 0.0
    %5364 = vmatprep.subr.mxu0 0.0
    %5365 = vmatpush2.msra.mxu0 0.0
    %5366 = vmatprep.subr.mxu0 0.0
    %5367 = vmatpush2.msra.mxu0 0.0
    %5368 = vmatprep.subr.mxu0 0.0
    %5369 = vmatpush2.msra.mxu0 0.0
    %5370 = vmatprep.subr.mxu0 0.0
    %5371 = vmatpush2.msra.mxu0 0.0
    %5372 = vmatprep.subr.mxu0 0.0
    %5373 = vmatpush2.msra.mxu0 0.0
    %5374 = vmatprep.mubr.f32.mxu0 0.0
    %5375 = vmatmul.mubr.f32.gmra.mxu0 %v5308
    %v5376 = vpop.f32.mrf.mxu0
    %v5377 = vadd.f32 0.0, %v5376
    %v5378 = vpop.f32.mrf.mxu0
    %v5379 = vadd.f32 0.0, %v5378
    %5380 = vdwg.mxu0
    %5382 = vrot.lane.b32.xlu0 %v5289, 32
    %v5383 = vpop.permute.xlu0 %5382
    %v5384 = vsel %vm387, %v5383, 0
    %5386 = vmatprep.subr.mxu0 0.0
    %5387 = vmatpush1.msra.mxu0 0.0
    %5388 = vmatprep.subr.mxu0 0.0
    %5389 = vmatpush1.msra.mxu0 0.0
    %5390 = vmatprep.subr.mxu0 0.0
    %5391 = vmatpush1.msra.mxu0 0.0
    %5392 = vmatprep.subr.mxu0 0.0
    %5393 = vmatpush1.msra.mxu0 0.0
    %5394 = vmatprep.subr.mxu0 0.0
    %5395 = vmatpush1.msra.mxu0 0.0
    %5396 = vmatprep.subr.mxu0 0.0
    %5397 = vmatpush1.msra.mxu0 0.0
    %5398 = vmatprep.subr.mxu0 0.0
    %5399 = vmatpush1.msra.mxu0 0.0
    %5400 = vmatprep.subr.mxu0 0.0
    %5401 = vmatpush1.msra.mxu0 0.0
    %5402 = vmatprep.subr.mxu0 0.0
    %5403 = vmatpush1.msra.mxu0 0.0
    %5404 = vmatprep.subr.mxu0 0.0
    %5405 = vmatpush1.msra.mxu0 0.0
    %5406 = vmatprep.subr.mxu0 0.0
    %5407 = vmatpush1.msra.mxu0 0.0
    %5408 = vmatprep.subr.mxu0 0.0
    %5409 = vmatpush1.msra.mxu0 0.0
    %5410 = vmatprep.subr.mxu0 %v5297
    %5411 = vmatpush1.msra.mxu0 %v5296
    %5412 = vmatprep.subr.mxu0 %v5295
    %5413 = vmatpush1.msra.mxu0 %v5294
    %5414 = vmatprep.subr.mxu0 %v5293
    %5415 = vmatpush1.msra.mxu0 %v5292
    %5416 = vmatprep.subr.mxu0 %v5291
    %5417 = vmatpush1.msra.mxu0 %v5290
    %5418 = vmatprep.subr.mxu0 0.0
    %5419 = vmatpush2.msra.mxu0 0.0
    %5420 = vmatprep.subr.mxu0 0.0
    %5421 = vmatpush2.msra.mxu0 0.0
    %5422 = vmatprep.subr.mxu0 0.0
    %5423 = vmatpush2.msra.mxu0 0.0
    %5424 = vmatprep.subr.mxu0 0.0
    %5425 = vmatpush2.msra.mxu0 0.0
    %5426 = vmatprep.subr.mxu0 0.0
    %5427 = vmatpush2.msra.mxu0 0.0
    %5428 = vmatprep.subr.mxu0 0.0
    %5429 = vmatpush2.msra.mxu0 0.0
    %5430 = vmatprep.subr.mxu0 0.0
    %5431 = vmatpush2.msra.mxu0 0.0
    %5432 = vmatprep.subr.mxu0 0.0
    %5433 = vmatpush2.msra.mxu0 0.0
    %5434 = vmatprep.subr.mxu0 0.0
    %5435 = vmatpush2.msra.mxu0 0.0
    %5436 = vmatprep.subr.mxu0 0.0
    %5437 = vmatpush2.msra.mxu0 0.0
    %5438 = vmatprep.subr.mxu0 0.0
    %5439 = vmatpush2.msra.mxu0 0.0
    %5440 = vmatprep.subr.mxu0 0.0
    %5441 = vmatpush2.msra.mxu0 0.0
    %5442 = vmatprep.subr.mxu0 0.0
    %5443 = vmatpush2.msra.mxu0 0.0
    %5444 = vmatprep.subr.mxu0 0.0
    %5445 = vmatpush2.msra.mxu0 0.0
    %5446 = vmatprep.subr.mxu0 0.0
    %5447 = vmatpush2.msra.mxu0 0.0
    %5448 = vmatprep.subr.mxu0 0.0
    %5449 = vmatpush2.msra.mxu0 0.0
    %5450 = vmatprep.mubr.f32.mxu0 0.0
    %5451 = vmatmul.mubr.f32.gmra.mxu0 %v5384
    %v5452 = vpop.f32.mrf.mxu0
    %v5453 = vadd.f32 %v5377, %v5452
    %v5454 = vpop.f32.mrf.mxu0
    %v5455 = vadd.f32 %v5379, %v5454
    %5456 = vdwg.mxu0
    %v5457 = vld [vmem:[%s8] sm:$0x3]
    %v5459 = vlaneseq
    %v5460 = vshrl.u32 %v5459, 7
    %v5461 = vsub.s32 0, %v5460
    %v5462 = vrot.slane %v5457, %v5461
    %v5463 = vlaneseq
    %v5464 = vshrl.u32 %v5463, 7
    %v5465 = vsub.s32 1, %v5464
    %v5466 = vrot.slane %v5457, %v5465
    %v5469 = vadd.f32 %v5453, %v5462
    %v5470 = vadd.f32 %v5455, %v5466
    %s5471 = scalar_lea.vmem [#allocation15], 14
    %5472 = vst [vmem:[%s5471] sm:$0x3] %v5469
    %s5473 = scalar_lea.vmem [#allocation16], 14
    %5474 = vst [vmem:[%s5473] sm:$0x3] %v5470
    // Predicated region
    $region62: #{tpu_custom_call.1} parent=1 // pred_check
      _
    $region63: #{tpu_custom_call.1} parent=1 // pred_check_branch
      %5476 = sbr.rel (0) target = $region65
    $region64: #{tpu_custom_call.1} parent=1 // pred_region
      %s5478 = ssub.s32 256, 256
      %5479 = vsyncadd [#allocation6], %s5478
      %s5480 = sshll.u32 [#allocation15], 4
      %s5481 = int_to_ptr.vmem [resolvable:$true] %s5480
      %5486 = dma.vmem_to_hbm [thread:$0]  %s5481, 256, %s9, [#allocation6], 32, 32, 2
    $region65: #{tpu_custom_call.1} parent=1 // pred_fallthru
      _
    // Predicated region
    $region66: #{tpu_custom_call.1} parent=1 // pred_check
      _
    $region67: #{tpu_custom_call.1} parent=1 // pred_check_branch
      %5488 = sbr.rel (0) target = $region69
    $region68: #{tpu_custom_call.1} parent=1 // pred_region
      %s5490 = ssub.s32 256, 256
      %5491 = vsyncadd [#allocation17], %s5490
      %s5492 = sshll.u32 [#allocation16], 4
      %s5493 = int_to_ptr.vmem [resolvable:$true] %s5492
      %5498 = dma.vmem_to_hbm [thread:$0]  %s5493, 256, %s10, [#allocation17], 32, 32, 2
    $region69: #{tpu_custom_call.1} parent=1 // pred_fallthru
      _
    // Predicated region
    $region70: #{tpu_custom_call.1} parent=1 // pred_check
      _
    $region71: #{tpu_custom_call.1} parent=1 // pred_check_branch
      %5500 = sbr.rel (0) target = $region73
    $region72: #{tpu_custom_call.1} parent=1 // pred_region
      %5501 = dma.done [#allocation6], 256
    $region73: #{tpu_custom_call.1} parent=1 // pred_fallthru
      _
    // Predicated region
    $region74: #{tpu_custom_call.1} parent=1 // pred_check
      _
    $region75: #{tpu_custom_call.1} parent=1 // pred_check_branch
      %5503 = sbr.rel (0) target = $region77
    $region76: #{tpu_custom_call.1} parent=1 // pred_region
      %5504 = dma.done [#allocation17], 256
    $region77: #{tpu_custom_call.1} parent=1 // pred_fallthru
      _
    %5505 = vsyncpa [#allocation5], 1
    %5506 = vsyncpa [#allocation8], 1
    %5507 = vsyncpa [#allocation11], 1
    %5508 = vsyncpa [#allocation14], 1
    %5509 = vsyncpa [#allocation6], 1
    %5510 = vsyncpa [#allocation17], 1

</llo_original>
